<compile_context>
chip_gen: v7x
topology: tpu7x:2x2x1
jax: 0.10.0
libtpu: 0.0.40
codegen_flags: <defaults>
</compile_context>

<pallas_src>
import functools

import jax
import jax.numpy as jnp
from jax.experimental import pallas as pl
from jax.experimental.pallas import tpu as pltpu

_LANE = 128


def _round_up(x, m):
    return (x + m - 1) // m * m


def _pick_tile_h(H, W, cin_p, cout_p, budget_bytes=20 * 1024 * 1024):
    """Largest tile height that divides H, fits a conservative VMEM budget,
    and (if possible) yields >= 2 tiles so the grid has parallel points."""
    def est(th):
        return 4 * ((th + 4) * (W + 4) * cin_p          # input slab
                    + 10 * (th + 2) * (W + 2) * cin_p   # im2col #1 (9C + src)
                    + (th + 2) * (W + 2) * cout_p       # intermediate
                    + 10 * th * W * cout_p              # im2col #2
                    + 2 * th * W * cout_p)              # out block (dbl-buf)
    divisors = [th for th in (128, 64, 32, 16, 8, 4, 2, 1) if H % th == 0]
    fitting = [th for th in divisors if est(th) <= budget_bytes]
    multi = [th for th in fitting if H // th >= 2]
    if multi:
        return multi[0]
    if fitting:
        return fitting[0]
    return divisors[-1]


def _fused_unet_conv_kernel(x_hbm, w1_ref, w2_ref, s1_ref, b1_ref, s2_ref,
                            b2_ref, o_ref, x_tile, dma_sem):
    # x_hbm : (N, H+4, W+4, Cin_p)  HBM, manual DMA (overlapping row windows)
    # w*_ref: (9*C_p, Cout_p)       resident im2col weights
    # s*/b* : (1, Cout_p)           folded per-channel scale / shift
    # o_ref : (1, TILE_H, W, Cout_p) lane-dense output block
    # x_tile: (TILE_H+4, W+4, Cin_p) VMEM scratch for the haloed input slab
    b = pl.program_id(0)
    t = pl.program_id(1)
    n_t = pl.num_programs(1)

    TH = o_ref.shape[1]
    W = o_ref.shape[2]
    Cout = o_ref.shape[3]
    Cin = x_tile.shape[2]
    MH, MW = TH + 2, W + 2            # conv1 output region (1-halo for conv2)

    # ---- fetch the input slab: TILE_H + 4 rows (2-row halo each side) ----
    row0 = pl.multiple_of(t * TH, TH)
    cp = pltpu.make_async_copy(x_hbm.at[b, pl.ds(row0, TH + 4)], x_tile,
                               dma_sem)
    cp.start()
    cp.wait()
    x = x_tile[...]

    def im2col(src, rows, cols, chans):
        taps = [src[dy:dy + rows, dx:dx + cols, :]
                for dy in range(3) for dx in range(3)]
        return jnp.concatenate(taps, axis=-1).reshape(rows * cols, 9 * chans)

    # ---- conv1 + affine + ReLU over the haloed (MH, MW) region ----
    p1 = im2col(x, MH, MW, Cin)                               # (MH*MW, 9*Cin)
    mid = jnp.dot(p1, w1_ref[...], preferred_element_type=jnp.float32)
    mid = jnp.maximum(mid * s1_ref[...] + b1_ref[...], 0.0)
    mid = mid.reshape(MH, MW, Cout)

    # conv2's SAME padding: intermediate positions outside the image are zero.
    row = jax.lax.broadcasted_iota(jnp.int32, (MH, MW, Cout), 0)
    col = jax.lax.broadcasted_iota(jnp.int32, (MH, MW, Cout), 1)
    inside = (col >= 1) & (col <= W)
    inside &= (row >= 1) | (t > 0)
    inside &= (row <= TH) | (t < n_t - 1)
    mid = jnp.where(inside, mid, 0.0)

    # ---- conv2 + affine + ReLU over the (TH, W) output tile ----
    p2 = im2col(mid, TH, W, Cout)                             # (TH*W, 9*Cout)
    out = jnp.dot(p2, w2_ref[...], preferred_element_type=jnp.float32)
    out = jnp.maximum(out * s2_ref[...] + b2_ref[...], 0.0)
    o_ref[0] = out.reshape(TH, W, Cout).astype(o_ref.dtype)


def fused_unet_conv2(x_nhwc, w1_hwio, w2_hwio, scale1, shift1, scale2, shift2):
    """relu(s2*conv3x3(relu(s1*conv3x3(x)+b1))+b2), SAME padding, NHWC."""
    N, H, W, Cin = x_nhwc.shape
    Cout = w1_hwio.shape[-1]
    cin_p = _round_up(Cin, _LANE)
    cout_p = _round_up(Cout, _LANE)
    tile_h = _pick_tile_h(H, W, cin_p, cout_p)
    n_tiles = H // tile_h

    # Channel pad to full lanes + 2-pixel spatial halo (zeros) for the fused
    # 3x3+3x3 stack; SAME padding of both convs = this pad + in-kernel mask.
    xp = jnp.pad(x_nhwc, ((0, 0), (2, 2), (2, 2), (0, cin_p - Cin)))

    # HWIO -> (9*C_p, Cout_p), tap order (dy, dx, c) matching the kernel.
    w1p = jnp.pad(w1_hwio,
                  ((0, 0), (0, 0), (0, cin_p - Cin), (0, cout_p - Cout)))
    w1p = w1p.reshape(9 * cin_p, cout_p)
    w2p = jnp.pad(w2_hwio,
                  ((0, 0), (0, 0), (0, cout_p - Cout), (0, cout_p - Cout)))
    w2p = w2p.reshape(9 * cout_p, cout_p)

    def pad_vec(v):
        return jnp.pad(v, (0, cout_p - Cout)).reshape(1, cout_p)

    out = pl.pallas_call(
        _fused_unet_conv_kernel,
        out_shape=jax.ShapeDtypeStruct((N, H, W, cout_p), x_nhwc.dtype),
        grid=(N, n_tiles),
        in_specs=[
            pl.BlockSpec(memory_space=pl.ANY),                 # x stays in HBM
            pl.BlockSpec((9 * cin_p, cout_p), lambda b, t: (0, 0)),
            pl.BlockSpec((9 * cout_p, cout_p), lambda b, t: (0, 0)),
            pl.BlockSpec((1, cout_p), lambda b, t: (0, 0)),
            pl.BlockSpec((1, cout_p), lambda b, t: (0, 0)),
            pl.BlockSpec((1, cout_p), lambda b, t: (0, 0)),
            pl.BlockSpec((1, cout_p), lambda b, t: (0, 0)),
        ],
        out_specs=pl.BlockSpec((1, tile_h, W, cout_p),
                               lambda b, t: (b, t, 0, 0)),
        scratch_shapes=[
            pltpu.VMEM((tile_h + 4, W + 4, cin_p), x_nhwc.dtype),
            pltpu.SemaphoreType.DMA,
        ],
        compiler_params=pltpu.CompilerParams(
            dimension_semantics=("parallel", "parallel"),
            vmem_limit_bytes=32 * 1024 * 1024),
    )(xp, w1p, w2p, pad_vec(scale1), pad_vec(shift1), pad_vec(scale2),
      pad_vec(shift2))
    return out[..., :Cout]


def _fold_bn(bias, is_batchnorm, eps=1e-5):
    """Fold conv bias + (fresh-init, eval-mode) BatchNorm into scale/shift."""
    cout = bias.shape[0]
    if is_batchnorm:
        gamma = jnp.ones((cout,), jnp.float32)
        beta = jnp.zeros((cout,), jnp.float32)
        mean = jnp.zeros((cout,), jnp.float32)
        var = jnp.ones((cout,), jnp.float32)
        scale = gamma / jnp.sqrt(var + eps)
        shift = beta - mean * scale + bias * scale
    else:
        scale = jnp.ones((cout,), jnp.float32)
        shift = bias
    return scale, shift


class UnetConv2:
    """Pallas implementation of unetConv2.forward (NCHW in / NCHW out)."""

    def __init__(self, in_size, out_size, is_batchnorm, key):
        k1, k2, k3, k4 = jax.random.split(key, 4)
        lim1 = 1.0 / jnp.sqrt(in_size * 9.0)
        lim2 = 1.0 / jnp.sqrt(out_size * 9.0)
        # HWIO conv weights.
        self.w1 = jax.random.uniform(k1, (3, 3, in_size, out_size),
                                     jnp.float32, -lim1, lim1)
        self.b1 = jax.random.uniform(k2, (out_size,), jnp.float32, -lim1, lim1)
        self.w2 = jax.random.uniform(k3, (3, 3, out_size, out_size),
                                     jnp.float32, -lim2, lim2)
        self.b2 = jax.random.uniform(k4, (out_size,), jnp.float32, -lim2, lim2)
        self.scale1, self.shift1 = _fold_bn(self.b1, is_batchnorm)
        self.scale2, self.shift2 = _fold_bn(self.b2, is_batchnorm)

    @functools.partial(jax.jit, static_argnums=0)
    def __call__(self, x_nchw):
        x = jnp.transpose(x_nchw, (0, 2, 3, 1))              # NCHW -> NHWC
        y = fused_unet_conv2(x, self.w1, self.w2, self.scale1, self.shift1,
                             self.scale2, self.shift2)
        return jnp.transpose(y, (0, 3, 1, 2))                # NHWC -> NCHW


def _reference(x_nchw, model):
    """Pure-JAX reference using lax.conv for validation."""
    x = jnp.transpose(x_nchw, (0, 2, 3, 1))

    def block(x, w, scale, shift):
        y = jax.lax.conv_general_dilated(
            x, w, window_strides=(1, 1), padding="SAME",
            dimension_numbers=("NHWC", "HWIO", "NHWC"))
        return jnp.maximum(y * scale + shift, 0.0)

    y = block(x, model.w1, model.scale1, model.shift1)
    y = block(y, model.w2, model.scale2, model.shift2)
    return jnp.transpose(y, (0, 3, 1, 2))


if __name__ == "__main__":
    key = jax.random.PRNGKey(0)
    k_param, k_x = jax.random.split(key)

    in_size, out_size = 4, 8
    N, H, W = 2, 16, 16

    model = UnetConv2(in_size, out_size, is_batchnorm=True, key=k_param)
    x = jax.random.normal(k_x, (N, in_size, H, W), jnp.float32)  # NCHW

    out = jax.block_until_ready(model(x))
    assert out.shape == (N, out_size, H, W), out.shape

    ref = jax.block_until_ready(_reference(x, model))
    assert jnp.allclose(out, ref, atol=1e-4, rtol=1e-4), (
        float(jnp.max(jnp.abs(out - ref))))

    print("KERNEL_OK")
</pallas_src>

<mosaic_0001>
module attributes {stable_mosaic.version = 11 : i64} {
  func.func @_fused_unet_conv_kernel(%arg0: i32, %arg1: i32, %arg2: memref<2x20x20x128xf32, #tpu.memory_space<any>>, %arg3: memref<1152x128xf32, #tpu.memory_space<vmem>>, %arg4: memref<1152x128xf32, #tpu.memory_space<vmem>>, %arg5: memref<1x128xf32, #tpu.memory_space<vmem>>, %arg6: memref<1x128xf32, #tpu.memory_space<vmem>>, %arg7: memref<1x128xf32, #tpu.memory_space<vmem>>, %arg8: memref<1x128xf32, #tpu.memory_space<vmem>>, %arg9: memref<1x8x16x128xf32, #tpu.memory_space<vmem>>, %arg10: memref<12x20x128xf32, #tpu.memory_space<vmem>>, %arg11: memref<!tpu.dma_semaphore, #tpu.memory_space<semaphore_mem>>) attributes {dimension_semantics = [#tpu.dimension_semantics<parallel>, #tpu.dimension_semantics<parallel>], iteration_bounds = array<i64: 2, 2>, scalar_prefetch = 0 : i64, scratch_operands = 2 : i64, tpu.core_type = #tpu.core_type<tc>, window_params = [{}, {pipeline_mode = #tpu.pipeline_mode<synchronous>, transform_indices = @transform_1, window_bounds = array<i64: 1152, 128>}, {pipeline_mode = #tpu.pipeline_mode<synchronous>, transform_indices = @transform_2, window_bounds = array<i64: 1152, 128>}, {pipeline_mode = #tpu.pipeline_mode<synchronous>, transform_indices = @transform_3, window_bounds = array<i64: 1, 128>}, {pipeline_mode = #tpu.pipeline_mode<synchronous>, transform_indices = @transform_4, window_bounds = array<i64: 1, 128>}, {pipeline_mode = #tpu.pipeline_mode<synchronous>, transform_indices = @transform_5, window_bounds = array<i64: 1, 128>}, {pipeline_mode = #tpu.pipeline_mode<synchronous>, transform_indices = @transform_6, window_bounds = array<i64: 1, 128>}, {transform_indices = @transform_7, window_bounds = array<i64: 1, 8, 16, 128>}]} {
    %c8_i32 = arith.constant 8 : i32
    %0 = arith.muli %arg1, %c8_i32 : i32
    %1 = tpu.assume_multiple %0, 8 : i32
    %c0_i32 = arith.constant 0 : i32
    %c0_i32_0 = arith.constant 0 : i32
    %2 = tpu.memref_slice %arg2[%arg0, %1, %c0_i32, %c0_i32_0] : memref<2x20x20x128xf32, #tpu.memory_space<any>> -> memref<1x12x20x128xf32, #tpu.memory_space<any>>
    %3 = tpu.memref_squeeze %2 : memref<1x12x20x128xf32, #tpu.memory_space<any>> -> memref<12x20x128xf32, #tpu.memory_space<any>>
    tpu.enqueue_dma source(%3 : memref<12x20x128xf32, #tpu.memory_space<any>>) target(%arg10 : memref<12x20x128xf32, #tpu.memory_space<vmem>>) target_semaphore(%arg11 : memref<!tpu.dma_semaphore, #tpu.memory_space<semaphore_mem>>)
    %c0_i32_1 = arith.constant 0 : i32
    %c0_i32_2 = arith.constant 0 : i32
    %4 = tpu.memref_slice %arg2[%arg0, %1, %c0_i32_1, %c0_i32_2] : memref<2x20x20x128xf32, #tpu.memory_space<any>> -> memref<1x12x20x128xf32, #tpu.memory_space<any>>
    %5 = tpu.memref_squeeze %4 : memref<1x12x20x128xf32, #tpu.memory_space<any>> -> memref<12x20x128xf32, #tpu.memory_space<any>>
    tpu.wait_dma2 semaphore(%arg11 : memref<!tpu.dma_semaphore, #tpu.memory_space<semaphore_mem>>) src(%5 : memref<12x20x128xf32, #tpu.memory_space<any>>) dst(%arg10 : memref<12x20x128xf32, #tpu.memory_space<vmem>>)
    %c0 = arith.constant 0 : index
    %c0_3 = arith.constant 0 : index
    %c0_4 = arith.constant 0 : index
    %6 = vector.load %arg10[%c0, %c0_3, %c0_4] : memref<12x20x128xf32, #tpu.memory_space<vmem>>, vector<12x20x128xf32>
    %7 = vector.extract_strided_slice %6 {offsets = [0, 0, 0], sizes = [10, 18, 128], strides = [1, 1, 1]} : vector<12x20x128xf32> to vector<10x18x128xf32>
    %8 = vector.extract_strided_slice %6 {offsets = [0, 1, 0], sizes = [10, 18, 128], strides = [1, 1, 1]} : vector<12x20x128xf32> to vector<10x18x128xf32>
    %9 = vector.extract_strided_slice %6 {offsets = [0, 2, 0], sizes = [10, 18, 128], strides = [1, 1, 1]} : vector<12x20x128xf32> to vector<10x18x128xf32>
    %10 = vector.extract_strided_slice %6 {offsets = [1, 0, 0], sizes = [10, 18, 128], strides = [1, 1, 1]} : vector<12x20x128xf32> to vector<10x18x128xf32>
    %11 = vector.extract_strided_slice %6 {offsets = [1, 1, 0], sizes = [10, 18, 128], strides = [1, 1, 1]} : vector<12x20x128xf32> to vector<10x18x128xf32>
    %12 = vector.extract_strided_slice %6 {offsets = [1, 2, 0], sizes = [10, 18, 128], strides = [1, 1, 1]} : vector<12x20x128xf32> to vector<10x18x128xf32>
    %13 = vector.extract_strided_slice %6 {offsets = [2, 0, 0], sizes = [10, 18, 128], strides = [1, 1, 1]} : vector<12x20x128xf32> to vector<10x18x128xf32>
    %14 = vector.extract_strided_slice %6 {offsets = [2, 1, 0], sizes = [10, 18, 128], strides = [1, 1, 1]} : vector<12x20x128xf32> to vector<10x18x128xf32>
    %15 = vector.extract_strided_slice %6 {offsets = [2, 2, 0], sizes = [10, 18, 128], strides = [1, 1, 1]} : vector<12x20x128xf32> to vector<10x18x128xf32>
    %16 = tpu.concatenate %7, %8, %9, %10, %11, %12, %13, %14, %15 in 2 : vector<10x18x128xf32>, vector<10x18x128xf32>, vector<10x18x128xf32>, vector<10x18x128xf32>, vector<10x18x128xf32>, vector<10x18x128xf32>, vector<10x18x128xf32>, vector<10x18x128xf32>, vector<10x18x128xf32> -> vector<10x18x1152xf32>
    %17 = vector.shape_cast %16 : vector<10x18x1152xf32> to vector<180x1152xf32>
    %c0_5 = arith.constant 0 : index
    %c0_6 = arith.constant 0 : index
    %18 = vector.load %arg3[%c0_5, %c0_6] : memref<1152x128xf32, #tpu.memory_space<vmem>>, vector<1152x128xf32>
    %cst = arith.constant dense<0.000000e+00> : vector<180x128xf32>
    %19 = tpu.matmul %17, %18, %cst {dimension_numbers = #tpu.dot_dimension_numbers<[1], [0], [0], [1], [0, 0, 1, 1], [], []>} : vector<180x1152xf32>, vector<1152x128xf32>, vector<180x128xf32> -> vector<180x128xf32>
    %c0_7 = arith.constant 0 : index
    %c0_8 = arith.constant 0 : index
    %20 = vector.load %arg5[%c0_7, %c0_8] : memref<1x128xf32, #tpu.memory_space<vmem>>, vector<1x128xf32>
    %21 = vector.broadcast %20 : vector<1x128xf32> to vector<180x128xf32>
    %22 = arith.mulf %19, %21 : vector<180x128xf32>
    %c0_9 = arith.constant 0 : index
    %c0_10 = arith.constant 0 : index
    %23 = vector.load %arg6[%c0_9, %c0_10] : memref<1x128xf32, #tpu.memory_space<vmem>>, vector<1x128xf32>
    %24 = vector.broadcast %23 : vector<1x128xf32> to vector<180x128xf32>
    %25 = arith.addf %22, %24 : vector<180x128xf32>
    %cst_11 = arith.constant 0.000000e+00 : f32
    %26 = vector.broadcast %cst_11 : f32 to vector<180x128xf32>
    %27 = arith.maximumf %25, %26 : vector<180x128xf32>
    %28 = vector.shape_cast %27 : vector<180x128xf32> to vector<10x18x128xf32>
    %29 = tpu.iota {dimensions = array<i32: 0>} : vector<10x18x128xi32>
    %30 = tpu.iota {dimensions = array<i32: 1>} : vector<10x18x128xi32>
    %c1_i32 = arith.constant 1 : i32
    %31 = vector.broadcast %c1_i32 : i32 to vector<10x18x128xi32>
    %32 = arith.cmpi sge, %30, %31 : vector<10x18x128xi32>
    %c16_i32 = arith.constant 16 : i32
    %33 = vector.broadcast %c16_i32 : i32 to vector<10x18x128xi32>
    %34 = arith.cmpi sle, %30, %33 : vector<10x18x128xi32>
    %35 = arith.andi %32, %34 : vector<10x18x128xi1>
    %c1_i32_12 = arith.constant 1 : i32
    %36 = vector.broadcast %c1_i32_12 : i32 to vector<10x18x128xi32>
    %37 = arith.cmpi sge, %29, %36 : vector<10x18x128xi32>
    %c0_i32_13 = arith.constant 0 : i32
    %38 = arith.cmpi sgt, %arg1, %c0_i32_13 : i32
    %39 = vector.broadcast %38 : i1 to vector<10x18x128xi1>
    %40 = arith.ori %37, %39 : vector<10x18x128xi1>
    %41 = arith.andi %35, %40 : vector<10x18x128xi1>
    %c8_i32_14 = arith.constant 8 : i32
    %42 = vector.broadcast %c8_i32_14 : i32 to vector<10x18x128xi32>
    %43 = arith.cmpi sle, %29, %42 : vector<10x18x128xi32>
    %c1_i32_15 = arith.constant 1 : i32
    %44 = arith.cmpi slt, %arg1, %c1_i32_15 : i32
    %45 = vector.broadcast %44 : i1 to vector<10x18x128xi1>
    %46 = arith.ori %43, %45 : vector<10x18x128xi1>
    %47 = arith.andi %41, %46 : vector<10x18x128xi1>
    %cst_16 = arith.constant 0.000000e+00 : f32
    %48 = vector.broadcast %cst_16 : f32 to vector<10x18x128xf32>
    %49 = arith.select %47, %28, %48 : vector<10x18x128xi1>, vector<10x18x128xf32>
    %50 = vector.extract_strided_slice %49 {offsets = [0, 0, 0], sizes = [8, 16, 128], strides = [1, 1, 1]} : vector<10x18x128xf32> to vector<8x16x128xf32>
    %51 = vector.extract_strided_slice %49 {offsets = [0, 1, 0], sizes = [8, 16, 128], strides = [1, 1, 1]} : vector<10x18x128xf32> to vector<8x16x128xf32>
    %52 = vector.extract_strided_slice %49 {offsets = [0, 2, 0], sizes = [8, 16, 128], strides = [1, 1, 1]} : vector<10x18x128xf32> to vector<8x16x128xf32>
    %53 = vector.extract_strided_slice %49 {offsets = [1, 0, 0], sizes = [8, 16, 128], strides = [1, 1, 1]} : vector<10x18x128xf32> to vector<8x16x128xf32>
    %54 = vector.extract_strided_slice %49 {offsets = [1, 1, 0], sizes = [8, 16, 128], strides = [1, 1, 1]} : vector<10x18x128xf32> to vector<8x16x128xf32>
    %55 = vector.extract_strided_slice %49 {offsets = [1, 2, 0], sizes = [8, 16, 128], strides = [1, 1, 1]} : vector<10x18x128xf32> to vector<8x16x128xf32>
    %56 = vector.extract_strided_slice %49 {offsets = [2, 0, 0], sizes = [8, 16, 128], strides = [1, 1, 1]} : vector<10x18x128xf32> to vector<8x16x128xf32>
    %57 = vector.extract_strided_slice %49 {offsets = [2, 1, 0], sizes = [8, 16, 128], strides = [1, 1, 1]} : vector<10x18x128xf32> to vector<8x16x128xf32>
    %58 = vector.extract_strided_slice %49 {offsets = [2, 2, 0], sizes = [8, 16, 128], strides = [1, 1, 1]} : vector<10x18x128xf32> to vector<8x16x128xf32>
    %59 = tpu.concatenate %50, %51, %52, %53, %54, %55, %56, %57, %58 in 2 : vector<8x16x128xf32>, vector<8x16x128xf32>, vector<8x16x128xf32>, vector<8x16x128xf32>, vector<8x16x128xf32>, vector<8x16x128xf32>, vector<8x16x128xf32>, vector<8x16x128xf32>, vector<8x16x128xf32> -> vector<8x16x1152xf32>
    %60 = vector.shape_cast %59 : vector<8x16x1152xf32> to vector<128x1152xf32>
    %c0_17 = arith.constant 0 : index
    %c0_18 = arith.constant 0 : index
    %61 = vector.load %arg4[%c0_17, %c0_18] : memref<1152x128xf32, #tpu.memory_space<vmem>>, vector<1152x128xf32>
    %cst_19 = arith.constant dense<0.000000e+00> : vector<128x128xf32>
    %62 = tpu.matmul %60, %61, %cst_19 {dimension_numbers = #tpu.dot_dimension_numbers<[1], [0], [0], [1], [0, 0, 1, 1], [], []>} : vector<128x1152xf32>, vector<1152x128xf32>, vector<128x128xf32> -> vector<128x128xf32>
    %c0_20 = arith.constant 0 : index
    %c0_21 = arith.constant 0 : index
    %63 = vector.load %arg7[%c0_20, %c0_21] : memref<1x128xf32, #tpu.memory_space<vmem>>, vector<1x128xf32>
    %64 = vector.broadcast %63 : vector<1x128xf32> to vector<128x128xf32>
    %65 = arith.mulf %62, %64 : vector<128x128xf32>
    %c0_22 = arith.constant 0 : index
    %c0_23 = arith.constant 0 : index
    %66 = vector.load %arg8[%c0_22, %c0_23] : memref<1x128xf32, #tpu.memory_space<vmem>>, vector<1x128xf32>
    %67 = vector.broadcast %66 : vector<1x128xf32> to vector<128x128xf32>
    %68 = arith.addf %65, %67 : vector<128x128xf32>
    %cst_24 = arith.constant 0.000000e+00 : f32
    %69 = vector.broadcast %cst_24 : f32 to vector<128x128xf32>
    %70 = arith.maximumf %68, %69 : vector<128x128xf32>
    %71 = vector.shape_cast %70 : vector<128x128xf32> to vector<8x16x128xf32>
    %c0_25 = arith.constant 0 : index
    %c0_26 = arith.constant 0 : index
    %c0_27 = arith.constant 0 : index
    %c0_28 = arith.constant 0 : index
    %72 = vector.load %arg9[%c0_25, %c0_26, %c0_27, %c0_28] : memref<1x8x16x128xf32, #tpu.memory_space<vmem>>, vector<1x8x16x128xf32>
    %73 = vector.shape_cast %72 : vector<1x8x16x128xf32> to vector<8x16x128xf32>
    %74 = vector.shape_cast %71 : vector<8x16x128xf32> to vector<1x8x16x128xf32>
    tpu.vector_store %arg9[%c0_25, %c0_26, %c0_27, %c0_28], %74 {strides = array<i32>} : memref<1x8x16x128xf32, #tpu.memory_space<vmem>>, vector<1x8x16x128xf32>,
    return
  }
  func.func @transform_1(%arg0: i32, %arg1: i32) -> (i32, i32) {
    %c0_i32 = arith.constant 0 : i32
    %c0_i32_0 = arith.constant 0 : i32
    %c0_i32_1 = arith.constant 0 : i32
    return %c0_i32, %c0_i32_0 : i32, i32
  }
  func.func @transform_2(%arg0: i32, %arg1: i32) -> (i32, i32) {
    %c0_i32 = arith.constant 0 : i32
    %c0_i32_0 = arith.constant 0 : i32
    %c0_i32_1 = arith.constant 0 : i32
    return %c0_i32, %c0_i32_0 : i32, i32
  }
  func.func @transform_3(%arg0: i32, %arg1: i32) -> (i32, i32) {
    %c0_i32 = arith.constant 0 : i32
    %c0_i32_0 = arith.constant 0 : i32
    %c0_i32_1 = arith.constant 0 : i32
    return %c0_i32, %c0_i32_0 : i32, i32
  }
  func.func @transform_4(%arg0: i32, %arg1: i32) -> (i32, i32) {
    %c0_i32 = arith.constant 0 : i32
    %c0_i32_0 = arith.constant 0 : i32
    %c0_i32_1 = arith.constant 0 : i32
    return %c0_i32, %c0_i32_0 : i32, i32
  }
  func.func @transform_5(%arg0: i32, %arg1: i32) -> (i32, i32) {
    %c0_i32 = arith.constant 0 : i32
    %c0_i32_0 = arith.constant 0 : i32
    %c0_i32_1 = arith.constant 0 : i32
    return %c0_i32, %c0_i32_0 : i32, i32
  }
  func.func @transform_6(%arg0: i32, %arg1: i32) -> (i32, i32) {
    %c0_i32 = arith.constant 0 : i32
    %c0_i32_0 = arith.constant 0 : i32
    %c0_i32_1 = arith.constant 0 : i32
    return %c0_i32, %c0_i32_0 : i32, i32
  }
  func.func @transform_7(%arg0: i32, %arg1: i32) -> (i32, i32, i32, i32) {
    %c0_i32 = arith.constant 0 : i32
    %c0_i32_0 = arith.constant 0 : i32
    %c0_i32_1 = arith.constant 0 : i32
    return %arg0, %arg1, %c0_i32, %c0_i32_0 : i32, i32, i32, i32
  }
}

</mosaic_0001>

<llo_original>
// kernel: a_call__.1
$region0: #{a_call__.1}
  #allocation0 [shape = 'u32[]', space=smem, size = 0x4, offset = 0x4, fixed_abs, tag = 'smem constant byte address 0x4 - core index']
  #allocation1 [shape = 'u32[144,128]{1,0:T(1,128)}', space=vmem, size = 0x12000, scoped, tag = 'internal scratch']
  #allocation2 [shape = 'f32[12,20,128]{2,1,0:T(8,128)}', space=vmem, size = 0x24000, scoped, tag = 'scratch operand']
  #allocation3 [shape = 's32[1]{0}', space=sflag, size = 0x4, scoped, tag = 'scratch operand']
  #allocation6 [shape = 's32[]', space=sflag, size = 0x4, offset = 0, fixed_abs, tag = 'sflag constant byte address 0x0 - dummy sync flag']
  %s0 = inlined_call_operand.vmem [shape: f32[2,20,20,128], index: 0, kind: input, shape index: {}]
  %s1 = inlined_call_operand.hbm [shape: f32[1152,128], index: 1, kind: input, shape index: {}]
  %s2 = inlined_call_operand.vmem [shape: f32[1152,128], index: 2, kind: input, shape index: {}]
  %s3 = inlined_call_operand.vmem [shape: f32[1,128], index: 3, kind: input, shape index: {}, may-alias: {3,5}]
  %s4 = inlined_call_operand.vmem [shape: f32[1,128], index: 4, kind: input, shape index: {}]
  %s5 = inlined_call_operand.vmem [shape: f32[1,128], index: 5, kind: input, shape index: {}, may-alias: {3,5}]
  %s6 = inlined_call_operand.vmem [shape: f32[1,128], index: 6, kind: input, shape index: {}]
  %s7 = inlined_call_operand.vmem [shape: f32[2,16,16,128], index: 7, kind: output, shape index: {}]
  %s8 = sld [smem:[#allocation0]]
  $region98: #{a_call__.1} parent=0
    _
  %s10 = ssub.s32 1, %s8
  %s11 = scalar_select 0, %s10, %s8
  $region1: #{a_call__.1} parent=0
    #allocation4 [shape = 'u8[589824]{0}', space=vmem, size = 0x90000, scoped, tag = 'input window, operand 1, single buffered']
    #allocation5 [shape = 's32[2]{0}', space=sflag, size = 0x8, scoped, tag = 'scoped memory for a_call__.1']
    %12 = vsyncpa [#allocation5], 0
    loop: start=0, step=1, limit=6
    $region2: #{a_call__.1} parent=1 // loop_pre_header
      _
    $region3: #{a_call__.1} parent=1 // loop_header
      %s14 = sphi 0, %s18
      %p15 = scmp.ge.s32.totalorder %s14, 6
      %s21 = sphi 0, %s33
      %s22 = sphi 0, %s29
      %s23 = sphi 0, %s21
      %s24 = sphi 0, %s22
      %s25 = sphi 0, %s23
      %s26 = sphi 0, %s24
      %s34 = sphi 0, %s34
      %s36 = sphi 0, %s34
      %s37 = sphi 0, %s36
      %s51 = sphi 0, %s37
      %s55 = sphi 0, %s55
      %s57 = sphi 0, %s55
      %s58 = sphi 0, %s57
      %s72 = sphi 0, %s58
      %s76 = sphi 0, %s76
      %s78 = sphi 0, %s76
      %s79 = sphi 0, %s78
      %s93 = sphi 0, %s79
      %s97 = sphi 0, %s97
      %s99 = sphi 0, %s97
      %s100 = sphi 0, %s99
      %s114 = sphi 0, %s100
      %s118 = sphi 0, %s118
      %s120 = sphi 0, %s118
      %s121 = sphi 0, %s120
      %s135 = sphi 0, %s121
      %s139 = sphi 0, %s139
      %s141 = sphi 0, %s139
      %s142 = sphi 0, %s141
      %s156 = sphi 0, %s142
      %s164 = sphi 0, %s166
      %s167 = sphi 0, %s164
      %s168 = sphi 0, %s167
      %s184 = sphi 0, %s168
    $region4: #{a_call__.1} parent=1 // loop_header_branch
      %17 = sbr.rel (%p15) target = $region8
    $region5: #{a_call__.1} parent=1 // loop_body
      %s19 = ssub.s32 %s14, 1
      %s20 = ssub.s32 %s14, 2
      %s27 = sadd.s32 1, %s22
      %p28 = scmp.ge.s32.totalorder %s27, 2
      %s29 = scalar_select %p28, 0, %s27
      %s30 = sadd.s32 1, %s21
      %s31 = scalar_select %p28, %s30, %s21
      %p32 = scmp.ge.s32.totalorder %s31, 2
      %s33 = scalar_select %p32, 0, %s31
      %s35 = sadd.s32 %s34, 1
      %p38 = scmp.eq.s32.totalorder %s14, 3
      %p39 = scmp.ne.s32.totalorder %s34, %s36
      %p40 = scmp.eq.s32.totalorder %s14, 0
      %p41 = por %p39, %p40
      %p42 = scmp.ne.s32.totalorder %s34, %s36
      %p43 = scmp.eq.s32.totalorder %s19, 3
      %p44 = por %p42, %p43
      %p45 = scmp.ne.s32.totalorder %s36, %s37
      %p46 = scmp.eq.s32.totalorder %s19, 0
      %p47 = por %p45, %p46
      %p48 = scmp.ne.s32.totalorder %s36, %s37
      %p49 = scmp.eq.s32.totalorder %s20, 3
      %p50 = por %p48, %p49
      %p52 = scmp.ne.s32.totalorder %s37, %s51
      %p53 = scmp.eq.s32.totalorder %s20, 0
      %p54 = por %p52, %p53
      %s56 = sadd.s32 %s55, 1
      %p59 = scmp.eq.s32.totalorder %s14, 3
      %p60 = scmp.ne.s32.totalorder %s55, %s57
      %p61 = scmp.eq.s32.totalorder %s14, 0
      %p62 = por %p60, %p61
      %p63 = scmp.ne.s32.totalorder %s55, %s57
      %p64 = scmp.eq.s32.totalorder %s19, 3
      %p65 = por %p63, %p64
      %p66 = scmp.ne.s32.totalorder %s57, %s58
      %p67 = scmp.eq.s32.totalorder %s19, 0
      %p68 = por %p66, %p67
      %p69 = scmp.ne.s32.totalorder %s57, %s58
      %p70 = scmp.eq.s32.totalorder %s20, 3
      %p71 = por %p69, %p70
      %p73 = scmp.ne.s32.totalorder %s58, %s72
      %p74 = scmp.eq.s32.totalorder %s20, 0
      %p75 = por %p73, %p74
      %s77 = sadd.s32 %s76, 1
      %p80 = scmp.eq.s32.totalorder %s14, 3
      %p81 = scmp.ne.s32.totalorder %s76, %s78
      %p82 = scmp.eq.s32.totalorder %s14, 0
      %p83 = por %p81, %p82
      %p84 = scmp.ne.s32.totalorder %s76, %s78
      %p85 = scmp.eq.s32.totalorder %s19, 3
      %p86 = por %p84, %p85
      %p87 = scmp.ne.s32.totalorder %s78, %s79
      %p88 = scmp.eq.s32.totalorder %s19, 0
      %p89 = por %p87, %p88
      %p90 = scmp.ne.s32.totalorder %s78, %s79
      %p91 = scmp.eq.s32.totalorder %s20, 3
      %p92 = por %p90, %p91
      %p94 = scmp.ne.s32.totalorder %s79, %s93
      %p95 = scmp.eq.s32.totalorder %s20, 0
      %p96 = por %p94, %p95
      %s98 = sadd.s32 %s97, 1
      %p101 = scmp.eq.s32.totalorder %s14, 3
      %p102 = scmp.ne.s32.totalorder %s97, %s99
      %p103 = scmp.eq.s32.totalorder %s14, 0
      %p104 = por %p102, %p103
      %p105 = scmp.ne.s32.totalorder %s97, %s99
      %p106 = scmp.eq.s32.totalorder %s19, 3
      %p107 = por %p105, %p106
      %p108 = scmp.ne.s32.totalorder %s99, %s100
      %p109 = scmp.eq.s32.totalorder %s19, 0
      %p110 = por %p108, %p109
      %p111 = scmp.ne.s32.totalorder %s99, %s100
      %p112 = scmp.eq.s32.totalorder %s20, 3
      %p113 = por %p111, %p112
      %p115 = scmp.ne.s32.totalorder %s100, %s114
      %p116 = scmp.eq.s32.totalorder %s20, 0
      %p117 = por %p115, %p116
      %s119 = sadd.s32 %s118, 1
      %p122 = scmp.eq.s32.totalorder %s14, 3
      %p123 = scmp.ne.s32.totalorder %s118, %s120
      %p124 = scmp.eq.s32.totalorder %s14, 0
      %p125 = por %p123, %p124
      %p126 = scmp.ne.s32.totalorder %s118, %s120
      %p127 = scmp.eq.s32.totalorder %s19, 3
      %p128 = por %p126, %p127
      %p129 = scmp.ne.s32.totalorder %s120, %s121
      %p130 = scmp.eq.s32.totalorder %s19, 0
      %p131 = por %p129, %p130
      %p132 = scmp.ne.s32.totalorder %s120, %s121
      %p133 = scmp.eq.s32.totalorder %s20, 3
      %p134 = por %p132, %p133
      %p136 = scmp.ne.s32.totalorder %s121, %s135
      %p137 = scmp.eq.s32.totalorder %s20, 0
      %p138 = por %p136, %p137
      %s140 = sadd.s32 %s139, 1
      %p143 = scmp.eq.s32.totalorder %s14, 3
      %p144 = scmp.ne.s32.totalorder %s139, %s141
      %p145 = scmp.eq.s32.totalorder %s14, 0
      %p146 = por %p144, %p145
      %p147 = scmp.ne.s32.totalorder %s139, %s141
      %p148 = scmp.eq.s32.totalorder %s19, 3
      %p149 = por %p147, %p148
      %p150 = scmp.ne.s32.totalorder %s141, %s142
      %p151 = scmp.eq.s32.totalorder %s19, 0
      %p152 = por %p150, %p151
      %p153 = scmp.ne.s32.totalorder %s141, %s142
      %p154 = scmp.eq.s32.totalorder %s20, 3
      %p155 = por %p153, %p154
      %p157 = scmp.ne.s32.totalorder %s142, %s156
      %p158 = scmp.eq.s32.totalorder %s20, 0
      %p159 = por %p157, %p158
      %s160 = ssub.s32 %s21, %s33
      %s161 = ssub.s32 %s22, %s29
      %s162 = sor.u32 %s160, %s161
      %p163 = scmp.eq.s32.totalorder %s162, 0
      %s165 = sadd.s32 %s164, 1
      %s166 = scalar_select %p163, %s164, %s165
      %p169 = pneg %p163
      %p170 = scmp.eq.s32.totalorder %s14, 3
      %p171 = por %p169, %p170
      %p172 = scmp.ne.s32.totalorder %s164, %s167
      %p173 = scmp.eq.s32.totalorder %s14, 0
      %p174 = por %p172, %p173
      %p175 = scmp.ne.s32.totalorder %s164, %s167
      %p176 = scmp.eq.s32.totalorder %s19, 3
      %p177 = por %p175, %p176
      %p178 = scmp.ne.s32.totalorder %s167, %s168
      %p179 = scmp.eq.s32.totalorder %s19, 0
      %p180 = por %p178, %p179
      %p181 = scmp.ne.s32.totalorder %s167, %s168
      %p182 = scmp.eq.s32.totalorder %s20, 3
      %p183 = por %p181, %p182
      %p185 = scmp.ne.s32.totalorder %s168, %s184
      %p186 = scmp.eq.s32.totalorder %s20, 0
      %p187 = por %p185, %p186
      %p188 = scmp.le.s32.totalorder 1, %s14
      %p189 = scmp.lt.s32.totalorder %s14, 5
      %p190 = pnand %p188, %p189
      %p191 = pneg %p190
      // Predicated region
      $region9: #{a_call__.1} parent=5 // pred_check
        _
      $region10: #{a_call__.1} parent=5 // pred_check_branch
        %193 = sbr.rel (%p190) target = $region12
      $region11: #{a_call__.1} parent=5 // pred_region
        %s194 = ssub.s32 %s14, 1
        // Predicated region
        $region13: #{a_call__.1} parent=11 // pred_check
          %p195 = pneg %p47
        $region14: #{a_call__.1} parent=11 // pred_check_branch
          %197 = sbr.rel (%p195) target = $region16
        $region15: #{a_call__.1} parent=11 // pred_region
          %s199 = ssub.s32 18432, 18432
          %200 = vsyncadd [#allocation5], %s199
          %s201 = sshll.u32 [#allocation4], 4
          %s202 = int_to_ptr.vmem [resolvable:$true] %s201
          %207 = dma.hbm_to_vmem [thread:$0]  %s1, 18432, %s202, [#allocation5], 128, 128, 8
        $region16: #{a_call__.1} parent=11 // pred_fallthru
          _
        // Predicated region
        $region17: #{a_call__.1} parent=11 // pred_check
          %p208 = pneg %p68
        $region18: #{a_call__.1} parent=11 // pred_check_branch
          %210 = sbr.rel (%p208) target = $region20
        $region19: #{a_call__.1} parent=11 // pred_region
          _
        $region20: #{a_call__.1} parent=11 // pred_fallthru
          _
        // Predicated region
        $region21: #{a_call__.1} parent=11 // pred_check
          %p211 = pneg %p89
        $region22: #{a_call__.1} parent=11 // pred_check_branch
          %213 = sbr.rel (%p211) target = $region24
        $region23: #{a_call__.1} parent=11 // pred_region
          _
        $region24: #{a_call__.1} parent=11 // pred_fallthru
          _
        // Predicated region
        $region25: #{a_call__.1} parent=11 // pred_check
          %p214 = pneg %p110
        $region26: #{a_call__.1} parent=11 // pred_check_branch
          %216 = sbr.rel (%p214) target = $region28
        $region27: #{a_call__.1} parent=11 // pred_region
          _
        $region28: #{a_call__.1} parent=11 // pred_fallthru
          _
        // Predicated region
        $region29: #{a_call__.1} parent=11 // pred_check
          %p217 = pneg %p131
        $region30: #{a_call__.1} parent=11 // pred_check_branch
          %219 = sbr.rel (%p217) target = $region32
        $region31: #{a_call__.1} parent=11 // pred_region
          _
        $region32: #{a_call__.1} parent=11 // pred_fallthru
          _
        // Predicated region
        $region33: #{a_call__.1} parent=11 // pred_check
          %p220 = pneg %p152
        $region34: #{a_call__.1} parent=11 // pred_check_branch
          %222 = sbr.rel (%p220) target = $region36
        $region35: #{a_call__.1} parent=11 // pred_region
          _
        $region36: #{a_call__.1} parent=11 // pred_fallthru
          _
      $region12: #{a_call__.1} parent=5 // pred_fallthru
        _
      %p223 = scmp.lt.s32.totalorder %s14, 4
      // Predicated region
      $region37: #{a_call__.1} parent=5 // pred_check
        %p224 = pneg %p223
      $region38: #{a_call__.1} parent=5 // pred_check_branch
        %226 = sbr.rel (%p224) target = $region40
      $region39: #{a_call__.1} parent=5 // pred_region
        _
      $region40: #{a_call__.1} parent=5 // pred_fallthru
        _
      %p227 = scmp.le.s32.totalorder 1, %s14
      %p228 = scmp.lt.s32.totalorder %s14, 5
      %p229 = pnand %p227, %p228
      %p230 = pneg %p229
      // Predicated region
      $region41: #{a_call__.1} parent=5 // pred_check
        _
      $region42: #{a_call__.1} parent=5 // pred_check_branch
        %232 = sbr.rel (%p229) target = $region44
      $region43: #{a_call__.1} parent=5 // pred_region
        %s233 = ssub.s32 %s14, 1
        // Predicated region
        $region45: #{a_call__.1} parent=43 // pred_check
          %p234 = pneg %p47
        $region46: #{a_call__.1} parent=43 // pred_check_branch
          %236 = sbr.rel (%p234) target = $region48
        $region47: #{a_call__.1} parent=43 // pred_region
          %237 = dma.done [#allocation5], 18432
        $region48: #{a_call__.1} parent=43 // pred_fallthru
          _
        %p238 = pneg %p47
        %p239 = pneg %p44
        %p240 = pneg %p68
        %p241 = pneg %p65
        %p242 = pneg %p89
        %p243 = pneg %p86
        %p244 = pneg %p110
        %p245 = pneg %p107
        %p246 = pneg %p131
        %p247 = pneg %p128
        %p248 = pneg %p152
        %p249 = pneg %p149
        %p250 = pneg %p180
        %p251 = pneg %p177
        %s252 = smul.u32 8, %s24
        %p253 = scmp.lt.s32.totalorder %s23, 1
        %s254 = scalar_select %p253, %s23, 1
        %p255 = scmp.lt.s32.totalorder %s252, 15
        %s256 = scalar_select %p255, %s252, 15
        %s257 = smul.addr %s256, 2
        %s258 = smul.addr %s254, 32
        %s259 = sadd.s32 %s257, %s258
        %s260 = smul.addr %s259, 8
        %s261 = scalar_lea.vmem %s7, %s260
        %s262 = smul.u32 8, %s24
        %p263 = scmp.lt.s32.totalorder %s23, 1
        %s264 = scalar_select %p263, %s23, 1
        %p265 = scmp.lt.s32.totalorder %s262, 15
        %s266 = scalar_select %p265, %s262, 15
        %s267 = smul.addr %s266, 2
        %s268 = smul.addr %s264, 32
        %s269 = sadd.s32 %s267, %s268
        %s270 = smul.addr %s269, 8
        %s271 = scalar_lea.vmem %s7, %s270
        %s272 = smul.u32 8, %s24
        %s273 = smul.u32 %s24, 8
        %s274 = smul.u32 %s273, 24
        %s275 = smul.u32 %s23, 480
        %s276 = sadd.s32 %s274, %s275
        %s277 = scalar_lea.vmem %s0, %s276
        %p279 = scmp.lt.u32.totalorder 20, 8
        %p280 = pneg %p279
        // Predicated region
        $region49: #{a_call__.1} parent=43 // pred_check
          _
        $region50: #{a_call__.1} parent=43 // pred_check_branch
          %282 = sbr.rel (%p279) target = $region52
        $region51: #{a_call__.1} parent=43 // pred_region
          %s319 = sand.u32 20, 7
          %p320 = scmp.eq.s32.totalorder %s319, 0
          %p321 = pneg %p320
          // Predicated region
          $region64: #{a_call__.1} parent=51 // pred_check
            _
          $region65: #{a_call__.1} parent=51 // pred_check_branch
            %323 = sbr.rel (%p320) target = $region67
          $region66: #{a_call__.1} parent=51 // pred_region
            %s324 = sand.u32 20, 7
            %s325 = ssub.s32 20, %s324
            %s326 = scalar_lea.vmem %s277, %s325
            %s327 = ssub.s32 20, %s324
            %s328 = scalar_lea.vmem [#allocation2], %s327
            loop: start=0, step=1, limit=1
            $region68: #{a_call__.1} parent=66 // loop_pre_header
              _
            $region69: #{a_call__.1} parent=66 // loop_header
              %s330 = sphi 0, %s334
              %p331 = scmp.ge.s32.totalorder %s330, 1
              %s335 = sphi %s277, %s277
              %s336 = sphi [#allocation2], [#allocation2]
            $region70: #{a_call__.1} parent=66 // loop_header_branch
              %333 = sbr.rel (%p331) target = $region74
            $region71: #{a_call__.1} parent=66 // loop_body
              %v337 = vld [vmem:[%s335] sm:$0xff]
              %338 = vst [vmem:[%s336] sm:$0xff] %v337
              %v339 = vld [vmem:[%s335 + $0x8] sm:$0xff]
              %340 = vst [vmem:[%s336 + $0x8] sm:$0xff] %v339
              %v341 = vld [vmem:[%s335 + $0x18] sm:$0xff]
              %342 = vst [vmem:[%s336 + $0x18] sm:$0xff] %v341
              %v343 = vld [vmem:[%s335 + $0x20] sm:$0xff]
              %344 = vst [vmem:[%s336 + $0x20] sm:$0xff] %v343
              %v345 = vld [vmem:[%s335 + $0x30] sm:$0xff]
              %346 = vst [vmem:[%s336 + $0x30] sm:$0xff] %v345
              %v347 = vld [vmem:[%s335 + $0x38] sm:$0xff]
              %348 = vst [vmem:[%s336 + $0x38] sm:$0xff] %v347
              %v349 = vld [vmem:[%s335 + $0x48] sm:$0xff]
              %350 = vst [vmem:[%s336 + $0x48] sm:$0xff] %v349
              %v351 = vld [vmem:[%s335 + $0x50] sm:$0xff]
              %352 = vst [vmem:[%s336 + $0x50] sm:$0xff] %v351
              %v353 = vld [vmem:[%s335 + $0x60] sm:$0xff]
              %354 = vst [vmem:[%s336 + $0x60] sm:$0xff] %v353
              %v355 = vld [vmem:[%s335 + $0x68] sm:$0xff]
              %356 = vst [vmem:[%s336 + $0x68] sm:$0xff] %v355
              %v357 = vld [vmem:[%s335 + $0x78] sm:$0xff]
              %358 = vst [vmem:[%s336 + $0x78] sm:$0xff] %v357
              %v359 = vld [vmem:[%s335 + $0x80] sm:$0xff]
              %360 = vst [vmem:[%s336 + $0x80] sm:$0xff] %v359
              %v361 = vld [vmem:[%s335 + $0x90] sm:$0xff]
              %362 = vst [vmem:[%s336 + $0x90] sm:$0xff] %v361
              %v363 = vld [vmem:[%s335 + $0x98] sm:$0xff]
              %364 = vst [vmem:[%s336 + $0x98] sm:$0xff] %v363
              %v365 = vld [vmem:[%s335 + $0xa8] sm:$0xff]
              %366 = vst [vmem:[%s336 + $0xa8] sm:$0xff] %v365
              %v367 = vld [vmem:[%s335 + $0xb0] sm:$0xff]
              %368 = vst [vmem:[%s336 + $0xb0] sm:$0xff] %v367
              %v369 = vld [vmem:[%s335 + $0xc0] sm:$0xff]
              %370 = vst [vmem:[%s336 + $0xc0] sm:$0xff] %v369
              %v371 = vld [vmem:[%s335 + $0xc8] sm:$0xff]
              %372 = vst [vmem:[%s336 + $0xc8] sm:$0xff] %v371
              %v373 = vld [vmem:[%s335 + $0xd8] sm:$0xff]
              %374 = vst [vmem:[%s336 + $0xd8] sm:$0xff] %v373
              %v375 = vld [vmem:[%s335 + $0xe0] sm:$0xff]
              %376 = vst [vmem:[%s336 + $0xe0] sm:$0xff] %v375
              %v377 = vld [vmem:[%s335 + $0xf0] sm:$0xff]
              %378 = vst [vmem:[%s336 + $0xf0] sm:$0xff] %v377
              %v379 = vld [vmem:[%s335 + $0xf8] sm:$0xff]
              %380 = vst [vmem:[%s336 + $0xf8] sm:$0xff] %v379
              %v381 = vld [vmem:[%s335 + $0x108] sm:$0xff]
              %382 = vst [vmem:[%s336 + $0x108] sm:$0xff] %v381
              %v383 = vld [vmem:[%s335 + $0x110] sm:$0xff]
              %384 = vst [vmem:[%s336 + $0x110] sm:$0xff] %v383
            $region72: #{a_call__.1} parent=66 // loop_footer
              %s334 = sadd.s32 1, %s330
            $region73: #{a_call__.1} parent=66 // loop_footer_branch
              %329 = sbr.rel target = $region69
            $region74: #{a_call__.1} parent=66 // loop_exit
              _
            %s385 = sshllo.u32 0, %s324
            loop: start=0, step=1, limit=1
            $region75: #{a_call__.1} parent=66 // loop_pre_header
              _
            $region76: #{a_call__.1} parent=66 // loop_header
              %s387 = sphi 0, %s391
              %p388 = scmp.ge.s32.totalorder %s387, 1
              %s392 = sphi %s326, %s326
              %s393 = sphi %s328, %s328
            $region77: #{a_call__.1} parent=66 // loop_header_branch
              %390 = sbr.rel (%p388) target = $region81
            $region78: #{a_call__.1} parent=66 // loop_body
              %v394 = vld [vmem:[%s392] sm:%s385]
              %395 = vst [vmem:[%s393] sm:%s385] %v394
              %v396 = vld [vmem:[%s392 + $0x18] sm:%s385]
              %397 = vst [vmem:[%s393 + $0x18] sm:%s385] %v396
              %v398 = vld [vmem:[%s392 + $0x30] sm:%s385]
              %399 = vst [vmem:[%s393 + $0x30] sm:%s385] %v398
              %v400 = vld [vmem:[%s392 + $0x48] sm:%s385]
              %401 = vst [vmem:[%s393 + $0x48] sm:%s385] %v400
              %v402 = vld [vmem:[%s392 + $0x60] sm:%s385]
              %403 = vst [vmem:[%s393 + $0x60] sm:%s385] %v402
              %v404 = vld [vmem:[%s392 + $0x78] sm:%s385]
              %405 = vst [vmem:[%s393 + $0x78] sm:%s385] %v404
              %v406 = vld [vmem:[%s392 + $0x90] sm:%s385]
              %407 = vst [vmem:[%s393 + $0x90] sm:%s385] %v406
              %v408 = vld [vmem:[%s392 + $0xa8] sm:%s385]
              %409 = vst [vmem:[%s393 + $0xa8] sm:%s385] %v408
              %v410 = vld [vmem:[%s392 + $0xc0] sm:%s385]
              %411 = vst [vmem:[%s393 + $0xc0] sm:%s385] %v410
              %v412 = vld [vmem:[%s392 + $0xd8] sm:%s385]
              %413 = vst [vmem:[%s393 + $0xd8] sm:%s385] %v412
              %v414 = vld [vmem:[%s392 + $0xf0] sm:%s385]
              %415 = vst [vmem:[%s393 + $0xf0] sm:%s385] %v414
              %v416 = vld [vmem:[%s392 + $0x108] sm:%s385]
              %417 = vst [vmem:[%s393 + $0x108] sm:%s385] %v416
            $region79: #{a_call__.1} parent=66 // loop_footer
              %s391 = sadd.s32 1, %s387
            $region80: #{a_call__.1} parent=66 // loop_footer_branch
              %386 = sbr.rel target = $region76
            $region81: #{a_call__.1} parent=66 // loop_exit
              _
          $region67: #{a_call__.1} parent=51 // pred_fallthru
            _
        $region52: #{a_call__.1} parent=43 // pred_fallthru
          _
        // Predicated region
        $region53: #{a_call__.1} parent=43 // pred_check
          %p283 = pneg %p279
        $region54: #{a_call__.1} parent=43 // pred_check_branch
          %285 = sbr.rel (%p283) target = $region56
        $region55: #{a_call__.1} parent=43 // pred_region
          %s286 = sshllo.u32 0, 20
          loop: start=0, step=1, limit=1
          $region57: #{a_call__.1} parent=55 // loop_pre_header
            _
          $region58: #{a_call__.1} parent=55 // loop_header
            %s288 = sphi 0, %s292
            %p289 = scmp.ge.s32.totalorder %s288, 1
            %s293 = sphi %s277, %s277
            %s294 = sphi [#allocation2], [#allocation2]
          $region59: #{a_call__.1} parent=55 // loop_header_branch
            %291 = sbr.rel (%p289) target = $region63
          $region60: #{a_call__.1} parent=55 // loop_body
            %v295 = vld [vmem:[%s293] sm:%s286]
            %296 = vst [vmem:[%s294] sm:%s286] %v295
            %v297 = vld [vmem:[%s293 + $0x18] sm:%s286]
            %298 = vst [vmem:[%s294 + $0x18] sm:%s286] %v297
            %v299 = vld [vmem:[%s293 + $0x30] sm:%s286]
            %300 = vst [vmem:[%s294 + $0x30] sm:%s286] %v299
            %v301 = vld [vmem:[%s293 + $0x48] sm:%s286]
            %302 = vst [vmem:[%s294 + $0x48] sm:%s286] %v301
            %v303 = vld [vmem:[%s293 + $0x60] sm:%s286]
            %304 = vst [vmem:[%s294 + $0x60] sm:%s286] %v303
            %v305 = vld [vmem:[%s293 + $0x78] sm:%s286]
            %306 = vst [vmem:[%s294 + $0x78] sm:%s286] %v305
            %v307 = vld [vmem:[%s293 + $0x90] sm:%s286]
            %308 = vst [vmem:[%s294 + $0x90] sm:%s286] %v307
            %v309 = vld [vmem:[%s293 + $0xa8] sm:%s286]
            %310 = vst [vmem:[%s294 + $0xa8] sm:%s286] %v309
            %v311 = vld [vmem:[%s293 + $0xc0] sm:%s286]
            %312 = vst [vmem:[%s294 + $0xc0] sm:%s286] %v311
            %v313 = vld [vmem:[%s293 + $0xd8] sm:%s286]
            %314 = vst [vmem:[%s294 + $0xd8] sm:%s286] %v313
            %v315 = vld [vmem:[%s293 + $0xf0] sm:%s286]
            %316 = vst [vmem:[%s294 + $0xf0] sm:%s286] %v315
            %v317 = vld [vmem:[%s293 + $0x108] sm:%s286]
            %318 = vst [vmem:[%s294 + $0x108] sm:%s286] %v317
          $region61: #{a_call__.1} parent=55 // loop_footer
            %s292 = sadd.s32 1, %s288
          $region62: #{a_call__.1} parent=55 // loop_footer_branch
            %287 = sbr.rel target = $region58
          $region63: #{a_call__.1} parent=55 // loop_exit
            _
        $region56: #{a_call__.1} parent=43 // pred_fallthru
          _
        // Predicated region
        $region82: #{a_call__.1} parent=43 // pred_check
          _
        $region83: #{a_call__.1} parent=43 // pred_check_branch
          %420 = sbr.rel (0) target = $region85
        $region84: #{a_call__.1} parent=43 // pred_region
          %421 = vsyncadd [#allocation3], 3840
        $region85: #{a_call__.1} parent=43 // pred_fallthru
          _
        %s422 = smul.u32 12, 20
        %s423 = smul.u32 %s422, 1
        %s424 = sshll.u32 %s423, 4
        %425 = dma.done [#allocation3], %s424
        %v426 = vld [vmem:[#allocation2] sm:$0xff]
        %v427 = vld [vmem:[#allocation2 + $0x8] sm:$0xff]
        %v428 = vld [vmem:[#allocation2 + $0x10] sm:$0xf]
        %v429 = vld [vmem:[#allocation2 + $0x18] sm:$0xff]
        %v430 = vld [vmem:[#allocation2 + $0x20] sm:$0xff]
        %v431 = vld [vmem:[#allocation2 + $0x28] sm:$0xf]
        %v432 = vld [vmem:[#allocation2 + $0x30] sm:$0xff]
        %v433 = vld [vmem:[#allocation2 + $0x38] sm:$0xff]
        %v434 = vld [vmem:[#allocation2 + $0x40] sm:$0xf]
        %v435 = vld [vmem:[#allocation2 + $0x48] sm:$0xff]
        %v436 = vld [vmem:[#allocation2 + $0x50] sm:$0xff]
        %v437 = vld [vmem:[#allocation2 + $0x58] sm:$0xf]
        %v438 = vld [vmem:[#allocation2 + $0x60] sm:$0xff]
        %v439 = vld [vmem:[#allocation2 + $0x68] sm:$0xff]
        %v440 = vld [vmem:[#allocation2 + $0x70] sm:$0xf]
        %v441 = vld [vmem:[#allocation2 + $0x78] sm:$0xff]
        %v442 = vld [vmem:[#allocation2 + $0x80] sm:$0xff]
        %v443 = vld [vmem:[#allocation2 + $0x88] sm:$0xf]
        %v444 = vld [vmem:[#allocation2 + $0x90] sm:$0xff]
        %v445 = vld [vmem:[#allocation2 + $0x98] sm:$0xff]
        %v446 = vld [vmem:[#allocation2 + $0xa0] sm:$0xf]
        %v447 = vld [vmem:[#allocation2 + $0xa8] sm:$0xff]
        %v448 = vld [vmem:[#allocation2 + $0xb0] sm:$0xff]
        %v449 = vld [vmem:[#allocation2 + $0xb8] sm:$0xf]
        %v450 = vld [vmem:[#allocation2 + $0xc0] sm:$0xff]
        %v451 = vld [vmem:[#allocation2 + $0xc8] sm:$0xff]
        %v452 = vld [vmem:[#allocation2 + $0xd0] sm:$0xf]
        %v453 = vld [vmem:[#allocation2 + $0xd8] sm:$0xff]
        %v454 = vld [vmem:[#allocation2 + $0xe0] sm:$0xff]
        %v455 = vld [vmem:[#allocation2 + $0xe8] sm:$0xf]
        %v456 = vld [vmem:[#allocation2 + $0xf0] sm:$0xff]
        %v457 = vld [vmem:[#allocation2 + $0xf8] sm:$0xff]
        %v458 = vld [vmem:[#allocation2 + $0x100] sm:$0xf]
        %v459 = vld [vmem:[#allocation2 + $0x108] sm:$0xff]
        %v460 = vld [vmem:[#allocation2 + $0x110] sm:$0xff]
        %v461 = vld [vmem:[#allocation2 + $0x118] sm:$0xf]
        %vm492 = vcmask 1046528
        %v493 = vrot.slane %v426, 1
        %v494 = vrot.slane %v427, 1
        %v495 = vsel %vm492, %v493, %v494
        %v496 = vrot.slane %v428, 1
        %v497 = vsel %vm492, %v494, %v496
        %v498 = vrot.slane %v429, 1
        %v499 = vrot.slane %v430, 1
        %v500 = vsel %vm492, %v498, %v499
        %v501 = vrot.slane %v431, 1
        %v502 = vsel %vm492, %v499, %v501
        %v503 = vrot.slane %v432, 1
        %v504 = vrot.slane %v433, 1
        %v505 = vsel %vm492, %v503, %v504
        %v506 = vrot.slane %v434, 1
        %v507 = vsel %vm492, %v504, %v506
        %v508 = vrot.slane %v435, 1
        %v509 = vrot.slane %v436, 1
        %v510 = vsel %vm492, %v508, %v509
        %v511 = vrot.slane %v437, 1
        %v512 = vsel %vm492, %v509, %v511
        %v513 = vrot.slane %v438, 1
        %v514 = vrot.slane %v439, 1
        %v515 = vsel %vm492, %v513, %v514
        %v516 = vrot.slane %v440, 1
        %v517 = vsel %vm492, %v514, %v516
        %v518 = vrot.slane %v441, 1
        %v519 = vrot.slane %v442, 1
        %v520 = vsel %vm492, %v518, %v519
        %v521 = vrot.slane %v443, 1
        %v522 = vsel %vm492, %v519, %v521
        %v523 = vrot.slane %v444, 1
        %v524 = vrot.slane %v445, 1
        %v525 = vsel %vm492, %v523, %v524
        %v526 = vrot.slane %v446, 1
        %v527 = vsel %vm492, %v524, %v526
        %v528 = vrot.slane %v447, 1
        %v529 = vrot.slane %v448, 1
        %v530 = vsel %vm492, %v528, %v529
        %v531 = vrot.slane %v449, 1
        %v532 = vsel %vm492, %v529, %v531
        %v533 = vrot.slane %v450, 1
        %v534 = vrot.slane %v451, 1
        %v535 = vsel %vm492, %v533, %v534
        %v536 = vrot.slane %v452, 1
        %v537 = vsel %vm492, %v534, %v536
        %v538 = vrot.slane %v453, 1
        %v539 = vrot.slane %v454, 1
        %v540 = vsel %vm492, %v538, %v539
        %v541 = vrot.slane %v455, 1
        %v542 = vsel %vm492, %v539, %v541
        %vm543 = vcmask 1045504
        %v544 = vrot.slane %v426, 2
        %v545 = vrot.slane %v427, 2
        %v546 = vsel %vm543, %v544, %v545
        %v547 = vrot.slane %v428, 2
        %v548 = vsel %vm543, %v545, %v547
        %v549 = vrot.slane %v429, 2
        %v550 = vrot.slane %v430, 2
        %v551 = vsel %vm543, %v549, %v550
        %v552 = vrot.slane %v431, 2
        %v553 = vsel %vm543, %v550, %v552
        %v554 = vrot.slane %v432, 2
        %v555 = vrot.slane %v433, 2
        %v556 = vsel %vm543, %v554, %v555
        %v557 = vrot.slane %v434, 2
        %v558 = vsel %vm543, %v555, %v557
        %v559 = vrot.slane %v435, 2
        %v560 = vrot.slane %v436, 2
        %v561 = vsel %vm543, %v559, %v560
        %v562 = vrot.slane %v437, 2
        %v563 = vsel %vm543, %v560, %v562
        %v564 = vrot.slane %v438, 2
        %v565 = vrot.slane %v439, 2
        %v566 = vsel %vm543, %v564, %v565
        %v567 = vrot.slane %v440, 2
        %v568 = vsel %vm543, %v565, %v567
        %v569 = vrot.slane %v441, 2
        %v570 = vrot.slane %v442, 2
        %v571 = vsel %vm543, %v569, %v570
        %v572 = vrot.slane %v443, 2
        %v573 = vsel %vm543, %v570, %v572
        %v574 = vrot.slane %v444, 2
        %v575 = vrot.slane %v445, 2
        %v576 = vsel %vm543, %v574, %v575
        %v577 = vrot.slane %v446, 2
        %v578 = vsel %vm543, %v575, %v577
        %v579 = vrot.slane %v447, 2
        %v580 = vrot.slane %v448, 2
        %v581 = vsel %vm543, %v579, %v580
        %v582 = vrot.slane %v449, 2
        %v583 = vsel %vm543, %v580, %v582
        %v584 = vrot.slane %v450, 2
        %v585 = vrot.slane %v451, 2
        %v586 = vsel %vm543, %v584, %v585
        %v587 = vrot.slane %v452, 2
        %v588 = vsel %vm543, %v585, %v587
        %v589 = vrot.slane %v453, 2
        %v590 = vrot.slane %v454, 2
        %v591 = vsel %vm543, %v589, %v590
        %v592 = vrot.slane %v455, 2
        %v593 = vsel %vm543, %v590, %v592
        %v597 = vrot.slane %v456, 1
        %v598 = vrot.slane %v457, 1
        %v599 = vsel %vm492, %v597, %v598
        %v600 = vrot.slane %v458, 1
        %v601 = vsel %vm492, %v598, %v600
        %v602 = vrot.slane %v456, 2
        %v603 = vrot.slane %v457, 2
        %v604 = vsel %vm543, %v602, %v603
        %v605 = vrot.slane %v458, 2
        %v606 = vsel %vm543, %v603, %v605
        %v610 = vrot.slane %v459, 1
        %v611 = vrot.slane %v460, 1
        %v612 = vsel %vm492, %v610, %v611
        %v613 = vrot.slane %v461, 1
        %v614 = vsel %vm492, %v611, %v613
        %v615 = vrot.slane %v459, 2
        %v616 = vrot.slane %v460, 2
        %v617 = vsel %vm543, %v615, %v616
        %v618 = vrot.slane %v461, 2
        %v619 = vsel %vm543, %v616, %v618
        %v620 = vcombine.low %v426, %v495
        %v621 = vcombine.high %v426, %v495
        %v622 = vcombine.low %v546, %v429
        %v623 = vcombine.high %v546, %v429
        %v625 = vunpack.c.l.s4 1983009808
        %v626 = vunpack.c.0.s8 %v625
        %v627 = vlaneseq
        %v628 = vshrl.u32 %v627, 7
        %v629 = vsub.s32 %v626, %v628
        %v630 = vrot.slane %v620, %v629
        %v632 = vunpack.c.l.s4 1983009808
        %v633 = vunpack.c.0.s8 %v632
        %v634 = vlaneseq
        %v635 = vshrl.u32 %v634, 7
        %v636 = vsub.s32 %v633, %v635
        %v637 = vrot.slane %v621, %v636
        %v639 = vunpack.c.l.s4 1983009808
        %v640 = vunpack.c.0.s8 %v639
        %v641 = vlaneseq
        %v642 = vshrl.u32 %v641, 7
        %v643 = vsub.s32 %v640, %v642
        %v644 = vrot.slane %v622, %v643
        %v646 = vunpack.c.l.s4 1983009808
        %v647 = vunpack.c.0.s8 %v646
        %v648 = vlaneseq
        %v649 = vshrl.u32 %v648, 7
        %v650 = vsub.s32 %v647, %v649
        %v651 = vrot.slane %v623, %v650
        %v652 = vcombine.low %v630, %v644
        %v653 = vcombine.high %v630, %v644
        %v654 = vcombine.low %v637, %v651
        %v655 = vcombine.high %v637, %v651
        %v656 = vcombine.low %v500, %v551
        %v657 = vcombine.high %v500, %v551
        %v658 = vcombine.low %v432, %v505
        %v659 = vcombine.high %v432, %v505
        %v661 = vunpack.c.l.s4 1983009808
        %v662 = vunpack.c.0.s8 %v661
        %v663 = vlaneseq
        %v664 = vshrl.u32 %v663, 7
        %v665 = vsub.s32 %v662, %v664
        %v666 = vrot.slane %v656, %v665
        %v668 = vunpack.c.l.s4 1983009808
        %v669 = vunpack.c.0.s8 %v668
        %v670 = vlaneseq
        %v671 = vshrl.u32 %v670, 7
        %v672 = vsub.s32 %v669, %v671
        %v673 = vrot.slane %v657, %v672
        %v675 = vunpack.c.l.s4 1983009808
        %v676 = vunpack.c.0.s8 %v675
        %v677 = vlaneseq
        %v678 = vshrl.u32 %v677, 7
        %v679 = vsub.s32 %v676, %v678
        %v680 = vrot.slane %v658, %v679
        %v682 = vunpack.c.l.s4 1983009808
        %v683 = vunpack.c.0.s8 %v682
        %v684 = vlaneseq
        %v685 = vshrl.u32 %v684, 7
        %v686 = vsub.s32 %v683, %v685
        %v687 = vrot.slane %v659, %v686
        %v688 = vcombine.low %v666, %v680
        %v689 = vcombine.high %v666, %v680
        %v690 = vcombine.low %v673, %v687
        %v691 = vcombine.high %v673, %v687
        %v692 = vcombine.high %v556, %v556
        %v694 = vunpack.c.l.s4 1983009808
        %v695 = vunpack.c.0.s8 %v694
        %v696 = vlaneseq
        %v697 = vshrl.u32 %v696, 7
        %v698 = vsub.s32 %v695, %v697
        %v699 = vrot.slane %v556, %v698
        %v701 = vunpack.c.l.s4 1983009808
        %v702 = vunpack.c.0.s8 %v701
        %v703 = vlaneseq
        %v704 = vshrl.u32 %v703, 7
        %v705 = vsub.s32 %v702, %v704
        %v706 = vrot.slane %v692, %v705
        %v707 = vcombine.high %v699, %v699
        %v708 = vcombine.high %v706, %v706
        %v709 = vcombine.low %v427, %v497
        %v710 = vcombine.high %v427, %v497
        %v711 = vcombine.low %v548, %v430
        %v712 = vcombine.high %v548, %v430
        %v714 = vunpack.c.l.s4 1983009808
        %v715 = vunpack.c.0.s8 %v714
        %v716 = vlaneseq
        %v717 = vshrl.u32 %v716, 7
        %v718 = vsub.s32 %v715, %v717
        %v719 = vrot.slane %v709, %v718
        %v721 = vunpack.c.l.s4 1983009808
        %v722 = vunpack.c.0.s8 %v721
        %v723 = vlaneseq
        %v724 = vshrl.u32 %v723, 7
        %v725 = vsub.s32 %v722, %v724
        %v726 = vrot.slane %v710, %v725
        %v728 = vunpack.c.l.s4 1983009808
        %v729 = vunpack.c.0.s8 %v728
        %v730 = vlaneseq
        %v731 = vshrl.u32 %v730, 7
        %v732 = vsub.s32 %v729, %v731
        %v733 = vrot.slane %v711, %v732
        %v735 = vunpack.c.l.s4 1983009808
        %v736 = vunpack.c.0.s8 %v735
        %v737 = vlaneseq
        %v738 = vshrl.u32 %v737, 7
        %v739 = vsub.s32 %v736, %v738
        %v740 = vrot.slane %v712, %v739
        %v741 = vcombine.low %v719, %v733
        %v742 = vcombine.high %v719, %v733
        %v743 = vcombine.low %v726, %v740
        %v744 = vcombine.high %v726, %v740
        %v745 = vcombine.low %v502, %v553
        %v746 = vcombine.high %v502, %v553
        %v747 = vcombine.low %v433, %v507
        %v748 = vcombine.high %v433, %v507
        %v750 = vunpack.c.l.s4 1983009808
        %v751 = vunpack.c.0.s8 %v750
        %v752 = vlaneseq
        %v753 = vshrl.u32 %v752, 7
        %v754 = vsub.s32 %v751, %v753
        %v755 = vrot.slane %v745, %v754
        %v757 = vunpack.c.l.s4 1983009808
        %v758 = vunpack.c.0.s8 %v757
        %v759 = vlaneseq
        %v760 = vshrl.u32 %v759, 7
        %v761 = vsub.s32 %v758, %v760
        %v762 = vrot.slane %v746, %v761
        %v764 = vunpack.c.l.s4 1983009808
        %v765 = vunpack.c.0.s8 %v764
        %v766 = vlaneseq
        %v767 = vshrl.u32 %v766, 7
        %v768 = vsub.s32 %v765, %v767
        %v769 = vrot.slane %v747, %v768
        %v771 = vunpack.c.l.s4 1983009808
        %v772 = vunpack.c.0.s8 %v771
        %v773 = vlaneseq
        %v774 = vshrl.u32 %v773, 7
        %v775 = vsub.s32 %v772, %v774
        %v776 = vrot.slane %v748, %v775
        %v777 = vcombine.low %v755, %v769
        %v778 = vcombine.high %v755, %v769
        %v779 = vcombine.low %v762, %v776
        %v780 = vcombine.high %v762, %v776
        %v781 = vcombine.high %v558, %v558
        %v783 = vunpack.c.l.s4 1983009808
        %v784 = vunpack.c.0.s8 %v783
        %v785 = vlaneseq
        %v786 = vshrl.u32 %v785, 7
        %v787 = vsub.s32 %v784, %v786
        %v788 = vrot.slane %v558, %v787
        %v790 = vunpack.c.l.s4 1983009808
        %v791 = vunpack.c.0.s8 %v790
        %v792 = vlaneseq
        %v793 = vshrl.u32 %v792, 7
        %v794 = vsub.s32 %v791, %v793
        %v795 = vrot.slane %v781, %v794
        %v796 = vcombine.high %v788, %v788
        %v797 = vcombine.high %v795, %v795
        %v798 = vcombine.low %v428, %v496
        %v799 = vcombine.low %v547, %v431
        %v801 = vunpack.c.l.s4 1983009808
        %v802 = vunpack.c.0.s8 %v801
        %v803 = vlaneseq
        %v804 = vshrl.u32 %v803, 7
        %v805 = vsub.s32 %v802, %v804
        %v806 = vrot.slane %v798, %v805
        %v808 = vunpack.c.l.s4 1983009808
        %v809 = vunpack.c.0.s8 %v808
        %v810 = vlaneseq
        %v811 = vshrl.u32 %v810, 7
        %v812 = vsub.s32 %v809, %v811
        %v813 = vrot.slane %v799, %v812
        %v814 = vcombine.low %v806, %v813
        %v815 = vcombine.low %v501, %v552
        %v816 = vcombine.low %v434, %v506
        %v818 = vunpack.c.l.s4 1983009808
        %v819 = vunpack.c.0.s8 %v818
        %v820 = vlaneseq
        %v821 = vshrl.u32 %v820, 7
        %v822 = vsub.s32 %v819, %v821
        %v823 = vrot.slane %v815, %v822
        %v825 = vunpack.c.l.s4 1983009808
        %v826 = vunpack.c.0.s8 %v825
        %v827 = vlaneseq
        %v828 = vshrl.u32 %v827, 7
        %v829 = vsub.s32 %v826, %v828
        %v830 = vrot.slane %v816, %v829
        %v831 = vcombine.low %v823, %v830
        %v833 = vunpack.c.l.s4 1983009808
        %v834 = vunpack.c.0.s8 %v833
        %v835 = vlaneseq
        %v836 = vshrl.u32 %v835, 7
        %v837 = vsub.s32 %v834, %v836
        %v838 = vrot.slane %v557, %v837
        %v839 = vcombine.low %v429, %v500
        %v840 = vcombine.high %v429, %v500
        %v841 = vcombine.low %v551, %v432
        %v842 = vcombine.high %v551, %v432
        %v844 = vunpack.c.l.s4 1983009808
        %v845 = vunpack.c.0.s8 %v844
        %v846 = vlaneseq
        %v847 = vshrl.u32 %v846, 7
        %v848 = vsub.s32 %v845, %v847
        %v849 = vrot.slane %v839, %v848
        %v851 = vunpack.c.l.s4 1983009808
        %v852 = vunpack.c.0.s8 %v851
        %v853 = vlaneseq
        %v854 = vshrl.u32 %v853, 7
        %v855 = vsub.s32 %v852, %v854
        %v856 = vrot.slane %v840, %v855
        %v858 = vunpack.c.l.s4 1983009808
        %v859 = vunpack.c.0.s8 %v858
        %v860 = vlaneseq
        %v861 = vshrl.u32 %v860, 7
        %v862 = vsub.s32 %v859, %v861
        %v863 = vrot.slane %v841, %v862
        %v865 = vunpack.c.l.s4 1983009808
        %v866 = vunpack.c.0.s8 %v865
        %v867 = vlaneseq
        %v868 = vshrl.u32 %v867, 7
        %v869 = vsub.s32 %v866, %v868
        %v870 = vrot.slane %v842, %v869
        %v871 = vcombine.low %v849, %v863
        %v872 = vcombine.high %v849, %v863
        %v873 = vcombine.low %v856, %v870
        %v874 = vcombine.high %v856, %v870
        %v875 = vcombine.low %v505, %v556
        %v876 = vcombine.high %v505, %v556
        %v877 = vcombine.low %v435, %v510
        %v878 = vcombine.high %v435, %v510
        %v880 = vunpack.c.l.s4 1983009808
        %v881 = vunpack.c.0.s8 %v880
        %v882 = vlaneseq
        %v883 = vshrl.u32 %v882, 7
        %v884 = vsub.s32 %v881, %v883
        %v885 = vrot.slane %v875, %v884
        %v887 = vunpack.c.l.s4 1983009808
        %v888 = vunpack.c.0.s8 %v887
        %v889 = vlaneseq
        %v890 = vshrl.u32 %v889, 7
        %v891 = vsub.s32 %v888, %v890
        %v892 = vrot.slane %v876, %v891
        %v894 = vunpack.c.l.s4 1983009808
        %v895 = vunpack.c.0.s8 %v894
        %v896 = vlaneseq
        %v897 = vshrl.u32 %v896, 7
        %v898 = vsub.s32 %v895, %v897
        %v899 = vrot.slane %v877, %v898
        %v901 = vunpack.c.l.s4 1983009808
        %v902 = vunpack.c.0.s8 %v901
        %v903 = vlaneseq
        %v904 = vshrl.u32 %v903, 7
        %v905 = vsub.s32 %v902, %v904
        %v906 = vrot.slane %v878, %v905
        %v907 = vcombine.low %v885, %v899
        %v908 = vcombine.high %v885, %v899
        %v909 = vcombine.low %v892, %v906
        %v910 = vcombine.high %v892, %v906
        %v911 = vcombine.high %v561, %v561
        %v913 = vunpack.c.l.s4 1983009808
        %v914 = vunpack.c.0.s8 %v913
        %v915 = vlaneseq
        %v916 = vshrl.u32 %v915, 7
        %v917 = vsub.s32 %v914, %v916
        %v918 = vrot.slane %v561, %v917
        %v920 = vunpack.c.l.s4 1983009808
        %v921 = vunpack.c.0.s8 %v920
        %v922 = vlaneseq
        %v923 = vshrl.u32 %v922, 7
        %v924 = vsub.s32 %v921, %v923
        %v925 = vrot.slane %v911, %v924
        %v926 = vcombine.high %v918, %v918
        %v927 = vcombine.high %v925, %v925
        %v928 = vcombine.low %v430, %v502
        %v929 = vcombine.high %v430, %v502
        %v930 = vcombine.low %v553, %v433
        %v931 = vcombine.high %v553, %v433
        %v933 = vunpack.c.l.s4 1983009808
        %v934 = vunpack.c.0.s8 %v933
        %v935 = vlaneseq
        %v936 = vshrl.u32 %v935, 7
        %v937 = vsub.s32 %v934, %v936
        %v938 = vrot.slane %v928, %v937
        %v940 = vunpack.c.l.s4 1983009808
        %v941 = vunpack.c.0.s8 %v940
        %v942 = vlaneseq
        %v943 = vshrl.u32 %v942, 7
        %v944 = vsub.s32 %v941, %v943
        %v945 = vrot.slane %v929, %v944
        %v947 = vunpack.c.l.s4 1983009808
        %v948 = vunpack.c.0.s8 %v947
        %v949 = vlaneseq
        %v950 = vshrl.u32 %v949, 7
        %v951 = vsub.s32 %v948, %v950
        %v952 = vrot.slane %v930, %v951
        %v954 = vunpack.c.l.s4 1983009808
        %v955 = vunpack.c.0.s8 %v954
        %v956 = vlaneseq
        %v957 = vshrl.u32 %v956, 7
        %v958 = vsub.s32 %v955, %v957
        %v959 = vrot.slane %v931, %v958
        %v960 = vcombine.low %v938, %v952
        %v961 = vcombine.high %v938, %v952
        %v962 = vcombine.low %v945, %v959
        %v963 = vcombine.high %v945, %v959
        %v964 = vcombine.low %v507, %v558
        %v965 = vcombine.high %v507, %v558
        %v966 = vcombine.low %v436, %v512
        %v967 = vcombine.high %v436, %v512
        %v969 = vunpack.c.l.s4 1983009808
        %v970 = vunpack.c.0.s8 %v969
        %v971 = vlaneseq
        %v972 = vshrl.u32 %v971, 7
        %v973 = vsub.s32 %v970, %v972
        %v974 = vrot.slane %v964, %v973
        %v976 = vunpack.c.l.s4 1983009808
        %v977 = vunpack.c.0.s8 %v976
        %v978 = vlaneseq
        %v979 = vshrl.u32 %v978, 7
        %v980 = vsub.s32 %v977, %v979
        %v981 = vrot.slane %v965, %v980
        %v983 = vunpack.c.l.s4 1983009808
        %v984 = vunpack.c.0.s8 %v983
        %v985 = vlaneseq
        %v986 = vshrl.u32 %v985, 7
        %v987 = vsub.s32 %v984, %v986
        %v988 = vrot.slane %v966, %v987
        %v990 = vunpack.c.l.s4 1983009808
        %v991 = vunpack.c.0.s8 %v990
        %v992 = vlaneseq
        %v993 = vshrl.u32 %v992, 7
        %v994 = vsub.s32 %v991, %v993
        %v995 = vrot.slane %v967, %v994
        %v996 = vcombine.low %v974, %v988
        %v997 = vcombine.high %v974, %v988
        %v998 = vcombine.low %v981, %v995
        %v999 = vcombine.high %v981, %v995
        %v1000 = vcombine.high %v563, %v563
        %v1002 = vunpack.c.l.s4 1983009808
        %v1003 = vunpack.c.0.s8 %v1002
        %v1004 = vlaneseq
        %v1005 = vshrl.u32 %v1004, 7
        %v1006 = vsub.s32 %v1003, %v1005
        %v1007 = vrot.slane %v563, %v1006
        %v1009 = vunpack.c.l.s4 1983009808
        %v1010 = vunpack.c.0.s8 %v1009
        %v1011 = vlaneseq
        %v1012 = vshrl.u32 %v1011, 7
        %v1013 = vsub.s32 %v1010, %v1012
        %v1014 = vrot.slane %v1000, %v1013
        %v1015 = vcombine.high %v1007, %v1007
        %v1016 = vcombine.high %v1014, %v1014
        %v1017 = vcombine.low %v431, %v501
        %v1018 = vcombine.low %v552, %v434
        %v1020 = vunpack.c.l.s4 1983009808
        %v1021 = vunpack.c.0.s8 %v1020
        %v1022 = vlaneseq
        %v1023 = vshrl.u32 %v1022, 7
        %v1024 = vsub.s32 %v1021, %v1023
        %v1025 = vrot.slane %v1017, %v1024
        %v1027 = vunpack.c.l.s4 1983009808
        %v1028 = vunpack.c.0.s8 %v1027
        %v1029 = vlaneseq
        %v1030 = vshrl.u32 %v1029, 7
        %v1031 = vsub.s32 %v1028, %v1030
        %v1032 = vrot.slane %v1018, %v1031
        %v1033 = vcombine.low %v1025, %v1032
        %v1034 = vcombine.low %v506, %v557
        %v1035 = vcombine.low %v437, %v511
        %v1037 = vunpack.c.l.s4 1983009808
        %v1038 = vunpack.c.0.s8 %v1037
        %v1039 = vlaneseq
        %v1040 = vshrl.u32 %v1039, 7
        %v1041 = vsub.s32 %v1038, %v1040
        %v1042 = vrot.slane %v1034, %v1041
        %v1044 = vunpack.c.l.s4 1983009808
        %v1045 = vunpack.c.0.s8 %v1044
        %v1046 = vlaneseq
        %v1047 = vshrl.u32 %v1046, 7
        %v1048 = vsub.s32 %v1045, %v1047
        %v1049 = vrot.slane %v1035, %v1048
        %v1050 = vcombine.low %v1042, %v1049
        %v1052 = vunpack.c.l.s4 1983009808
        %v1053 = vunpack.c.0.s8 %v1052
        %v1054 = vlaneseq
        %v1055 = vshrl.u32 %v1054, 7
        %v1056 = vsub.s32 %v1053, %v1055
        %v1057 = vrot.slane %v562, %v1056
        %v1058 = vcombine.low %v556, %v435
        %v1059 = vcombine.high %v556, %v435
        %v1061 = vunpack.c.l.s4 1983009808
        %v1062 = vunpack.c.0.s8 %v1061
        %v1063 = vlaneseq
        %v1064 = vshrl.u32 %v1063, 7
        %v1065 = vsub.s32 %v1062, %v1064
        %v1066 = vrot.slane %v1058, %v1065
        %v1068 = vunpack.c.l.s4 1983009808
        %v1069 = vunpack.c.0.s8 %v1068
        %v1070 = vlaneseq
        %v1071 = vshrl.u32 %v1070, 7
        %v1072 = vsub.s32 %v1069, %v1071
        %v1073 = vrot.slane %v1059, %v1072
        %v1074 = vcombine.low %v680, %v1066
        %v1075 = vcombine.high %v680, %v1066
        %v1076 = vcombine.low %v687, %v1073
        %v1077 = vcombine.high %v687, %v1073
        %v1078 = vcombine.low %v510, %v561
        %v1079 = vcombine.high %v510, %v561
        %v1080 = vcombine.low %v438, %v515
        %v1081 = vcombine.high %v438, %v515
        %v1083 = vunpack.c.l.s4 1983009808
        %v1084 = vunpack.c.0.s8 %v1083
        %v1085 = vlaneseq
        %v1086 = vshrl.u32 %v1085, 7
        %v1087 = vsub.s32 %v1084, %v1086
        %v1088 = vrot.slane %v1078, %v1087
        %v1090 = vunpack.c.l.s4 1983009808
        %v1091 = vunpack.c.0.s8 %v1090
        %v1092 = vlaneseq
        %v1093 = vshrl.u32 %v1092, 7
        %v1094 = vsub.s32 %v1091, %v1093
        %v1095 = vrot.slane %v1079, %v1094
        %v1097 = vunpack.c.l.s4 1983009808
        %v1098 = vunpack.c.0.s8 %v1097
        %v1099 = vlaneseq
        %v1100 = vshrl.u32 %v1099, 7
        %v1101 = vsub.s32 %v1098, %v1100
        %v1102 = vrot.slane %v1080, %v1101
        %v1104 = vunpack.c.l.s4 1983009808
        %v1105 = vunpack.c.0.s8 %v1104
        %v1106 = vlaneseq
        %v1107 = vshrl.u32 %v1106, 7
        %v1108 = vsub.s32 %v1105, %v1107
        %v1109 = vrot.slane %v1081, %v1108
        %v1110 = vcombine.low %v1088, %v1102
        %v1111 = vcombine.high %v1088, %v1102
        %v1112 = vcombine.low %v1095, %v1109
        %v1113 = vcombine.high %v1095, %v1109
        %v1114 = vcombine.high %v566, %v566
        %v1116 = vunpack.c.l.s4 1983009808
        %v1117 = vunpack.c.0.s8 %v1116
        %v1118 = vlaneseq
        %v1119 = vshrl.u32 %v1118, 7
        %v1120 = vsub.s32 %v1117, %v1119
        %v1121 = vrot.slane %v566, %v1120
        %v1123 = vunpack.c.l.s4 1983009808
        %v1124 = vunpack.c.0.s8 %v1123
        %v1125 = vlaneseq
        %v1126 = vshrl.u32 %v1125, 7
        %v1127 = vsub.s32 %v1124, %v1126
        %v1128 = vrot.slane %v1114, %v1127
        %v1129 = vcombine.high %v1121, %v1121
        %v1130 = vcombine.high %v1128, %v1128
        %v1131 = vcombine.low %v558, %v436
        %v1132 = vcombine.high %v558, %v436
        %v1134 = vunpack.c.l.s4 1983009808
        %v1135 = vunpack.c.0.s8 %v1134
        %v1136 = vlaneseq
        %v1137 = vshrl.u32 %v1136, 7
        %v1138 = vsub.s32 %v1135, %v1137
        %v1139 = vrot.slane %v1131, %v1138
        %v1141 = vunpack.c.l.s4 1983009808
        %v1142 = vunpack.c.0.s8 %v1141
        %v1143 = vlaneseq
        %v1144 = vshrl.u32 %v1143, 7
        %v1145 = vsub.s32 %v1142, %v1144
        %v1146 = vrot.slane %v1132, %v1145
        %v1147 = vcombine.low %v769, %v1139
        %v1148 = vcombine.high %v769, %v1139
        %v1149 = vcombine.low %v776, %v1146
        %v1150 = vcombine.high %v776, %v1146
        %v1151 = vcombine.low %v512, %v563
        %v1152 = vcombine.high %v512, %v563
        %v1153 = vcombine.low %v439, %v517
        %v1154 = vcombine.high %v439, %v517
        %v1156 = vunpack.c.l.s4 1983009808
        %v1157 = vunpack.c.0.s8 %v1156
        %v1158 = vlaneseq
        %v1159 = vshrl.u32 %v1158, 7
        %v1160 = vsub.s32 %v1157, %v1159
        %v1161 = vrot.slane %v1151, %v1160
        %v1163 = vunpack.c.l.s4 1983009808
        %v1164 = vunpack.c.0.s8 %v1163
        %v1165 = vlaneseq
        %v1166 = vshrl.u32 %v1165, 7
        %v1167 = vsub.s32 %v1164, %v1166
        %v1168 = vrot.slane %v1152, %v1167
        %v1170 = vunpack.c.l.s4 1983009808
        %v1171 = vunpack.c.0.s8 %v1170
        %v1172 = vlaneseq
        %v1173 = vshrl.u32 %v1172, 7
        %v1174 = vsub.s32 %v1171, %v1173
        %v1175 = vrot.slane %v1153, %v1174
        %v1177 = vunpack.c.l.s4 1983009808
        %v1178 = vunpack.c.0.s8 %v1177
        %v1179 = vlaneseq
        %v1180 = vshrl.u32 %v1179, 7
        %v1181 = vsub.s32 %v1178, %v1180
        %v1182 = vrot.slane %v1154, %v1181
        %v1183 = vcombine.low %v1161, %v1175
        %v1184 = vcombine.high %v1161, %v1175
        %v1185 = vcombine.low %v1168, %v1182
        %v1186 = vcombine.high %v1168, %v1182
        %v1187 = vcombine.high %v568, %v568
        %v1189 = vunpack.c.l.s4 1983009808
        %v1190 = vunpack.c.0.s8 %v1189
        %v1191 = vlaneseq
        %v1192 = vshrl.u32 %v1191, 7
        %v1193 = vsub.s32 %v1190, %v1192
        %v1194 = vrot.slane %v568, %v1193
        %v1196 = vunpack.c.l.s4 1983009808
        %v1197 = vunpack.c.0.s8 %v1196
        %v1198 = vlaneseq
        %v1199 = vshrl.u32 %v1198, 7
        %v1200 = vsub.s32 %v1197, %v1199
        %v1201 = vrot.slane %v1187, %v1200
        %v1202 = vcombine.high %v1194, %v1194
        %v1203 = vcombine.high %v1201, %v1201
        %v1204 = vcombine.low %v557, %v437
        %v1206 = vunpack.c.l.s4 1983009808
        %v1207 = vunpack.c.0.s8 %v1206
        %v1208 = vlaneseq
        %v1209 = vshrl.u32 %v1208, 7
        %v1210 = vsub.s32 %v1207, %v1209
        %v1211 = vrot.slane %v1204, %v1210
        %v1212 = vcombine.low %v830, %v1211
        %v1213 = vcombine.low %v511, %v562
        %v1214 = vcombine.low %v440, %v516
        %v1216 = vunpack.c.l.s4 1983009808
        %v1217 = vunpack.c.0.s8 %v1216
        %v1218 = vlaneseq
        %v1219 = vshrl.u32 %v1218, 7
        %v1220 = vsub.s32 %v1217, %v1219
        %v1221 = vrot.slane %v1213, %v1220
        %v1223 = vunpack.c.l.s4 1983009808
        %v1224 = vunpack.c.0.s8 %v1223
        %v1225 = vlaneseq
        %v1226 = vshrl.u32 %v1225, 7
        %v1227 = vsub.s32 %v1224, %v1226
        %v1228 = vrot.slane %v1214, %v1227
        %v1229 = vcombine.low %v1221, %v1228
        %v1231 = vunpack.c.l.s4 1983009808
        %v1232 = vunpack.c.0.s8 %v1231
        %v1233 = vlaneseq
        %v1234 = vshrl.u32 %v1233, 7
        %v1235 = vsub.s32 %v1232, %v1234
        %v1236 = vrot.slane %v567, %v1235
        %v1237 = vcombine.low %v561, %v438
        %v1238 = vcombine.high %v561, %v438
        %v1240 = vunpack.c.l.s4 1983009808
        %v1241 = vunpack.c.0.s8 %v1240
        %v1242 = vlaneseq
        %v1243 = vshrl.u32 %v1242, 7
        %v1244 = vsub.s32 %v1241, %v1243
        %v1245 = vrot.slane %v1237, %v1244
        %v1247 = vunpack.c.l.s4 1983009808
        %v1248 = vunpack.c.0.s8 %v1247
        %v1249 = vlaneseq
        %v1250 = vshrl.u32 %v1249, 7
        %v1251 = vsub.s32 %v1248, %v1250
        %v1252 = vrot.slane %v1238, %v1251
        %v1253 = vcombine.low %v899, %v1245
        %v1254 = vcombine.high %v899, %v1245
        %v1255 = vcombine.low %v906, %v1252
        %v1256 = vcombine.high %v906, %v1252
        %v1257 = vcombine.low %v515, %v566
        %v1258 = vcombine.high %v515, %v566
        %v1259 = vcombine.low %v441, %v520
        %v1260 = vcombine.high %v441, %v520
        %v1262 = vunpack.c.l.s4 1983009808
        %v1263 = vunpack.c.0.s8 %v1262
        %v1264 = vlaneseq
        %v1265 = vshrl.u32 %v1264, 7
        %v1266 = vsub.s32 %v1263, %v1265
        %v1267 = vrot.slane %v1257, %v1266
        %v1269 = vunpack.c.l.s4 1983009808
        %v1270 = vunpack.c.0.s8 %v1269
        %v1271 = vlaneseq
        %v1272 = vshrl.u32 %v1271, 7
        %v1273 = vsub.s32 %v1270, %v1272
        %v1274 = vrot.slane %v1258, %v1273
        %v1276 = vunpack.c.l.s4 1983009808
        %v1277 = vunpack.c.0.s8 %v1276
        %v1278 = vlaneseq
        %v1279 = vshrl.u32 %v1278, 7
        %v1280 = vsub.s32 %v1277, %v1279
        %v1281 = vrot.slane %v1259, %v1280
        %v1283 = vunpack.c.l.s4 1983009808
        %v1284 = vunpack.c.0.s8 %v1283
        %v1285 = vlaneseq
        %v1286 = vshrl.u32 %v1285, 7
        %v1287 = vsub.s32 %v1284, %v1286
        %v1288 = vrot.slane %v1260, %v1287
        %v1289 = vcombine.low %v1267, %v1281
        %v1290 = vcombine.high %v1267, %v1281
        %v1291 = vcombine.low %v1274, %v1288
        %v1292 = vcombine.high %v1274, %v1288
        %v1293 = vcombine.high %v571, %v571
        %v1295 = vunpack.c.l.s4 1983009808
        %v1296 = vunpack.c.0.s8 %v1295
        %v1297 = vlaneseq
        %v1298 = vshrl.u32 %v1297, 7
        %v1299 = vsub.s32 %v1296, %v1298
        %v1300 = vrot.slane %v571, %v1299
        %v1302 = vunpack.c.l.s4 1983009808
        %v1303 = vunpack.c.0.s8 %v1302
        %v1304 = vlaneseq
        %v1305 = vshrl.u32 %v1304, 7
        %v1306 = vsub.s32 %v1303, %v1305
        %v1307 = vrot.slane %v1293, %v1306
        %v1308 = vcombine.high %v1300, %v1300
        %v1309 = vcombine.high %v1307, %v1307
        %v1310 = vcombine.low %v563, %v439
        %v1311 = vcombine.high %v563, %v439
        %v1313 = vunpack.c.l.s4 1983009808
        %v1314 = vunpack.c.0.s8 %v1313
        %v1315 = vlaneseq
        %v1316 = vshrl.u32 %v1315, 7
        %v1317 = vsub.s32 %v1314, %v1316
        %v1318 = vrot.slane %v1310, %v1317
        %v1320 = vunpack.c.l.s4 1983009808
        %v1321 = vunpack.c.0.s8 %v1320
        %v1322 = vlaneseq
        %v1323 = vshrl.u32 %v1322, 7
        %v1324 = vsub.s32 %v1321, %v1323
        %v1325 = vrot.slane %v1311, %v1324
        %v1326 = vcombine.low %v988, %v1318
        %v1327 = vcombine.high %v988, %v1318
        %v1328 = vcombine.low %v995, %v1325
        %v1329 = vcombine.high %v995, %v1325
        %v1330 = vcombine.low %v517, %v568
        %v1331 = vcombine.high %v517, %v568
        %v1332 = vcombine.low %v442, %v522
        %v1333 = vcombine.high %v442, %v522
        %v1335 = vunpack.c.l.s4 1983009808
        %v1336 = vunpack.c.0.s8 %v1335
        %v1337 = vlaneseq
        %v1338 = vshrl.u32 %v1337, 7
        %v1339 = vsub.s32 %v1336, %v1338
        %v1340 = vrot.slane %v1330, %v1339
        %v1342 = vunpack.c.l.s4 1983009808
        %v1343 = vunpack.c.0.s8 %v1342
        %v1344 = vlaneseq
        %v1345 = vshrl.u32 %v1344, 7
        %v1346 = vsub.s32 %v1343, %v1345
        %v1347 = vrot.slane %v1331, %v1346
        %v1349 = vunpack.c.l.s4 1983009808
        %v1350 = vunpack.c.0.s8 %v1349
        %v1351 = vlaneseq
        %v1352 = vshrl.u32 %v1351, 7
        %v1353 = vsub.s32 %v1350, %v1352
        %v1354 = vrot.slane %v1332, %v1353
        %v1356 = vunpack.c.l.s4 1983009808
        %v1357 = vunpack.c.0.s8 %v1356
        %v1358 = vlaneseq
        %v1359 = vshrl.u32 %v1358, 7
        %v1360 = vsub.s32 %v1357, %v1359
        %v1361 = vrot.slane %v1333, %v1360
        %v1362 = vcombine.low %v1340, %v1354
        %v1363 = vcombine.high %v1340, %v1354
        %v1364 = vcombine.low %v1347, %v1361
        %v1365 = vcombine.high %v1347, %v1361
        %v1366 = vcombine.high %v573, %v573
        %v1368 = vunpack.c.l.s4 1983009808
        %v1369 = vunpack.c.0.s8 %v1368
        %v1370 = vlaneseq
        %v1371 = vshrl.u32 %v1370, 7
        %v1372 = vsub.s32 %v1369, %v1371
        %v1373 = vrot.slane %v573, %v1372
        %v1375 = vunpack.c.l.s4 1983009808
        %v1376 = vunpack.c.0.s8 %v1375
        %v1377 = vlaneseq
        %v1378 = vshrl.u32 %v1377, 7
        %v1379 = vsub.s32 %v1376, %v1378
        %v1380 = vrot.slane %v1366, %v1379
        %v1381 = vcombine.high %v1373, %v1373
        %v1382 = vcombine.high %v1380, %v1380
        %v1383 = vcombine.low %v562, %v440
        %v1385 = vunpack.c.l.s4 1983009808
        %v1386 = vunpack.c.0.s8 %v1385
        %v1387 = vlaneseq
        %v1388 = vshrl.u32 %v1387, 7
        %v1389 = vsub.s32 %v1386, %v1388
        %v1390 = vrot.slane %v1383, %v1389
        %v1391 = vcombine.low %v1049, %v1390
        %v1392 = vcombine.low %v516, %v567
        %v1393 = vcombine.low %v443, %v521
        %v1395 = vunpack.c.l.s4 1983009808
        %v1396 = vunpack.c.0.s8 %v1395
        %v1397 = vlaneseq
        %v1398 = vshrl.u32 %v1397, 7
        %v1399 = vsub.s32 %v1396, %v1398
        %v1400 = vrot.slane %v1392, %v1399
        %v1402 = vunpack.c.l.s4 1983009808
        %v1403 = vunpack.c.0.s8 %v1402
        %v1404 = vlaneseq
        %v1405 = vshrl.u32 %v1404, 7
        %v1406 = vsub.s32 %v1403, %v1405
        %v1407 = vrot.slane %v1393, %v1406
        %v1408 = vcombine.low %v1400, %v1407
        %v1410 = vunpack.c.l.s4 1983009808
        %v1411 = vunpack.c.0.s8 %v1410
        %v1412 = vlaneseq
        %v1413 = vshrl.u32 %v1412, 7
        %v1414 = vsub.s32 %v1411, %v1413
        %v1415 = vrot.slane %v572, %v1414
        %v1416 = vcombine.low %v566, %v441
        %v1417 = vcombine.high %v566, %v441
        %v1419 = vunpack.c.l.s4 1983009808
        %v1420 = vunpack.c.0.s8 %v1419
        %v1421 = vlaneseq
        %v1422 = vshrl.u32 %v1421, 7
        %v1423 = vsub.s32 %v1420, %v1422
        %v1424 = vrot.slane %v1416, %v1423
        %v1426 = vunpack.c.l.s4 1983009808
        %v1427 = vunpack.c.0.s8 %v1426
        %v1428 = vlaneseq
        %v1429 = vshrl.u32 %v1428, 7
        %v1430 = vsub.s32 %v1427, %v1429
        %v1431 = vrot.slane %v1417, %v1430
        %v1432 = vcombine.low %v1102, %v1424
        %v1433 = vcombine.high %v1102, %v1424
        %v1434 = vcombine.low %v1109, %v1431
        %v1435 = vcombine.high %v1109, %v1431
        %v1436 = vcombine.low %v520, %v571
        %v1437 = vcombine.high %v520, %v571
        %v1438 = vcombine.low %v444, %v525
        %v1439 = vcombine.high %v444, %v525
        %v1441 = vunpack.c.l.s4 1983009808
        %v1442 = vunpack.c.0.s8 %v1441
        %v1443 = vlaneseq
        %v1444 = vshrl.u32 %v1443, 7
        %v1445 = vsub.s32 %v1442, %v1444
        %v1446 = vrot.slane %v1436, %v1445
        %v1448 = vunpack.c.l.s4 1983009808
        %v1449 = vunpack.c.0.s8 %v1448
        %v1450 = vlaneseq
        %v1451 = vshrl.u32 %v1450, 7
        %v1452 = vsub.s32 %v1449, %v1451
        %v1453 = vrot.slane %v1437, %v1452
        %v1455 = vunpack.c.l.s4 1983009808
        %v1456 = vunpack.c.0.s8 %v1455
        %v1457 = vlaneseq
        %v1458 = vshrl.u32 %v1457, 7
        %v1459 = vsub.s32 %v1456, %v1458
        %v1460 = vrot.slane %v1438, %v1459
        %v1462 = vunpack.c.l.s4 1983009808
        %v1463 = vunpack.c.0.s8 %v1462
        %v1464 = vlaneseq
        %v1465 = vshrl.u32 %v1464, 7
        %v1466 = vsub.s32 %v1463, %v1465
        %v1467 = vrot.slane %v1439, %v1466
        %v1468 = vcombine.low %v1446, %v1460
        %v1469 = vcombine.high %v1446, %v1460
        %v1470 = vcombine.low %v1453, %v1467
        %v1471 = vcombine.high %v1453, %v1467
        %v1472 = vcombine.high %v576, %v576
        %v1474 = vunpack.c.l.s4 1983009808
        %v1475 = vunpack.c.0.s8 %v1474
        %v1476 = vlaneseq
        %v1477 = vshrl.u32 %v1476, 7
        %v1478 = vsub.s32 %v1475, %v1477
        %v1479 = vrot.slane %v576, %v1478
        %v1481 = vunpack.c.l.s4 1983009808
        %v1482 = vunpack.c.0.s8 %v1481
        %v1483 = vlaneseq
        %v1484 = vshrl.u32 %v1483, 7
        %v1485 = vsub.s32 %v1482, %v1484
        %v1486 = vrot.slane %v1472, %v1485
        %v1487 = vcombine.high %v1479, %v1479
        %v1488 = vcombine.high %v1486, %v1486
        %v1489 = vcombine.low %v568, %v442
        %v1490 = vcombine.high %v568, %v442
        %v1492 = vunpack.c.l.s4 1983009808
        %v1493 = vunpack.c.0.s8 %v1492
        %v1494 = vlaneseq
        %v1495 = vshrl.u32 %v1494, 7
        %v1496 = vsub.s32 %v1493, %v1495
        %v1497 = vrot.slane %v1489, %v1496
        %v1499 = vunpack.c.l.s4 1983009808
        %v1500 = vunpack.c.0.s8 %v1499
        %v1501 = vlaneseq
        %v1502 = vshrl.u32 %v1501, 7
        %v1503 = vsub.s32 %v1500, %v1502
        %v1504 = vrot.slane %v1490, %v1503
        %v1505 = vcombine.low %v1175, %v1497
        %v1506 = vcombine.high %v1175, %v1497
        %v1507 = vcombine.low %v1182, %v1504
        %v1508 = vcombine.high %v1182, %v1504
        %v1509 = vcombine.low %v522, %v573
        %v1510 = vcombine.high %v522, %v573
        %v1511 = vcombine.low %v445, %v527
        %v1512 = vcombine.high %v445, %v527
        %v1514 = vunpack.c.l.s4 1983009808
        %v1515 = vunpack.c.0.s8 %v1514
        %v1516 = vlaneseq
        %v1517 = vshrl.u32 %v1516, 7
        %v1518 = vsub.s32 %v1515, %v1517
        %v1519 = vrot.slane %v1509, %v1518
        %v1521 = vunpack.c.l.s4 1983009808
        %v1522 = vunpack.c.0.s8 %v1521
        %v1523 = vlaneseq
        %v1524 = vshrl.u32 %v1523, 7
        %v1525 = vsub.s32 %v1522, %v1524
        %v1526 = vrot.slane %v1510, %v1525
        %v1528 = vunpack.c.l.s4 1983009808
        %v1529 = vunpack.c.0.s8 %v1528
        %v1530 = vlaneseq
        %v1531 = vshrl.u32 %v1530, 7
        %v1532 = vsub.s32 %v1529, %v1531
        %v1533 = vrot.slane %v1511, %v1532
        %v1535 = vunpack.c.l.s4 1983009808
        %v1536 = vunpack.c.0.s8 %v1535
        %v1537 = vlaneseq
        %v1538 = vshrl.u32 %v1537, 7
        %v1539 = vsub.s32 %v1536, %v1538
        %v1540 = vrot.slane %v1512, %v1539
        %v1541 = vcombine.low %v1519, %v1533
        %v1542 = vcombine.high %v1519, %v1533
        %v1543 = vcombine.low %v1526, %v1540
        %v1544 = vcombine.high %v1526, %v1540
        %v1545 = vcombine.high %v578, %v578
        %v1547 = vunpack.c.l.s4 1983009808
        %v1548 = vunpack.c.0.s8 %v1547
        %v1549 = vlaneseq
        %v1550 = vshrl.u32 %v1549, 7
        %v1551 = vsub.s32 %v1548, %v1550
        %v1552 = vrot.slane %v578, %v1551
        %v1554 = vunpack.c.l.s4 1983009808
        %v1555 = vunpack.c.0.s8 %v1554
        %v1556 = vlaneseq
        %v1557 = vshrl.u32 %v1556, 7
        %v1558 = vsub.s32 %v1555, %v1557
        %v1559 = vrot.slane %v1545, %v1558
        %v1560 = vcombine.high %v1552, %v1552
        %v1561 = vcombine.high %v1559, %v1559
        %v1562 = vcombine.low %v567, %v443
        %v1564 = vunpack.c.l.s4 1983009808
        %v1565 = vunpack.c.0.s8 %v1564
        %v1566 = vlaneseq
        %v1567 = vshrl.u32 %v1566, 7
        %v1568 = vsub.s32 %v1565, %v1567
        %v1569 = vrot.slane %v1562, %v1568
        %v1570 = vcombine.low %v1228, %v1569
        %v1571 = vcombine.low %v521, %v572
        %v1572 = vcombine.low %v446, %v526
        %v1574 = vunpack.c.l.s4 1983009808
        %v1575 = vunpack.c.0.s8 %v1574
        %v1576 = vlaneseq
        %v1577 = vshrl.u32 %v1576, 7
        %v1578 = vsub.s32 %v1575, %v1577
        %v1579 = vrot.slane %v1571, %v1578
        %v1581 = vunpack.c.l.s4 1983009808
        %v1582 = vunpack.c.0.s8 %v1581
        %v1583 = vlaneseq
        %v1584 = vshrl.u32 %v1583, 7
        %v1585 = vsub.s32 %v1582, %v1584
        %v1586 = vrot.slane %v1572, %v1585
        %v1587 = vcombine.low %v1579, %v1586
        %v1589 = vunpack.c.l.s4 1983009808
        %v1590 = vunpack.c.0.s8 %v1589
        %v1591 = vlaneseq
        %v1592 = vshrl.u32 %v1591, 7
        %v1593 = vsub.s32 %v1590, %v1592
        %v1594 = vrot.slane %v577, %v1593
        %v1595 = vcombine.low %v571, %v444
        %v1596 = vcombine.high %v571, %v444
        %v1598 = vunpack.c.l.s4 1983009808
        %v1599 = vunpack.c.0.s8 %v1598
        %v1600 = vlaneseq
        %v1601 = vshrl.u32 %v1600, 7
        %v1602 = vsub.s32 %v1599, %v1601
        %v1603 = vrot.slane %v1595, %v1602
        %v1605 = vunpack.c.l.s4 1983009808
        %v1606 = vunpack.c.0.s8 %v1605
        %v1607 = vlaneseq
        %v1608 = vshrl.u32 %v1607, 7
        %v1609 = vsub.s32 %v1606, %v1608
        %v1610 = vrot.slane %v1596, %v1609
        %v1611 = vcombine.low %v1281, %v1603
        %v1612 = vcombine.high %v1281, %v1603
        %v1613 = vcombine.low %v1288, %v1610
        %v1614 = vcombine.high %v1288, %v1610
        %v1615 = vcombine.low %v525, %v576
        %v1616 = vcombine.high %v525, %v576
        %v1617 = vcombine.low %v447, %v530
        %v1618 = vcombine.high %v447, %v530
        %v1620 = vunpack.c.l.s4 1983009808
        %v1621 = vunpack.c.0.s8 %v1620
        %v1622 = vlaneseq
        %v1623 = vshrl.u32 %v1622, 7
        %v1624 = vsub.s32 %v1621, %v1623
        %v1625 = vrot.slane %v1615, %v1624
        %v1627 = vunpack.c.l.s4 1983009808
        %v1628 = vunpack.c.0.s8 %v1627
        %v1629 = vlaneseq
        %v1630 = vshrl.u32 %v1629, 7
        %v1631 = vsub.s32 %v1628, %v1630
        %v1632 = vrot.slane %v1616, %v1631
        %v1634 = vunpack.c.l.s4 1983009808
        %v1635 = vunpack.c.0.s8 %v1634
        %v1636 = vlaneseq
        %v1637 = vshrl.u32 %v1636, 7
        %v1638 = vsub.s32 %v1635, %v1637
        %v1639 = vrot.slane %v1617, %v1638
        %v1641 = vunpack.c.l.s4 1983009808
        %v1642 = vunpack.c.0.s8 %v1641
        %v1643 = vlaneseq
        %v1644 = vshrl.u32 %v1643, 7
        %v1645 = vsub.s32 %v1642, %v1644
        %v1646 = vrot.slane %v1618, %v1645
        %v1647 = vcombine.low %v1625, %v1639
        %v1648 = vcombine.high %v1625, %v1639
        %v1649 = vcombine.low %v1632, %v1646
        %v1650 = vcombine.high %v1632, %v1646
        %v1651 = vcombine.high %v581, %v581
        %v1653 = vunpack.c.l.s4 1983009808
        %v1654 = vunpack.c.0.s8 %v1653
        %v1655 = vlaneseq
        %v1656 = vshrl.u32 %v1655, 7
        %v1657 = vsub.s32 %v1654, %v1656
        %v1658 = vrot.slane %v581, %v1657
        %v1660 = vunpack.c.l.s4 1983009808
        %v1661 = vunpack.c.0.s8 %v1660
        %v1662 = vlaneseq
        %v1663 = vshrl.u32 %v1662, 7
        %v1664 = vsub.s32 %v1661, %v1663
        %v1665 = vrot.slane %v1651, %v1664
        %v1666 = vcombine.high %v1658, %v1658
        %v1667 = vcombine.high %v1665, %v1665
        %v1668 = vcombine.low %v573, %v445
        %v1669 = vcombine.high %v573, %v445
        %v1671 = vunpack.c.l.s4 1983009808
        %v1672 = vunpack.c.0.s8 %v1671
        %v1673 = vlaneseq
        %v1674 = vshrl.u32 %v1673, 7
        %v1675 = vsub.s32 %v1672, %v1674
        %v1676 = vrot.slane %v1668, %v1675
        %v1678 = vunpack.c.l.s4 1983009808
        %v1679 = vunpack.c.0.s8 %v1678
        %v1680 = vlaneseq
        %v1681 = vshrl.u32 %v1680, 7
        %v1682 = vsub.s32 %v1679, %v1681
        %v1683 = vrot.slane %v1669, %v1682
        %v1684 = vcombine.low %v1354, %v1676
        %v1685 = vcombine.high %v1354, %v1676
        %v1686 = vcombine.low %v1361, %v1683
        %v1687 = vcombine.high %v1361, %v1683
        %v1688 = vcombine.low %v527, %v578
        %v1689 = vcombine.high %v527, %v578
        %v1690 = vcombine.low %v448, %v532
        %v1691 = vcombine.high %v448, %v532
        %v1693 = vunpack.c.l.s4 1983009808
        %v1694 = vunpack.c.0.s8 %v1693
        %v1695 = vlaneseq
        %v1696 = vshrl.u32 %v1695, 7
        %v1697 = vsub.s32 %v1694, %v1696
        %v1698 = vrot.slane %v1688, %v1697
        %v1700 = vunpack.c.l.s4 1983009808
        %v1701 = vunpack.c.0.s8 %v1700
        %v1702 = vlaneseq
        %v1703 = vshrl.u32 %v1702, 7
        %v1704 = vsub.s32 %v1701, %v1703
        %v1705 = vrot.slane %v1689, %v1704
        %v1707 = vunpack.c.l.s4 1983009808
        %v1708 = vunpack.c.0.s8 %v1707
        %v1709 = vlaneseq
        %v1710 = vshrl.u32 %v1709, 7
        %v1711 = vsub.s32 %v1708, %v1710
        %v1712 = vrot.slane %v1690, %v1711
        %v1714 = vunpack.c.l.s4 1983009808
        %v1715 = vunpack.c.0.s8 %v1714
        %v1716 = vlaneseq
        %v1717 = vshrl.u32 %v1716, 7
        %v1718 = vsub.s32 %v1715, %v1717
        %v1719 = vrot.slane %v1691, %v1718
        %v1720 = vcombine.low %v1698, %v1712
        %v1721 = vcombine.high %v1698, %v1712
        %v1722 = vcombine.low %v1705, %v1719
        %v1723 = vcombine.high %v1705, %v1719
        %v1724 = vcombine.high %v583, %v583
        %v1726 = vunpack.c.l.s4 1983009808
        %v1727 = vunpack.c.0.s8 %v1726
        %v1728 = vlaneseq
        %v1729 = vshrl.u32 %v1728, 7
        %v1730 = vsub.s32 %v1727, %v1729
        %v1731 = vrot.slane %v583, %v1730
        %v1733 = vunpack.c.l.s4 1983009808
        %v1734 = vunpack.c.0.s8 %v1733
        %v1735 = vlaneseq
        %v1736 = vshrl.u32 %v1735, 7
        %v1737 = vsub.s32 %v1734, %v1736
        %v1738 = vrot.slane %v1724, %v1737
        %v1739 = vcombine.high %v1731, %v1731
        %v1740 = vcombine.high %v1738, %v1738
        %v1741 = vcombine.low %v572, %v446
        %v1743 = vunpack.c.l.s4 1983009808
        %v1744 = vunpack.c.0.s8 %v1743
        %v1745 = vlaneseq
        %v1746 = vshrl.u32 %v1745, 7
        %v1747 = vsub.s32 %v1744, %v1746
        %v1748 = vrot.slane %v1741, %v1747
        %v1749 = vcombine.low %v1407, %v1748
        %v1750 = vcombine.low %v526, %v577
        %v1751 = vcombine.low %v449, %v531
        %v1753 = vunpack.c.l.s4 1983009808
        %v1754 = vunpack.c.0.s8 %v1753
        %v1755 = vlaneseq
        %v1756 = vshrl.u32 %v1755, 7
        %v1757 = vsub.s32 %v1754, %v1756
        %v1758 = vrot.slane %v1750, %v1757
        %v1760 = vunpack.c.l.s4 1983009808
        %v1761 = vunpack.c.0.s8 %v1760
        %v1762 = vlaneseq
        %v1763 = vshrl.u32 %v1762, 7
        %v1764 = vsub.s32 %v1761, %v1763
        %v1765 = vrot.slane %v1751, %v1764
        %v1766 = vcombine.low %v1758, %v1765
        %v1768 = vunpack.c.l.s4 1983009808
        %v1769 = vunpack.c.0.s8 %v1768
        %v1770 = vlaneseq
        %v1771 = vshrl.u32 %v1770, 7
        %v1772 = vsub.s32 %v1769, %v1771
        %v1773 = vrot.slane %v582, %v1772
        %v1774 = vcombine.low %v576, %v447
        %v1775 = vcombine.high %v576, %v447
        %v1777 = vunpack.c.l.s4 1983009808
        %v1778 = vunpack.c.0.s8 %v1777
        %v1779 = vlaneseq
        %v1780 = vshrl.u32 %v1779, 7
        %v1781 = vsub.s32 %v1778, %v1780
        %v1782 = vrot.slane %v1774, %v1781
        %v1784 = vunpack.c.l.s4 1983009808
        %v1785 = vunpack.c.0.s8 %v1784
        %v1786 = vlaneseq
        %v1787 = vshrl.u32 %v1786, 7
        %v1788 = vsub.s32 %v1785, %v1787
        %v1789 = vrot.slane %v1775, %v1788
        %v1790 = vcombine.low %v1460, %v1782
        %v1791 = vcombine.high %v1460, %v1782
        %v1792 = vcombine.low %v1467, %v1789
        %v1793 = vcombine.high %v1467, %v1789
        %v1794 = vcombine.low %v530, %v581
        %v1795 = vcombine.high %v530, %v581
        %v1796 = vcombine.low %v450, %v535
        %v1797 = vcombine.high %v450, %v535
        %v1799 = vunpack.c.l.s4 1983009808
        %v1800 = vunpack.c.0.s8 %v1799
        %v1801 = vlaneseq
        %v1802 = vshrl.u32 %v1801, 7
        %v1803 = vsub.s32 %v1800, %v1802
        %v1804 = vrot.slane %v1794, %v1803
        %v1806 = vunpack.c.l.s4 1983009808
        %v1807 = vunpack.c.0.s8 %v1806
        %v1808 = vlaneseq
        %v1809 = vshrl.u32 %v1808, 7
        %v1810 = vsub.s32 %v1807, %v1809
        %v1811 = vrot.slane %v1795, %v1810
        %v1813 = vunpack.c.l.s4 1983009808
        %v1814 = vunpack.c.0.s8 %v1813
        %v1815 = vlaneseq
        %v1816 = vshrl.u32 %v1815, 7
        %v1817 = vsub.s32 %v1814, %v1816
        %v1818 = vrot.slane %v1796, %v1817
        %v1820 = vunpack.c.l.s4 1983009808
        %v1821 = vunpack.c.0.s8 %v1820
        %v1822 = vlaneseq
        %v1823 = vshrl.u32 %v1822, 7
        %v1824 = vsub.s32 %v1821, %v1823
        %v1825 = vrot.slane %v1797, %v1824
        %v1826 = vcombine.low %v1804, %v1818
        %v1827 = vcombine.high %v1804, %v1818
        %v1828 = vcombine.low %v1811, %v1825
        %v1829 = vcombine.high %v1811, %v1825
        %v1830 = vcombine.high %v586, %v586
        %v1832 = vunpack.c.l.s4 1983009808
        %v1833 = vunpack.c.0.s8 %v1832
        %v1834 = vlaneseq
        %v1835 = vshrl.u32 %v1834, 7
        %v1836 = vsub.s32 %v1833, %v1835
        %v1837 = vrot.slane %v586, %v1836
        %v1839 = vunpack.c.l.s4 1983009808
        %v1840 = vunpack.c.0.s8 %v1839
        %v1841 = vlaneseq
        %v1842 = vshrl.u32 %v1841, 7
        %v1843 = vsub.s32 %v1840, %v1842
        %v1844 = vrot.slane %v1830, %v1843
        %v1845 = vcombine.high %v1837, %v1837
        %v1846 = vcombine.high %v1844, %v1844
        %v1847 = vcombine.low %v578, %v448
        %v1848 = vcombine.high %v578, %v448
        %v1850 = vunpack.c.l.s4 1983009808
        %v1851 = vunpack.c.0.s8 %v1850
        %v1852 = vlaneseq
        %v1853 = vshrl.u32 %v1852, 7
        %v1854 = vsub.s32 %v1851, %v1853
        %v1855 = vrot.slane %v1847, %v1854
        %v1857 = vunpack.c.l.s4 1983009808
        %v1858 = vunpack.c.0.s8 %v1857
        %v1859 = vlaneseq
        %v1860 = vshrl.u32 %v1859, 7
        %v1861 = vsub.s32 %v1858, %v1860
        %v1862 = vrot.slane %v1848, %v1861
        %v1863 = vcombine.low %v1533, %v1855
        %v1864 = vcombine.high %v1533, %v1855
        %v1865 = vcombine.low %v1540, %v1862
        %v1866 = vcombine.high %v1540, %v1862
        %v1867 = vcombine.low %v532, %v583
        %v1868 = vcombine.high %v532, %v583
        %v1869 = vcombine.low %v451, %v537
        %v1870 = vcombine.high %v451, %v537
        %v1872 = vunpack.c.l.s4 1983009808
        %v1873 = vunpack.c.0.s8 %v1872
        %v1874 = vlaneseq
        %v1875 = vshrl.u32 %v1874, 7
        %v1876 = vsub.s32 %v1873, %v1875
        %v1877 = vrot.slane %v1867, %v1876
        %v1879 = vunpack.c.l.s4 1983009808
        %v1880 = vunpack.c.0.s8 %v1879
        %v1881 = vlaneseq
        %v1882 = vshrl.u32 %v1881, 7
        %v1883 = vsub.s32 %v1880, %v1882
        %v1884 = vrot.slane %v1868, %v1883
        %v1886 = vunpack.c.l.s4 1983009808
        %v1887 = vunpack.c.0.s8 %v1886
        %v1888 = vlaneseq
        %v1889 = vshrl.u32 %v1888, 7
        %v1890 = vsub.s32 %v1887, %v1889
        %v1891 = vrot.slane %v1869, %v1890
        %v1893 = vunpack.c.l.s4 1983009808
        %v1894 = vunpack.c.0.s8 %v1893
        %v1895 = vlaneseq
        %v1896 = vshrl.u32 %v1895, 7
        %v1897 = vsub.s32 %v1894, %v1896
        %v1898 = vrot.slane %v1870, %v1897
        %v1899 = vcombine.low %v1877, %v1891
        %v1900 = vcombine.high %v1877, %v1891
        %v1901 = vcombine.low %v1884, %v1898
        %v1902 = vcombine.high %v1884, %v1898
        %v1903 = vcombine.high %v588, %v588
        %v1905 = vunpack.c.l.s4 1983009808
        %v1906 = vunpack.c.0.s8 %v1905
        %v1907 = vlaneseq
        %v1908 = vshrl.u32 %v1907, 7
        %v1909 = vsub.s32 %v1906, %v1908
        %v1910 = vrot.slane %v588, %v1909
        %v1912 = vunpack.c.l.s4 1983009808
        %v1913 = vunpack.c.0.s8 %v1912
        %v1914 = vlaneseq
        %v1915 = vshrl.u32 %v1914, 7
        %v1916 = vsub.s32 %v1913, %v1915
        %v1917 = vrot.slane %v1903, %v1916
        %v1918 = vcombine.high %v1910, %v1910
        %v1919 = vcombine.high %v1917, %v1917
        %v1920 = vcombine.low %v577, %v449
        %v1922 = vunpack.c.l.s4 1983009808
        %v1923 = vunpack.c.0.s8 %v1922
        %v1924 = vlaneseq
        %v1925 = vshrl.u32 %v1924, 7
        %v1926 = vsub.s32 %v1923, %v1925
        %v1927 = vrot.slane %v1920, %v1926
        %v1928 = vcombine.low %v1586, %v1927
        %v1929 = vcombine.low %v531, %v582
        %v1930 = vcombine.low %v452, %v536
        %v1932 = vunpack.c.l.s4 1983009808
        %v1933 = vunpack.c.0.s8 %v1932
        %v1934 = vlaneseq
        %v1935 = vshrl.u32 %v1934, 7
        %v1936 = vsub.s32 %v1933, %v1935
        %v1937 = vrot.slane %v1929, %v1936
        %v1939 = vunpack.c.l.s4 1983009808
        %v1940 = vunpack.c.0.s8 %v1939
        %v1941 = vlaneseq
        %v1942 = vshrl.u32 %v1941, 7
        %v1943 = vsub.s32 %v1940, %v1942
        %v1944 = vrot.slane %v1930, %v1943
        %v1945 = vcombine.low %v1937, %v1944
        %v1947 = vunpack.c.l.s4 1983009808
        %v1948 = vunpack.c.0.s8 %v1947
        %v1949 = vlaneseq
        %v1950 = vshrl.u32 %v1949, 7
        %v1951 = vsub.s32 %v1948, %v1950
        %v1952 = vrot.slane %v587, %v1951
        %v1953 = vcombine.low %v581, %v450
        %v1954 = vcombine.high %v581, %v450
        %v1956 = vunpack.c.l.s4 1983009808
        %v1957 = vunpack.c.0.s8 %v1956
        %v1958 = vlaneseq
        %v1959 = vshrl.u32 %v1958, 7
        %v1960 = vsub.s32 %v1957, %v1959
        %v1961 = vrot.slane %v1953, %v1960
        %v1963 = vunpack.c.l.s4 1983009808
        %v1964 = vunpack.c.0.s8 %v1963
        %v1965 = vlaneseq
        %v1966 = vshrl.u32 %v1965, 7
        %v1967 = vsub.s32 %v1964, %v1966
        %v1968 = vrot.slane %v1954, %v1967
        %v1969 = vcombine.low %v1639, %v1961
        %v1970 = vcombine.high %v1639, %v1961
        %v1971 = vcombine.low %v1646, %v1968
        %v1972 = vcombine.high %v1646, %v1968
        %v1973 = vcombine.low %v535, %v586
        %v1974 = vcombine.high %v535, %v586
        %v1975 = vcombine.low %v453, %v540
        %v1976 = vcombine.high %v453, %v540
        %v1978 = vunpack.c.l.s4 1983009808
        %v1979 = vunpack.c.0.s8 %v1978
        %v1980 = vlaneseq
        %v1981 = vshrl.u32 %v1980, 7
        %v1982 = vsub.s32 %v1979, %v1981
        %v1983 = vrot.slane %v1973, %v1982
        %v1985 = vunpack.c.l.s4 1983009808
        %v1986 = vunpack.c.0.s8 %v1985
        %v1987 = vlaneseq
        %v1988 = vshrl.u32 %v1987, 7
        %v1989 = vsub.s32 %v1986, %v1988
        %v1990 = vrot.slane %v1974, %v1989
        %v1992 = vunpack.c.l.s4 1983009808
        %v1993 = vunpack.c.0.s8 %v1992
        %v1994 = vlaneseq
        %v1995 = vshrl.u32 %v1994, 7
        %v1996 = vsub.s32 %v1993, %v1995
        %v1997 = vrot.slane %v1975, %v1996
        %v1999 = vunpack.c.l.s4 1983009808
        %v2000 = vunpack.c.0.s8 %v1999
        %v2001 = vlaneseq
        %v2002 = vshrl.u32 %v2001, 7
        %v2003 = vsub.s32 %v2000, %v2002
        %v2004 = vrot.slane %v1976, %v2003
        %v2005 = vcombine.low %v1983, %v1997
        %v2006 = vcombine.high %v1983, %v1997
        %v2007 = vcombine.low %v1990, %v2004
        %v2008 = vcombine.high %v1990, %v2004
        %v2009 = vcombine.high %v591, %v591
        %v2011 = vunpack.c.l.s4 1983009808
        %v2012 = vunpack.c.0.s8 %v2011
        %v2013 = vlaneseq
        %v2014 = vshrl.u32 %v2013, 7
        %v2015 = vsub.s32 %v2012, %v2014
        %v2016 = vrot.slane %v591, %v2015
        %v2018 = vunpack.c.l.s4 1983009808
        %v2019 = vunpack.c.0.s8 %v2018
        %v2020 = vlaneseq
        %v2021 = vshrl.u32 %v2020, 7
        %v2022 = vsub.s32 %v2019, %v2021
        %v2023 = vrot.slane %v2009, %v2022
        %v2024 = vcombine.high %v2016, %v2016
        %v2025 = vcombine.high %v2023, %v2023
        %v2026 = vcombine.low %v583, %v451
        %v2027 = vcombine.high %v583, %v451
        %v2029 = vunpack.c.l.s4 1983009808
        %v2030 = vunpack.c.0.s8 %v2029
        %v2031 = vlaneseq
        %v2032 = vshrl.u32 %v2031, 7
        %v2033 = vsub.s32 %v2030, %v2032
        %v2034 = vrot.slane %v2026, %v2033
        %v2036 = vunpack.c.l.s4 1983009808
        %v2037 = vunpack.c.0.s8 %v2036
        %v2038 = vlaneseq
        %v2039 = vshrl.u32 %v2038, 7
        %v2040 = vsub.s32 %v2037, %v2039
        %v2041 = vrot.slane %v2027, %v2040
        %v2042 = vcombine.low %v1712, %v2034
        %v2043 = vcombine.high %v1712, %v2034
        %v2044 = vcombine.low %v1719, %v2041
        %v2045 = vcombine.high %v1719, %v2041
        %v2046 = vcombine.low %v537, %v588
        %v2047 = vcombine.high %v537, %v588
        %v2048 = vcombine.low %v454, %v542
        %v2049 = vcombine.high %v454, %v542
        %v2051 = vunpack.c.l.s4 1983009808
        %v2052 = vunpack.c.0.s8 %v2051
        %v2053 = vlaneseq
        %v2054 = vshrl.u32 %v2053, 7
        %v2055 = vsub.s32 %v2052, %v2054
        %v2056 = vrot.slane %v2046, %v2055
        %v2058 = vunpack.c.l.s4 1983009808
        %v2059 = vunpack.c.0.s8 %v2058
        %v2060 = vlaneseq
        %v2061 = vshrl.u32 %v2060, 7
        %v2062 = vsub.s32 %v2059, %v2061
        %v2063 = vrot.slane %v2047, %v2062
        %v2065 = vunpack.c.l.s4 1983009808
        %v2066 = vunpack.c.0.s8 %v2065
        %v2067 = vlaneseq
        %v2068 = vshrl.u32 %v2067, 7
        %v2069 = vsub.s32 %v2066, %v2068
        %v2070 = vrot.slane %v2048, %v2069
        %v2072 = vunpack.c.l.s4 1983009808
        %v2073 = vunpack.c.0.s8 %v2072
        %v2074 = vlaneseq
        %v2075 = vshrl.u32 %v2074, 7
        %v2076 = vsub.s32 %v2073, %v2075
        %v2077 = vrot.slane %v2049, %v2076
        %v2078 = vcombine.low %v2056, %v2070
        %v2079 = vcombine.high %v2056, %v2070
        %v2080 = vcombine.low %v2063, %v2077
        %v2081 = vcombine.high %v2063, %v2077
        %v2082 = vcombine.high %v593, %v593
        %v2084 = vunpack.c.l.s4 1983009808
        %v2085 = vunpack.c.0.s8 %v2084
        %v2086 = vlaneseq
        %v2087 = vshrl.u32 %v2086, 7
        %v2088 = vsub.s32 %v2085, %v2087
        %v2089 = vrot.slane %v593, %v2088
        %v2091 = vunpack.c.l.s4 1983009808
        %v2092 = vunpack.c.0.s8 %v2091
        %v2093 = vlaneseq
        %v2094 = vshrl.u32 %v2093, 7
        %v2095 = vsub.s32 %v2092, %v2094
        %v2096 = vrot.slane %v2082, %v2095
        %v2097 = vcombine.high %v2089, %v2089
        %v2098 = vcombine.high %v2096, %v2096
        %v2099 = vcombine.low %v582, %v452
        %v2101 = vunpack.c.l.s4 1983009808
        %v2102 = vunpack.c.0.s8 %v2101
        %v2103 = vlaneseq
        %v2104 = vshrl.u32 %v2103, 7
        %v2105 = vsub.s32 %v2102, %v2104
        %v2106 = vrot.slane %v2099, %v2105
        %v2107 = vcombine.low %v1765, %v2106
        %v2108 = vcombine.low %v536, %v587
        %v2109 = vcombine.low %v455, %v541
        %v2111 = vunpack.c.l.s4 1983009808
        %v2112 = vunpack.c.0.s8 %v2111
        %v2113 = vlaneseq
        %v2114 = vshrl.u32 %v2113, 7
        %v2115 = vsub.s32 %v2112, %v2114
        %v2116 = vrot.slane %v2108, %v2115
        %v2118 = vunpack.c.l.s4 1983009808
        %v2119 = vunpack.c.0.s8 %v2118
        %v2120 = vlaneseq
        %v2121 = vshrl.u32 %v2120, 7
        %v2122 = vsub.s32 %v2119, %v2121
        %v2123 = vrot.slane %v2109, %v2122
        %v2124 = vcombine.low %v2116, %v2123
        %v2126 = vunpack.c.l.s4 1983009808
        %v2127 = vunpack.c.0.s8 %v2126
        %v2128 = vlaneseq
        %v2129 = vshrl.u32 %v2128, 7
        %v2130 = vsub.s32 %v2127, %v2129
        %v2131 = vrot.slane %v592, %v2130
        %v2132 = vcombine.low %v586, %v453
        %v2133 = vcombine.high %v586, %v453
        %v2135 = vunpack.c.l.s4 1983009808
        %v2136 = vunpack.c.0.s8 %v2135
        %v2137 = vlaneseq
        %v2138 = vshrl.u32 %v2137, 7
        %v2139 = vsub.s32 %v2136, %v2138
        %v2140 = vrot.slane %v2132, %v2139
        %v2142 = vunpack.c.l.s4 1983009808
        %v2143 = vunpack.c.0.s8 %v2142
        %v2144 = vlaneseq
        %v2145 = vshrl.u32 %v2144, 7
        %v2146 = vsub.s32 %v2143, %v2145
        %v2147 = vrot.slane %v2133, %v2146
        %v2148 = vcombine.low %v1818, %v2140
        %v2149 = vcombine.high %v1818, %v2140
        %v2150 = vcombine.low %v1825, %v2147
        %v2151 = vcombine.high %v1825, %v2147
        %v2152 = vcombine.low %v540, %v591
        %v2153 = vcombine.high %v540, %v591
        %v2154 = vcombine.low %v456, %v599
        %v2155 = vcombine.high %v456, %v599
        %v2157 = vunpack.c.l.s4 1983009808
        %v2158 = vunpack.c.0.s8 %v2157
        %v2159 = vlaneseq
        %v2160 = vshrl.u32 %v2159, 7
        %v2161 = vsub.s32 %v2158, %v2160
        %v2162 = vrot.slane %v2152, %v2161
        %v2164 = vunpack.c.l.s4 1983009808
        %v2165 = vunpack.c.0.s8 %v2164
        %v2166 = vlaneseq
        %v2167 = vshrl.u32 %v2166, 7
        %v2168 = vsub.s32 %v2165, %v2167
        %v2169 = vrot.slane %v2153, %v2168
        %v2171 = vunpack.c.l.s4 1983009808
        %v2172 = vunpack.c.0.s8 %v2171
        %v2173 = vlaneseq
        %v2174 = vshrl.u32 %v2173, 7
        %v2175 = vsub.s32 %v2172, %v2174
        %v2176 = vrot.slane %v2154, %v2175
        %v2178 = vunpack.c.l.s4 1983009808
        %v2179 = vunpack.c.0.s8 %v2178
        %v2180 = vlaneseq
        %v2181 = vshrl.u32 %v2180, 7
        %v2182 = vsub.s32 %v2179, %v2181
        %v2183 = vrot.slane %v2155, %v2182
        %v2184 = vcombine.low %v2162, %v2176
        %v2185 = vcombine.high %v2162, %v2176
        %v2186 = vcombine.low %v2169, %v2183
        %v2187 = vcombine.high %v2169, %v2183
        %v2188 = vcombine.high %v604, %v604
        %v2190 = vunpack.c.l.s4 1983009808
        %v2191 = vunpack.c.0.s8 %v2190
        %v2192 = vlaneseq
        %v2193 = vshrl.u32 %v2192, 7
        %v2194 = vsub.s32 %v2191, %v2193
        %v2195 = vrot.slane %v604, %v2194
        %v2197 = vunpack.c.l.s4 1983009808
        %v2198 = vunpack.c.0.s8 %v2197
        %v2199 = vlaneseq
        %v2200 = vshrl.u32 %v2199, 7
        %v2201 = vsub.s32 %v2198, %v2200
        %v2202 = vrot.slane %v2188, %v2201
        %v2203 = vcombine.high %v2195, %v2195
        %v2204 = vcombine.high %v2202, %v2202
        %v2205 = vcombine.low %v588, %v454
        %v2206 = vcombine.high %v588, %v454
        %v2208 = vunpack.c.l.s4 1983009808
        %v2209 = vunpack.c.0.s8 %v2208
        %v2210 = vlaneseq
        %v2211 = vshrl.u32 %v2210, 7
        %v2212 = vsub.s32 %v2209, %v2211
        %v2213 = vrot.slane %v2205, %v2212
        %v2215 = vunpack.c.l.s4 1983009808
        %v2216 = vunpack.c.0.s8 %v2215
        %v2217 = vlaneseq
        %v2218 = vshrl.u32 %v2217, 7
        %v2219 = vsub.s32 %v2216, %v2218
        %v2220 = vrot.slane %v2206, %v2219
        %v2221 = vcombine.low %v1891, %v2213
        %v2222 = vcombine.high %v1891, %v2213
        %v2223 = vcombine.low %v1898, %v2220
        %v2224 = vcombine.high %v1898, %v2220
        %v2225 = vcombine.low %v542, %v593
        %v2226 = vcombine.high %v542, %v593
        %v2227 = vcombine.low %v457, %v601
        %v2228 = vcombine.high %v457, %v601
        %v2230 = vunpack.c.l.s4 1983009808
        %v2231 = vunpack.c.0.s8 %v2230
        %v2232 = vlaneseq
        %v2233 = vshrl.u32 %v2232, 7
        %v2234 = vsub.s32 %v2231, %v2233
        %v2235 = vrot.slane %v2225, %v2234
        %v2237 = vunpack.c.l.s4 1983009808
        %v2238 = vunpack.c.0.s8 %v2237
        %v2239 = vlaneseq
        %v2240 = vshrl.u32 %v2239, 7
        %v2241 = vsub.s32 %v2238, %v2240
        %v2242 = vrot.slane %v2226, %v2241
        %v2244 = vunpack.c.l.s4 1983009808
        %v2245 = vunpack.c.0.s8 %v2244
        %v2246 = vlaneseq
        %v2247 = vshrl.u32 %v2246, 7
        %v2248 = vsub.s32 %v2245, %v2247
        %v2249 = vrot.slane %v2227, %v2248
        %v2251 = vunpack.c.l.s4 1983009808
        %v2252 = vunpack.c.0.s8 %v2251
        %v2253 = vlaneseq
        %v2254 = vshrl.u32 %v2253, 7
        %v2255 = vsub.s32 %v2252, %v2254
        %v2256 = vrot.slane %v2228, %v2255
        %v2257 = vcombine.low %v2235, %v2249
        %v2258 = vcombine.high %v2235, %v2249
        %v2259 = vcombine.low %v2242, %v2256
        %v2260 = vcombine.high %v2242, %v2256
        %v2261 = vcombine.high %v606, %v606
        %v2263 = vunpack.c.l.s4 1983009808
        %v2264 = vunpack.c.0.s8 %v2263
        %v2265 = vlaneseq
        %v2266 = vshrl.u32 %v2265, 7
        %v2267 = vsub.s32 %v2264, %v2266
        %v2268 = vrot.slane %v606, %v2267
        %v2270 = vunpack.c.l.s4 1983009808
        %v2271 = vunpack.c.0.s8 %v2270
        %v2272 = vlaneseq
        %v2273 = vshrl.u32 %v2272, 7
        %v2274 = vsub.s32 %v2271, %v2273
        %v2275 = vrot.slane %v2261, %v2274
        %v2276 = vcombine.high %v2268, %v2268
        %v2277 = vcombine.high %v2275, %v2275
        %v2278 = vcombine.low %v587, %v455
        %v2280 = vunpack.c.l.s4 1983009808
        %v2281 = vunpack.c.0.s8 %v2280
        %v2282 = vlaneseq
        %v2283 = vshrl.u32 %v2282, 7
        %v2284 = vsub.s32 %v2281, %v2283
        %v2285 = vrot.slane %v2278, %v2284
        %v2286 = vcombine.low %v1944, %v2285
        %v2287 = vcombine.low %v541, %v592
        %v2288 = vcombine.low %v458, %v600
        %v2290 = vunpack.c.l.s4 1983009808
        %v2291 = vunpack.c.0.s8 %v2290
        %v2292 = vlaneseq
        %v2293 = vshrl.u32 %v2292, 7
        %v2294 = vsub.s32 %v2291, %v2293
        %v2295 = vrot.slane %v2287, %v2294
        %v2297 = vunpack.c.l.s4 1983009808
        %v2298 = vunpack.c.0.s8 %v2297
        %v2299 = vlaneseq
        %v2300 = vshrl.u32 %v2299, 7
        %v2301 = vsub.s32 %v2298, %v2300
        %v2302 = vrot.slane %v2288, %v2301
        %v2303 = vcombine.low %v2295, %v2302
        %v2305 = vunpack.c.l.s4 1983009808
        %v2306 = vunpack.c.0.s8 %v2305
        %v2307 = vlaneseq
        %v2308 = vshrl.u32 %v2307, 7
        %v2309 = vsub.s32 %v2306, %v2308
        %v2310 = vrot.slane %v605, %v2309
        %v2311 = vcombine.low %v591, %v456
        %v2312 = vcombine.high %v591, %v456
        %v2314 = vunpack.c.l.s4 1983009808
        %v2315 = vunpack.c.0.s8 %v2314
        %v2316 = vlaneseq
        %v2317 = vshrl.u32 %v2316, 7
        %v2318 = vsub.s32 %v2315, %v2317
        %v2319 = vrot.slane %v2311, %v2318
        %v2321 = vunpack.c.l.s4 1983009808
        %v2322 = vunpack.c.0.s8 %v2321
        %v2323 = vlaneseq
        %v2324 = vshrl.u32 %v2323, 7
        %v2325 = vsub.s32 %v2322, %v2324
        %v2326 = vrot.slane %v2312, %v2325
        %v2327 = vcombine.low %v1997, %v2319
        %v2328 = vcombine.high %v1997, %v2319
        %v2329 = vcombine.low %v2004, %v2326
        %v2330 = vcombine.high %v2004, %v2326
        %v2331 = vcombine.low %v599, %v604
        %v2332 = vcombine.high %v599, %v604
        %v2333 = vcombine.low %v459, %v612
        %v2334 = vcombine.high %v459, %v612
        %v2336 = vunpack.c.l.s4 1983009808
        %v2337 = vunpack.c.0.s8 %v2336
        %v2338 = vlaneseq
        %v2339 = vshrl.u32 %v2338, 7
        %v2340 = vsub.s32 %v2337, %v2339
        %v2341 = vrot.slane %v2331, %v2340
        %v2343 = vunpack.c.l.s4 1983009808
        %v2344 = vunpack.c.0.s8 %v2343
        %v2345 = vlaneseq
        %v2346 = vshrl.u32 %v2345, 7
        %v2347 = vsub.s32 %v2344, %v2346
        %v2348 = vrot.slane %v2332, %v2347
        %v2350 = vunpack.c.l.s4 1983009808
        %v2351 = vunpack.c.0.s8 %v2350
        %v2352 = vlaneseq
        %v2353 = vshrl.u32 %v2352, 7
        %v2354 = vsub.s32 %v2351, %v2353
        %v2355 = vrot.slane %v2333, %v2354
        %v2357 = vunpack.c.l.s4 1983009808
        %v2358 = vunpack.c.0.s8 %v2357
        %v2359 = vlaneseq
        %v2360 = vshrl.u32 %v2359, 7
        %v2361 = vsub.s32 %v2358, %v2360
        %v2362 = vrot.slane %v2334, %v2361
        %v2363 = vcombine.low %v2341, %v2355
        %v2364 = vcombine.high %v2341, %v2355
        %v2365 = vcombine.low %v2348, %v2362
        %v2366 = vcombine.high %v2348, %v2362
        %v2367 = vcombine.high %v617, %v617
        %v2369 = vunpack.c.l.s4 1983009808
        %v2370 = vunpack.c.0.s8 %v2369
        %v2371 = vlaneseq
        %v2372 = vshrl.u32 %v2371, 7
        %v2373 = vsub.s32 %v2370, %v2372
        %v2374 = vrot.slane %v617, %v2373
        %v2376 = vunpack.c.l.s4 1983009808
        %v2377 = vunpack.c.0.s8 %v2376
        %v2378 = vlaneseq
        %v2379 = vshrl.u32 %v2378, 7
        %v2380 = vsub.s32 %v2377, %v2379
        %v2381 = vrot.slane %v2367, %v2380
        %v2382 = vcombine.high %v2374, %v2374
        %v2383 = vcombine.high %v2381, %v2381
        %v2384 = vcombine.low %v593, %v457
        %v2385 = vcombine.high %v593, %v457
        %v2387 = vunpack.c.l.s4 1983009808
        %v2388 = vunpack.c.0.s8 %v2387
        %v2389 = vlaneseq
        %v2390 = vshrl.u32 %v2389, 7
        %v2391 = vsub.s32 %v2388, %v2390
        %v2392 = vrot.slane %v2384, %v2391
        %v2394 = vunpack.c.l.s4 1983009808
        %v2395 = vunpack.c.0.s8 %v2394
        %v2396 = vlaneseq
        %v2397 = vshrl.u32 %v2396, 7
        %v2398 = vsub.s32 %v2395, %v2397
        %v2399 = vrot.slane %v2385, %v2398
        %v2400 = vcombine.low %v2070, %v2392
        %v2401 = vcombine.high %v2070, %v2392
        %v2402 = vcombine.low %v2077, %v2399
        %v2403 = vcombine.high %v2077, %v2399
        %v2404 = vcombine.low %v601, %v606
        %v2405 = vcombine.high %v601, %v606
        %v2406 = vcombine.low %v460, %v614
        %v2407 = vcombine.high %v460, %v614
        %v2409 = vunpack.c.l.s4 1983009808
        %v2410 = vunpack.c.0.s8 %v2409
        %v2411 = vlaneseq
        %v2412 = vshrl.u32 %v2411, 7
        %v2413 = vsub.s32 %v2410, %v2412
        %v2414 = vrot.slane %v2404, %v2413
        %v2416 = vunpack.c.l.s4 1983009808
        %v2417 = vunpack.c.0.s8 %v2416
        %v2418 = vlaneseq
        %v2419 = vshrl.u32 %v2418, 7
        %v2420 = vsub.s32 %v2417, %v2419
        %v2421 = vrot.slane %v2405, %v2420
        %v2423 = vunpack.c.l.s4 1983009808
        %v2424 = vunpack.c.0.s8 %v2423
        %v2425 = vlaneseq
        %v2426 = vshrl.u32 %v2425, 7
        %v2427 = vsub.s32 %v2424, %v2426
        %v2428 = vrot.slane %v2406, %v2427
        %v2430 = vunpack.c.l.s4 1983009808
        %v2431 = vunpack.c.0.s8 %v2430
        %v2432 = vlaneseq
        %v2433 = vshrl.u32 %v2432, 7
        %v2434 = vsub.s32 %v2431, %v2433
        %v2435 = vrot.slane %v2407, %v2434
        %v2436 = vcombine.low %v2414, %v2428
        %v2437 = vcombine.high %v2414, %v2428
        %v2438 = vcombine.low %v2421, %v2435
        %v2439 = vcombine.high %v2421, %v2435
        %v2440 = vcombine.high %v619, %v619
        %v2442 = vunpack.c.l.s4 1983009808
        %v2443 = vunpack.c.0.s8 %v2442
        %v2444 = vlaneseq
        %v2445 = vshrl.u32 %v2444, 7
        %v2446 = vsub.s32 %v2443, %v2445
        %v2447 = vrot.slane %v619, %v2446
        %v2449 = vunpack.c.l.s4 1983009808
        %v2450 = vunpack.c.0.s8 %v2449
        %v2451 = vlaneseq
        %v2452 = vshrl.u32 %v2451, 7
        %v2453 = vsub.s32 %v2450, %v2452
        %v2454 = vrot.slane %v2440, %v2453
        %v2455 = vcombine.high %v2447, %v2447
        %v2456 = vcombine.high %v2454, %v2454
        %v2457 = vcombine.low %v592, %v458
        %v2459 = vunpack.c.l.s4 1983009808
        %v2460 = vunpack.c.0.s8 %v2459
        %v2461 = vlaneseq
        %v2462 = vshrl.u32 %v2461, 7
        %v2463 = vsub.s32 %v2460, %v2462
        %v2464 = vrot.slane %v2457, %v2463
        %v2465 = vcombine.low %v2123, %v2464
        %v2466 = vcombine.low %v600, %v605
        %v2467 = vcombine.low %v461, %v613
        %v2469 = vunpack.c.l.s4 1983009808
        %v2470 = vunpack.c.0.s8 %v2469
        %v2471 = vlaneseq
        %v2472 = vshrl.u32 %v2471, 7
        %v2473 = vsub.s32 %v2470, %v2472
        %v2474 = vrot.slane %v2466, %v2473
        %v2476 = vunpack.c.l.s4 1983009808
        %v2477 = vunpack.c.0.s8 %v2476
        %v2478 = vlaneseq
        %v2479 = vshrl.u32 %v2478, 7
        %v2480 = vsub.s32 %v2477, %v2479
        %v2481 = vrot.slane %v2467, %v2480
        %v2482 = vcombine.low %v2474, %v2481
        %v2484 = vunpack.c.l.s4 1983009808
        %v2485 = vunpack.c.0.s8 %v2484
        %v2486 = vlaneseq
        %v2487 = vshrl.u32 %v2486, 7
        %v2488 = vsub.s32 %v2485, %v2487
        %v2489 = vrot.slane %v618, %v2488
        %v2490 = vld [vmem:[#allocation4] sm:$0xff]
        %v2491 = vld [vmem:[#allocation4 + $0x8] sm:$0xff]
        %v2492 = vld [vmem:[#allocation4 + $0x10] sm:$0xff]
        %v2493 = vld [vmem:[#allocation4 + $0x18] sm:$0xff]
        %v2494 = vld [vmem:[#allocation4 + $0x20] sm:$0xff]
        %v2495 = vld [vmem:[#allocation4 + $0x28] sm:$0xff]
        %v2496 = vld [vmem:[#allocation4 + $0x30] sm:$0xff]
        %v2497 = vld [vmem:[#allocation4 + $0x38] sm:$0xff]
        %v2498 = vld [vmem:[#allocation4 + $0x40] sm:$0xff]
        %v2499 = vld [vmem:[#allocation4 + $0x48] sm:$0xff]
        %v2500 = vld [vmem:[#allocation4 + $0x50] sm:$0xff]
        %v2501 = vld [vmem:[#allocation4 + $0x58] sm:$0xff]
        %v2502 = vld [vmem:[#allocation4 + $0x60] sm:$0xff]
        %v2503 = vld [vmem:[#allocation4 + $0x68] sm:$0xff]
        %v2504 = vld [vmem:[#allocation4 + $0x70] sm:$0xff]
        %v2505 = vld [vmem:[#allocation4 + $0x78] sm:$0xff]
        %v2506 = vld [vmem:[#allocation4 + $0x80] sm:$0xff]
        %v2507 = vld [vmem:[#allocation4 + $0x88] sm:$0xff]
        %v2508 = vld [vmem:[#allocation4 + $0x90] sm:$0xff]
        %v2509 = vld [vmem:[#allocation4 + $0x98] sm:$0xff]
        %v2510 = vld [vmem:[#allocation4 + $0xa0] sm:$0xff]
        %v2511 = vld [vmem:[#allocation4 + $0xa8] sm:$0xff]
        %v2512 = vld [vmem:[#allocation4 + $0xb0] sm:$0xff]
        %v2513 = vld [vmem:[#allocation4 + $0xb8] sm:$0xff]
        %v2514 = vld [vmem:[#allocation4 + $0xc0] sm:$0xff]
        %v2515 = vld [vmem:[#allocation4 + $0xc8] sm:$0xff]
        %v2516 = vld [vmem:[#allocation4 + $0xd0] sm:$0xff]
        %v2517 = vld [vmem:[#allocation4 + $0xd8] sm:$0xff]
        %v2518 = vld [vmem:[#allocation4 + $0xe0] sm:$0xff]
        %v2519 = vld [vmem:[#allocation4 + $0xe8] sm:$0xff]
        %v2520 = vld [vmem:[#allocation4 + $0xf0] sm:$0xff]
        %v2521 = vld [vmem:[#allocation4 + $0xf8] sm:$0xff]
        %v2522 = vld [vmem:[#allocation4 + $0x100] sm:$0xff]
        %v2523 = vld [vmem:[#allocation4 + $0x108] sm:$0xff]
        %v2524 = vld [vmem:[#allocation4 + $0x110] sm:$0xff]
        %v2525 = vld [vmem:[#allocation4 + $0x118] sm:$0xff]
        %v2526 = vld [vmem:[#allocation4 + $0x120] sm:$0xff]
        %v2527 = vld [vmem:[#allocation4 + $0x128] sm:$0xff]
        %v2528 = vld [vmem:[#allocation4 + $0x130] sm:$0xff]
        %v2529 = vld [vmem:[#allocation4 + $0x138] sm:$0xff]
        %v2530 = vld [vmem:[#allocation4 + $0x140] sm:$0xff]
        %v2531 = vld [vmem:[#allocation4 + $0x148] sm:$0xff]
        %v2532 = vld [vmem:[#allocation4 + $0x150] sm:$0xff]
        %v2533 = vld [vmem:[#allocation4 + $0x158] sm:$0xff]
        %v2534 = vld [vmem:[#allocation4 + $0x160] sm:$0xff]
        %v2535 = vld [vmem:[#allocation4 + $0x168] sm:$0xff]
        %v2536 = vld [vmem:[#allocation4 + $0x170] sm:$0xff]
        %v2537 = vld [vmem:[#allocation4 + $0x178] sm:$0xff]
        %v2538 = vld [vmem:[#allocation4 + $0x180] sm:$0xff]
        %v2539 = vld [vmem:[#allocation4 + $0x188] sm:$0xff]
        %v2540 = vld [vmem:[#allocation4 + $0x190] sm:$0xff]
        %v2541 = vld [vmem:[#allocation4 + $0x198] sm:$0xff]
        %v2542 = vld [vmem:[#allocation4 + $0x1a0] sm:$0xff]
        %v2543 = vld [vmem:[#allocation4 + $0x1a8] sm:$0xff]
        %v2544 = vld [vmem:[#allocation4 + $0x1b0] sm:$0xff]
        %v2545 = vld [vmem:[#allocation4 + $0x1b8] sm:$0xff]
        %v2546 = vld [vmem:[#allocation4 + $0x1c0] sm:$0xff]
        %v2547 = vld [vmem:[#allocation4 + $0x1c8] sm:$0xff]
        %v2548 = vld [vmem:[#allocation4 + $0x1d0] sm:$0xff]
        %v2549 = vld [vmem:[#allocation4 + $0x1d8] sm:$0xff]
        %v2550 = vld [vmem:[#allocation4 + $0x1e0] sm:$0xff]
        %v2551 = vld [vmem:[#allocation4 + $0x1e8] sm:$0xff]
        %v2552 = vld [vmem:[#allocation4 + $0x1f0] sm:$0xff]
        %v2553 = vld [vmem:[#allocation4 + $0x1f8] sm:$0xff]
        %v2554 = vld [vmem:[#allocation4 + $0x200] sm:$0xff]
        %v2555 = vld [vmem:[#allocation4 + $0x208] sm:$0xff]
        %v2556 = vld [vmem:[#allocation4 + $0x210] sm:$0xff]
        %v2557 = vld [vmem:[#allocation4 + $0x218] sm:$0xff]
        %v2558 = vld [vmem:[#allocation4 + $0x220] sm:$0xff]
        %v2559 = vld [vmem:[#allocation4 + $0x228] sm:$0xff]
        %v2560 = vld [vmem:[#allocation4 + $0x230] sm:$0xff]
        %v2561 = vld [vmem:[#allocation4 + $0x238] sm:$0xff]
        %v2562 = vld [vmem:[#allocation4 + $0x240] sm:$0xff]
        %v2563 = vld [vmem:[#allocation4 + $0x248] sm:$0xff]
        %v2564 = vld [vmem:[#allocation4 + $0x250] sm:$0xff]
        %v2565 = vld [vmem:[#allocation4 + $0x258] sm:$0xff]
        %v2566 = vld [vmem:[#allocation4 + $0x260] sm:$0xff]
        %v2567 = vld [vmem:[#allocation4 + $0x268] sm:$0xff]
        %v2568 = vld [vmem:[#allocation4 + $0x270] sm:$0xff]
        %v2569 = vld [vmem:[#allocation4 + $0x278] sm:$0xff]
        %v2570 = vld [vmem:[#allocation4 + $0x280] sm:$0xff]
        %v2571 = vld [vmem:[#allocation4 + $0x288] sm:$0xff]
        %v2572 = vld [vmem:[#allocation4 + $0x290] sm:$0xff]
        %v2573 = vld [vmem:[#allocation4 + $0x298] sm:$0xff]
        %v2574 = vld [vmem:[#allocation4 + $0x2a0] sm:$0xff]
        %v2575 = vld [vmem:[#allocation4 + $0x2a8] sm:$0xff]
        %v2576 = vld [vmem:[#allocation4 + $0x2b0] sm:$0xff]
        %v2577 = vld [vmem:[#allocation4 + $0x2b8] sm:$0xff]
        %v2578 = vld [vmem:[#allocation4 + $0x2c0] sm:$0xff]
        %v2579 = vld [vmem:[#allocation4 + $0x2c8] sm:$0xff]
        %v2580 = vld [vmem:[#allocation4 + $0x2d0] sm:$0xff]
        %v2581 = vld [vmem:[#allocation4 + $0x2d8] sm:$0xff]
        %v2582 = vld [vmem:[#allocation4 + $0x2e0] sm:$0xff]
        %v2583 = vld [vmem:[#allocation4 + $0x2e8] sm:$0xff]
        %v2584 = vld [vmem:[#allocation4 + $0x2f0] sm:$0xff]
        %v2585 = vld [vmem:[#allocation4 + $0x2f8] sm:$0xff]
        %v2586 = vld [vmem:[#allocation4 + $0x300] sm:$0xff]
        %v2587 = vld [vmem:[#allocation4 + $0x308] sm:$0xff]
        %v2588 = vld [vmem:[#allocation4 + $0x310] sm:$0xff]
        %v2589 = vld [vmem:[#allocation4 + $0x318] sm:$0xff]
        %v2590 = vld [vmem:[#allocation4 + $0x320] sm:$0xff]
        %v2591 = vld [vmem:[#allocation4 + $0x328] sm:$0xff]
        %v2592 = vld [vmem:[#allocation4 + $0x330] sm:$0xff]
        %v2593 = vld [vmem:[#allocation4 + $0x338] sm:$0xff]
        %v2594 = vld [vmem:[#allocation4 + $0x340] sm:$0xff]
        %v2595 = vld [vmem:[#allocation4 + $0x348] sm:$0xff]
        %v2596 = vld [vmem:[#allocation4 + $0x350] sm:$0xff]
        %v2597 = vld [vmem:[#allocation4 + $0x358] sm:$0xff]
        %v2598 = vld [vmem:[#allocation4 + $0x360] sm:$0xff]
        %v2599 = vld [vmem:[#allocation4 + $0x368] sm:$0xff]
        %v2600 = vld [vmem:[#allocation4 + $0x370] sm:$0xff]
        %v2601 = vld [vmem:[#allocation4 + $0x378] sm:$0xff]
        %v2602 = vld [vmem:[#allocation4 + $0x380] sm:$0xff]
        %v2603 = vld [vmem:[#allocation4 + $0x388] sm:$0xff]
        %v2604 = vld [vmem:[#allocation4 + $0x390] sm:$0xff]
        %v2605 = vld [vmem:[#allocation4 + $0x398] sm:$0xff]
        %v2606 = vld [vmem:[#allocation4 + $0x3a0] sm:$0xff]
        %v2607 = vld [vmem:[#allocation4 + $0x3a8] sm:$0xff]
        %v2608 = vld [vmem:[#allocation4 + $0x3b0] sm:$0xff]
        %v2609 = vld [vmem:[#allocation4 + $0x3b8] sm:$0xff]
        %v2610 = vld [vmem:[#allocation4 + $0x3c0] sm:$0xff]
        %v2611 = vld [vmem:[#allocation4 + $0x3c8] sm:$0xff]
        %v2612 = vld [vmem:[#allocation4 + $0x3d0] sm:$0xff]
        %v2613 = vld [vmem:[#allocation4 + $0x3d8] sm:$0xff]
        %v2614 = vld [vmem:[#allocation4 + $0x3e0] sm:$0xff]
        %v2615 = vld [vmem:[#allocation4 + $0x3e8] sm:$0xff]
        %v2616 = vld [vmem:[#allocation4 + $0x3f0] sm:$0xff]
        %v2617 = vld [vmem:[#allocation4 + $0x3f8] sm:$0xff]
        %v2618 = vld [vmem:[#allocation4 + $0x400] sm:$0xff]
        %v2619 = vld [vmem:[#allocation4 + $0x408] sm:$0xff]
        %v2620 = vld [vmem:[#allocation4 + $0x410] sm:$0xff]
        %v2621 = vld [vmem:[#allocation4 + $0x418] sm:$0xff]
        %v2622 = vld [vmem:[#allocation4 + $0x420] sm:$0xff]
        %v2623 = vld [vmem:[#allocation4 + $0x428] sm:$0xff]
        %v2624 = vld [vmem:[#allocation4 + $0x430] sm:$0xff]
        %v2625 = vld [vmem:[#allocation4 + $0x438] sm:$0xff]
        %v2626 = vld [vmem:[#allocation4 + $0x440] sm:$0xff]
        %v2627 = vld [vmem:[#allocation4 + $0x448] sm:$0xff]
        %v2628 = vld [vmem:[#allocation4 + $0x450] sm:$0xff]
        %v2629 = vld [vmem:[#allocation4 + $0x458] sm:$0xff]
        %v2630 = vld [vmem:[#allocation4 + $0x460] sm:$0xff]
        %v2631 = vld [vmem:[#allocation4 + $0x468] sm:$0xff]
        %v2632 = vld [vmem:[#allocation4 + $0x470] sm:$0xff]
        %v2633 = vld [vmem:[#allocation4 + $0x478] sm:$0xff]
        %v2634 = vcombine.low %v652, %v653
        %v2635 = vcombine.high %v652, %v653
        %v2636 = vcombine.low %v654, %v655
        %v2637 = vcombine.high %v654, %v655
        %v2639 = vunpack.c.l.s4 1983009808
        %v2640 = vunpack.c.0.s8 %v2639
        %v2641 = vlaneseq
        %v2642 = vshrl.u32 %v2641, 7
        %v2643 = vsub.s32 %v2640, %v2642
        %v2644 = vrot.slane %v2634, %v2643
        %v2646 = vunpack.c.l.s4 1983009808
        %v2647 = vunpack.c.0.s8 %v2646
        %v2648 = vlaneseq
        %v2649 = vshrl.u32 %v2648, 7
        %v2650 = vsub.s32 %v2647, %v2649
        %v2651 = vrot.slane %v2635, %v2650
        %v2653 = vunpack.c.l.s4 1983009808
        %v2654 = vunpack.c.0.s8 %v2653
        %v2655 = vlaneseq
        %v2656 = vshrl.u32 %v2655, 7
        %v2657 = vsub.s32 %v2654, %v2656
        %v2658 = vrot.slane %v2636, %v2657
        %v2660 = vunpack.c.l.s4 1983009808
        %v2661 = vunpack.c.0.s8 %v2660
        %v2662 = vlaneseq
        %v2663 = vshrl.u32 %v2662, 7
        %v2664 = vsub.s32 %v2661, %v2663
        %v2665 = vrot.slane %v2637, %v2664
        %v2666 = vcombine.low %v2644, %v2658
        %v2667 = vcombine.high %v2644, %v2658
        %v2668 = vcombine.low %v2651, %v2665
        %v2669 = vcombine.high %v2651, %v2665
        %v2670 = vcombine.low %v688, %v689
        %v2671 = vcombine.high %v688, %v689
        %v2672 = vcombine.low %v690, %v691
        %v2673 = vcombine.high %v690, %v691
        %v2675 = vunpack.c.l.s4 1983009808
        %v2676 = vunpack.c.0.s8 %v2675
        %v2677 = vlaneseq
        %v2678 = vshrl.u32 %v2677, 7
        %v2679 = vsub.s32 %v2676, %v2678
        %v2680 = vrot.slane %v2670, %v2679
        %v2682 = vunpack.c.l.s4 1983009808
        %v2683 = vunpack.c.0.s8 %v2682
        %v2684 = vlaneseq
        %v2685 = vshrl.u32 %v2684, 7
        %v2686 = vsub.s32 %v2683, %v2685
        %v2687 = vrot.slane %v2671, %v2686
        %v2689 = vunpack.c.l.s4 1983009808
        %v2690 = vunpack.c.0.s8 %v2689
        %v2691 = vlaneseq
        %v2692 = vshrl.u32 %v2691, 7
        %v2693 = vsub.s32 %v2690, %v2692
        %v2694 = vrot.slane %v2672, %v2693
        %v2696 = vunpack.c.l.s4 1983009808
        %v2697 = vunpack.c.0.s8 %v2696
        %v2698 = vlaneseq
        %v2699 = vshrl.u32 %v2698, 7
        %v2700 = vsub.s32 %v2697, %v2699
        %v2701 = vrot.slane %v2673, %v2700
        %v2702 = vcombine.low %v2680, %v2694
        %v2703 = vcombine.high %v2680, %v2694
        %v2704 = vcombine.low %v2687, %v2701
        %v2705 = vcombine.high %v2687, %v2701
        %v2706 = vcombine.low %v699, %v707
        %v2707 = vcombine.low %v706, %v708
        %v2709 = vunpack.c.l.s4 1983009808
        %v2710 = vunpack.c.0.s8 %v2709
        %v2711 = vlaneseq
        %v2712 = vshrl.u32 %v2711, 7
        %v2713 = vsub.s32 %v2710, %v2712
        %v2714 = vrot.slane %v2706, %v2713
        %v2716 = vunpack.c.l.s4 1983009808
        %v2717 = vunpack.c.0.s8 %v2716
        %v2718 = vlaneseq
        %v2719 = vshrl.u32 %v2718, 7
        %v2720 = vsub.s32 %v2717, %v2719
        %v2721 = vrot.slane %v2707, %v2720
        %v2722 = vcombine.low %v2714, %v2721
        %v2723 = vcombine.low %v741, %v742
        %v2724 = vcombine.high %v741, %v742
        %v2725 = vcombine.low %v743, %v744
        %v2726 = vcombine.high %v743, %v744
        %v2728 = vunpack.c.l.s4 1983009808
        %v2729 = vunpack.c.0.s8 %v2728
        %v2730 = vlaneseq
        %v2731 = vshrl.u32 %v2730, 7
        %v2732 = vsub.s32 %v2729, %v2731
        %v2733 = vrot.slane %v2723, %v2732
        %v2735 = vunpack.c.l.s4 1983009808
        %v2736 = vunpack.c.0.s8 %v2735
        %v2737 = vlaneseq
        %v2738 = vshrl.u32 %v2737, 7
        %v2739 = vsub.s32 %v2736, %v2738
        %v2740 = vrot.slane %v2724, %v2739
        %v2742 = vunpack.c.l.s4 1983009808
        %v2743 = vunpack.c.0.s8 %v2742
        %v2744 = vlaneseq
        %v2745 = vshrl.u32 %v2744, 7
        %v2746 = vsub.s32 %v2743, %v2745
        %v2747 = vrot.slane %v2725, %v2746
        %v2749 = vunpack.c.l.s4 1983009808
        %v2750 = vunpack.c.0.s8 %v2749
        %v2751 = vlaneseq
        %v2752 = vshrl.u32 %v2751, 7
        %v2753 = vsub.s32 %v2750, %v2752
        %v2754 = vrot.slane %v2726, %v2753
        %v2755 = vcombine.low %v2733, %v2747
        %v2756 = vcombine.high %v2733, %v2747
        %v2757 = vcombine.low %v2740, %v2754
        %v2758 = vcombine.high %v2740, %v2754
        %v2759 = vcombine.low %v777, %v778
        %v2760 = vcombine.high %v777, %v778
        %v2761 = vcombine.low %v779, %v780
        %v2762 = vcombine.high %v779, %v780
        %v2764 = vunpack.c.l.s4 1983009808
        %v2765 = vunpack.c.0.s8 %v2764
        %v2766 = vlaneseq
        %v2767 = vshrl.u32 %v2766, 7
        %v2768 = vsub.s32 %v2765, %v2767
        %v2769 = vrot.slane %v2759, %v2768
        %v2771 = vunpack.c.l.s4 1983009808
        %v2772 = vunpack.c.0.s8 %v2771
        %v2773 = vlaneseq
        %v2774 = vshrl.u32 %v2773, 7
        %v2775 = vsub.s32 %v2772, %v2774
        %v2776 = vrot.slane %v2760, %v2775
        %v2778 = vunpack.c.l.s4 1983009808
        %v2779 = vunpack.c.0.s8 %v2778
        %v2780 = vlaneseq
        %v2781 = vshrl.u32 %v2780, 7
        %v2782 = vsub.s32 %v2779, %v2781
        %v2783 = vrot.slane %v2761, %v2782
        %v2785 = vunpack.c.l.s4 1983009808
        %v2786 = vunpack.c.0.s8 %v2785
        %v2787 = vlaneseq
        %v2788 = vshrl.u32 %v2787, 7
        %v2789 = vsub.s32 %v2786, %v2788
        %v2790 = vrot.slane %v2762, %v2789
        %v2791 = vcombine.low %v2769, %v2783
        %v2792 = vcombine.high %v2769, %v2783
        %v2793 = vcombine.low %v2776, %v2790
        %v2794 = vcombine.high %v2776, %v2790
        %v2795 = vcombine.low %v788, %v796
        %v2796 = vcombine.low %v795, %v797
        %v2798 = vunpack.c.l.s4 1983009808
        %v2799 = vunpack.c.0.s8 %v2798
        %v2800 = vlaneseq
        %v2801 = vshrl.u32 %v2800, 7
        %v2802 = vsub.s32 %v2799, %v2801
        %v2803 = vrot.slane %v2795, %v2802
        %v2805 = vunpack.c.l.s4 1983009808
        %v2806 = vunpack.c.0.s8 %v2805
        %v2807 = vlaneseq
        %v2808 = vshrl.u32 %v2807, 7
        %v2809 = vsub.s32 %v2806, %v2808
        %v2810 = vrot.slane %v2796, %v2809
        %v2811 = vcombine.low %v2803, %v2810
        %v2812 = vcombine.low %v814, %v871
        %v2813 = vcombine.high %v814, %v871
        %v2814 = vcombine.low %v872, %v873
        %v2815 = vcombine.high %v872, %v873
        %v2817 = vunpack.c.l.s4 1983009808
        %v2818 = vunpack.c.0.s8 %v2817
        %v2819 = vlaneseq
        %v2820 = vshrl.u32 %v2819, 7
        %v2821 = vsub.s32 %v2818, %v2820
        %v2822 = vrot.slane %v2812, %v2821
        %v2824 = vunpack.c.l.s4 1983009808
        %v2825 = vunpack.c.0.s8 %v2824
        %v2826 = vlaneseq
        %v2827 = vshrl.u32 %v2826, 7
        %v2828 = vsub.s32 %v2825, %v2827
        %v2829 = vrot.slane %v2813, %v2828
        %v2831 = vunpack.c.l.s4 1983009808
        %v2832 = vunpack.c.0.s8 %v2831
        %v2833 = vlaneseq
        %v2834 = vshrl.u32 %v2833, 7
        %v2835 = vsub.s32 %v2832, %v2834
        %v2836 = vrot.slane %v2814, %v2835
        %v2838 = vunpack.c.l.s4 1983009808
        %v2839 = vunpack.c.0.s8 %v2838
        %v2840 = vlaneseq
        %v2841 = vshrl.u32 %v2840, 7
        %v2842 = vsub.s32 %v2839, %v2841
        %v2843 = vrot.slane %v2815, %v2842
        %v2844 = vcombine.low %v2822, %v2836
        %v2845 = vcombine.high %v2822, %v2836
        %v2846 = vcombine.low %v2829, %v2843
        %v2847 = vcombine.high %v2829, %v2843
        %v2848 = vcombine.low %v831, %v907
        %v2849 = vcombine.high %v831, %v907
        %v2850 = vcombine.low %v908, %v909
        %v2851 = vcombine.high %v908, %v909
        %v2853 = vunpack.c.l.s4 1983009808
        %v2854 = vunpack.c.0.s8 %v2853
        %v2855 = vlaneseq
        %v2856 = vshrl.u32 %v2855, 7
        %v2857 = vsub.s32 %v2854, %v2856
        %v2858 = vrot.slane %v2848, %v2857
        %v2860 = vunpack.c.l.s4 1983009808
        %v2861 = vunpack.c.0.s8 %v2860
        %v2862 = vlaneseq
        %v2863 = vshrl.u32 %v2862, 7
        %v2864 = vsub.s32 %v2861, %v2863
        %v2865 = vrot.slane %v2849, %v2864
        %v2867 = vunpack.c.l.s4 1983009808
        %v2868 = vunpack.c.0.s8 %v2867
        %v2869 = vlaneseq
        %v2870 = vshrl.u32 %v2869, 7
        %v2871 = vsub.s32 %v2868, %v2870
        %v2872 = vrot.slane %v2850, %v2871
        %v2874 = vunpack.c.l.s4 1983009808
        %v2875 = vunpack.c.0.s8 %v2874
        %v2876 = vlaneseq
        %v2877 = vshrl.u32 %v2876, 7
        %v2878 = vsub.s32 %v2875, %v2877
        %v2879 = vrot.slane %v2851, %v2878
        %v2880 = vcombine.low %v2858, %v2872
        %v2881 = vcombine.high %v2858, %v2872
        %v2882 = vcombine.low %v2865, %v2879
        %v2883 = vcombine.high %v2865, %v2879
        %v2884 = vcombine.low %v838, %v918
        %v2885 = vcombine.low %v926, %v925
        %v2887 = vunpack.c.l.s4 1983009808
        %v2888 = vunpack.c.0.s8 %v2887
        %v2889 = vlaneseq
        %v2890 = vshrl.u32 %v2889, 7
        %v2891 = vsub.s32 %v2888, %v2890
        %v2892 = vrot.slane %v2884, %v2891
        %v2894 = vunpack.c.l.s4 1983009808
        %v2895 = vunpack.c.0.s8 %v2894
        %v2896 = vlaneseq
        %v2897 = vshrl.u32 %v2896, 7
        %v2898 = vsub.s32 %v2895, %v2897
        %v2899 = vrot.slane %v2885, %v2898
        %v2900 = vcombine.low %v2892, %v2899
        %v2901 = vcombine.low %v874, %v960
        %v2902 = vcombine.high %v874, %v960
        %v2903 = vcombine.low %v961, %v962
        %v2904 = vcombine.high %v961, %v962
        %v2906 = vunpack.c.l.s4 1983009808
        %v2907 = vunpack.c.0.s8 %v2906
        %v2908 = vlaneseq
        %v2909 = vshrl.u32 %v2908, 7
        %v2910 = vsub.s32 %v2907, %v2909
        %v2911 = vrot.slane %v2901, %v2910
        %v2913 = vunpack.c.l.s4 1983009808
        %v2914 = vunpack.c.0.s8 %v2913
        %v2915 = vlaneseq
        %v2916 = vshrl.u32 %v2915, 7
        %v2917 = vsub.s32 %v2914, %v2916
        %v2918 = vrot.slane %v2902, %v2917
        %v2920 = vunpack.c.l.s4 1983009808
        %v2921 = vunpack.c.0.s8 %v2920
        %v2922 = vlaneseq
        %v2923 = vshrl.u32 %v2922, 7
        %v2924 = vsub.s32 %v2921, %v2923
        %v2925 = vrot.slane %v2903, %v2924
        %v2927 = vunpack.c.l.s4 1983009808
        %v2928 = vunpack.c.0.s8 %v2927
        %v2929 = vlaneseq
        %v2930 = vshrl.u32 %v2929, 7
        %v2931 = vsub.s32 %v2928, %v2930
        %v2932 = vrot.slane %v2904, %v2931
        %v2933 = vcombine.low %v2911, %v2925
        %v2934 = vcombine.high %v2911, %v2925
        %v2935 = vcombine.low %v2918, %v2932
        %v2936 = vcombine.high %v2918, %v2932
        %v2937 = vcombine.low %v910, %v996
        %v2938 = vcombine.high %v910, %v996
        %v2939 = vcombine.low %v997, %v998
        %v2940 = vcombine.high %v997, %v998
        %v2942 = vunpack.c.l.s4 1983009808
        %v2943 = vunpack.c.0.s8 %v2942
        %v2944 = vlaneseq
        %v2945 = vshrl.u32 %v2944, 7
        %v2946 = vsub.s32 %v2943, %v2945
        %v2947 = vrot.slane %v2937, %v2946
        %v2949 = vunpack.c.l.s4 1983009808
        %v2950 = vunpack.c.0.s8 %v2949
        %v2951 = vlaneseq
        %v2952 = vshrl.u32 %v2951, 7
        %v2953 = vsub.s32 %v2950, %v2952
        %v2954 = vrot.slane %v2938, %v2953
        %v2956 = vunpack.c.l.s4 1983009808
        %v2957 = vunpack.c.0.s8 %v2956
        %v2958 = vlaneseq
        %v2959 = vshrl.u32 %v2958, 7
        %v2960 = vsub.s32 %v2957, %v2959
        %v2961 = vrot.slane %v2939, %v2960
        %v2963 = vunpack.c.l.s4 1983009808
        %v2964 = vunpack.c.0.s8 %v2963
        %v2965 = vlaneseq
        %v2966 = vshrl.u32 %v2965, 7
        %v2967 = vsub.s32 %v2964, %v2966
        %v2968 = vrot.slane %v2940, %v2967
        %v2969 = vcombine.low %v2947, %v2961
        %v2970 = vcombine.high %v2947, %v2961
        %v2971 = vcombine.low %v2954, %v2968
        %v2972 = vcombine.high %v2954, %v2968
        %v2973 = vcombine.low %v927, %v1007
        %v2974 = vcombine.low %v1015, %v1014
        %v2976 = vunpack.c.l.s4 1983009808
        %v2977 = vunpack.c.0.s8 %v2976
        %v2978 = vlaneseq
        %v2979 = vshrl.u32 %v2978, 7
        %v2980 = vsub.s32 %v2977, %v2979
        %v2981 = vrot.slane %v2973, %v2980
        %v2983 = vunpack.c.l.s4 1983009808
        %v2984 = vunpack.c.0.s8 %v2983
        %v2985 = vlaneseq
        %v2986 = vshrl.u32 %v2985, 7
        %v2987 = vsub.s32 %v2984, %v2986
        %v2988 = vrot.slane %v2974, %v2987
        %v2989 = vcombine.low %v2981, %v2988
        %v2990 = vcombine.low %v963, %v1033
        %v2991 = vcombine.high %v963, %v1033
        %v2992 = vcombine.low %v1074, %v1075
        %v2993 = vcombine.high %v1074, %v1075
        %v2995 = vunpack.c.l.s4 1983009808
        %v2996 = vunpack.c.0.s8 %v2995
        %v2997 = vlaneseq
        %v2998 = vshrl.u32 %v2997, 7
        %v2999 = vsub.s32 %v2996, %v2998
        %v3000 = vrot.slane %v2990, %v2999
        %v3002 = vunpack.c.l.s4 1983009808
        %v3003 = vunpack.c.0.s8 %v3002
        %v3004 = vlaneseq
        %v3005 = vshrl.u32 %v3004, 7
        %v3006 = vsub.s32 %v3003, %v3005
        %v3007 = vrot.slane %v2991, %v3006
        %v3009 = vunpack.c.l.s4 1983009808
        %v3010 = vunpack.c.0.s8 %v3009
        %v3011 = vlaneseq
        %v3012 = vshrl.u32 %v3011, 7
        %v3013 = vsub.s32 %v3010, %v3012
        %v3014 = vrot.slane %v2992, %v3013
        %v3016 = vunpack.c.l.s4 1983009808
        %v3017 = vunpack.c.0.s8 %v3016
        %v3018 = vlaneseq
        %v3019 = vshrl.u32 %v3018, 7
        %v3020 = vsub.s32 %v3017, %v3019
        %v3021 = vrot.slane %v2993, %v3020
        %v3022 = vcombine.low %v3000, %v3014
        %v3023 = vcombine.high %v3000, %v3014
        %v3024 = vcombine.low %v3007, %v3021
        %v3025 = vcombine.high %v3007, %v3021
        %v3026 = vcombine.low %v999, %v1050
        %v3027 = vcombine.high %v999, %v1050
        %v3028 = vcombine.low %v1110, %v1111
        %v3029 = vcombine.high %v1110, %v1111
        %v3031 = vunpack.c.l.s4 1983009808
        %v3032 = vunpack.c.0.s8 %v3031
        %v3033 = vlaneseq
        %v3034 = vshrl.u32 %v3033, 7
        %v3035 = vsub.s32 %v3032, %v3034
        %v3036 = vrot.slane %v3026, %v3035
        %v3038 = vunpack.c.l.s4 1983009808
        %v3039 = vunpack.c.0.s8 %v3038
        %v3040 = vlaneseq
        %v3041 = vshrl.u32 %v3040, 7
        %v3042 = vsub.s32 %v3039, %v3041
        %v3043 = vrot.slane %v3027, %v3042
        %v3045 = vunpack.c.l.s4 1983009808
        %v3046 = vunpack.c.0.s8 %v3045
        %v3047 = vlaneseq
        %v3048 = vshrl.u32 %v3047, 7
        %v3049 = vsub.s32 %v3046, %v3048
        %v3050 = vrot.slane %v3028, %v3049
        %v3052 = vunpack.c.l.s4 1983009808
        %v3053 = vunpack.c.0.s8 %v3052
        %v3054 = vlaneseq
        %v3055 = vshrl.u32 %v3054, 7
        %v3056 = vsub.s32 %v3053, %v3055
        %v3057 = vrot.slane %v3029, %v3056
        %v3058 = vcombine.low %v3036, %v3050
        %v3059 = vcombine.high %v3036, %v3050
        %v3060 = vcombine.low %v3043, %v3057
        %v3061 = vcombine.high %v3043, %v3057
        %v3062 = vcombine.low %v1016, %v1057
        %v3063 = vcombine.low %v1121, %v1129
        %v3065 = vunpack.c.l.s4 1983009808
        %v3066 = vunpack.c.0.s8 %v3065
        %v3067 = vlaneseq
        %v3068 = vshrl.u32 %v3067, 7
        %v3069 = vsub.s32 %v3066, %v3068
        %v3070 = vrot.slane %v3062, %v3069
        %v3072 = vunpack.c.l.s4 1983009808
        %v3073 = vunpack.c.0.s8 %v3072
        %v3074 = vlaneseq
        %v3075 = vshrl.u32 %v3074, 7
        %v3076 = vsub.s32 %v3073, %v3075
        %v3077 = vrot.slane %v3063, %v3076
        %v3078 = vcombine.low %v3070, %v3077
        %v3079 = vcombine.low %v1076, %v1077
        %v3080 = vcombine.high %v1076, %v1077
        %v3081 = vcombine.low %v1147, %v1148
        %v3082 = vcombine.high %v1147, %v1148
        %v3084 = vunpack.c.l.s4 1983009808
        %v3085 = vunpack.c.0.s8 %v3084
        %v3086 = vlaneseq
        %v3087 = vshrl.u32 %v3086, 7
        %v3088 = vsub.s32 %v3085, %v3087
        %v3089 = vrot.slane %v3079, %v3088
        %v3091 = vunpack.c.l.s4 1983009808
        %v3092 = vunpack.c.0.s8 %v3091
        %v3093 = vlaneseq
        %v3094 = vshrl.u32 %v3093, 7
        %v3095 = vsub.s32 %v3092, %v3094
        %v3096 = vrot.slane %v3080, %v3095
        %v3098 = vunpack.c.l.s4 1983009808
        %v3099 = vunpack.c.0.s8 %v3098
        %v3100 = vlaneseq
        %v3101 = vshrl.u32 %v3100, 7
        %v3102 = vsub.s32 %v3099, %v3101
        %v3103 = vrot.slane %v3081, %v3102
        %v3105 = vunpack.c.l.s4 1983009808
        %v3106 = vunpack.c.0.s8 %v3105
        %v3107 = vlaneseq
        %v3108 = vshrl.u32 %v3107, 7
        %v3109 = vsub.s32 %v3106, %v3108
        %v3110 = vrot.slane %v3082, %v3109
        %v3111 = vcombine.low %v3089, %v3103
        %v3112 = vcombine.high %v3089, %v3103
        %v3113 = vcombine.low %v3096, %v3110
        %v3114 = vcombine.high %v3096, %v3110
        %v3115 = vcombine.low %v1112, %v1113
        %v3116 = vcombine.high %v1112, %v1113
        %v3117 = vcombine.low %v1183, %v1184
        %v3118 = vcombine.high %v1183, %v1184
        %v3120 = vunpack.c.l.s4 1983009808
        %v3121 = vunpack.c.0.s8 %v3120
        %v3122 = vlaneseq
        %v3123 = vshrl.u32 %v3122, 7
        %v3124 = vsub.s32 %v3121, %v3123
        %v3125 = vrot.slane %v3115, %v3124
        %v3127 = vunpack.c.l.s4 1983009808
        %v3128 = vunpack.c.0.s8 %v3127
        %v3129 = vlaneseq
        %v3130 = vshrl.u32 %v3129, 7
        %v3131 = vsub.s32 %v3128, %v3130
        %v3132 = vrot.slane %v3116, %v3131
        %v3134 = vunpack.c.l.s4 1983009808
        %v3135 = vunpack.c.0.s8 %v3134
        %v3136 = vlaneseq
        %v3137 = vshrl.u32 %v3136, 7
        %v3138 = vsub.s32 %v3135, %v3137
        %v3139 = vrot.slane %v3117, %v3138
        %v3141 = vunpack.c.l.s4 1983009808
        %v3142 = vunpack.c.0.s8 %v3141
        %v3143 = vlaneseq
        %v3144 = vshrl.u32 %v3143, 7
        %v3145 = vsub.s32 %v3142, %v3144
        %v3146 = vrot.slane %v3118, %v3145
        %v3147 = vcombine.low %v3125, %v3139
        %v3148 = vcombine.high %v3125, %v3139
        %v3149 = vcombine.low %v3132, %v3146
        %v3150 = vcombine.high %v3132, %v3146
        %v3151 = vcombine.low %v1128, %v1130
        %v3152 = vcombine.low %v1194, %v1202
        %v3154 = vunpack.c.l.s4 1983009808
        %v3155 = vunpack.c.0.s8 %v3154
        %v3156 = vlaneseq
        %v3157 = vshrl.u32 %v3156, 7
        %v3158 = vsub.s32 %v3155, %v3157
        %v3159 = vrot.slane %v3151, %v3158
        %v3161 = vunpack.c.l.s4 1983009808
        %v3162 = vunpack.c.0.s8 %v3161
        %v3163 = vlaneseq
        %v3164 = vshrl.u32 %v3163, 7
        %v3165 = vsub.s32 %v3162, %v3164
        %v3166 = vrot.slane %v3152, %v3165
        %v3167 = vcombine.low %v3159, %v3166
        %v3168 = vcombine.low %v1149, %v1150
        %v3169 = vcombine.high %v1149, %v1150
        %v3170 = vcombine.low %v1212, %v1253
        %v3171 = vcombine.high %v1212, %v1253
        %v3173 = vunpack.c.l.s4 1983009808
        %v3174 = vunpack.c.0.s8 %v3173
        %v3175 = vlaneseq
        %v3176 = vshrl.u32 %v3175, 7
        %v3177 = vsub.s32 %v3174, %v3176
        %v3178 = vrot.slane %v3168, %v3177
        %v3180 = vunpack.c.l.s4 1983009808
        %v3181 = vunpack.c.0.s8 %v3180
        %v3182 = vlaneseq
        %v3183 = vshrl.u32 %v3182, 7
        %v3184 = vsub.s32 %v3181, %v3183
        %v3185 = vrot.slane %v3169, %v3184
        %v3187 = vunpack.c.l.s4 1983009808
        %v3188 = vunpack.c.0.s8 %v3187
        %v3189 = vlaneseq
        %v3190 = vshrl.u32 %v3189, 7
        %v3191 = vsub.s32 %v3188, %v3190
        %v3192 = vrot.slane %v3170, %v3191
        %v3194 = vunpack.c.l.s4 1983009808
        %v3195 = vunpack.c.0.s8 %v3194
        %v3196 = vlaneseq
        %v3197 = vshrl.u32 %v3196, 7
        %v3198 = vsub.s32 %v3195, %v3197
        %v3199 = vrot.slane %v3171, %v3198
        %v3200 = vcombine.low %v3178, %v3192
        %v3201 = vcombine.high %v3178, %v3192
        %v3202 = vcombine.low %v3185, %v3199
        %v3203 = vcombine.high %v3185, %v3199
        %v3204 = vcombine.low %v1185, %v1186
        %v3205 = vcombine.high %v1185, %v1186
        %v3206 = vcombine.low %v1229, %v1289
        %v3207 = vcombine.high %v1229, %v1289
        %v3209 = vunpack.c.l.s4 1983009808
        %v3210 = vunpack.c.0.s8 %v3209
        %v3211 = vlaneseq
        %v3212 = vshrl.u32 %v3211, 7
        %v3213 = vsub.s32 %v3210, %v3212
        %v3214 = vrot.slane %v3204, %v3213
        %v3216 = vunpack.c.l.s4 1983009808
        %v3217 = vunpack.c.0.s8 %v3216
        %v3218 = vlaneseq
        %v3219 = vshrl.u32 %v3218, 7
        %v3220 = vsub.s32 %v3217, %v3219
        %v3221 = vrot.slane %v3205, %v3220
        %v3223 = vunpack.c.l.s4 1983009808
        %v3224 = vunpack.c.0.s8 %v3223
        %v3225 = vlaneseq
        %v3226 = vshrl.u32 %v3225, 7
        %v3227 = vsub.s32 %v3224, %v3226
        %v3228 = vrot.slane %v3206, %v3227
        %v3230 = vunpack.c.l.s4 1983009808
        %v3231 = vunpack.c.0.s8 %v3230
        %v3232 = vlaneseq
        %v3233 = vshrl.u32 %v3232, 7
        %v3234 = vsub.s32 %v3231, %v3233
        %v3235 = vrot.slane %v3207, %v3234
        %v3236 = vcombine.low %v3214, %v3228
        %v3237 = vcombine.high %v3214, %v3228
        %v3238 = vcombine.low %v3221, %v3235
        %v3239 = vcombine.high %v3221, %v3235
        %v3240 = vcombine.low %v1201, %v1203
        %v3241 = vcombine.low %v1236, %v1300
        %v3243 = vunpack.c.l.s4 1983009808
        %v3244 = vunpack.c.0.s8 %v3243
        %v3245 = vlaneseq
        %v3246 = vshrl.u32 %v3245, 7
        %v3247 = vsub.s32 %v3244, %v3246
        %v3248 = vrot.slane %v3240, %v3247
        %v3250 = vunpack.c.l.s4 1983009808
        %v3251 = vunpack.c.0.s8 %v3250
        %v3252 = vlaneseq
        %v3253 = vshrl.u32 %v3252, 7
        %v3254 = vsub.s32 %v3251, %v3253
        %v3255 = vrot.slane %v3241, %v3254
        %v3256 = vcombine.low %v3248, %v3255
        %v3257 = vcombine.low %v1254, %v1255
        %v3258 = vcombine.high %v1254, %v1255
        %v3259 = vcombine.low %v1256, %v1326
        %v3260 = vcombine.high %v1256, %v1326
        %v3262 = vunpack.c.l.s4 1983009808
        %v3263 = vunpack.c.0.s8 %v3262
        %v3264 = vlaneseq
        %v3265 = vshrl.u32 %v3264, 7
        %v3266 = vsub.s32 %v3263, %v3265
        %v3267 = vrot.slane %v3257, %v3266
        %v3269 = vunpack.c.l.s4 1983009808
        %v3270 = vunpack.c.0.s8 %v3269
        %v3271 = vlaneseq
        %v3272 = vshrl.u32 %v3271, 7
        %v3273 = vsub.s32 %v3270, %v3272
        %v3274 = vrot.slane %v3258, %v3273
        %v3276 = vunpack.c.l.s4 1983009808
        %v3277 = vunpack.c.0.s8 %v3276
        %v3278 = vlaneseq
        %v3279 = vshrl.u32 %v3278, 7
        %v3280 = vsub.s32 %v3277, %v3279
        %v3281 = vrot.slane %v3259, %v3280
        %v3283 = vunpack.c.l.s4 1983009808
        %v3284 = vunpack.c.0.s8 %v3283
        %v3285 = vlaneseq
        %v3286 = vshrl.u32 %v3285, 7
        %v3287 = vsub.s32 %v3284, %v3286
        %v3288 = vrot.slane %v3260, %v3287
        %v3289 = vcombine.low %v3267, %v3281
        %v3290 = vcombine.high %v3267, %v3281
        %v3291 = vcombine.low %v3274, %v3288
        %v3292 = vcombine.high %v3274, %v3288
        %v3293 = vcombine.low %v1290, %v1291
        %v3294 = vcombine.high %v1290, %v1291
        %v3295 = vcombine.low %v1292, %v1362
        %v3296 = vcombine.high %v1292, %v1362
        %v3298 = vunpack.c.l.s4 1983009808
        %v3299 = vunpack.c.0.s8 %v3298
        %v3300 = vlaneseq
        %v3301 = vshrl.u32 %v3300, 7
        %v3302 = vsub.s32 %v3299, %v3301
        %v3303 = vrot.slane %v3293, %v3302
        %v3305 = vunpack.c.l.s4 1983009808
        %v3306 = vunpack.c.0.s8 %v3305
        %v3307 = vlaneseq
        %v3308 = vshrl.u32 %v3307, 7
        %v3309 = vsub.s32 %v3306, %v3308
        %v3310 = vrot.slane %v3294, %v3309
        %v3312 = vunpack.c.l.s4 1983009808
        %v3313 = vunpack.c.0.s8 %v3312
        %v3314 = vlaneseq
        %v3315 = vshrl.u32 %v3314, 7
        %v3316 = vsub.s32 %v3313, %v3315
        %v3317 = vrot.slane %v3295, %v3316
        %v3319 = vunpack.c.l.s4 1983009808
        %v3320 = vunpack.c.0.s8 %v3319
        %v3321 = vlaneseq
        %v3322 = vshrl.u32 %v3321, 7
        %v3323 = vsub.s32 %v3320, %v3322
        %v3324 = vrot.slane %v3296, %v3323
        %v3325 = vcombine.low %v3303, %v3317
        %v3326 = vcombine.high %v3303, %v3317
        %v3327 = vcombine.low %v3310, %v3324
        %v3328 = vcombine.high %v3310, %v3324
        %v3329 = vcombine.low %v1308, %v1307
        %v3330 = vcombine.low %v1309, %v1373
        %v3332 = vunpack.c.l.s4 1983009808
        %v3333 = vunpack.c.0.s8 %v3332
        %v3334 = vlaneseq
        %v3335 = vshrl.u32 %v3334, 7
        %v3336 = vsub.s32 %v3333, %v3335
        %v3337 = vrot.slane %v3329, %v3336
        %v3339 = vunpack.c.l.s4 1983009808
        %v3340 = vunpack.c.0.s8 %v3339
        %v3341 = vlaneseq
        %v3342 = vshrl.u32 %v3341, 7
        %v3343 = vsub.s32 %v3340, %v3342
        %v3344 = vrot.slane %v3330, %v3343
        %v3345 = vcombine.low %v3337, %v3344
        %v3346 = vcombine.low %v1327, %v1328
        %v3347 = vcombine.high %v1327, %v1328
        %v3348 = vcombine.low %v1329, %v1391
        %v3349 = vcombine.high %v1329, %v1391
        %v3351 = vunpack.c.l.s4 1983009808
        %v3352 = vunpack.c.0.s8 %v3351
        %v3353 = vlaneseq
        %v3354 = vshrl.u32 %v3353, 7
        %v3355 = vsub.s32 %v3352, %v3354
        %v3356 = vrot.slane %v3346, %v3355
        %v3358 = vunpack.c.l.s4 1983009808
        %v3359 = vunpack.c.0.s8 %v3358
        %v3360 = vlaneseq
        %v3361 = vshrl.u32 %v3360, 7
        %v3362 = vsub.s32 %v3359, %v3361
        %v3363 = vrot.slane %v3347, %v3362
        %v3365 = vunpack.c.l.s4 1983009808
        %v3366 = vunpack.c.0.s8 %v3365
        %v3367 = vlaneseq
        %v3368 = vshrl.u32 %v3367, 7
        %v3369 = vsub.s32 %v3366, %v3368
        %v3370 = vrot.slane %v3348, %v3369
        %v3372 = vunpack.c.l.s4 1983009808
        %v3373 = vunpack.c.0.s8 %v3372
        %v3374 = vlaneseq
        %v3375 = vshrl.u32 %v3374, 7
        %v3376 = vsub.s32 %v3373, %v3375
        %v3377 = vrot.slane %v3349, %v3376
        %v3378 = vcombine.low %v3356, %v3370
        %v3379 = vcombine.high %v3356, %v3370
        %v3380 = vcombine.low %v3363, %v3377
        %v3381 = vcombine.high %v3363, %v3377
        %v3382 = vcombine.low %v1363, %v1364
        %v3383 = vcombine.high %v1363, %v1364
        %v3384 = vcombine.low %v1365, %v1408
        %v3385 = vcombine.high %v1365, %v1408
        %v3387 = vunpack.c.l.s4 1983009808
        %v3388 = vunpack.c.0.s8 %v3387
        %v3389 = vlaneseq
        %v3390 = vshrl.u32 %v3389, 7
        %v3391 = vsub.s32 %v3388, %v3390
        %v3392 = vrot.slane %v3382, %v3391
        %v3394 = vunpack.c.l.s4 1983009808
        %v3395 = vunpack.c.0.s8 %v3394
        %v3396 = vlaneseq
        %v3397 = vshrl.u32 %v3396, 7
        %v3398 = vsub.s32 %v3395, %v3397
        %v3399 = vrot.slane %v3383, %v3398
        %v3401 = vunpack.c.l.s4 1983009808
        %v3402 = vunpack.c.0.s8 %v3401
        %v3403 = vlaneseq
        %v3404 = vshrl.u32 %v3403, 7
        %v3405 = vsub.s32 %v3402, %v3404
        %v3406 = vrot.slane %v3384, %v3405
        %v3408 = vunpack.c.l.s4 1983009808
        %v3409 = vunpack.c.0.s8 %v3408
        %v3410 = vlaneseq
        %v3411 = vshrl.u32 %v3410, 7
        %v3412 = vsub.s32 %v3409, %v3411
        %v3413 = vrot.slane %v3385, %v3412
        %v3414 = vcombine.low %v3392, %v3406
        %v3415 = vcombine.high %v3392, %v3406
        %v3416 = vcombine.low %v3399, %v3413
        %v3417 = vcombine.high %v3399, %v3413
        %v3418 = vcombine.low %v1381, %v1380
        %v3419 = vcombine.low %v1382, %v1415
        %v3421 = vunpack.c.l.s4 1983009808
        %v3422 = vunpack.c.0.s8 %v3421
        %v3423 = vlaneseq
        %v3424 = vshrl.u32 %v3423, 7
        %v3425 = vsub.s32 %v3422, %v3424
        %v3426 = vrot.slane %v3418, %v3425
        %v3428 = vunpack.c.l.s4 1983009808
        %v3429 = vunpack.c.0.s8 %v3428
        %v3430 = vlaneseq
        %v3431 = vshrl.u32 %v3430, 7
        %v3432 = vsub.s32 %v3429, %v3431
        %v3433 = vrot.slane %v3419, %v3432
        %v3434 = vcombine.low %v3426, %v3433
        %v3435 = vcombine.low %v1432, %v1433
        %v3436 = vcombine.high %v1432, %v1433
        %v3437 = vcombine.low %v1434, %v1435
        %v3438 = vcombine.high %v1434, %v1435
        %v3440 = vunpack.c.l.s4 1983009808
        %v3441 = vunpack.c.0.s8 %v3440
        %v3442 = vlaneseq
        %v3443 = vshrl.u32 %v3442, 7
        %v3444 = vsub.s32 %v3441, %v3443
        %v3445 = vrot.slane %v3435, %v3444
        %v3447 = vunpack.c.l.s4 1983009808
        %v3448 = vunpack.c.0.s8 %v3447
        %v3449 = vlaneseq
        %v3450 = vshrl.u32 %v3449, 7
        %v3451 = vsub.s32 %v3448, %v3450
        %v3452 = vrot.slane %v3436, %v3451
        %v3454 = vunpack.c.l.s4 1983009808
        %v3455 = vunpack.c.0.s8 %v3454
        %v3456 = vlaneseq
        %v3457 = vshrl.u32 %v3456, 7
        %v3458 = vsub.s32 %v3455, %v3457
        %v3459 = vrot.slane %v3437, %v3458
        %v3461 = vunpack.c.l.s4 1983009808
        %v3462 = vunpack.c.0.s8 %v3461
        %v3463 = vlaneseq
        %v3464 = vshrl.u32 %v3463, 7
        %v3465 = vsub.s32 %v3462, %v3464
        %v3466 = vrot.slane %v3438, %v3465
        %v3467 = vcombine.low %v3445, %v3459
        %v3468 = vcombine.high %v3445, %v3459
        %v3469 = vcombine.low %v3452, %v3466
        %v3470 = vcombine.high %v3452, %v3466
        %v3471 = vcombine.low %v1468, %v1469
        %v3472 = vcombine.high %v1468, %v1469
        %v3473 = vcombine.low %v1470, %v1471
        %v3474 = vcombine.high %v1470, %v1471
        %v3476 = vunpack.c.l.s4 1983009808
        %v3477 = vunpack.c.0.s8 %v3476
        %v3478 = vlaneseq
        %v3479 = vshrl.u32 %v3478, 7
        %v3480 = vsub.s32 %v3477, %v3479
        %v3481 = vrot.slane %v3471, %v3480
        %v3483 = vunpack.c.l.s4 1983009808
        %v3484 = vunpack.c.0.s8 %v3483
        %v3485 = vlaneseq
        %v3486 = vshrl.u32 %v3485, 7
        %v3487 = vsub.s32 %v3484, %v3486
        %v3488 = vrot.slane %v3472, %v3487
        %v3490 = vunpack.c.l.s4 1983009808
        %v3491 = vunpack.c.0.s8 %v3490
        %v3492 = vlaneseq
        %v3493 = vshrl.u32 %v3492, 7
        %v3494 = vsub.s32 %v3491, %v3493
        %v3495 = vrot.slane %v3473, %v3494
        %v3497 = vunpack.c.l.s4 1983009808
        %v3498 = vunpack.c.0.s8 %v3497
        %v3499 = vlaneseq
        %v3500 = vshrl.u32 %v3499, 7
        %v3501 = vsub.s32 %v3498, %v3500
        %v3502 = vrot.slane %v3474, %v3501
        %v3503 = vcombine.low %v3481, %v3495
        %v3504 = vcombine.high %v3481, %v3495
        %v3505 = vcombine.low %v3488, %v3502
        %v3506 = vcombine.high %v3488, %v3502
        %v3507 = vcombine.low %v1479, %v1487
        %v3508 = vcombine.low %v1486, %v1488
        %v3510 = vunpack.c.l.s4 1983009808
        %v3511 = vunpack.c.0.s8 %v3510
        %v3512 = vlaneseq
        %v3513 = vshrl.u32 %v3512, 7
        %v3514 = vsub.s32 %v3511, %v3513
        %v3515 = vrot.slane %v3507, %v3514
        %v3517 = vunpack.c.l.s4 1983009808
        %v3518 = vunpack.c.0.s8 %v3517
        %v3519 = vlaneseq
        %v3520 = vshrl.u32 %v3519, 7
        %v3521 = vsub.s32 %v3518, %v3520
        %v3522 = vrot.slane %v3508, %v3521
        %v3523 = vcombine.low %v3515, %v3522
        %v3524 = vcombine.low %v1505, %v1506
        %v3525 = vcombine.high %v1505, %v1506
        %v3526 = vcombine.low %v1507, %v1508
        %v3527 = vcombine.high %v1507, %v1508
        %v3529 = vunpack.c.l.s4 1983009808
        %v3530 = vunpack.c.0.s8 %v3529
        %v3531 = vlaneseq
        %v3532 = vshrl.u32 %v3531, 7
        %v3533 = vsub.s32 %v3530, %v3532
        %v3534 = vrot.slane %v3524, %v3533
        %v3536 = vunpack.c.l.s4 1983009808
        %v3537 = vunpack.c.0.s8 %v3536
        %v3538 = vlaneseq
        %v3539 = vshrl.u32 %v3538, 7
        %v3540 = vsub.s32 %v3537, %v3539
        %v3541 = vrot.slane %v3525, %v3540
        %v3543 = vunpack.c.l.s4 1983009808
        %v3544 = vunpack.c.0.s8 %v3543
        %v3545 = vlaneseq
        %v3546 = vshrl.u32 %v3545, 7
        %v3547 = vsub.s32 %v3544, %v3546
        %v3548 = vrot.slane %v3526, %v3547
        %v3550 = vunpack.c.l.s4 1983009808
        %v3551 = vunpack.c.0.s8 %v3550
        %v3552 = vlaneseq
        %v3553 = vshrl.u32 %v3552, 7
        %v3554 = vsub.s32 %v3551, %v3553
        %v3555 = vrot.slane %v3527, %v3554
        %v3556 = vcombine.low %v3534, %v3548
        %v3557 = vcombine.high %v3534, %v3548
        %v3558 = vcombine.low %v3541, %v3555
        %v3559 = vcombine.high %v3541, %v3555
        %v3560 = vcombine.low %v1541, %v1542
        %v3561 = vcombine.high %v1541, %v1542
        %v3562 = vcombine.low %v1543, %v1544
        %v3563 = vcombine.high %v1543, %v1544
        %v3565 = vunpack.c.l.s4 1983009808
        %v3566 = vunpack.c.0.s8 %v3565
        %v3567 = vlaneseq
        %v3568 = vshrl.u32 %v3567, 7
        %v3569 = vsub.s32 %v3566, %v3568
        %v3570 = vrot.slane %v3560, %v3569
        %v3572 = vunpack.c.l.s4 1983009808
        %v3573 = vunpack.c.0.s8 %v3572
        %v3574 = vlaneseq
        %v3575 = vshrl.u32 %v3574, 7
        %v3576 = vsub.s32 %v3573, %v3575
        %v3577 = vrot.slane %v3561, %v3576
        %v3579 = vunpack.c.l.s4 1983009808
        %v3580 = vunpack.c.0.s8 %v3579
        %v3581 = vlaneseq
        %v3582 = vshrl.u32 %v3581, 7
        %v3583 = vsub.s32 %v3580, %v3582
        %v3584 = vrot.slane %v3562, %v3583
        %v3586 = vunpack.c.l.s4 1983009808
        %v3587 = vunpack.c.0.s8 %v3586
        %v3588 = vlaneseq
        %v3589 = vshrl.u32 %v3588, 7
        %v3590 = vsub.s32 %v3587, %v3589
        %v3591 = vrot.slane %v3563, %v3590
        %v3592 = vcombine.low %v3570, %v3584
        %v3593 = vcombine.high %v3570, %v3584
        %v3594 = vcombine.low %v3577, %v3591
        %v3595 = vcombine.high %v3577, %v3591
        %v3596 = vcombine.low %v1552, %v1560
        %v3597 = vcombine.low %v1559, %v1561
        %v3599 = vunpack.c.l.s4 1983009808
        %v3600 = vunpack.c.0.s8 %v3599
        %v3601 = vlaneseq
        %v3602 = vshrl.u32 %v3601, 7
        %v3603 = vsub.s32 %v3600, %v3602
        %v3604 = vrot.slane %v3596, %v3603
        %v3606 = vunpack.c.l.s4 1983009808
        %v3607 = vunpack.c.0.s8 %v3606
        %v3608 = vlaneseq
        %v3609 = vshrl.u32 %v3608, 7
        %v3610 = vsub.s32 %v3607, %v3609
        %v3611 = vrot.slane %v3597, %v3610
        %v3612 = vcombine.low %v3604, %v3611
        %v3613 = vcombine.low %v1570, %v1611
        %v3614 = vcombine.high %v1570, %v1611
        %v3615 = vcombine.low %v1612, %v1613
        %v3616 = vcombine.high %v1612, %v1613
        %v3618 = vunpack.c.l.s4 1983009808
        %v3619 = vunpack.c.0.s8 %v3618
        %v3620 = vlaneseq
        %v3621 = vshrl.u32 %v3620, 7
        %v3622 = vsub.s32 %v3619, %v3621
        %v3623 = vrot.slane %v3613, %v3622
        %v3625 = vunpack.c.l.s4 1983009808
        %v3626 = vunpack.c.0.s8 %v3625
        %v3627 = vlaneseq
        %v3628 = vshrl.u32 %v3627, 7
        %v3629 = vsub.s32 %v3626, %v3628
        %v3630 = vrot.slane %v3614, %v3629
        %v3632 = vunpack.c.l.s4 1983009808
        %v3633 = vunpack.c.0.s8 %v3632
        %v3634 = vlaneseq
        %v3635 = vshrl.u32 %v3634, 7
        %v3636 = vsub.s32 %v3633, %v3635
        %v3637 = vrot.slane %v3615, %v3636
        %v3639 = vunpack.c.l.s4 1983009808
        %v3640 = vunpack.c.0.s8 %v3639
        %v3641 = vlaneseq
        %v3642 = vshrl.u32 %v3641, 7
        %v3643 = vsub.s32 %v3640, %v3642
        %v3644 = vrot.slane %v3616, %v3643
        %v3645 = vcombine.low %v3623, %v3637
        %v3646 = vcombine.high %v3623, %v3637
        %v3647 = vcombine.low %v3630, %v3644
        %v3648 = vcombine.high %v3630, %v3644
        %v3649 = vcombine.low %v1587, %v1647
        %v3650 = vcombine.high %v1587, %v1647
        %v3651 = vcombine.low %v1648, %v1649
        %v3652 = vcombine.high %v1648, %v1649
        %v3654 = vunpack.c.l.s4 1983009808
        %v3655 = vunpack.c.0.s8 %v3654
        %v3656 = vlaneseq
        %v3657 = vshrl.u32 %v3656, 7
        %v3658 = vsub.s32 %v3655, %v3657
        %v3659 = vrot.slane %v3649, %v3658
        %v3661 = vunpack.c.l.s4 1983009808
        %v3662 = vunpack.c.0.s8 %v3661
        %v3663 = vlaneseq
        %v3664 = vshrl.u32 %v3663, 7
        %v3665 = vsub.s32 %v3662, %v3664
        %v3666 = vrot.slane %v3650, %v3665
        %v3668 = vunpack.c.l.s4 1983009808
        %v3669 = vunpack.c.0.s8 %v3668
        %v3670 = vlaneseq
        %v3671 = vshrl.u32 %v3670, 7
        %v3672 = vsub.s32 %v3669, %v3671
        %v3673 = vrot.slane %v3651, %v3672
        %v3675 = vunpack.c.l.s4 1983009808
        %v3676 = vunpack.c.0.s8 %v3675
        %v3677 = vlaneseq
        %v3678 = vshrl.u32 %v3677, 7
        %v3679 = vsub.s32 %v3676, %v3678
        %v3680 = vrot.slane %v3652, %v3679
        %v3681 = vcombine.low %v3659, %v3673
        %v3682 = vcombine.high %v3659, %v3673
        %v3683 = vcombine.low %v3666, %v3680
        %v3684 = vcombine.high %v3666, %v3680
        %v3685 = vcombine.low %v1594, %v1658
        %v3686 = vcombine.low %v1666, %v1665
        %v3688 = vunpack.c.l.s4 1983009808
        %v3689 = vunpack.c.0.s8 %v3688
        %v3690 = vlaneseq
        %v3691 = vshrl.u32 %v3690, 7
        %v3692 = vsub.s32 %v3689, %v3691
        %v3693 = vrot.slane %v3685, %v3692
        %v3695 = vunpack.c.l.s4 1983009808
        %v3696 = vunpack.c.0.s8 %v3695
        %v3697 = vlaneseq
        %v3698 = vshrl.u32 %v3697, 7
        %v3699 = vsub.s32 %v3696, %v3698
        %v3700 = vrot.slane %v3686, %v3699
        %v3701 = vcombine.low %v3693, %v3700
        %v3702 = vcombine.low %v1614, %v1684
        %v3703 = vcombine.high %v1614, %v1684
        %v3704 = vcombine.low %v1685, %v1686
        %v3705 = vcombine.high %v1685, %v1686
        %v3707 = vunpack.c.l.s4 1983009808
        %v3708 = vunpack.c.0.s8 %v3707
        %v3709 = vlaneseq
        %v3710 = vshrl.u32 %v3709, 7
        %v3711 = vsub.s32 %v3708, %v3710
        %v3712 = vrot.slane %v3702, %v3711
        %v3714 = vunpack.c.l.s4 1983009808
        %v3715 = vunpack.c.0.s8 %v3714
        %v3716 = vlaneseq
        %v3717 = vshrl.u32 %v3716, 7
        %v3718 = vsub.s32 %v3715, %v3717
        %v3719 = vrot.slane %v3703, %v3718
        %v3721 = vunpack.c.l.s4 1983009808
        %v3722 = vunpack.c.0.s8 %v3721
        %v3723 = vlaneseq
        %v3724 = vshrl.u32 %v3723, 7
        %v3725 = vsub.s32 %v3722, %v3724
        %v3726 = vrot.slane %v3704, %v3725
        %v3728 = vunpack.c.l.s4 1983009808
        %v3729 = vunpack.c.0.s8 %v3728
        %v3730 = vlaneseq
        %v3731 = vshrl.u32 %v3730, 7
        %v3732 = vsub.s32 %v3729, %v3731
        %v3733 = vrot.slane %v3705, %v3732
        %v3734 = vcombine.low %v3712, %v3726
        %v3735 = vcombine.high %v3712, %v3726
        %v3736 = vcombine.low %v3719, %v3733
        %v3737 = vcombine.high %v3719, %v3733
        %v3738 = vcombine.low %v1650, %v1720
        %v3739 = vcombine.high %v1650, %v1720
        %v3740 = vcombine.low %v1721, %v1722
        %v3741 = vcombine.high %v1721, %v1722
        %v3743 = vunpack.c.l.s4 1983009808
        %v3744 = vunpack.c.0.s8 %v3743
        %v3745 = vlaneseq
        %v3746 = vshrl.u32 %v3745, 7
        %v3747 = vsub.s32 %v3744, %v3746
        %v3748 = vrot.slane %v3738, %v3747
        %v3750 = vunpack.c.l.s4 1983009808
        %v3751 = vunpack.c.0.s8 %v3750
        %v3752 = vlaneseq
        %v3753 = vshrl.u32 %v3752, 7
        %v3754 = vsub.s32 %v3751, %v3753
        %v3755 = vrot.slane %v3739, %v3754
        %v3757 = vunpack.c.l.s4 1983009808
        %v3758 = vunpack.c.0.s8 %v3757
        %v3759 = vlaneseq
        %v3760 = vshrl.u32 %v3759, 7
        %v3761 = vsub.s32 %v3758, %v3760
        %v3762 = vrot.slane %v3740, %v3761
        %v3764 = vunpack.c.l.s4 1983009808
        %v3765 = vunpack.c.0.s8 %v3764
        %v3766 = vlaneseq
        %v3767 = vshrl.u32 %v3766, 7
        %v3768 = vsub.s32 %v3765, %v3767
        %v3769 = vrot.slane %v3741, %v3768
        %v3770 = vcombine.low %v3748, %v3762
        %v3771 = vcombine.high %v3748, %v3762
        %v3772 = vcombine.low %v3755, %v3769
        %v3773 = vcombine.high %v3755, %v3769
        %v3774 = vcombine.low %v1667, %v1731
        %v3775 = vcombine.low %v1739, %v1738
        %v3777 = vunpack.c.l.s4 1983009808
        %v3778 = vunpack.c.0.s8 %v3777
        %v3779 = vlaneseq
        %v3780 = vshrl.u32 %v3779, 7
        %v3781 = vsub.s32 %v3778, %v3780
        %v3782 = vrot.slane %v3774, %v3781
        %v3784 = vunpack.c.l.s4 1983009808
        %v3785 = vunpack.c.0.s8 %v3784
        %v3786 = vlaneseq
        %v3787 = vshrl.u32 %v3786, 7
        %v3788 = vsub.s32 %v3785, %v3787
        %v3789 = vrot.slane %v3775, %v3788
        %v3790 = vcombine.low %v3782, %v3789
        %v3791 = vcombine.low %v1687, %v1749
        %v3792 = vcombine.high %v1687, %v1749
        %v3793 = vcombine.low %v1790, %v1791
        %v3794 = vcombine.high %v1790, %v1791
        %v3796 = vunpack.c.l.s4 1983009808
        %v3797 = vunpack.c.0.s8 %v3796
        %v3798 = vlaneseq
        %v3799 = vshrl.u32 %v3798, 7
        %v3800 = vsub.s32 %v3797, %v3799
        %v3801 = vrot.slane %v3791, %v3800
        %v3803 = vunpack.c.l.s4 1983009808
        %v3804 = vunpack.c.0.s8 %v3803
        %v3805 = vlaneseq
        %v3806 = vshrl.u32 %v3805, 7
        %v3807 = vsub.s32 %v3804, %v3806
        %v3808 = vrot.slane %v3792, %v3807
        %v3810 = vunpack.c.l.s4 1983009808
        %v3811 = vunpack.c.0.s8 %v3810
        %v3812 = vlaneseq
        %v3813 = vshrl.u32 %v3812, 7
        %v3814 = vsub.s32 %v3811, %v3813
        %v3815 = vrot.slane %v3793, %v3814
        %v3817 = vunpack.c.l.s4 1983009808
        %v3818 = vunpack.c.0.s8 %v3817
        %v3819 = vlaneseq
        %v3820 = vshrl.u32 %v3819, 7
        %v3821 = vsub.s32 %v3818, %v3820
        %v3822 = vrot.slane %v3794, %v3821
        %v3823 = vcombine.low %v3801, %v3815
        %v3824 = vcombine.high %v3801, %v3815
        %v3825 = vcombine.low %v3808, %v3822
        %v3826 = vcombine.high %v3808, %v3822
        %v3827 = vcombine.low %v1723, %v1766
        %v3828 = vcombine.high %v1723, %v1766
        %v3829 = vcombine.low %v1826, %v1827
        %v3830 = vcombine.high %v1826, %v1827
        %v3832 = vunpack.c.l.s4 1983009808
        %v3833 = vunpack.c.0.s8 %v3832
        %v3834 = vlaneseq
        %v3835 = vshrl.u32 %v3834, 7
        %v3836 = vsub.s32 %v3833, %v3835
        %v3837 = vrot.slane %v3827, %v3836
        %v3839 = vunpack.c.l.s4 1983009808
        %v3840 = vunpack.c.0.s8 %v3839
        %v3841 = vlaneseq
        %v3842 = vshrl.u32 %v3841, 7
        %v3843 = vsub.s32 %v3840, %v3842
        %v3844 = vrot.slane %v3828, %v3843
        %v3846 = vunpack.c.l.s4 1983009808
        %v3847 = vunpack.c.0.s8 %v3846
        %v3848 = vlaneseq
        %v3849 = vshrl.u32 %v3848, 7
        %v3850 = vsub.s32 %v3847, %v3849
        %v3851 = vrot.slane %v3829, %v3850
        %v3853 = vunpack.c.l.s4 1983009808
        %v3854 = vunpack.c.0.s8 %v3853
        %v3855 = vlaneseq
        %v3856 = vshrl.u32 %v3855, 7
        %v3857 = vsub.s32 %v3854, %v3856
        %v3858 = vrot.slane %v3830, %v3857
        %v3859 = vcombine.low %v3837, %v3851
        %v3860 = vcombine.high %v3837, %v3851
        %v3861 = vcombine.low %v3844, %v3858
        %v3862 = vcombine.high %v3844, %v3858
        %v3863 = vcombine.low %v1740, %v1773
        %v3864 = vcombine.low %v1837, %v1845
        %v3866 = vunpack.c.l.s4 1983009808
        %v3867 = vunpack.c.0.s8 %v3866
        %v3868 = vlaneseq
        %v3869 = vshrl.u32 %v3868, 7
        %v3870 = vsub.s32 %v3867, %v3869
        %v3871 = vrot.slane %v3863, %v3870
        %v3873 = vunpack.c.l.s4 1983009808
        %v3874 = vunpack.c.0.s8 %v3873
        %v3875 = vlaneseq
        %v3876 = vshrl.u32 %v3875, 7
        %v3877 = vsub.s32 %v3874, %v3876
        %v3878 = vrot.slane %v3864, %v3877
        %v3879 = vcombine.low %v3871, %v3878
        %v3880 = vcombine.low %v1792, %v1793
        %v3881 = vcombine.high %v1792, %v1793
        %v3882 = vcombine.low %v1863, %v1864
        %v3883 = vcombine.high %v1863, %v1864
        %v3885 = vunpack.c.l.s4 1983009808
        %v3886 = vunpack.c.0.s8 %v3885
        %v3887 = vlaneseq
        %v3888 = vshrl.u32 %v3887, 7
        %v3889 = vsub.s32 %v3886, %v3888
        %v3890 = vrot.slane %v3880, %v3889
        %v3892 = vunpack.c.l.s4 1983009808
        %v3893 = vunpack.c.0.s8 %v3892
        %v3894 = vlaneseq
        %v3895 = vshrl.u32 %v3894, 7
        %v3896 = vsub.s32 %v3893, %v3895
        %v3897 = vrot.slane %v3881, %v3896
        %v3899 = vunpack.c.l.s4 1983009808
        %v3900 = vunpack.c.0.s8 %v3899
        %v3901 = vlaneseq
        %v3902 = vshrl.u32 %v3901, 7
        %v3903 = vsub.s32 %v3900, %v3902
        %v3904 = vrot.slane %v3882, %v3903
        %v3906 = vunpack.c.l.s4 1983009808
        %v3907 = vunpack.c.0.s8 %v3906
        %v3908 = vlaneseq
        %v3909 = vshrl.u32 %v3908, 7
        %v3910 = vsub.s32 %v3907, %v3909
        %v3911 = vrot.slane %v3883, %v3910
        %v3912 = vcombine.low %v3890, %v3904
        %v3913 = vcombine.high %v3890, %v3904
        %v3914 = vcombine.low %v3897, %v3911
        %v3915 = vcombine.high %v3897, %v3911
        %v3916 = vcombine.low %v1828, %v1829
        %v3917 = vcombine.high %v1828, %v1829
        %v3918 = vcombine.low %v1899, %v1900
        %v3919 = vcombine.high %v1899, %v1900
        %v3921 = vunpack.c.l.s4 1983009808
        %v3922 = vunpack.c.0.s8 %v3921
        %v3923 = vlaneseq
        %v3924 = vshrl.u32 %v3923, 7
        %v3925 = vsub.s32 %v3922, %v3924
        %v3926 = vrot.slane %v3916, %v3925
        %v3928 = vunpack.c.l.s4 1983009808
        %v3929 = vunpack.c.0.s8 %v3928
        %v3930 = vlaneseq
        %v3931 = vshrl.u32 %v3930, 7
        %v3932 = vsub.s32 %v3929, %v3931
        %v3933 = vrot.slane %v3917, %v3932
        %v3935 = vunpack.c.l.s4 1983009808
        %v3936 = vunpack.c.0.s8 %v3935
        %v3937 = vlaneseq
        %v3938 = vshrl.u32 %v3937, 7
        %v3939 = vsub.s32 %v3936, %v3938
        %v3940 = vrot.slane %v3918, %v3939
        %v3942 = vunpack.c.l.s4 1983009808
        %v3943 = vunpack.c.0.s8 %v3942
        %v3944 = vlaneseq
        %v3945 = vshrl.u32 %v3944, 7
        %v3946 = vsub.s32 %v3943, %v3945
        %v3947 = vrot.slane %v3919, %v3946
        %v3948 = vcombine.low %v3926, %v3940
        %v3949 = vcombine.high %v3926, %v3940
        %v3950 = vcombine.low %v3933, %v3947
        %v3951 = vcombine.high %v3933, %v3947
        %v3952 = vcombine.low %v1844, %v1846
        %v3953 = vcombine.low %v1910, %v1918
        %v3955 = vunpack.c.l.s4 1983009808
        %v3956 = vunpack.c.0.s8 %v3955
        %v3957 = vlaneseq
        %v3958 = vshrl.u32 %v3957, 7
        %v3959 = vsub.s32 %v3956, %v3958
        %v3960 = vrot.slane %v3952, %v3959
        %v3962 = vunpack.c.l.s4 1983009808
        %v3963 = vunpack.c.0.s8 %v3962
        %v3964 = vlaneseq
        %v3965 = vshrl.u32 %v3964, 7
        %v3966 = vsub.s32 %v3963, %v3965
        %v3967 = vrot.slane %v3953, %v3966
        %v3968 = vcombine.low %v3960, %v3967
        %v3969 = vcombine.low %v1865, %v1866
        %v3970 = vcombine.high %v1865, %v1866
        %v3971 = vcombine.low %v1928, %v1969
        %v3972 = vcombine.high %v1928, %v1969
        %v3974 = vunpack.c.l.s4 1983009808
        %v3975 = vunpack.c.0.s8 %v3974
        %v3976 = vlaneseq
        %v3977 = vshrl.u32 %v3976, 7
        %v3978 = vsub.s32 %v3975, %v3977
        %v3979 = vrot.slane %v3969, %v3978
        %v3981 = vunpack.c.l.s4 1983009808
        %v3982 = vunpack.c.0.s8 %v3981
        %v3983 = vlaneseq
        %v3984 = vshrl.u32 %v3983, 7
        %v3985 = vsub.s32 %v3982, %v3984
        %v3986 = vrot.slane %v3970, %v3985
        %v3988 = vunpack.c.l.s4 1983009808
        %v3989 = vunpack.c.0.s8 %v3988
        %v3990 = vlaneseq
        %v3991 = vshrl.u32 %v3990, 7
        %v3992 = vsub.s32 %v3989, %v3991
        %v3993 = vrot.slane %v3971, %v3992
        %v3995 = vunpack.c.l.s4 1983009808
        %v3996 = vunpack.c.0.s8 %v3995
        %v3997 = vlaneseq
        %v3998 = vshrl.u32 %v3997, 7
        %v3999 = vsub.s32 %v3996, %v3998
        %v4000 = vrot.slane %v3972, %v3999
        %v4001 = vcombine.low %v3979, %v3993
        %v4002 = vcombine.high %v3979, %v3993
        %v4003 = vcombine.low %v3986, %v4000
        %v4004 = vcombine.high %v3986, %v4000
        %v4005 = vcombine.low %v1901, %v1902
        %v4006 = vcombine.high %v1901, %v1902
        %v4007 = vcombine.low %v1945, %v2005
        %v4008 = vcombine.high %v1945, %v2005
        %v4010 = vunpack.c.l.s4 1983009808
        %v4011 = vunpack.c.0.s8 %v4010
        %v4012 = vlaneseq
        %v4013 = vshrl.u32 %v4012, 7
        %v4014 = vsub.s32 %v4011, %v4013
        %v4015 = vrot.slane %v4005, %v4014
        %v4017 = vunpack.c.l.s4 1983009808
        %v4018 = vunpack.c.0.s8 %v4017
        %v4019 = vlaneseq
        %v4020 = vshrl.u32 %v4019, 7
        %v4021 = vsub.s32 %v4018, %v4020
        %v4022 = vrot.slane %v4006, %v4021
        %v4024 = vunpack.c.l.s4 1983009808
        %v4025 = vunpack.c.0.s8 %v4024
        %v4026 = vlaneseq
        %v4027 = vshrl.u32 %v4026, 7
        %v4028 = vsub.s32 %v4025, %v4027
        %v4029 = vrot.slane %v4007, %v4028
        %v4031 = vunpack.c.l.s4 1983009808
        %v4032 = vunpack.c.0.s8 %v4031
        %v4033 = vlaneseq
        %v4034 = vshrl.u32 %v4033, 7
        %v4035 = vsub.s32 %v4032, %v4034
        %v4036 = vrot.slane %v4008, %v4035
        %v4037 = vcombine.low %v4015, %v4029
        %v4038 = vcombine.high %v4015, %v4029
        %v4039 = vcombine.low %v4022, %v4036
        %v4040 = vcombine.high %v4022, %v4036
        %v4041 = vcombine.low %v1917, %v1919
        %v4042 = vcombine.low %v1952, %v2016
        %v4044 = vunpack.c.l.s4 1983009808
        %v4045 = vunpack.c.0.s8 %v4044
        %v4046 = vlaneseq
        %v4047 = vshrl.u32 %v4046, 7
        %v4048 = vsub.s32 %v4045, %v4047
        %v4049 = vrot.slane %v4041, %v4048
        %v4051 = vunpack.c.l.s4 1983009808
        %v4052 = vunpack.c.0.s8 %v4051
        %v4053 = vlaneseq
        %v4054 = vshrl.u32 %v4053, 7
        %v4055 = vsub.s32 %v4052, %v4054
        %v4056 = vrot.slane %v4042, %v4055
        %v4057 = vcombine.low %v4049, %v4056
        %v4058 = vcombine.low %v1970, %v1971
        %v4059 = vcombine.high %v1970, %v1971
        %v4060 = vcombine.low %v1972, %v2042
        %v4061 = vcombine.high %v1972, %v2042
        %v4063 = vunpack.c.l.s4 1983009808
        %v4064 = vunpack.c.0.s8 %v4063
        %v4065 = vlaneseq
        %v4066 = vshrl.u32 %v4065, 7
        %v4067 = vsub.s32 %v4064, %v4066
        %v4068 = vrot.slane %v4058, %v4067
        %v4070 = vunpack.c.l.s4 1983009808
        %v4071 = vunpack.c.0.s8 %v4070
        %v4072 = vlaneseq
        %v4073 = vshrl.u32 %v4072, 7
        %v4074 = vsub.s32 %v4071, %v4073
        %v4075 = vrot.slane %v4059, %v4074
        %v4077 = vunpack.c.l.s4 1983009808
        %v4078 = vunpack.c.0.s8 %v4077
        %v4079 = vlaneseq
        %v4080 = vshrl.u32 %v4079, 7
        %v4081 = vsub.s32 %v4078, %v4080
        %v4082 = vrot.slane %v4060, %v4081
        %v4084 = vunpack.c.l.s4 1983009808
        %v4085 = vunpack.c.0.s8 %v4084
        %v4086 = vlaneseq
        %v4087 = vshrl.u32 %v4086, 7
        %v4088 = vsub.s32 %v4085, %v4087
        %v4089 = vrot.slane %v4061, %v4088
        %v4090 = vcombine.low %v4068, %v4082
        %v4091 = vcombine.high %v4068, %v4082
        %v4092 = vcombine.low %v4075, %v4089
        %v4093 = vcombine.high %v4075, %v4089
        %v4094 = vcombine.low %v2006, %v2007
        %v4095 = vcombine.high %v2006, %v2007
        %v4096 = vcombine.low %v2008, %v2078
        %v4097 = vcombine.high %v2008, %v2078
        %v4099 = vunpack.c.l.s4 1983009808
        %v4100 = vunpack.c.0.s8 %v4099
        %v4101 = vlaneseq
        %v4102 = vshrl.u32 %v4101, 7
        %v4103 = vsub.s32 %v4100, %v4102
        %v4104 = vrot.slane %v4094, %v4103
        %v4106 = vunpack.c.l.s4 1983009808
        %v4107 = vunpack.c.0.s8 %v4106
        %v4108 = vlaneseq
        %v4109 = vshrl.u32 %v4108, 7
        %v4110 = vsub.s32 %v4107, %v4109
        %v4111 = vrot.slane %v4095, %v4110
        %v4113 = vunpack.c.l.s4 1983009808
        %v4114 = vunpack.c.0.s8 %v4113
        %v4115 = vlaneseq
        %v4116 = vshrl.u32 %v4115, 7
        %v4117 = vsub.s32 %v4114, %v4116
        %v4118 = vrot.slane %v4096, %v4117
        %v4120 = vunpack.c.l.s4 1983009808
        %v4121 = vunpack.c.0.s8 %v4120
        %v4122 = vlaneseq
        %v4123 = vshrl.u32 %v4122, 7
        %v4124 = vsub.s32 %v4121, %v4123
        %v4125 = vrot.slane %v4097, %v4124
        %v4126 = vcombine.low %v4104, %v4118
        %v4127 = vcombine.high %v4104, %v4118
        %v4128 = vcombine.low %v4111, %v4125
        %v4129 = vcombine.high %v4111, %v4125
        %v4130 = vcombine.low %v2024, %v2023
        %v4131 = vcombine.low %v2025, %v2089
        %v4133 = vunpack.c.l.s4 1983009808
        %v4134 = vunpack.c.0.s8 %v4133
        %v4135 = vlaneseq
        %v4136 = vshrl.u32 %v4135, 7
        %v4137 = vsub.s32 %v4134, %v4136
        %v4138 = vrot.slane %v4130, %v4137
        %v4140 = vunpack.c.l.s4 1983009808
        %v4141 = vunpack.c.0.s8 %v4140
        %v4142 = vlaneseq
        %v4143 = vshrl.u32 %v4142, 7
        %v4144 = vsub.s32 %v4141, %v4143
        %v4145 = vrot.slane %v4131, %v4144
        %v4146 = vcombine.low %v4138, %v4145
        %v4147 = vcombine.low %v2043, %v2044
        %v4148 = vcombine.high %v2043, %v2044
        %v4149 = vcombine.low %v2045, %v2107
        %v4150 = vcombine.high %v2045, %v2107
        %v4152 = vunpack.c.l.s4 1983009808
        %v4153 = vunpack.c.0.s8 %v4152
        %v4154 = vlaneseq
        %v4155 = vshrl.u32 %v4154, 7
        %v4156 = vsub.s32 %v4153, %v4155
        %v4157 = vrot.slane %v4147, %v4156
        %v4159 = vunpack.c.l.s4 1983009808
        %v4160 = vunpack.c.0.s8 %v4159
        %v4161 = vlaneseq
        %v4162 = vshrl.u32 %v4161, 7
        %v4163 = vsub.s32 %v4160, %v4162
        %v4164 = vrot.slane %v4148, %v4163
        %v4166 = vunpack.c.l.s4 1983009808
        %v4167 = vunpack.c.0.s8 %v4166
        %v4168 = vlaneseq
        %v4169 = vshrl.u32 %v4168, 7
        %v4170 = vsub.s32 %v4167, %v4169
        %v4171 = vrot.slane %v4149, %v4170
        %v4173 = vunpack.c.l.s4 1983009808
        %v4174 = vunpack.c.0.s8 %v4173
        %v4175 = vlaneseq
        %v4176 = vshrl.u32 %v4175, 7
        %v4177 = vsub.s32 %v4174, %v4176
        %v4178 = vrot.slane %v4150, %v4177
        %v4179 = vcombine.low %v4157, %v4171
        %v4180 = vcombine.high %v4157, %v4171
        %v4181 = vcombine.low %v4164, %v4178
        %v4182 = vcombine.high %v4164, %v4178
        %v4183 = vcombine.low %v2079, %v2080
        %v4184 = vcombine.high %v2079, %v2080
        %v4185 = vcombine.low %v2081, %v2124
        %v4186 = vcombine.high %v2081, %v2124
        %v4188 = vunpack.c.l.s4 1983009808
        %v4189 = vunpack.c.0.s8 %v4188
        %v4190 = vlaneseq
        %v4191 = vshrl.u32 %v4190, 7
        %v4192 = vsub.s32 %v4189, %v4191
        %v4193 = vrot.slane %v4183, %v4192
        %v4195 = vunpack.c.l.s4 1983009808
        %v4196 = vunpack.c.0.s8 %v4195
        %v4197 = vlaneseq
        %v4198 = vshrl.u32 %v4197, 7
        %v4199 = vsub.s32 %v4196, %v4198
        %v4200 = vrot.slane %v4184, %v4199
        %v4202 = vunpack.c.l.s4 1983009808
        %v4203 = vunpack.c.0.s8 %v4202
        %v4204 = vlaneseq
        %v4205 = vshrl.u32 %v4204, 7
        %v4206 = vsub.s32 %v4203, %v4205
        %v4207 = vrot.slane %v4185, %v4206
        %v4209 = vunpack.c.l.s4 1983009808
        %v4210 = vunpack.c.0.s8 %v4209
        %v4211 = vlaneseq
        %v4212 = vshrl.u32 %v4211, 7
        %v4213 = vsub.s32 %v4210, %v4212
        %v4214 = vrot.slane %v4186, %v4213
        %v4215 = vcombine.low %v4193, %v4207
        %v4216 = vcombine.high %v4193, %v4207
        %v4217 = vcombine.low %v4200, %v4214
        %v4218 = vcombine.high %v4200, %v4214
        %v4219 = vcombine.low %v2097, %v2096
        %v4220 = vcombine.low %v2098, %v2131
        %v4222 = vunpack.c.l.s4 1983009808
        %v4223 = vunpack.c.0.s8 %v4222
        %v4224 = vlaneseq
        %v4225 = vshrl.u32 %v4224, 7
        %v4226 = vsub.s32 %v4223, %v4225
        %v4227 = vrot.slane %v4219, %v4226
        %v4229 = vunpack.c.l.s4 1983009808
        %v4230 = vunpack.c.0.s8 %v4229
        %v4231 = vlaneseq
        %v4232 = vshrl.u32 %v4231, 7
        %v4233 = vsub.s32 %v4230, %v4232
        %v4234 = vrot.slane %v4220, %v4233
        %v4235 = vcombine.low %v4227, %v4234
        %v4236 = vcombine.low %v2148, %v2149
        %v4237 = vcombine.high %v2148, %v2149
        %v4238 = vcombine.low %v2150, %v2151
        %v4239 = vcombine.high %v2150, %v2151
        %v4241 = vunpack.c.l.s4 1983009808
        %v4242 = vunpack.c.0.s8 %v4241
        %v4243 = vlaneseq
        %v4244 = vshrl.u32 %v4243, 7
        %v4245 = vsub.s32 %v4242, %v4244
        %v4246 = vrot.slane %v4236, %v4245
        %v4248 = vunpack.c.l.s4 1983009808
        %v4249 = vunpack.c.0.s8 %v4248
        %v4250 = vlaneseq
        %v4251 = vshrl.u32 %v4250, 7
        %v4252 = vsub.s32 %v4249, %v4251
        %v4253 = vrot.slane %v4237, %v4252
        %v4255 = vunpack.c.l.s4 1983009808
        %v4256 = vunpack.c.0.s8 %v4255
        %v4257 = vlaneseq
        %v4258 = vshrl.u32 %v4257, 7
        %v4259 = vsub.s32 %v4256, %v4258
        %v4260 = vrot.slane %v4238, %v4259
        %v4262 = vunpack.c.l.s4 1983009808
        %v4263 = vunpack.c.0.s8 %v4262
        %v4264 = vlaneseq
        %v4265 = vshrl.u32 %v4264, 7
        %v4266 = vsub.s32 %v4263, %v4265
        %v4267 = vrot.slane %v4239, %v4266
        %v4268 = vcombine.low %v4246, %v4260
        %v4269 = vcombine.high %v4246, %v4260
        %v4270 = vcombine.low %v4253, %v4267
        %v4271 = vcombine.high %v4253, %v4267
        %v4272 = vcombine.low %v2184, %v2185
        %v4273 = vcombine.high %v2184, %v2185
        %v4274 = vcombine.low %v2186, %v2187
        %v4275 = vcombine.high %v2186, %v2187
        %v4277 = vunpack.c.l.s4 1983009808
        %v4278 = vunpack.c.0.s8 %v4277
        %v4279 = vlaneseq
        %v4280 = vshrl.u32 %v4279, 7
        %v4281 = vsub.s32 %v4278, %v4280
        %v4282 = vrot.slane %v4272, %v4281
        %v4284 = vunpack.c.l.s4 1983009808
        %v4285 = vunpack.c.0.s8 %v4284
        %v4286 = vlaneseq
        %v4287 = vshrl.u32 %v4286, 7
        %v4288 = vsub.s32 %v4285, %v4287
        %v4289 = vrot.slane %v4273, %v4288
        %v4291 = vunpack.c.l.s4 1983009808
        %v4292 = vunpack.c.0.s8 %v4291
        %v4293 = vlaneseq
        %v4294 = vshrl.u32 %v4293, 7
        %v4295 = vsub.s32 %v4292, %v4294
        %v4296 = vrot.slane %v4274, %v4295
        %v4298 = vunpack.c.l.s4 1983009808
        %v4299 = vunpack.c.0.s8 %v4298
        %v4300 = vlaneseq
        %v4301 = vshrl.u32 %v4300, 7
        %v4302 = vsub.s32 %v4299, %v4301
        %v4303 = vrot.slane %v4275, %v4302
        %v4304 = vcombine.low %v4282, %v4296
        %v4305 = vcombine.high %v4282, %v4296
        %v4306 = vcombine.low %v4289, %v4303
        %v4307 = vcombine.high %v4289, %v4303
        %v4308 = vcombine.low %v2195, %v2203
        %v4309 = vcombine.low %v2202, %v2204
        %v4311 = vunpack.c.l.s4 1983009808
        %v4312 = vunpack.c.0.s8 %v4311
        %v4313 = vlaneseq
        %v4314 = vshrl.u32 %v4313, 7
        %v4315 = vsub.s32 %v4312, %v4314
        %v4316 = vrot.slane %v4308, %v4315
        %v4318 = vunpack.c.l.s4 1983009808
        %v4319 = vunpack.c.0.s8 %v4318
        %v4320 = vlaneseq
        %v4321 = vshrl.u32 %v4320, 7
        %v4322 = vsub.s32 %v4319, %v4321
        %v4323 = vrot.slane %v4309, %v4322
        %v4324 = vcombine.low %v4316, %v4323
        %v4325 = vcombine.low %v2221, %v2222
        %v4326 = vcombine.high %v2221, %v2222
        %v4327 = vcombine.low %v2223, %v2224
        %v4328 = vcombine.high %v2223, %v2224
        %v4330 = vunpack.c.l.s4 1983009808
        %v4331 = vunpack.c.0.s8 %v4330
        %v4332 = vlaneseq
        %v4333 = vshrl.u32 %v4332, 7
        %v4334 = vsub.s32 %v4331, %v4333
        %v4335 = vrot.slane %v4325, %v4334
        %v4337 = vunpack.c.l.s4 1983009808
        %v4338 = vunpack.c.0.s8 %v4337
        %v4339 = vlaneseq
        %v4340 = vshrl.u32 %v4339, 7
        %v4341 = vsub.s32 %v4338, %v4340
        %v4342 = vrot.slane %v4326, %v4341
        %v4344 = vunpack.c.l.s4 1983009808
        %v4345 = vunpack.c.0.s8 %v4344
        %v4346 = vlaneseq
        %v4347 = vshrl.u32 %v4346, 7
        %v4348 = vsub.s32 %v4345, %v4347
        %v4349 = vrot.slane %v4327, %v4348
        %v4351 = vunpack.c.l.s4 1983009808
        %v4352 = vunpack.c.0.s8 %v4351
        %v4353 = vlaneseq
        %v4354 = vshrl.u32 %v4353, 7
        %v4355 = vsub.s32 %v4352, %v4354
        %v4356 = vrot.slane %v4328, %v4355
        %v4357 = vcombine.low %v4335, %v4349
        %v4358 = vcombine.high %v4335, %v4349
        %v4359 = vcombine.low %v4342, %v4356
        %v4360 = vcombine.high %v4342, %v4356
        %v4361 = vcombine.low %v2257, %v2258
        %v4362 = vcombine.high %v2257, %v2258
        %v4363 = vcombine.low %v2259, %v2260
        %v4364 = vcombine.high %v2259, %v2260
        %v4366 = vunpack.c.l.s4 1983009808
        %v4367 = vunpack.c.0.s8 %v4366
        %v4368 = vlaneseq
        %v4369 = vshrl.u32 %v4368, 7
        %v4370 = vsub.s32 %v4367, %v4369
        %v4371 = vrot.slane %v4361, %v4370
        %v4373 = vunpack.c.l.s4 1983009808
        %v4374 = vunpack.c.0.s8 %v4373
        %v4375 = vlaneseq
        %v4376 = vshrl.u32 %v4375, 7
        %v4377 = vsub.s32 %v4374, %v4376
        %v4378 = vrot.slane %v4362, %v4377
        %v4380 = vunpack.c.l.s4 1983009808
        %v4381 = vunpack.c.0.s8 %v4380
        %v4382 = vlaneseq
        %v4383 = vshrl.u32 %v4382, 7
        %v4384 = vsub.s32 %v4381, %v4383
        %v4385 = vrot.slane %v4363, %v4384
        %v4387 = vunpack.c.l.s4 1983009808
        %v4388 = vunpack.c.0.s8 %v4387
        %v4389 = vlaneseq
        %v4390 = vshrl.u32 %v4389, 7
        %v4391 = vsub.s32 %v4388, %v4390
        %v4392 = vrot.slane %v4364, %v4391
        %v4393 = vcombine.low %v4371, %v4385
        %v4394 = vcombine.high %v4371, %v4385
        %v4395 = vcombine.low %v4378, %v4392
        %v4396 = vcombine.high %v4378, %v4392
        %v4397 = vcombine.low %v2268, %v2276
        %v4398 = vcombine.low %v2275, %v2277
        %v4400 = vunpack.c.l.s4 1983009808
        %v4401 = vunpack.c.0.s8 %v4400
        %v4402 = vlaneseq
        %v4403 = vshrl.u32 %v4402, 7
        %v4404 = vsub.s32 %v4401, %v4403
        %v4405 = vrot.slane %v4397, %v4404
        %v4407 = vunpack.c.l.s4 1983009808
        %v4408 = vunpack.c.0.s8 %v4407
        %v4409 = vlaneseq
        %v4410 = vshrl.u32 %v4409, 7
        %v4411 = vsub.s32 %v4408, %v4410
        %v4412 = vrot.slane %v4398, %v4411
        %v4413 = vcombine.low %v4405, %v4412
        %v4414 = vcombine.low %v2286, %v2327
        %v4415 = vcombine.high %v2286, %v2327
        %v4416 = vcombine.low %v2328, %v2329
        %v4417 = vcombine.high %v2328, %v2329
        %v4419 = vunpack.c.l.s4 1983009808
        %v4420 = vunpack.c.0.s8 %v4419
        %v4421 = vlaneseq
        %v4422 = vshrl.u32 %v4421, 7
        %v4423 = vsub.s32 %v4420, %v4422
        %v4424 = vrot.slane %v4414, %v4423
        %v4426 = vunpack.c.l.s4 1983009808
        %v4427 = vunpack.c.0.s8 %v4426
        %v4428 = vlaneseq
        %v4429 = vshrl.u32 %v4428, 7
        %v4430 = vsub.s32 %v4427, %v4429
        %v4431 = vrot.slane %v4415, %v4430
        %v4433 = vunpack.c.l.s4 1983009808
        %v4434 = vunpack.c.0.s8 %v4433
        %v4435 = vlaneseq
        %v4436 = vshrl.u32 %v4435, 7
        %v4437 = vsub.s32 %v4434, %v4436
        %v4438 = vrot.slane %v4416, %v4437
        %v4440 = vunpack.c.l.s4 1983009808
        %v4441 = vunpack.c.0.s8 %v4440
        %v4442 = vlaneseq
        %v4443 = vshrl.u32 %v4442, 7
        %v4444 = vsub.s32 %v4441, %v4443
        %v4445 = vrot.slane %v4417, %v4444
        %v4446 = vcombine.low %v4424, %v4438
        %v4447 = vcombine.high %v4424, %v4438
        %v4448 = vcombine.low %v4431, %v4445
        %v4449 = vcombine.high %v4431, %v4445
        %v4450 = vcombine.low %v2303, %v2363
        %v4451 = vcombine.high %v2303, %v2363
        %v4452 = vcombine.low %v2364, %v2365
        %v4453 = vcombine.high %v2364, %v2365
        %v4455 = vunpack.c.l.s4 1983009808
        %v4456 = vunpack.c.0.s8 %v4455
        %v4457 = vlaneseq
        %v4458 = vshrl.u32 %v4457, 7
        %v4459 = vsub.s32 %v4456, %v4458
        %v4460 = vrot.slane %v4450, %v4459
        %v4462 = vunpack.c.l.s4 1983009808
        %v4463 = vunpack.c.0.s8 %v4462
        %v4464 = vlaneseq
        %v4465 = vshrl.u32 %v4464, 7
        %v4466 = vsub.s32 %v4463, %v4465
        %v4467 = vrot.slane %v4451, %v4466
        %v4469 = vunpack.c.l.s4 1983009808
        %v4470 = vunpack.c.0.s8 %v4469
        %v4471 = vlaneseq
        %v4472 = vshrl.u32 %v4471, 7
        %v4473 = vsub.s32 %v4470, %v4472
        %v4474 = vrot.slane %v4452, %v4473
        %v4476 = vunpack.c.l.s4 1983009808
        %v4477 = vunpack.c.0.s8 %v4476
        %v4478 = vlaneseq
        %v4479 = vshrl.u32 %v4478, 7
        %v4480 = vsub.s32 %v4477, %v4479
        %v4481 = vrot.slane %v4453, %v4480
        %v4482 = vcombine.low %v4460, %v4474
        %v4483 = vcombine.high %v4460, %v4474
        %v4484 = vcombine.low %v4467, %v4481
        %v4485 = vcombine.high %v4467, %v4481
        %v4486 = vcombine.low %v2310, %v2374
        %v4487 = vcombine.low %v2382, %v2381
        %v4489 = vunpack.c.l.s4 1983009808
        %v4490 = vunpack.c.0.s8 %v4489
        %v4491 = vlaneseq
        %v4492 = vshrl.u32 %v4491, 7
        %v4493 = vsub.s32 %v4490, %v4492
        %v4494 = vrot.slane %v4486, %v4493
        %v4496 = vunpack.c.l.s4 1983009808
        %v4497 = vunpack.c.0.s8 %v4496
        %v4498 = vlaneseq
        %v4499 = vshrl.u32 %v4498, 7
        %v4500 = vsub.s32 %v4497, %v4499
        %v4501 = vrot.slane %v4487, %v4500
        %v4502 = vcombine.low %v4494, %v4501
        %v4503 = vcombine.low %v2330, %v2400
        %v4504 = vcombine.high %v2330, %v2400
        %v4505 = vcombine.low %v2401, %v2402
        %v4506 = vcombine.high %v2401, %v2402
        %v4508 = vunpack.c.l.s4 1983009808
        %v4509 = vunpack.c.0.s8 %v4508
        %v4510 = vlaneseq
        %v4511 = vshrl.u32 %v4510, 7
        %v4512 = vsub.s32 %v4509, %v4511
        %v4513 = vrot.slane %v4503, %v4512
        %v4515 = vunpack.c.l.s4 1983009808
        %v4516 = vunpack.c.0.s8 %v4515
        %v4517 = vlaneseq
        %v4518 = vshrl.u32 %v4517, 7
        %v4519 = vsub.s32 %v4516, %v4518
        %v4520 = vrot.slane %v4504, %v4519
        %v4522 = vunpack.c.l.s4 1983009808
        %v4523 = vunpack.c.0.s8 %v4522
        %v4524 = vlaneseq
        %v4525 = vshrl.u32 %v4524, 7
        %v4526 = vsub.s32 %v4523, %v4525
        %v4527 = vrot.slane %v4505, %v4526
        %v4529 = vunpack.c.l.s4 1983009808
        %v4530 = vunpack.c.0.s8 %v4529
        %v4531 = vlaneseq
        %v4532 = vshrl.u32 %v4531, 7
        %v4533 = vsub.s32 %v4530, %v4532
        %v4534 = vrot.slane %v4506, %v4533
        %v4535 = vcombine.low %v4513, %v4527
        %v4536 = vcombine.high %v4513, %v4527
        %v4537 = vcombine.low %v4520, %v4534
        %v4538 = vcombine.high %v4520, %v4534
        %v4539 = vcombine.low %v2366, %v2436
        %v4540 = vcombine.high %v2366, %v2436
        %v4541 = vcombine.low %v2437, %v2438
        %v4542 = vcombine.high %v2437, %v2438
        %v4544 = vunpack.c.l.s4 1983009808
        %v4545 = vunpack.c.0.s8 %v4544
        %v4546 = vlaneseq
        %v4547 = vshrl.u32 %v4546, 7
        %v4548 = vsub.s32 %v4545, %v4547
        %v4549 = vrot.slane %v4539, %v4548
        %v4551 = vunpack.c.l.s4 1983009808
        %v4552 = vunpack.c.0.s8 %v4551
        %v4553 = vlaneseq
        %v4554 = vshrl.u32 %v4553, 7
        %v4555 = vsub.s32 %v4552, %v4554
        %v4556 = vrot.slane %v4540, %v4555
        %v4558 = vunpack.c.l.s4 1983009808
        %v4559 = vunpack.c.0.s8 %v4558
        %v4560 = vlaneseq
        %v4561 = vshrl.u32 %v4560, 7
        %v4562 = vsub.s32 %v4559, %v4561
        %v4563 = vrot.slane %v4541, %v4562
        %v4565 = vunpack.c.l.s4 1983009808
        %v4566 = vunpack.c.0.s8 %v4565
        %v4567 = vlaneseq
        %v4568 = vshrl.u32 %v4567, 7
        %v4569 = vsub.s32 %v4566, %v4568
        %v4570 = vrot.slane %v4542, %v4569
        %v4571 = vcombine.low %v4549, %v4563
        %v4572 = vcombine.high %v4549, %v4563
        %v4573 = vcombine.low %v4556, %v4570
        %v4574 = vcombine.high %v4556, %v4570
        %v4575 = vcombine.low %v2383, %v2447
        %v4576 = vcombine.low %v2455, %v2454
        %v4578 = vunpack.c.l.s4 1983009808
        %v4579 = vunpack.c.0.s8 %v4578
        %v4580 = vlaneseq
        %v4581 = vshrl.u32 %v4580, 7
        %v4582 = vsub.s32 %v4579, %v4581
        %v4583 = vrot.slane %v4575, %v4582
        %v4585 = vunpack.c.l.s4 1983009808
        %v4586 = vunpack.c.0.s8 %v4585
        %v4587 = vlaneseq
        %v4588 = vshrl.u32 %v4587, 7
        %v4589 = vsub.s32 %v4586, %v4588
        %v4590 = vrot.slane %v4576, %v4589
        %v4591 = vcombine.low %v4583, %v4590
        %v4592 = vcombine.low %v2403, %v2465
        %v4593 = vcombine.high %v2403, %v2465
        %v4595 = vunpack.c.l.s4 1983009808
        %v4596 = vunpack.c.0.s8 %v4595
        %v4597 = vlaneseq
        %v4598 = vshrl.u32 %v4597, 7
        %v4599 = vsub.s32 %v4596, %v4598
        %v4600 = vrot.slane %v4592, %v4599
        %v4602 = vunpack.c.l.s4 1983009808
        %v4603 = vunpack.c.0.s8 %v4602
        %v4604 = vlaneseq
        %v4605 = vshrl.u32 %v4604, 7
        %v4606 = vsub.s32 %v4603, %v4605
        %v4607 = vrot.slane %v4593, %v4606
        %v4608 = vcombine.high %v4600, %v4600
        %v4609 = vcombine.high %v4607, %v4607
        %v4610 = vcombine.low %v2439, %v2482
        %v4611 = vcombine.high %v2439, %v2482
        %v4613 = vunpack.c.l.s4 1983009808
        %v4614 = vunpack.c.0.s8 %v4613
        %v4615 = vlaneseq
        %v4616 = vshrl.u32 %v4615, 7
        %v4617 = vsub.s32 %v4614, %v4616
        %v4618 = vrot.slane %v4610, %v4617
        %v4620 = vunpack.c.l.s4 1983009808
        %v4621 = vunpack.c.0.s8 %v4620
        %v4622 = vlaneseq
        %v4623 = vshrl.u32 %v4622, 7
        %v4624 = vsub.s32 %v4621, %v4623
        %v4625 = vrot.slane %v4611, %v4624
        %v4626 = vcombine.high %v4618, %v4618
        %v4627 = vcombine.high %v4625, %v4625
        %v4628 = vcombine.low %v2456, %v2489
        %v4630 = vunpack.c.l.s4 1983009808
        %v4631 = vunpack.c.0.s8 %v4630
        %v4632 = vlaneseq
        %v4633 = vshrl.u32 %v4632, 7
        %v4634 = vsub.s32 %v4631, %v4633
        %v4635 = vrot.slane %v4628, %v4634
        %4843 = vmatprep.subr.mxu0 0.0
        %4844 = vmatpush1.msra.mxu0 %v2490
        %4845 = vmatprep.subr.mxu0 0.0
        %4846 = vmatpush1.msra.mxu0 %v2491
        %4847 = vmatprep.subr.mxu0 0.0
        %4848 = vmatpush1.msra.mxu0 %v2492
        %4849 = vmatprep.subr.mxu0 0.0
        %4850 = vmatpush1.msra.mxu0 %v2493
        %4851 = vmatprep.subr.mxu0 0.0
        %4852 = vmatpush1.msra.mxu0 %v2494
        %4853 = vmatprep.subr.mxu0 0.0
        %4854 = vmatpush1.msra.mxu0 %v2495
        %4855 = vmatprep.subr.mxu0 0.0
        %4856 = vmatpush1.msra.mxu0 %v2496
        %4857 = vmatprep.subr.mxu0 0.0
        %4858 = vmatpush1.msra.mxu0 %v2497
        %4859 = vmatprep.subr.mxu0 0.0
        %4860 = vmatpush1.msra.mxu0 %v2498
        %4861 = vmatprep.subr.mxu0 0.0
        %4862 = vmatpush1.msra.mxu0 %v2499
        %4863 = vmatprep.subr.mxu0 0.0
        %4864 = vmatpush1.msra.mxu0 %v2500
        %4865 = vmatprep.subr.mxu0 0.0
        %4866 = vmatpush1.msra.mxu0 %v2501
        %4867 = vmatprep.subr.mxu0 0.0
        %4868 = vmatpush1.msra.mxu0 %v2502
        %4869 = vmatprep.subr.mxu0 0.0
        %4870 = vmatpush1.msra.mxu0 %v2503
        %4871 = vmatprep.subr.mxu0 0.0
        %4872 = vmatpush1.msra.mxu0 %v2504
        %4873 = vmatprep.subr.mxu0 0.0
        %4874 = vmatpush1.msra.mxu0 %v2505
        %4875 = vmatprep.subr.mxu0 0.0
        %4876 = vmatpush1.msra.mxu0 %v2506
        %4877 = vmatprep.subr.mxu0 0.0
        %4878 = vmatpush1.msra.mxu0 %v2507
        %4879 = vmatprep.subr.mxu0 0.0
        %4880 = vmatpush1.msra.mxu0 %v2508
        %4881 = vmatprep.subr.mxu0 0.0
        %4882 = vmatpush1.msra.mxu0 %v2509
        %4883 = vmatprep.subr.mxu0 0.0
        %4884 = vmatpush1.msra.mxu0 %v2510
        %4885 = vmatprep.subr.mxu0 0.0
        %4886 = vmatpush1.msra.mxu0 %v2511
        %4887 = vmatprep.subr.mxu0 0.0
        %4888 = vmatpush1.msra.mxu0 %v2512
        %4889 = vmatprep.subr.mxu0 0.0
        %4890 = vmatpush1.msra.mxu0 %v2513
        %4891 = vmatprep.subr.mxu0 0.0
        %4892 = vmatpush1.msra.mxu0 %v2514
        %4893 = vmatprep.subr.mxu0 0.0
        %4894 = vmatpush1.msra.mxu0 %v2515
        %4895 = vmatprep.subr.mxu0 0.0
        %4896 = vmatpush1.msra.mxu0 %v2516
        %4897 = vmatprep.subr.mxu0 0.0
        %4898 = vmatpush1.msra.mxu0 %v2517
        %4899 = vmatprep.subr.mxu0 0.0
        %4900 = vmatpush1.msra.mxu0 %v2518
        %4901 = vmatprep.subr.mxu0 0.0
        %4902 = vmatpush1.msra.mxu0 %v2519
        %4903 = vmatprep.subr.mxu0 0.0
        %4904 = vmatpush1.msra.mxu0 %v2520
        %4905 = vmatprep.subr.mxu0 0.0
        %4906 = vmatpush1.msra.mxu0 %v2521
        %4907 = vmatprep.mubr.f32.mxu0 %v2667
        %4908 = vmatmul.mubr.f32.gmra.mrb[0].mxu0 %v2666
        %v4909 = vpop.f32.mrb[0].mxu0
        %v4910 = vadd.f32 0.0, %v4909
        %v4911 = vpop.f32.mrb[0].mxu0
        %4912 = vmatprep.mubr.f32.mxu0 %v2756
        %4913 = vmatmul.mubr.f32.gmra.mrb[0].mxu0 %v2755
        %v4914 = vpop.f32.mrb[0].mxu0
        %v4915 = vadd.f32 0.0, %v4914
        %v4916 = vpop.f32.mrb[0].mxu0
        %4917 = vmatprep.mubr.f32.mxu0 %v2845
        %4918 = vmatmul.mubr.f32.gmra.mrb[0].mxu0 %v2844
        %v4919 = vpop.f32.mrb[0].mxu0
        %v4920 = vadd.f32 0.0, %v4919
        %v4921 = vpop.f32.mrb[0].mxu0
        %4922 = vmatprep.mubr.f32.mxu0 %v2934
        %4923 = vmatmul.mubr.f32.gmra.mrb[0].mxu0 %v2933
        %v4924 = vpop.f32.mrb[0].mxu0
        %v4925 = vadd.f32 0.0, %v4924
        %v4926 = vpop.f32.mrb[0].mxu0
        %4927 = vmatprep.mubr.f32.mxu0 %v3023
        %4928 = vmatmul.mubr.f32.gmra.mrb[0].mxu0 %v3022
        %v4929 = vpop.f32.mrb[0].mxu0
        %v4930 = vadd.f32 0.0, %v4929
        %v4931 = vpop.f32.mrb[0].mxu0
        %4932 = vmatprep.mubr.f32.mxu0 %v3112
        %4933 = vmatmul.mubr.f32.gmra.mrb[0].mxu0 %v3111
        %v4934 = vpop.f32.mrb[0].mxu0
        %v4935 = vadd.f32 0.0, %v4934
        %v4936 = vpop.f32.mrb[0].mxu0
        %4937 = vmatprep.mubr.f32.mxu0 %v3201
        %4938 = vmatmul.mubr.f32.gmra.mrb[0].mxu0 %v3200
        %v4939 = vpop.f32.mrb[0].mxu0
        %v4940 = vadd.f32 0.0, %v4939
        %v4941 = vpop.f32.mrb[0].mxu0
        %4942 = vmatprep.mubr.f32.mxu0 %v3290
        %4943 = vmatmul.mubr.f32.gmra.mrb[0].mxu0 %v3289
        %v4944 = vpop.f32.mrb[0].mxu0
        %v4945 = vadd.f32 0.0, %v4944
        %v4946 = vpop.f32.mrb[0].mxu0
        %4947 = vmatprep.mubr.f32.mxu0 %v3379
        %4948 = vmatmul.mubr.f32.gmra.mrb[0].mxu0 %v3378
        %v4949 = vpop.f32.mrb[0].mxu0
        %v4950 = vadd.f32 0.0, %v4949
        %v4951 = vpop.f32.mrb[0].mxu0
        %4952 = vmatprep.mubr.f32.mxu0 %v3468
        %4953 = vmatmul.mubr.f32.gmra.mrb[0].mxu0 %v3467
        %v4954 = vpop.f32.mrb[0].mxu0
        %v4955 = vadd.f32 0.0, %v4954
        %v4956 = vpop.f32.mrb[0].mxu0
        %4957 = vmatprep.mubr.f32.mxu0 %v3557
        %4958 = vmatmul.mubr.f32.gmra.mrb[0].mxu0 %v3556
        %v4959 = vpop.f32.mrb[0].mxu0
        %v4960 = vadd.f32 0.0, %v4959
        %v4961 = vpop.f32.mrb[0].mxu0
        %4962 = vmatprep.mubr.f32.mxu0 %v3646
        %4963 = vmatmul.mubr.f32.gmra.mrb[0].mxu0 %v3645
        %v4964 = vpop.f32.mrb[0].mxu0
        %v4965 = vadd.f32 0.0, %v4964
        %v4966 = vpop.f32.mrb[0].mxu0
        %4967 = vmatprep.mubr.f32.mxu0 %v3735
        %4968 = vmatmul.mubr.f32.gmra.mrb[0].mxu0 %v3734
        %v4969 = vpop.f32.mrb[0].mxu0
        %v4970 = vadd.f32 0.0, %v4969
        %v4971 = vpop.f32.mrb[0].mxu0
        %4972 = vmatprep.mubr.f32.mxu0 %v3824
        %4973 = vmatmul.mubr.f32.gmra.mrb[0].mxu0 %v3823
        %v4974 = vpop.f32.mrb[0].mxu0
        %v4975 = vadd.f32 0.0, %v4974
        %v4976 = vpop.f32.mrb[0].mxu0
        %4977 = vmatprep.mubr.f32.mxu0 %v3913
        %4978 = vmatmul.mubr.f32.gmra.mrb[0].mxu0 %v3912
        %v4979 = vpop.f32.mrb[0].mxu0
        %v4980 = vadd.f32 0.0, %v4979
        %v4981 = vpop.f32.mrb[0].mxu0
        %4982 = vmatprep.mubr.f32.mxu0 %v4002
        %4983 = vmatmul.mubr.f32.gmra.mrb[0].mxu0 %v4001
        %v4984 = vpop.f32.mrb[0].mxu0
        %v4985 = vadd.f32 0.0, %v4984
        %v4986 = vpop.f32.mrb[0].mxu0
        %4987 = vmatprep.mubr.f32.mxu0 %v4091
        %4988 = vmatmul.mubr.f32.gmra.mrb[0].mxu0 %v4090
        %v4989 = vpop.f32.mrb[0].mxu0
        %v4990 = vadd.f32 0.0, %v4989
        %v4991 = vpop.f32.mrb[0].mxu0
        %4992 = vmatprep.mubr.f32.mxu0 %v4180
        %4993 = vmatmul.mubr.f32.gmra.mrb[0].mxu0 %v4179
        %v4994 = vpop.f32.mrb[0].mxu0
        %v4995 = vadd.f32 0.0, %v4994
        %v4996 = vpop.f32.mrb[0].mxu0
        %4997 = vmatprep.mubr.f32.mxu0 %v4269
        %4998 = vmatmul.mubr.f32.gmra.mrb[0].mxu0 %v4268
        %v4999 = vpop.f32.mrb[0].mxu0
        %v5000 = vadd.f32 0.0, %v4999
        %v5001 = vpop.f32.mrb[0].mxu0
        %5002 = vmatprep.mubr.f32.mxu0 %v4358
        %5003 = vmatmul.mubr.f32.gmra.mrb[0].mxu0 %v4357
        %v5004 = vpop.f32.mrb[0].mxu0
        %v5005 = vadd.f32 0.0, %v5004
        %v5006 = vpop.f32.mrb[0].mxu0
        %5007 = vmatprep.mubr.f32.mxu0 %v4447
        %5008 = vmatmul.mubr.f32.gmra.mrb[0].mxu0 %v4446
        %v5009 = vpop.f32.mrb[0].mxu0
        %v5010 = vadd.f32 0.0, %v5009
        %v5011 = vpop.f32.mrb[0].mxu0
        %5012 = vmatprep.mubr.f32.mxu0 %v4536
        %5013 = vmatmul.mubr.f32.gmra.mrb[0].mxu0 %v4535
        %v5014 = vpop.f32.mrb[0].mxu0
        %v5015 = vadd.f32 0.0, %v5014
        %v5016 = vpop.f32.mrb[0].mxu0
        %5017 = vmatprep.mubr.f32.mxu0 %v4608
        %5018 = vmatmul.mubr.f32.gmra.mrb[0].mxu0 %v4600
        %v5019 = vpop.f32.mrb[0].mxu0
        %v5020 = vadd.f32 0.0, %v5019
        %v5021 = vpop.f32.mrb[0].mxu0
        %5022 = vdwg.mxu0
        %5023 = vmatprep.subr.mxu0 0.0
        %5024 = vmatpush1.msra.mxu0 %v2522
        %5025 = vmatprep.subr.mxu0 0.0
        %5026 = vmatpush1.msra.mxu0 %v2523
        %5027 = vmatprep.subr.mxu0 0.0
        %5028 = vmatpush1.msra.mxu0 %v2524
        %5029 = vmatprep.subr.mxu0 0.0
        %5030 = vmatpush1.msra.mxu0 %v2525
        %5031 = vmatprep.subr.mxu0 0.0
        %5032 = vmatpush1.msra.mxu0 %v2526
        %5033 = vmatprep.subr.mxu0 0.0
        %5034 = vmatpush1.msra.mxu0 %v2527
        %5035 = vmatprep.subr.mxu0 0.0
        %5036 = vmatpush1.msra.mxu0 %v2528
        %5037 = vmatprep.subr.mxu0 0.0
        %5038 = vmatpush1.msra.mxu0 %v2529
        %5039 = vmatprep.subr.mxu0 0.0
        %5040 = vmatpush1.msra.mxu0 %v2530
        %5041 = vmatprep.subr.mxu0 0.0
        %5042 = vmatpush1.msra.mxu0 %v2531
        %5043 = vmatprep.subr.mxu0 0.0
        %5044 = vmatpush1.msra.mxu0 %v2532
        %5045 = vmatprep.subr.mxu0 0.0
        %5046 = vmatpush1.msra.mxu0 %v2533
        %5047 = vmatprep.subr.mxu0 0.0
        %5048 = vmatpush1.msra.mxu0 %v2534
        %5049 = vmatprep.subr.mxu0 0.0
        %5050 = vmatpush1.msra.mxu0 %v2535
        %5051 = vmatprep.subr.mxu0 0.0
        %5052 = vmatpush1.msra.mxu0 %v2536
        %5053 = vmatprep.subr.mxu0 0.0
        %5054 = vmatpush1.msra.mxu0 %v2537
        %5055 = vmatprep.subr.mxu0 0.0
        %5056 = vmatpush1.msra.mxu0 %v2538
        %5057 = vmatprep.subr.mxu0 0.0
        %5058 = vmatpush1.msra.mxu0 %v2539
        %5059 = vmatprep.subr.mxu0 0.0
        %5060 = vmatpush1.msra.mxu0 %v2540
        %5061 = vmatprep.subr.mxu0 0.0
        %5062 = vmatpush1.msra.mxu0 %v2541
        %5063 = vmatprep.subr.mxu0 0.0
        %5064 = vmatpush1.msra.mxu0 %v2542
        %5065 = vmatprep.subr.mxu0 0.0
        %5066 = vmatpush1.msra.mxu0 %v2543
        %5067 = vmatprep.subr.mxu0 0.0
        %5068 = vmatpush1.msra.mxu0 %v2544
        %5069 = vmatprep.subr.mxu0 0.0
        %5070 = vmatpush1.msra.mxu0 %v2545
        %5071 = vmatprep.subr.mxu0 0.0
        %5072 = vmatpush1.msra.mxu0 %v2546
        %5073 = vmatprep.subr.mxu0 0.0
        %5074 = vmatpush1.msra.mxu0 %v2547
        %5075 = vmatprep.subr.mxu0 0.0
        %5076 = vmatpush1.msra.mxu0 %v2548
        %5077 = vmatprep.subr.mxu0 0.0
        %5078 = vmatpush1.msra.mxu0 %v2549
        %5079 = vmatprep.subr.mxu0 0.0
        %5080 = vmatpush1.msra.mxu0 %v2550
        %5081 = vmatprep.subr.mxu0 0.0
        %5082 = vmatpush1.msra.mxu0 %v2551
        %5083 = vmatprep.subr.mxu0 0.0
        %5084 = vmatpush1.msra.mxu0 %v2552
        %5085 = vmatprep.subr.mxu0 0.0
        %5086 = vmatpush1.msra.mxu0 %v2553
        %5087 = vmatprep.mubr.f32.mxu0 %v2669
        %5088 = vmatmul.mubr.f32.gmra.mrb[0].mxu0 %v2668
        %v5089 = vpop.f32.mrb[0].mxu0
        %v5090 = vadd.f32 %v4910, %v5089
        %v5091 = vpop.f32.mrb[0].mxu0
        %5092 = vmatprep.mubr.f32.mxu0 %v2758
        %5093 = vmatmul.mubr.f32.gmra.mrb[0].mxu0 %v2757
        %v5094 = vpop.f32.mrb[0].mxu0
        %v5095 = vadd.f32 %v4915, %v5094
        %v5096 = vpop.f32.mrb[0].mxu0
        %5097 = vmatprep.mubr.f32.mxu0 %v2847
        %5098 = vmatmul.mubr.f32.gmra.mrb[0].mxu0 %v2846
        %v5099 = vpop.f32.mrb[0].mxu0
        %v5100 = vadd.f32 %v4920, %v5099
        %v5101 = vpop.f32.mrb[0].mxu0
        %5102 = vmatprep.mubr.f32.mxu0 %v2936
        %5103 = vmatmul.mubr.f32.gmra.mrb[0].mxu0 %v2935
        %v5104 = vpop.f32.mrb[0].mxu0
        %v5105 = vadd.f32 %v4925, %v5104
        %v5106 = vpop.f32.mrb[0].mxu0
        %5107 = vmatprep.mubr.f32.mxu0 %v3025
        %5108 = vmatmul.mubr.f32.gmra.mrb[0].mxu0 %v3024
        %v5109 = vpop.f32.mrb[0].mxu0
        %v5110 = vadd.f32 %v4930, %v5109
        %v5111 = vpop.f32.mrb[0].mxu0
        %5112 = vmatprep.mubr.f32.mxu0 %v3114
        %5113 = vmatmul.mubr.f32.gmra.mrb[0].mxu0 %v3113
        %v5114 = vpop.f32.mrb[0].mxu0
        %v5115 = vadd.f32 %v4935, %v5114
        %v5116 = vpop.f32.mrb[0].mxu0
        %5117 = vmatprep.mubr.f32.mxu0 %v3203
        %5118 = vmatmul.mubr.f32.gmra.mrb[0].mxu0 %v3202
        %v5119 = vpop.f32.mrb[0].mxu0
        %v5120 = vadd.f32 %v4940, %v5119
        %v5121 = vpop.f32.mrb[0].mxu0
        %5122 = vmatprep.mubr.f32.mxu0 %v3292
        %5123 = vmatmul.mubr.f32.gmra.mrb[0].mxu0 %v3291
        %v5124 = vpop.f32.mrb[0].mxu0
        %v5125 = vadd.f32 %v4945, %v5124
        %v5126 = vpop.f32.mrb[0].mxu0
        %5127 = vmatprep.mubr.f32.mxu0 %v3381
        %5128 = vmatmul.mubr.f32.gmra.mrb[0].mxu0 %v3380
        %v5129 = vpop.f32.mrb[0].mxu0
        %v5130 = vadd.f32 %v4950, %v5129
        %v5131 = vpop.f32.mrb[0].mxu0
        %5132 = vmatprep.mubr.f32.mxu0 %v3470
        %5133 = vmatmul.mubr.f32.gmra.mrb[0].mxu0 %v3469
        %v5134 = vpop.f32.mrb[0].mxu0
        %v5135 = vadd.f32 %v4955, %v5134
        %v5136 = vpop.f32.mrb[0].mxu0
        %5137 = vmatprep.mubr.f32.mxu0 %v3559
        %5138 = vmatmul.mubr.f32.gmra.mrb[0].mxu0 %v3558
        %v5139 = vpop.f32.mrb[0].mxu0
        %v5140 = vadd.f32 %v4960, %v5139
        %v5141 = vpop.f32.mrb[0].mxu0
        %5142 = vmatprep.mubr.f32.mxu0 %v3648
        %5143 = vmatmul.mubr.f32.gmra.mrb[0].mxu0 %v3647
        %v5144 = vpop.f32.mrb[0].mxu0
        %v5145 = vadd.f32 %v4965, %v5144
        %v5146 = vpop.f32.mrb[0].mxu0
        %5147 = vmatprep.mubr.f32.mxu0 %v3737
        %5148 = vmatmul.mubr.f32.gmra.mrb[0].mxu0 %v3736
        %v5149 = vpop.f32.mrb[0].mxu0
        %v5150 = vadd.f32 %v4970, %v5149
        %v5151 = vpop.f32.mrb[0].mxu0
        %5152 = vmatprep.mubr.f32.mxu0 %v3826
        %5153 = vmatmul.mubr.f32.gmra.mrb[0].mxu0 %v3825
        %v5154 = vpop.f32.mrb[0].mxu0
        %v5155 = vadd.f32 %v4975, %v5154
        %v5156 = vpop.f32.mrb[0].mxu0
        %5157 = vmatprep.mubr.f32.mxu0 %v3915
        %5158 = vmatmul.mubr.f32.gmra.mrb[0].mxu0 %v3914
        %v5159 = vpop.f32.mrb[0].mxu0
        %v5160 = vadd.f32 %v4980, %v5159
        %v5161 = vpop.f32.mrb[0].mxu0
        %5162 = vmatprep.mubr.f32.mxu0 %v4004
        %5163 = vmatmul.mubr.f32.gmra.mrb[0].mxu0 %v4003
        %v5164 = vpop.f32.mrb[0].mxu0
        %v5165 = vadd.f32 %v4985, %v5164
        %v5166 = vpop.f32.mrb[0].mxu0
        %5167 = vmatprep.mubr.f32.mxu0 %v4093
        %5168 = vmatmul.mubr.f32.gmra.mrb[0].mxu0 %v4092
        %v5169 = vpop.f32.mrb[0].mxu0
        %v5170 = vadd.f32 %v4990, %v5169
        %v5171 = vpop.f32.mrb[0].mxu0
        %5172 = vmatprep.mubr.f32.mxu0 %v4182
        %5173 = vmatmul.mubr.f32.gmra.mrb[0].mxu0 %v4181
        %v5174 = vpop.f32.mrb[0].mxu0
        %v5175 = vadd.f32 %v4995, %v5174
        %v5176 = vpop.f32.mrb[0].mxu0
        %5177 = vmatprep.mubr.f32.mxu0 %v4271
        %5178 = vmatmul.mubr.f32.gmra.mrb[0].mxu0 %v4270
        %v5179 = vpop.f32.mrb[0].mxu0
        %v5180 = vadd.f32 %v5000, %v5179
        %v5181 = vpop.f32.mrb[0].mxu0
        %5182 = vmatprep.mubr.f32.mxu0 %v4360
        %5183 = vmatmul.mubr.f32.gmra.mrb[0].mxu0 %v4359
        %v5184 = vpop.f32.mrb[0].mxu0
        %v5185 = vadd.f32 %v5005, %v5184
        %v5186 = vpop.f32.mrb[0].mxu0
        %5187 = vmatprep.mubr.f32.mxu0 %v4449
        %5188 = vmatmul.mubr.f32.gmra.mrb[0].mxu0 %v4448
        %v5189 = vpop.f32.mrb[0].mxu0
        %v5190 = vadd.f32 %v5010, %v5189
        %v5191 = vpop.f32.mrb[0].mxu0
        %5192 = vmatprep.mubr.f32.mxu0 %v4538
        %5193 = vmatmul.mubr.f32.gmra.mrb[0].mxu0 %v4537
        %v5194 = vpop.f32.mrb[0].mxu0
        %v5195 = vadd.f32 %v5015, %v5194
        %v5196 = vpop.f32.mrb[0].mxu0
        %5197 = vmatprep.mubr.f32.mxu0 %v4609
        %5198 = vmatmul.mubr.f32.gmra.mrb[0].mxu0 %v4607
        %v5199 = vpop.f32.mrb[0].mxu0
        %v5200 = vadd.f32 %v5020, %v5199
        %v5201 = vpop.f32.mrb[0].mxu0
        %5202 = vdwg.mxu0
        %5203 = vmatprep.subr.mxu0 0.0
        %5204 = vmatpush1.msra.mxu0 %v2554
        %5205 = vmatprep.subr.mxu0 0.0
        %5206 = vmatpush1.msra.mxu0 %v2555
        %5207 = vmatprep.subr.mxu0 0.0
        %5208 = vmatpush1.msra.mxu0 %v2556
        %5209 = vmatprep.subr.mxu0 0.0
        %5210 = vmatpush1.msra.mxu0 %v2557
        %5211 = vmatprep.subr.mxu0 0.0
        %5212 = vmatpush1.msra.mxu0 %v2558
        %5213 = vmatprep.subr.mxu0 0.0
        %5214 = vmatpush1.msra.mxu0 %v2559
        %5215 = vmatprep.subr.mxu0 0.0
        %5216 = vmatpush1.msra.mxu0 %v2560
        %5217 = vmatprep.subr.mxu0 0.0
        %5218 = vmatpush1.msra.mxu0 %v2561
        %5219 = vmatprep.subr.mxu0 0.0
        %5220 = vmatpush1.msra.mxu0 %v2562
        %5221 = vmatprep.subr.mxu0 0.0
        %5222 = vmatpush1.msra.mxu0 %v2563
        %5223 = vmatprep.subr.mxu0 0.0
        %5224 = vmatpush1.msra.mxu0 %v2564
        %5225 = vmatprep.subr.mxu0 0.0
        %5226 = vmatpush1.msra.mxu0 %v2565
        %5227 = vmatprep.subr.mxu0 0.0
        %5228 = vmatpush1.msra.mxu0 %v2566
        %5229 = vmatprep.subr.mxu0 0.0
        %5230 = vmatpush1.msra.mxu0 %v2567
        %5231 = vmatprep.subr.mxu0 0.0
        %5232 = vmatpush1.msra.mxu0 %v2568
        %5233 = vmatprep.subr.mxu0 0.0
        %5234 = vmatpush1.msra.mxu0 %v2569
        %5235 = vmatprep.subr.mxu0 0.0
        %5236 = vmatpush1.msra.mxu0 %v2570
        %5237 = vmatprep.subr.mxu0 0.0
        %5238 = vmatpush1.msra.mxu0 %v2571
        %5239 = vmatprep.subr.mxu0 0.0
        %5240 = vmatpush1.msra.mxu0 %v2572
        %5241 = vmatprep.subr.mxu0 0.0
        %5242 = vmatpush1.msra.mxu0 %v2573
        %5243 = vmatprep.subr.mxu0 0.0
        %5244 = vmatpush1.msra.mxu0 %v2574
        %5245 = vmatprep.subr.mxu0 0.0
        %5246 = vmatpush1.msra.mxu0 %v2575
        %5247 = vmatprep.subr.mxu0 0.0
        %5248 = vmatpush1.msra.mxu0 %v2576
        %5249 = vmatprep.subr.mxu0 0.0
        %5250 = vmatpush1.msra.mxu0 %v2577
        %5251 = vmatprep.subr.mxu0 0.0
        %5252 = vmatpush1.msra.mxu0 %v2578
        %5253 = vmatprep.subr.mxu0 0.0
        %5254 = vmatpush1.msra.mxu0 %v2579
        %5255 = vmatprep.subr.mxu0 0.0
        %5256 = vmatpush1.msra.mxu0 %v2580
        %5257 = vmatprep.subr.mxu0 0.0
        %5258 = vmatpush1.msra.mxu0 %v2581
        %5259 = vmatprep.subr.mxu0 0.0
        %5260 = vmatpush1.msra.mxu0 %v2582
        %5261 = vmatprep.subr.mxu0 0.0
        %5262 = vmatpush1.msra.mxu0 %v2583
        %5263 = vmatprep.subr.mxu0 0.0
        %5264 = vmatpush1.msra.mxu0 %v2584
        %5265 = vmatprep.subr.mxu0 0.0
        %5266 = vmatpush1.msra.mxu0 %v2585
        %5267 = vmatprep.mubr.f32.mxu0 %v2703
        %5268 = vmatmul.mubr.f32.gmra.mrb[0].mxu0 %v2702
        %v5269 = vpop.f32.mrb[0].mxu0
        %v5270 = vadd.f32 %v5090, %v5269
        %v5271 = vpop.f32.mrb[0].mxu0
        %5272 = vmatprep.mubr.f32.mxu0 %v2792
        %5273 = vmatmul.mubr.f32.gmra.mrb[0].mxu0 %v2791
        %v5274 = vpop.f32.mrb[0].mxu0
        %v5275 = vadd.f32 %v5095, %v5274
        %v5276 = vpop.f32.mrb[0].mxu0
        %5277 = vmatprep.mubr.f32.mxu0 %v2881
        %5278 = vmatmul.mubr.f32.gmra.mrb[0].mxu0 %v2880
        %v5279 = vpop.f32.mrb[0].mxu0
        %v5280 = vadd.f32 %v5100, %v5279
        %v5281 = vpop.f32.mrb[0].mxu0
        %5282 = vmatprep.mubr.f32.mxu0 %v2970
        %5283 = vmatmul.mubr.f32.gmra.mrb[0].mxu0 %v2969
        %v5284 = vpop.f32.mrb[0].mxu0
        %v5285 = vadd.f32 %v5105, %v5284
        %v5286 = vpop.f32.mrb[0].mxu0
        %5287 = vmatprep.mubr.f32.mxu0 %v3059
        %5288 = vmatmul.mubr.f32.gmra.mrb[0].mxu0 %v3058
        %v5289 = vpop.f32.mrb[0].mxu0
        %v5290 = vadd.f32 %v5110, %v5289
        %v5291 = vpop.f32.mrb[0].mxu0
        %5292 = vmatprep.mubr.f32.mxu0 %v3148
        %5293 = vmatmul.mubr.f32.gmra.mrb[0].mxu0 %v3147
        %v5294 = vpop.f32.mrb[0].mxu0
        %v5295 = vadd.f32 %v5115, %v5294
        %v5296 = vpop.f32.mrb[0].mxu0
        %5297 = vmatprep.mubr.f32.mxu0 %v3237
        %5298 = vmatmul.mubr.f32.gmra.mrb[0].mxu0 %v3236
        %v5299 = vpop.f32.mrb[0].mxu0
        %v5300 = vadd.f32 %v5120, %v5299
        %v5301 = vpop.f32.mrb[0].mxu0
        %5302 = vmatprep.mubr.f32.mxu0 %v3326
        %5303 = vmatmul.mubr.f32.gmra.mrb[0].mxu0 %v3325
        %v5304 = vpop.f32.mrb[0].mxu0
        %v5305 = vadd.f32 %v5125, %v5304
        %v5306 = vpop.f32.mrb[0].mxu0
        %5307 = vmatprep.mubr.f32.mxu0 %v3415
        %5308 = vmatmul.mubr.f32.gmra.mrb[0].mxu0 %v3414
        %v5309 = vpop.f32.mrb[0].mxu0
        %v5310 = vadd.f32 %v5130, %v5309
        %v5311 = vpop.f32.mrb[0].mxu0
        %5312 = vmatprep.mubr.f32.mxu0 %v3504
        %5313 = vmatmul.mubr.f32.gmra.mrb[0].mxu0 %v3503
        %v5314 = vpop.f32.mrb[0].mxu0
        %v5315 = vadd.f32 %v5135, %v5314
        %v5316 = vpop.f32.mrb[0].mxu0
        %5317 = vmatprep.mubr.f32.mxu0 %v3593
        %5318 = vmatmul.mubr.f32.gmra.mrb[0].mxu0 %v3592
        %v5319 = vpop.f32.mrb[0].mxu0
        %v5320 = vadd.f32 %v5140, %v5319
        %v5321 = vpop.f32.mrb[0].mxu0
        %5322 = vmatprep.mubr.f32.mxu0 %v3682
        %5323 = vmatmul.mubr.f32.gmra.mrb[0].mxu0 %v3681
        %v5324 = vpop.f32.mrb[0].mxu0
        %v5325 = vadd.f32 %v5145, %v5324
        %v5326 = vpop.f32.mrb[0].mxu0
        %5327 = vmatprep.mubr.f32.mxu0 %v3771
        %5328 = vmatmul.mubr.f32.gmra.mrb[0].mxu0 %v3770
        %v5329 = vpop.f32.mrb[0].mxu0
        %v5330 = vadd.f32 %v5150, %v5329
        %v5331 = vpop.f32.mrb[0].mxu0
        %5332 = vmatprep.mubr.f32.mxu0 %v3860
        %5333 = vmatmul.mubr.f32.gmra.mrb[0].mxu0 %v3859
        %v5334 = vpop.f32.mrb[0].mxu0
        %v5335 = vadd.f32 %v5155, %v5334
        %v5336 = vpop.f32.mrb[0].mxu0
        %5337 = vmatprep.mubr.f32.mxu0 %v3949
        %5338 = vmatmul.mubr.f32.gmra.mrb[0].mxu0 %v3948
        %v5339 = vpop.f32.mrb[0].mxu0
        %v5340 = vadd.f32 %v5160, %v5339
        %v5341 = vpop.f32.mrb[0].mxu0
        %5342 = vmatprep.mubr.f32.mxu0 %v4038
        %5343 = vmatmul.mubr.f32.gmra.mrb[0].mxu0 %v4037
        %v5344 = vpop.f32.mrb[0].mxu0
        %v5345 = vadd.f32 %v5165, %v5344
        %v5346 = vpop.f32.mrb[0].mxu0
        %5347 = vmatprep.mubr.f32.mxu0 %v4127
        %5348 = vmatmul.mubr.f32.gmra.mrb[0].mxu0 %v4126
        %v5349 = vpop.f32.mrb[0].mxu0
        %v5350 = vadd.f32 %v5170, %v5349
        %v5351 = vpop.f32.mrb[0].mxu0
        %5352 = vmatprep.mubr.f32.mxu0 %v4216
        %5353 = vmatmul.mubr.f32.gmra.mrb[0].mxu0 %v4215
        %v5354 = vpop.f32.mrb[0].mxu0
        %v5355 = vadd.f32 %v5175, %v5354
        %v5356 = vpop.f32.mrb[0].mxu0
        %5357 = vmatprep.mubr.f32.mxu0 %v4305
        %5358 = vmatmul.mubr.f32.gmra.mrb[0].mxu0 %v4304
        %v5359 = vpop.f32.mrb[0].mxu0
        %v5360 = vadd.f32 %v5180, %v5359
        %v5361 = vpop.f32.mrb[0].mxu0
        %5362 = vmatprep.mubr.f32.mxu0 %v4394
        %5363 = vmatmul.mubr.f32.gmra.mrb[0].mxu0 %v4393
        %v5364 = vpop.f32.mrb[0].mxu0
        %v5365 = vadd.f32 %v5185, %v5364
        %v5366 = vpop.f32.mrb[0].mxu0
        %5367 = vmatprep.mubr.f32.mxu0 %v4483
        %5368 = vmatmul.mubr.f32.gmra.mrb[0].mxu0 %v4482
        %v5369 = vpop.f32.mrb[0].mxu0
        %v5370 = vadd.f32 %v5190, %v5369
        %v5371 = vpop.f32.mrb[0].mxu0
        %5372 = vmatprep.mubr.f32.mxu0 %v4572
        %5373 = vmatmul.mubr.f32.gmra.mrb[0].mxu0 %v4571
        %v5374 = vpop.f32.mrb[0].mxu0
        %v5375 = vadd.f32 %v5195, %v5374
        %v5376 = vpop.f32.mrb[0].mxu0
        %5377 = vmatprep.mubr.f32.mxu0 %v4626
        %5378 = vmatmul.mubr.f32.gmra.mrb[0].mxu0 %v4618
        %v5379 = vpop.f32.mrb[0].mxu0
        %v5380 = vadd.f32 %v5200, %v5379
        %v5381 = vpop.f32.mrb[0].mxu0
        %5382 = vdwg.mxu0
        %5383 = vmatprep.subr.mxu0 0.0
        %5384 = vmatpush1.msra.mxu0 %v2586
        %5385 = vmatprep.subr.mxu0 0.0
        %5386 = vmatpush1.msra.mxu0 %v2587
        %5387 = vmatprep.subr.mxu0 0.0
        %5388 = vmatpush1.msra.mxu0 %v2588
        %5389 = vmatprep.subr.mxu0 0.0
        %5390 = vmatpush1.msra.mxu0 %v2589
        %5391 = vmatprep.subr.mxu0 0.0
        %5392 = vmatpush1.msra.mxu0 %v2590
        %5393 = vmatprep.subr.mxu0 0.0
        %5394 = vmatpush1.msra.mxu0 %v2591
        %5395 = vmatprep.subr.mxu0 0.0
        %5396 = vmatpush1.msra.mxu0 %v2592
        %5397 = vmatprep.subr.mxu0 0.0
        %5398 = vmatpush1.msra.mxu0 %v2593
        %5399 = vmatprep.subr.mxu0 0.0
        %5400 = vmatpush1.msra.mxu0 %v2594
        %5401 = vmatprep.subr.mxu0 0.0
        %5402 = vmatpush1.msra.mxu0 %v2595
        %5403 = vmatprep.subr.mxu0 0.0
        %5404 = vmatpush1.msra.mxu0 %v2596
        %5405 = vmatprep.subr.mxu0 0.0
        %5406 = vmatpush1.msra.mxu0 %v2597
        %5407 = vmatprep.subr.mxu0 0.0
        %5408 = vmatpush1.msra.mxu0 %v2598
        %5409 = vmatprep.subr.mxu0 0.0
        %5410 = vmatpush1.msra.mxu0 %v2599
        %5411 = vmatprep.subr.mxu0 0.0
        %5412 = vmatpush1.msra.mxu0 %v2600
        %5413 = vmatprep.subr.mxu0 0.0
        %5414 = vmatpush1.msra.mxu0 %v2601
        %5415 = vmatprep.subr.mxu0 0.0
        %5416 = vmatpush1.msra.mxu0 %v2602
        %5417 = vmatprep.subr.mxu0 0.0
        %5418 = vmatpush1.msra.mxu0 %v2603
        %5419 = vmatprep.subr.mxu0 0.0
        %5420 = vmatpush1.msra.mxu0 %v2604
        %5421 = vmatprep.subr.mxu0 0.0
        %5422 = vmatpush1.msra.mxu0 %v2605
        %5423 = vmatprep.subr.mxu0 0.0
        %5424 = vmatpush1.msra.mxu0 %v2606
        %5425 = vmatprep.subr.mxu0 0.0
        %5426 = vmatpush1.msra.mxu0 %v2607
        %5427 = vmatprep.subr.mxu0 0.0
        %5428 = vmatpush1.msra.mxu0 %v2608
        %5429 = vmatprep.subr.mxu0 0.0
        %5430 = vmatpush1.msra.mxu0 %v2609
        %5431 = vmatprep.subr.mxu0 0.0
        %5432 = vmatpush1.msra.mxu0 %v2610
        %5433 = vmatprep.subr.mxu0 0.0
        %5434 = vmatpush1.msra.mxu0 %v2611
        %5435 = vmatprep.subr.mxu0 0.0
        %5436 = vmatpush1.msra.mxu0 %v2612
        %5437 = vmatprep.subr.mxu0 0.0
        %5438 = vmatpush1.msra.mxu0 %v2613
        %5439 = vmatprep.subr.mxu0 0.0
        %5440 = vmatpush1.msra.mxu0 %v2614
        %5441 = vmatprep.subr.mxu0 0.0
        %5442 = vmatpush1.msra.mxu0 %v2615
        %5443 = vmatprep.subr.mxu0 0.0
        %5444 = vmatpush1.msra.mxu0 %v2616
        %5445 = vmatprep.subr.mxu0 0.0
        %5446 = vmatpush1.msra.mxu0 %v2617
        %5447 = vmatprep.mubr.f32.mxu0 %v2705
        %5448 = vmatmul.mubr.f32.gmra.mrb[0].mxu0 %v2704
        %v5449 = vpop.f32.mrb[0].mxu0
        %v5450 = vadd.f32 %v5270, %v5449
        %v5451 = vpop.f32.mrb[0].mxu0
        %5452 = vmatprep.mubr.f32.mxu0 %v2794
        %5453 = vmatmul.mubr.f32.gmra.mrb[0].mxu0 %v2793
        %v5454 = vpop.f32.mrb[0].mxu0
        %v5455 = vadd.f32 %v5275, %v5454
        %v5456 = vpop.f32.mrb[0].mxu0
        %5457 = vmatprep.mubr.f32.mxu0 %v2883
        %5458 = vmatmul.mubr.f32.gmra.mrb[0].mxu0 %v2882
        %v5459 = vpop.f32.mrb[0].mxu0
        %v5460 = vadd.f32 %v5280, %v5459
        %v5461 = vpop.f32.mrb[0].mxu0
        %5462 = vmatprep.mubr.f32.mxu0 %v2972
        %5463 = vmatmul.mubr.f32.gmra.mrb[0].mxu0 %v2971
        %v5464 = vpop.f32.mrb[0].mxu0
        %v5465 = vadd.f32 %v5285, %v5464
        %v5466 = vpop.f32.mrb[0].mxu0
        %5467 = vmatprep.mubr.f32.mxu0 %v3061
        %5468 = vmatmul.mubr.f32.gmra.mrb[0].mxu0 %v3060
        %v5469 = vpop.f32.mrb[0].mxu0
        %v5470 = vadd.f32 %v5290, %v5469
        %v5471 = vpop.f32.mrb[0].mxu0
        %5472 = vmatprep.mubr.f32.mxu0 %v3150
        %5473 = vmatmul.mubr.f32.gmra.mrb[0].mxu0 %v3149
        %v5474 = vpop.f32.mrb[0].mxu0
        %v5475 = vadd.f32 %v5295, %v5474
        %v5476 = vpop.f32.mrb[0].mxu0
        %5477 = vmatprep.mubr.f32.mxu0 %v3239
        %5478 = vmatmul.mubr.f32.gmra.mrb[0].mxu0 %v3238
        %v5479 = vpop.f32.mrb[0].mxu0
        %v5480 = vadd.f32 %v5300, %v5479
        %v5481 = vpop.f32.mrb[0].mxu0
        %5482 = vmatprep.mubr.f32.mxu0 %v3328
        %5483 = vmatmul.mubr.f32.gmra.mrb[0].mxu0 %v3327
        %v5484 = vpop.f32.mrb[0].mxu0
        %v5485 = vadd.f32 %v5305, %v5484
        %v5486 = vpop.f32.mrb[0].mxu0
        %5487 = vmatprep.mubr.f32.mxu0 %v3417
        %5488 = vmatmul.mubr.f32.gmra.mrb[0].mxu0 %v3416
        %v5489 = vpop.f32.mrb[0].mxu0
        %v5490 = vadd.f32 %v5310, %v5489
        %v5491 = vpop.f32.mrb[0].mxu0
        %5492 = vmatprep.mubr.f32.mxu0 %v3506
        %5493 = vmatmul.mubr.f32.gmra.mrb[0].mxu0 %v3505
        %v5494 = vpop.f32.mrb[0].mxu0
        %v5495 = vadd.f32 %v5315, %v5494
        %v5496 = vpop.f32.mrb[0].mxu0
        %5497 = vmatprep.mubr.f32.mxu0 %v3595
        %5498 = vmatmul.mubr.f32.gmra.mrb[0].mxu0 %v3594
        %v5499 = vpop.f32.mrb[0].mxu0
        %v5500 = vadd.f32 %v5320, %v5499
        %v5501 = vpop.f32.mrb[0].mxu0
        %5502 = vmatprep.mubr.f32.mxu0 %v3684
        %5503 = vmatmul.mubr.f32.gmra.mrb[0].mxu0 %v3683
        %v5504 = vpop.f32.mrb[0].mxu0
        %v5505 = vadd.f32 %v5325, %v5504
        %v5506 = vpop.f32.mrb[0].mxu0
        %5507 = vmatprep.mubr.f32.mxu0 %v3773
        %5508 = vmatmul.mubr.f32.gmra.mrb[0].mxu0 %v3772
        %v5509 = vpop.f32.mrb[0].mxu0
        %v5510 = vadd.f32 %v5330, %v5509
        %v5511 = vpop.f32.mrb[0].mxu0
        %5512 = vmatprep.mubr.f32.mxu0 %v3862
        %5513 = vmatmul.mubr.f32.gmra.mrb[0].mxu0 %v3861
        %v5514 = vpop.f32.mrb[0].mxu0
        %v5515 = vadd.f32 %v5335, %v5514
        %v5516 = vpop.f32.mrb[0].mxu0
        %5517 = vmatprep.mubr.f32.mxu0 %v3951
        %5518 = vmatmul.mubr.f32.gmra.mrb[0].mxu0 %v3950
        %v5519 = vpop.f32.mrb[0].mxu0
        %v5520 = vadd.f32 %v5340, %v5519
        %v5521 = vpop.f32.mrb[0].mxu0
        %5522 = vmatprep.mubr.f32.mxu0 %v4040
        %5523 = vmatmul.mubr.f32.gmra.mrb[0].mxu0 %v4039
        %v5524 = vpop.f32.mrb[0].mxu0
        %v5525 = vadd.f32 %v5345, %v5524
        %v5526 = vpop.f32.mrb[0].mxu0
        %5527 = vmatprep.mubr.f32.mxu0 %v4129
        %5528 = vmatmul.mubr.f32.gmra.mrb[0].mxu0 %v4128
        %v5529 = vpop.f32.mrb[0].mxu0
        %v5530 = vadd.f32 %v5350, %v5529
        %v5531 = vpop.f32.mrb[0].mxu0
        %5532 = vmatprep.mubr.f32.mxu0 %v4218
        %5533 = vmatmul.mubr.f32.gmra.mrb[0].mxu0 %v4217
        %v5534 = vpop.f32.mrb[0].mxu0
        %v5535 = vadd.f32 %v5355, %v5534
        %v5536 = vpop.f32.mrb[0].mxu0
        %5537 = vmatprep.mubr.f32.mxu0 %v4307
        %5538 = vmatmul.mubr.f32.gmra.mrb[0].mxu0 %v4306
        %v5539 = vpop.f32.mrb[0].mxu0
        %v5540 = vadd.f32 %v5360, %v5539
        %v5541 = vpop.f32.mrb[0].mxu0
        %5542 = vmatprep.mubr.f32.mxu0 %v4396
        %5543 = vmatmul.mubr.f32.gmra.mrb[0].mxu0 %v4395
        %v5544 = vpop.f32.mrb[0].mxu0
        %v5545 = vadd.f32 %v5365, %v5544
        %v5546 = vpop.f32.mrb[0].mxu0
        %5547 = vmatprep.mubr.f32.mxu0 %v4485
        %5548 = vmatmul.mubr.f32.gmra.mrb[0].mxu0 %v4484
        %v5549 = vpop.f32.mrb[0].mxu0
        %v5550 = vadd.f32 %v5370, %v5549
        %v5551 = vpop.f32.mrb[0].mxu0
        %5552 = vmatprep.mubr.f32.mxu0 %v4574
        %5553 = vmatmul.mubr.f32.gmra.mrb[0].mxu0 %v4573
        %v5554 = vpop.f32.mrb[0].mxu0
        %v5555 = vadd.f32 %v5375, %v5554
        %v5556 = vpop.f32.mrb[0].mxu0
        %5557 = vmatprep.mubr.f32.mxu0 %v4627
        %5558 = vmatmul.mubr.f32.gmra.mrb[0].mxu0 %v4625
        %v5559 = vpop.f32.mrb[0].mxu0
        %v5560 = vadd.f32 %v5380, %v5559
        %v5561 = vpop.f32.mrb[0].mxu0
        %5562 = vdwg.mxu0
        %5563 = vmatprep.subr.mxu0 0.0
        %5564 = vmatpush1.msra.mxu0 %v2618
        %5565 = vmatprep.subr.mxu0 0.0
        %5566 = vmatpush1.msra.mxu0 %v2619
        %5567 = vmatprep.subr.mxu0 0.0
        %5568 = vmatpush1.msra.mxu0 %v2620
        %5569 = vmatprep.subr.mxu0 0.0
        %5570 = vmatpush1.msra.mxu0 %v2621
        %5571 = vmatprep.subr.mxu0 0.0
        %5572 = vmatpush1.msra.mxu0 %v2622
        %5573 = vmatprep.subr.mxu0 0.0
        %5574 = vmatpush1.msra.mxu0 %v2623
        %5575 = vmatprep.subr.mxu0 0.0
        %5576 = vmatpush1.msra.mxu0 %v2624
        %5577 = vmatprep.subr.mxu0 0.0
        %5578 = vmatpush1.msra.mxu0 %v2625
        %5579 = vmatprep.subr.mxu0 0.0
        %5580 = vmatpush1.msra.mxu0 %v2626
        %5581 = vmatprep.subr.mxu0 0.0
        %5582 = vmatpush1.msra.mxu0 %v2627
        %5583 = vmatprep.subr.mxu0 0.0
        %5584 = vmatpush1.msra.mxu0 %v2628
        %5585 = vmatprep.subr.mxu0 0.0
        %5586 = vmatpush1.msra.mxu0 %v2629
        %5587 = vmatprep.subr.mxu0 0.0
        %5588 = vmatpush1.msra.mxu0 %v2630
        %5589 = vmatprep.subr.mxu0 0.0
        %5590 = vmatpush1.msra.mxu0 %v2631
        %5591 = vmatprep.subr.mxu0 0.0
        %5592 = vmatpush1.msra.mxu0 %v2632
        %5593 = vmatprep.subr.mxu0 0.0
        %5594 = vmatpush1.msra.mxu0 %v2633
        %5595 = vmatprep.subr.mxu0 0.0
        %5596 = vmatpush1.msra.mxu0 0.0
        %5597 = vmatprep.subr.mxu0 0.0
        %5598 = vmatpush1.msra.mxu0 0.0
        %5599 = vmatprep.subr.mxu0 0.0
        %5600 = vmatpush1.msra.mxu0 0.0
        %5601 = vmatprep.subr.mxu0 0.0
        %5602 = vmatpush1.msra.mxu0 0.0
        %5603 = vmatprep.subr.mxu0 0.0
        %5604 = vmatpush1.msra.mxu0 0.0
        %5605 = vmatprep.subr.mxu0 0.0
        %5606 = vmatpush1.msra.mxu0 0.0
        %5607 = vmatprep.subr.mxu0 0.0
        %5608 = vmatpush1.msra.mxu0 0.0
        %5609 = vmatprep.subr.mxu0 0.0
        %5610 = vmatpush1.msra.mxu0 0.0
        %5611 = vmatprep.subr.mxu0 0.0
        %5612 = vmatpush1.msra.mxu0 0.0
        %5613 = vmatprep.subr.mxu0 0.0
        %5614 = vmatpush1.msra.mxu0 0.0
        %5615 = vmatprep.subr.mxu0 0.0
        %5616 = vmatpush1.msra.mxu0 0.0
        %5617 = vmatprep.subr.mxu0 0.0
        %5618 = vmatpush1.msra.mxu0 0.0
        %5619 = vmatprep.subr.mxu0 0.0
        %5620 = vmatpush1.msra.mxu0 0.0
        %5621 = vmatprep.subr.mxu0 0.0
        %5622 = vmatpush1.msra.mxu0 0.0
        %5623 = vmatprep.subr.mxu0 0.0
        %5624 = vmatpush1.msra.mxu0 0.0
        %5625 = vmatprep.subr.mxu0 0.0
        %5626 = vmatpush1.msra.mxu0 0.0
        %5627 = vmatprep.mubr.f32.mxu0 0.0
        %5628 = vmatmul.mubr.f32.gmra.mrb[0].mxu0 %v2722
        %v5629 = vpop.f32.mrb[0].mxu0
        %v5630 = vadd.f32 %v5450, %v5629
        %v5631 = vpop.f32.mrb[0].mxu0
        %5632 = vmatprep.mubr.f32.mxu0 0.0
        %5633 = vmatmul.mubr.f32.gmra.mrb[0].mxu0 %v2811
        %v5634 = vpop.f32.mrb[0].mxu0
        %v5635 = vadd.f32 %v5455, %v5634
        %v5636 = vpop.f32.mrb[0].mxu0
        %5637 = vmatprep.mubr.f32.mxu0 0.0
        %5638 = vmatmul.mubr.f32.gmra.mrb[0].mxu0 %v2900
        %v5639 = vpop.f32.mrb[0].mxu0
        %v5640 = vadd.f32 %v5460, %v5639
        %v5641 = vpop.f32.mrb[0].mxu0
        %5642 = vmatprep.mubr.f32.mxu0 0.0
        %5643 = vmatmul.mubr.f32.gmra.mrb[0].mxu0 %v2989
        %v5644 = vpop.f32.mrb[0].mxu0
        %v5645 = vadd.f32 %v5465, %v5644
        %v5646 = vpop.f32.mrb[0].mxu0
        %5647 = vmatprep.mubr.f32.mxu0 0.0
        %5648 = vmatmul.mubr.f32.gmra.mrb[0].mxu0 %v3078
        %v5649 = vpop.f32.mrb[0].mxu0
        %v5650 = vadd.f32 %v5470, %v5649
        %v5651 = vpop.f32.mrb[0].mxu0
        %5652 = vmatprep.mubr.f32.mxu0 0.0
        %5653 = vmatmul.mubr.f32.gmra.mrb[0].mxu0 %v3167
        %v5654 = vpop.f32.mrb[0].mxu0
        %v5655 = vadd.f32 %v5475, %v5654
        %v5656 = vpop.f32.mrb[0].mxu0
        %5657 = vmatprep.mubr.f32.mxu0 0.0
        %5658 = vmatmul.mubr.f32.gmra.mrb[0].mxu0 %v3256
        %v5659 = vpop.f32.mrb[0].mxu0
        %v5660 = vadd.f32 %v5480, %v5659
        %v5661 = vpop.f32.mrb[0].mxu0
        %5662 = vmatprep.mubr.f32.mxu0 0.0
        %5663 = vmatmul.mubr.f32.gmra.mrb[0].mxu0 %v3345
        %v5664 = vpop.f32.mrb[0].mxu0
        %v5665 = vadd.f32 %v5485, %v5664
        %v5666 = vpop.f32.mrb[0].mxu0
        %5667 = vmatprep.mubr.f32.mxu0 0.0
        %5668 = vmatmul.mubr.f32.gmra.mrb[0].mxu0 %v3434
        %v5669 = vpop.f32.mrb[0].mxu0
        %v5670 = vadd.f32 %v5490, %v5669
        %v5671 = vpop.f32.mrb[0].mxu0
        %5672 = vmatprep.mubr.f32.mxu0 0.0
        %5673 = vmatmul.mubr.f32.gmra.mrb[0].mxu0 %v3523
        %v5674 = vpop.f32.mrb[0].mxu0
        %v5675 = vadd.f32 %v5495, %v5674
        %v5676 = vpop.f32.mrb[0].mxu0
        %5677 = vmatprep.mubr.f32.mxu0 0.0
        %5678 = vmatmul.mubr.f32.gmra.mrb[0].mxu0 %v3612
        %v5679 = vpop.f32.mrb[0].mxu0
        %v5680 = vadd.f32 %v5500, %v5679
        %v5681 = vpop.f32.mrb[0].mxu0
        %5682 = vmatprep.mubr.f32.mxu0 0.0
        %5683 = vmatmul.mubr.f32.gmra.mrb[0].mxu0 %v3701
        %v5684 = vpop.f32.mrb[0].mxu0
        %v5685 = vadd.f32 %v5505, %v5684
        %v5686 = vpop.f32.mrb[0].mxu0
        %5687 = vmatprep.mubr.f32.mxu0 0.0
        %5688 = vmatmul.mubr.f32.gmra.mrb[0].mxu0 %v3790
        %v5689 = vpop.f32.mrb[0].mxu0
        %v5690 = vadd.f32 %v5510, %v5689
        %v5691 = vpop.f32.mrb[0].mxu0
        %5692 = vmatprep.mubr.f32.mxu0 0.0
        %5693 = vmatmul.mubr.f32.gmra.mrb[0].mxu0 %v3879
        %v5694 = vpop.f32.mrb[0].mxu0
        %v5695 = vadd.f32 %v5515, %v5694
        %v5696 = vpop.f32.mrb[0].mxu0
        %5697 = vmatprep.mubr.f32.mxu0 0.0
        %5698 = vmatmul.mubr.f32.gmra.mrb[0].mxu0 %v3968
        %v5699 = vpop.f32.mrb[0].mxu0
        %v5700 = vadd.f32 %v5520, %v5699
        %v5701 = vpop.f32.mrb[0].mxu0
        %5702 = vmatprep.mubr.f32.mxu0 0.0
        %5703 = vmatmul.mubr.f32.gmra.mrb[0].mxu0 %v4057
        %v5704 = vpop.f32.mrb[0].mxu0
        %v5705 = vadd.f32 %v5525, %v5704
        %v5706 = vpop.f32.mrb[0].mxu0
        %5707 = vmatprep.mubr.f32.mxu0 0.0
        %5708 = vmatmul.mubr.f32.gmra.mrb[0].mxu0 %v4146
        %v5709 = vpop.f32.mrb[0].mxu0
        %v5710 = vadd.f32 %v5530, %v5709
        %v5711 = vpop.f32.mrb[0].mxu0
        %5712 = vmatprep.mubr.f32.mxu0 0.0
        %5713 = vmatmul.mubr.f32.gmra.mrb[0].mxu0 %v4235
        %v5714 = vpop.f32.mrb[0].mxu0
        %v5715 = vadd.f32 %v5535, %v5714
        %v5716 = vpop.f32.mrb[0].mxu0
        %5717 = vmatprep.mubr.f32.mxu0 0.0
        %5718 = vmatmul.mubr.f32.gmra.mrb[0].mxu0 %v4324
        %v5719 = vpop.f32.mrb[0].mxu0
        %v5720 = vadd.f32 %v5540, %v5719
        %v5721 = vpop.f32.mrb[0].mxu0
        %5722 = vmatprep.mubr.f32.mxu0 0.0
        %5723 = vmatmul.mubr.f32.gmra.mrb[0].mxu0 %v4413
        %v5724 = vpop.f32.mrb[0].mxu0
        %v5725 = vadd.f32 %v5545, %v5724
        %v5726 = vpop.f32.mrb[0].mxu0
        %5727 = vmatprep.mubr.f32.mxu0 0.0
        %5728 = vmatmul.mubr.f32.gmra.mrb[0].mxu0 %v4502
        %v5729 = vpop.f32.mrb[0].mxu0
        %v5730 = vadd.f32 %v5550, %v5729
        %v5731 = vpop.f32.mrb[0].mxu0
        %5732 = vmatprep.mubr.f32.mxu0 0.0
        %5733 = vmatmul.mubr.f32.gmra.mrb[0].mxu0 %v4591
        %v5734 = vpop.f32.mrb[0].mxu0
        %v5735 = vadd.f32 %v5555, %v5734
        %v5736 = vpop.f32.mrb[0].mxu0
        %5737 = vmatprep.mubr.f32.mxu0 0.0
        %5738 = vmatmul.mubr.f32.gmra.mrb[0].mxu0 %v4635
        %v5739 = vpop.f32.mrb[0].mxu0
        %v5740 = vadd.f32 %v5560, %v5739
        %v5741 = vpop.f32.mrb[0].mxu0
        %5742 = vdwg.mxu0
        %v5743 = vld [vmem:[%s3] sm:$0x1]
        %v5745 = vlaneseq
        %v5746 = vshrl.u32 %v5745, 7
        %v5747 = vsub.s32 0, %v5746
        %v5748 = vrot.slane %v5743, %v5747
        %v5750 = vmul.f32 %v5630, %v5748
        %v5751 = vmul.f32 %v5635, %v5748
        %v5752 = vmul.f32 %v5640, %v5748
        %v5753 = vmul.f32 %v5645, %v5748
        %v5754 = vmul.f32 %v5650, %v5748
        %v5755 = vmul.f32 %v5655, %v5748
        %v5756 = vmul.f32 %v5660, %v5748
        %v5757 = vmul.f32 %v5665, %v5748
        %v5758 = vmul.f32 %v5670, %v5748
        %v5759 = vmul.f32 %v5675, %v5748
        %v5760 = vmul.f32 %v5680, %v5748
        %v5761 = vmul.f32 %v5685, %v5748
        %v5762 = vmul.f32 %v5690, %v5748
        %v5763 = vmul.f32 %v5695, %v5748
        %v5764 = vmul.f32 %v5700, %v5748
        %v5765 = vmul.f32 %v5705, %v5748
        %v5766 = vmul.f32 %v5710, %v5748
        %v5767 = vmul.f32 %v5715, %v5748
        %v5768 = vmul.f32 %v5720, %v5748
        %v5769 = vmul.f32 %v5725, %v5748
        %v5770 = vmul.f32 %v5730, %v5748
        %v5771 = vmul.f32 %v5735, %v5748
        %v5772 = vmul.f32 %v5740, %v5748
        %v5773 = vld [vmem:[%s4] sm:$0x1]
        %v5775 = vlaneseq
        %v5776 = vshrl.u32 %v5775, 7
        %v5777 = vsub.s32 0, %v5776
        %v5778 = vrot.slane %v5773, %v5777
        %v5780 = vadd.f32 %v5750, %v5778
        %v5781 = vadd.f32 %v5751, %v5778
        %v5782 = vadd.f32 %v5752, %v5778
        %v5783 = vadd.f32 %v5753, %v5778
        %v5784 = vadd.f32 %v5754, %v5778
        %v5785 = vadd.f32 %v5755, %v5778
        %v5786 = vadd.f32 %v5756, %v5778
        %v5787 = vadd.f32 %v5757, %v5778
        %v5788 = vadd.f32 %v5758, %v5778
        %v5789 = vadd.f32 %v5759, %v5778
        %v5790 = vadd.f32 %v5760, %v5778
        %v5791 = vadd.f32 %v5761, %v5778
        %v5792 = vadd.f32 %v5762, %v5778
        %v5793 = vadd.f32 %v5763, %v5778
        %v5794 = vadd.f32 %v5764, %v5778
        %v5795 = vadd.f32 %v5765, %v5778
        %v5796 = vadd.f32 %v5766, %v5778
        %v5797 = vadd.f32 %v5767, %v5778
        %v5798 = vadd.f32 %v5768, %v5778
        %v5799 = vadd.f32 %v5769, %v5778
        %v5800 = vadd.f32 %v5770, %v5778
        %v5801 = vadd.f32 %v5771, %v5778
        %v5802 = vadd.f32 %v5772, %v5778
        %v5803 = vmax.f32 %v5780, 0.0
        %v5804 = vmax.f32 %v5781, 0.0
        %v5805 = vmax.f32 %v5782, 0.0
        %v5806 = vmax.f32 %v5783, 0.0
        %v5807 = vmax.f32 %v5784, 0.0
        %v5808 = vmax.f32 %v5785, 0.0
        %v5809 = vmax.f32 %v5786, 0.0
        %v5810 = vmax.f32 %v5787, 0.0
        %v5811 = vmax.f32 %v5788, 0.0
        %v5812 = vmax.f32 %v5789, 0.0
        %v5813 = vmax.f32 %v5790, 0.0
        %v5814 = vmax.f32 %v5791, 0.0
        %v5815 = vmax.f32 %v5792, 0.0
        %v5816 = vmax.f32 %v5793, 0.0
        %v5817 = vmax.f32 %v5794, 0.0
        %v5818 = vmax.f32 %v5795, 0.0
        %v5819 = vmax.f32 %v5796, 0.0
        %v5820 = vmax.f32 %v5797, 0.0
        %v5821 = vmax.f32 %v5798, 0.0
        %v5822 = vmax.f32 %v5799, 0.0
        %v5823 = vmax.f32 %v5800, 0.0
        %v5824 = vmax.f32 %v5801, 0.0
        %v5825 = vmax.f32 %v5802, 0.0
        %v5849 = vcombine.high %v5803, %v5803
        %v5851 = vunpack.c.l.s4 1983009808
        %v5852 = vunpack.c.0.s8 %v5851
        %v5853 = vlaneseq
        %v5854 = vshrl.u32 %v5853, 7
        %v5855 = vsub.s32 %v5852, %v5854
        %v5856 = vrot.slane %v5803, %v5855
        %v5858 = vunpack.c.l.s4 1983009808
        %v5859 = vunpack.c.0.s8 %v5858
        %v5860 = vlaneseq
        %v5861 = vshrl.u32 %v5860, 7
        %v5862 = vsub.s32 %v5859, %v5861
        %v5863 = vrot.slane %v5849, %v5862
        %v5864 = vcombine.high %v5856, %v5856
        %v5865 = vcombine.high %v5863, %v5863
        %v5866 = vcombine.high %v5804, %v5804
        %v5868 = vunpack.c.l.s4 1983009808
        %v5869 = vunpack.c.0.s8 %v5868
        %v5870 = vlaneseq
        %v5871 = vshrl.u32 %v5870, 7
        %v5872 = vsub.s32 %v5869, %v5871
        %v5873 = vrot.slane %v5804, %v5872
        %v5875 = vunpack.c.l.s4 1983009808
        %v5876 = vunpack.c.0.s8 %v5875
        %v5877 = vlaneseq
        %v5878 = vshrl.u32 %v5877, 7
        %v5879 = vsub.s32 %v5876, %v5878
        %v5880 = vrot.slane %v5866, %v5879
        %v5881 = vcombine.high %v5873, %v5873
        %v5882 = vcombine.high %v5880, %v5880
        %v5883 = vcombine.high %v5805, %v5805
        %v5885 = vunpack.c.l.s4 1983009808
        %v5886 = vunpack.c.0.s8 %v5885
        %v5887 = vlaneseq
        %v5888 = vshrl.u32 %v5887, 7
        %v5889 = vsub.s32 %v5886, %v5888
        %v5890 = vrot.slane %v5805, %v5889
        %v5892 = vunpack.c.l.s4 1983009808
        %v5893 = vunpack.c.0.s8 %v5892
        %v5894 = vlaneseq
        %v5895 = vshrl.u32 %v5894, 7
        %v5896 = vsub.s32 %v5893, %v5895
        %v5897 = vrot.slane %v5883, %v5896
        %v5898 = vcombine.high %v5890, %v5890
        %v5899 = vcombine.high %v5897, %v5897
        %v5900 = vcombine.high %v5806, %v5806
        %v5902 = vunpack.c.l.s4 1983009808
        %v5903 = vunpack.c.0.s8 %v5902
        %v5904 = vlaneseq
        %v5905 = vshrl.u32 %v5904, 7
        %v5906 = vsub.s32 %v5903, %v5905
        %v5907 = vrot.slane %v5806, %v5906
        %v5909 = vunpack.c.l.s4 1983009808
        %v5910 = vunpack.c.0.s8 %v5909
        %v5911 = vlaneseq
        %v5912 = vshrl.u32 %v5911, 7
        %v5913 = vsub.s32 %v5910, %v5912
        %v5914 = vrot.slane %v5900, %v5913
        %v5915 = vcombine.high %v5907, %v5907
        %v5916 = vcombine.high %v5914, %v5914
        %v5917 = vcombine.high %v5807, %v5807
        %v5919 = vunpack.c.l.s4 1983009808
        %v5920 = vunpack.c.0.s8 %v5919
        %v5921 = vlaneseq
        %v5922 = vshrl.u32 %v5921, 7
        %v5923 = vsub.s32 %v5920, %v5922
        %v5924 = vrot.slane %v5807, %v5923
        %v5926 = vunpack.c.l.s4 1983009808
        %v5927 = vunpack.c.0.s8 %v5926
        %v5928 = vlaneseq
        %v5929 = vshrl.u32 %v5928, 7
        %v5930 = vsub.s32 %v5927, %v5929
        %v5931 = vrot.slane %v5917, %v5930
        %v5932 = vcombine.high %v5924, %v5924
        %v5933 = vcombine.high %v5931, %v5931
        %v5934 = vcombine.high %v5808, %v5808
        %v5936 = vunpack.c.l.s4 1983009808
        %v5937 = vunpack.c.0.s8 %v5936
        %v5938 = vlaneseq
        %v5939 = vshrl.u32 %v5938, 7
        %v5940 = vsub.s32 %v5937, %v5939
        %v5941 = vrot.slane %v5808, %v5940
        %v5943 = vunpack.c.l.s4 1983009808
        %v5944 = vunpack.c.0.s8 %v5943
        %v5945 = vlaneseq
        %v5946 = vshrl.u32 %v5945, 7
        %v5947 = vsub.s32 %v5944, %v5946
        %v5948 = vrot.slane %v5934, %v5947
        %v5949 = vcombine.high %v5941, %v5941
        %v5950 = vcombine.high %v5948, %v5948
        %v5951 = vcombine.high %v5809, %v5809
        %v5953 = vunpack.c.l.s4 1983009808
        %v5954 = vunpack.c.0.s8 %v5953
        %v5955 = vlaneseq
        %v5956 = vshrl.u32 %v5955, 7
        %v5957 = vsub.s32 %v5954, %v5956
        %v5958 = vrot.slane %v5809, %v5957
        %v5960 = vunpack.c.l.s4 1983009808
        %v5961 = vunpack.c.0.s8 %v5960
        %v5962 = vlaneseq
        %v5963 = vshrl.u32 %v5962, 7
        %v5964 = vsub.s32 %v5961, %v5963
        %v5965 = vrot.slane %v5951, %v5964
        %v5966 = vcombine.high %v5958, %v5958
        %v5967 = vcombine.high %v5965, %v5965
        %v5968 = vcombine.high %v5810, %v5810
        %v5970 = vunpack.c.l.s4 1983009808
        %v5971 = vunpack.c.0.s8 %v5970
        %v5972 = vlaneseq
        %v5973 = vshrl.u32 %v5972, 7
        %v5974 = vsub.s32 %v5971, %v5973
        %v5975 = vrot.slane %v5810, %v5974
        %v5977 = vunpack.c.l.s4 1983009808
        %v5978 = vunpack.c.0.s8 %v5977
        %v5979 = vlaneseq
        %v5980 = vshrl.u32 %v5979, 7
        %v5981 = vsub.s32 %v5978, %v5980
        %v5982 = vrot.slane %v5968, %v5981
        %v5983 = vcombine.high %v5975, %v5975
        %v5984 = vcombine.high %v5982, %v5982
        %v5985 = vcombine.high %v5811, %v5811
        %v5987 = vunpack.c.l.s4 1983009808
        %v5988 = vunpack.c.0.s8 %v5987
        %v5989 = vlaneseq
        %v5990 = vshrl.u32 %v5989, 7
        %v5991 = vsub.s32 %v5988, %v5990
        %v5992 = vrot.slane %v5811, %v5991
        %v5994 = vunpack.c.l.s4 1983009808
        %v5995 = vunpack.c.0.s8 %v5994
        %v5996 = vlaneseq
        %v5997 = vshrl.u32 %v5996, 7
        %v5998 = vsub.s32 %v5995, %v5997
        %v5999 = vrot.slane %v5985, %v5998
        %v6000 = vcombine.high %v5992, %v5992
        %v6001 = vcombine.high %v5999, %v5999
        %v6002 = vcombine.high %v5812, %v5812
        %v6004 = vunpack.c.l.s4 1983009808
        %v6005 = vunpack.c.0.s8 %v6004
        %v6006 = vlaneseq
        %v6007 = vshrl.u32 %v6006, 7
        %v6008 = vsub.s32 %v6005, %v6007
        %v6009 = vrot.slane %v5812, %v6008
        %v6011 = vunpack.c.l.s4 1983009808
        %v6012 = vunpack.c.0.s8 %v6011
        %v6013 = vlaneseq
        %v6014 = vshrl.u32 %v6013, 7
        %v6015 = vsub.s32 %v6012, %v6014
        %v6016 = vrot.slane %v6002, %v6015
        %v6017 = vcombine.high %v6009, %v6009
        %v6018 = vcombine.high %v6016, %v6016
        %v6019 = vcombine.high %v5813, %v5813
        %v6021 = vunpack.c.l.s4 1983009808
        %v6022 = vunpack.c.0.s8 %v6021
        %v6023 = vlaneseq
        %v6024 = vshrl.u32 %v6023, 7
        %v6025 = vsub.s32 %v6022, %v6024
        %v6026 = vrot.slane %v5813, %v6025
        %v6028 = vunpack.c.l.s4 1983009808
        %v6029 = vunpack.c.0.s8 %v6028
        %v6030 = vlaneseq
        %v6031 = vshrl.u32 %v6030, 7
        %v6032 = vsub.s32 %v6029, %v6031
        %v6033 = vrot.slane %v6019, %v6032
        %v6034 = vcombine.high %v6026, %v6026
        %v6035 = vcombine.high %v6033, %v6033
        %v6036 = vcombine.high %v5814, %v5814
        %v6038 = vunpack.c.l.s4 1983009808
        %v6039 = vunpack.c.0.s8 %v6038
        %v6040 = vlaneseq
        %v6041 = vshrl.u32 %v6040, 7
        %v6042 = vsub.s32 %v6039, %v6041
        %v6043 = vrot.slane %v5814, %v6042
        %v6045 = vunpack.c.l.s4 1983009808
        %v6046 = vunpack.c.0.s8 %v6045
        %v6047 = vlaneseq
        %v6048 = vshrl.u32 %v6047, 7
        %v6049 = vsub.s32 %v6046, %v6048
        %v6050 = vrot.slane %v6036, %v6049
        %v6051 = vcombine.high %v6043, %v6043
        %v6052 = vcombine.high %v6050, %v6050
        %v6053 = vcombine.high %v5815, %v5815
        %v6055 = vunpack.c.l.s4 1983009808
        %v6056 = vunpack.c.0.s8 %v6055
        %v6057 = vlaneseq
        %v6058 = vshrl.u32 %v6057, 7
        %v6059 = vsub.s32 %v6056, %v6058
        %v6060 = vrot.slane %v5815, %v6059
        %v6062 = vunpack.c.l.s4 1983009808
        %v6063 = vunpack.c.0.s8 %v6062
        %v6064 = vlaneseq
        %v6065 = vshrl.u32 %v6064, 7
        %v6066 = vsub.s32 %v6063, %v6065
        %v6067 = vrot.slane %v6053, %v6066
        %v6068 = vcombine.high %v6060, %v6060
        %v6069 = vcombine.high %v6067, %v6067
        %v6070 = vcombine.high %v5816, %v5816
        %v6072 = vunpack.c.l.s4 1983009808
        %v6073 = vunpack.c.0.s8 %v6072
        %v6074 = vlaneseq
        %v6075 = vshrl.u32 %v6074, 7
        %v6076 = vsub.s32 %v6073, %v6075
        %v6077 = vrot.slane %v5816, %v6076
        %v6079 = vunpack.c.l.s4 1983009808
        %v6080 = vunpack.c.0.s8 %v6079
        %v6081 = vlaneseq
        %v6082 = vshrl.u32 %v6081, 7
        %v6083 = vsub.s32 %v6080, %v6082
        %v6084 = vrot.slane %v6070, %v6083
        %v6085 = vcombine.high %v6077, %v6077
        %v6086 = vcombine.high %v6084, %v6084
        %v6087 = vcombine.high %v5817, %v5817
        %v6089 = vunpack.c.l.s4 1983009808
        %v6090 = vunpack.c.0.s8 %v6089
        %v6091 = vlaneseq
        %v6092 = vshrl.u32 %v6091, 7
        %v6093 = vsub.s32 %v6090, %v6092
        %v6094 = vrot.slane %v5817, %v6093
        %v6096 = vunpack.c.l.s4 1983009808
        %v6097 = vunpack.c.0.s8 %v6096
        %v6098 = vlaneseq
        %v6099 = vshrl.u32 %v6098, 7
        %v6100 = vsub.s32 %v6097, %v6099
        %v6101 = vrot.slane %v6087, %v6100
        %v6102 = vcombine.high %v6094, %v6094
        %v6103 = vcombine.high %v6101, %v6101
        %v6104 = vcombine.high %v5818, %v5818
        %v6106 = vunpack.c.l.s4 1983009808
        %v6107 = vunpack.c.0.s8 %v6106
        %v6108 = vlaneseq
        %v6109 = vshrl.u32 %v6108, 7
        %v6110 = vsub.s32 %v6107, %v6109
        %v6111 = vrot.slane %v5818, %v6110
        %v6113 = vunpack.c.l.s4 1983009808
        %v6114 = vunpack.c.0.s8 %v6113
        %v6115 = vlaneseq
        %v6116 = vshrl.u32 %v6115, 7
        %v6117 = vsub.s32 %v6114, %v6116
        %v6118 = vrot.slane %v6104, %v6117
        %v6119 = vcombine.high %v6111, %v6111
        %v6120 = vcombine.high %v6118, %v6118
        %v6121 = vcombine.high %v5819, %v5819
        %v6123 = vunpack.c.l.s4 1983009808
        %v6124 = vunpack.c.0.s8 %v6123
        %v6125 = vlaneseq
        %v6126 = vshrl.u32 %v6125, 7
        %v6127 = vsub.s32 %v6124, %v6126
        %v6128 = vrot.slane %v5819, %v6127
        %v6130 = vunpack.c.l.s4 1983009808
        %v6131 = vunpack.c.0.s8 %v6130
        %v6132 = vlaneseq
        %v6133 = vshrl.u32 %v6132, 7
        %v6134 = vsub.s32 %v6131, %v6133
        %v6135 = vrot.slane %v6121, %v6134
        %v6136 = vcombine.high %v6128, %v6128
        %v6137 = vcombine.high %v6135, %v6135
        %v6138 = vcombine.high %v5820, %v5820
        %v6140 = vunpack.c.l.s4 1983009808
        %v6141 = vunpack.c.0.s8 %v6140
        %v6142 = vlaneseq
        %v6143 = vshrl.u32 %v6142, 7
        %v6144 = vsub.s32 %v6141, %v6143
        %v6145 = vrot.slane %v5820, %v6144
        %v6147 = vunpack.c.l.s4 1983009808
        %v6148 = vunpack.c.0.s8 %v6147
        %v6149 = vlaneseq
        %v6150 = vshrl.u32 %v6149, 7
        %v6151 = vsub.s32 %v6148, %v6150
        %v6152 = vrot.slane %v6138, %v6151
        %v6153 = vcombine.high %v6145, %v6145
        %v6154 = vcombine.high %v6152, %v6152
        %v6155 = vcombine.high %v5821, %v5821
        %v6157 = vunpack.c.l.s4 1983009808
        %v6158 = vunpack.c.0.s8 %v6157
        %v6159 = vlaneseq
        %v6160 = vshrl.u32 %v6159, 7
        %v6161 = vsub.s32 %v6158, %v6160
        %v6162 = vrot.slane %v5821, %v6161
        %v6164 = vunpack.c.l.s4 1983009808
        %v6165 = vunpack.c.0.s8 %v6164
        %v6166 = vlaneseq
        %v6167 = vshrl.u32 %v6166, 7
        %v6168 = vsub.s32 %v6165, %v6167
        %v6169 = vrot.slane %v6155, %v6168
        %v6170 = vcombine.high %v6162, %v6162
        %v6171 = vcombine.high %v6169, %v6169
        %v6172 = vcombine.high %v5822, %v5822
        %v6174 = vunpack.c.l.s4 1983009808
        %v6175 = vunpack.c.0.s8 %v6174
        %v6176 = vlaneseq
        %v6177 = vshrl.u32 %v6176, 7
        %v6178 = vsub.s32 %v6175, %v6177
        %v6179 = vrot.slane %v5822, %v6178
        %v6181 = vunpack.c.l.s4 1983009808
        %v6182 = vunpack.c.0.s8 %v6181
        %v6183 = vlaneseq
        %v6184 = vshrl.u32 %v6183, 7
        %v6185 = vsub.s32 %v6182, %v6184
        %v6186 = vrot.slane %v6172, %v6185
        %v6187 = vcombine.high %v6179, %v6179
        %v6188 = vcombine.high %v6186, %v6186
        %v6189 = vcombine.high %v5823, %v5823
        %v6191 = vunpack.c.l.s4 1983009808
        %v6192 = vunpack.c.0.s8 %v6191
        %v6193 = vlaneseq
        %v6194 = vshrl.u32 %v6193, 7
        %v6195 = vsub.s32 %v6192, %v6194
        %v6196 = vrot.slane %v5823, %v6195
        %v6198 = vunpack.c.l.s4 1983009808
        %v6199 = vunpack.c.0.s8 %v6198
        %v6200 = vlaneseq
        %v6201 = vshrl.u32 %v6200, 7
        %v6202 = vsub.s32 %v6199, %v6201
        %v6203 = vrot.slane %v6189, %v6202
        %v6204 = vcombine.high %v6196, %v6196
        %v6205 = vcombine.high %v6203, %v6203
        %v6206 = vcombine.high %v5824, %v5824
        %v6208 = vunpack.c.l.s4 1983009808
        %v6209 = vunpack.c.0.s8 %v6208
        %v6210 = vlaneseq
        %v6211 = vshrl.u32 %v6210, 7
        %v6212 = vsub.s32 %v6209, %v6211
        %v6213 = vrot.slane %v5824, %v6212
        %v6215 = vunpack.c.l.s4 1983009808
        %v6216 = vunpack.c.0.s8 %v6215
        %v6217 = vlaneseq
        %v6218 = vshrl.u32 %v6217, 7
        %v6219 = vsub.s32 %v6216, %v6218
        %v6220 = vrot.slane %v6206, %v6219
        %v6221 = vcombine.high %v6213, %v6213
        %v6222 = vcombine.high %v6220, %v6220
        %v6224 = vunpack.c.l.s4 1983009808
        %v6225 = vunpack.c.0.s8 %v6224
        %v6226 = vlaneseq
        %v6227 = vshrl.u32 %v6226, 7
        %v6228 = vsub.s32 %v6225, %v6227
        %v6229 = vrot.slane %v5825, %v6228
        %v6230 = vcombine.high %v6229, %v6229
        %v6231 = vlaneseq
        %v6232 = vshrl.u32 %v6231, 7
        %v6233 = vadd.s32 %v6232, 8
        %v6234 = vadd.s32 %v6232, 16
        %vm6235 = vcmp.ge.s32.totalorder %v6232, 1
        %vm6236 = vcmp.ge.s32.totalorder %v6233, 1
        %vm6237 = vcmp.ge.s32.totalorder %v6234, 1
        %vm6238 = vcmp.le.s32.totalorder %v6232, 16
        %vm6239 = vcmp.le.s32.totalorder %v6233, 16
        %vm6240 = vcmp.le.s32.totalorder %v6234, 16
        %vm6241 = vmand %vm6235, %vm6238
        %vm6242 = vmand %vm6236, %vm6239
        %vm6243 = vmand %vm6237, %vm6240
        %p6244 = scmp.gt.s32.totalorder %s24, 0
        %s6245 = scalar_select %p6244, 1, 0
        %v6246 = vstv %s6245
        %vm6247 = vcmp.eq.s32.totalorder %v6246, 1
        %vm6248 = vmand %vm6241, %vm6247
        %vm6249 = vmand %vm6242, %vm6247
        %vm6250 = vmand %vm6243, %vm6247
        %vm6251 = vmand %vm6241, 1
        %vm6252 = vmand %vm6242, 1
        %vm6253 = vmand %vm6243, 1
        %p6254 = scmp.lt.s32.totalorder %s24, 1
        %s6255 = scalar_select %p6254, 1, 0
        %v6256 = vstv %s6255
        %vm6257 = vcmp.eq.s32.totalorder %v6256, 1
        %vm6258 = vmand %vm6248, 1
        %vm6259 = vmand %vm6249, 1
        %vm6260 = vmand %vm6250, 1
        %vm6261 = vmand %vm6251, %vm6257
        %vm6262 = vmand %vm6252, %vm6257
        %vm6263 = vmand %vm6253, %vm6257
        %v6264 = vcombine.low %v5856, %v5864
        %v6265 = vcombine.low %v5863, %v5865
        %v6267 = vunpack.c.l.s4 1983009808
        %v6268 = vunpack.c.0.s8 %v6267
        %v6269 = vlaneseq
        %v6270 = vshrl.u32 %v6269, 7
        %v6271 = vsub.s32 %v6268, %v6270
        %v6272 = vrot.slane %v6264, %v6271
        %v6274 = vunpack.c.l.s4 1983009808
        %v6275 = vunpack.c.0.s8 %v6274
        %v6276 = vlaneseq
        %v6277 = vshrl.u32 %v6276, 7
        %v6278 = vsub.s32 %v6275, %v6277
        %v6279 = vrot.slane %v6265, %v6278
        %v6280 = vcombine.low %v6272, %v6279
        %v6281 = vcombine.low %v5873, %v5881
        %v6282 = vcombine.low %v5880, %v5882
        %v6284 = vunpack.c.l.s4 1983009808
        %v6285 = vunpack.c.0.s8 %v6284
        %v6286 = vlaneseq
        %v6287 = vshrl.u32 %v6286, 7
        %v6288 = vsub.s32 %v6285, %v6287
        %v6289 = vrot.slane %v6281, %v6288
        %v6291 = vunpack.c.l.s4 1983009808
        %v6292 = vunpack.c.0.s8 %v6291
        %v6293 = vlaneseq
        %v6294 = vshrl.u32 %v6293, 7
        %v6295 = vsub.s32 %v6292, %v6294
        %v6296 = vrot.slane %v6282, %v6295
        %v6297 = vcombine.low %v6289, %v6296
        %v6299 = vunpack.c.l.s4 1983009808
        %v6300 = vunpack.c.0.s8 %v6299
        %v6301 = vlaneseq
        %v6302 = vshrl.u32 %v6301, 7
        %v6303 = vsub.s32 %v6300, %v6302
        %v6304 = vrot.slane %v5890, %v6303
        %v6305 = vcombine.low %v5898, %v5897
        %v6306 = vcombine.low %v5899, %v5907
        %v6308 = vunpack.c.l.s4 1983009808
        %v6309 = vunpack.c.0.s8 %v6308
        %v6310 = vlaneseq
        %v6311 = vshrl.u32 %v6310, 7
        %v6312 = vsub.s32 %v6309, %v6311
        %v6313 = vrot.slane %v6305, %v6312
        %v6315 = vunpack.c.l.s4 1983009808
        %v6316 = vunpack.c.0.s8 %v6315
        %v6317 = vlaneseq
        %v6318 = vshrl.u32 %v6317, 7
        %v6319 = vsub.s32 %v6316, %v6318
        %v6320 = vrot.slane %v6306, %v6319
        %v6321 = vcombine.low %v6313, %v6320
        %v6322 = vcombine.low %v5915, %v5914
        %v6323 = vcombine.low %v5916, %v5924
        %v6325 = vunpack.c.l.s4 1983009808
        %v6326 = vunpack.c.0.s8 %v6325
        %v6327 = vlaneseq
        %v6328 = vshrl.u32 %v6327, 7
        %v6329 = vsub.s32 %v6326, %v6328
        %v6330 = vrot.slane %v6322, %v6329
        %v6332 = vunpack.c.l.s4 1983009808
        %v6333 = vunpack.c.0.s8 %v6332
        %v6334 = vlaneseq
        %v6335 = vshrl.u32 %v6334, 7
        %v6336 = vsub.s32 %v6333, %v6335
        %v6337 = vrot.slane %v6323, %v6336
        %v6338 = vcombine.low %v6330, %v6337
        %v6340 = vunpack.c.l.s4 1983009808
        %v6341 = vunpack.c.0.s8 %v6340
        %v6342 = vlaneseq
        %v6343 = vshrl.u32 %v6342, 7
        %v6344 = vsub.s32 %v6341, %v6343
        %v6345 = vrot.slane %v5932, %v6344
        %v6346 = vcombine.low %v5931, %v5933
        %v6347 = vcombine.low %v5941, %v5949
        %v6349 = vunpack.c.l.s4 1983009808
        %v6350 = vunpack.c.0.s8 %v6349
        %v6351 = vlaneseq
        %v6352 = vshrl.u32 %v6351, 7
        %v6353 = vsub.s32 %v6350, %v6352
        %v6354 = vrot.slane %v6346, %v6353
        %v6356 = vunpack.c.l.s4 1983009808
        %v6357 = vunpack.c.0.s8 %v6356
        %v6358 = vlaneseq
        %v6359 = vshrl.u32 %v6358, 7
        %v6360 = vsub.s32 %v6357, %v6359
        %v6361 = vrot.slane %v6347, %v6360
        %v6362 = vcombine.low %v6354, %v6361
        %v6363 = vcombine.low %v5948, %v5950
        %v6364 = vcombine.low %v5958, %v5966
        %v6366 = vunpack.c.l.s4 1983009808
        %v6367 = vunpack.c.0.s8 %v6366
        %v6368 = vlaneseq
        %v6369 = vshrl.u32 %v6368, 7
        %v6370 = vsub.s32 %v6367, %v6369
        %v6371 = vrot.slane %v6363, %v6370
        %v6373 = vunpack.c.l.s4 1983009808
        %v6374 = vunpack.c.0.s8 %v6373
        %v6375 = vlaneseq
        %v6376 = vshrl.u32 %v6375, 7
        %v6377 = vsub.s32 %v6374, %v6376
        %v6378 = vrot.slane %v6364, %v6377
        %v6379 = vcombine.low %v6371, %v6378
        %v6381 = vunpack.c.l.s4 1983009808
        %v6382 = vunpack.c.0.s8 %v6381
        %v6383 = vlaneseq
        %v6384 = vshrl.u32 %v6383, 7
        %v6385 = vsub.s32 %v6382, %v6384
        %v6386 = vrot.slane %v5965, %v6385
        %v6387 = vcombine.low %v5967, %v5975
        %v6388 = vcombine.low %v5983, %v5982
        %v6390 = vunpack.c.l.s4 1983009808
        %v6391 = vunpack.c.0.s8 %v6390
        %v6392 = vlaneseq
        %v6393 = vshrl.u32 %v6392, 7
        %v6394 = vsub.s32 %v6391, %v6393
        %v6395 = vrot.slane %v6387, %v6394
        %v6397 = vunpack.c.l.s4 1983009808
        %v6398 = vunpack.c.0.s8 %v6397
        %v6399 = vlaneseq
        %v6400 = vshrl.u32 %v6399, 7
        %v6401 = vsub.s32 %v6398, %v6400
        %v6402 = vrot.slane %v6388, %v6401
        %v6403 = vcombine.low %v6395, %v6402
        %v6404 = vcombine.low %v5984, %v5992
        %v6405 = vcombine.low %v6000, %v5999
        %v6407 = vunpack.c.l.s4 1983009808
        %v6408 = vunpack.c.0.s8 %v6407
        %v6409 = vlaneseq
        %v6410 = vshrl.u32 %v6409, 7
        %v6411 = vsub.s32 %v6408, %v6410
        %v6412 = vrot.slane %v6404, %v6411
        %v6414 = vunpack.c.l.s4 1983009808
        %v6415 = vunpack.c.0.s8 %v6414
        %v6416 = vlaneseq
        %v6417 = vshrl.u32 %v6416, 7
        %v6418 = vsub.s32 %v6415, %v6417
        %v6419 = vrot.slane %v6405, %v6418
        %v6420 = vcombine.low %v6412, %v6419
        %v6422 = vunpack.c.l.s4 1983009808
        %v6423 = vunpack.c.0.s8 %v6422
        %v6424 = vlaneseq
        %v6425 = vshrl.u32 %v6424, 7
        %v6426 = vsub.s32 %v6423, %v6425
        %v6427 = vrot.slane %v6001, %v6426
        %v6428 = vcombine.low %v6009, %v6017
        %v6429 = vcombine.low %v6016, %v6018
        %v6431 = vunpack.c.l.s4 1983009808
        %v6432 = vunpack.c.0.s8 %v6431
        %v6433 = vlaneseq
        %v6434 = vshrl.u32 %v6433, 7
        %v6435 = vsub.s32 %v6432, %v6434
        %v6436 = vrot.slane %v6428, %v6435
        %v6438 = vunpack.c.l.s4 1983009808
        %v6439 = vunpack.c.0.s8 %v6438
        %v6440 = vlaneseq
        %v6441 = vshrl.u32 %v6440, 7
        %v6442 = vsub.s32 %v6439, %v6441
        %v6443 = vrot.slane %v6429, %v6442
        %v6444 = vcombine.low %v6436, %v6443
        %v6445 = vcombine.low %v6026, %v6034
        %v6446 = vcombine.low %v6033, %v6035
        %v6448 = vunpack.c.l.s4 1983009808
        %v6449 = vunpack.c.0.s8 %v6448
        %v6450 = vlaneseq
        %v6451 = vshrl.u32 %v6450, 7
        %v6452 = vsub.s32 %v6449, %v6451
        %v6453 = vrot.slane %v6445, %v6452
        %v6455 = vunpack.c.l.s4 1983009808
        %v6456 = vunpack.c.0.s8 %v6455
        %v6457 = vlaneseq
        %v6458 = vshrl.u32 %v6457, 7
        %v6459 = vsub.s32 %v6456, %v6458
        %v6460 = vrot.slane %v6446, %v6459
        %v6461 = vcombine.low %v6453, %v6460
        %v6463 = vunpack.c.l.s4 1983009808
        %v6464 = vunpack.c.0.s8 %v6463
        %v6465 = vlaneseq
        %v6466 = vshrl.u32 %v6465, 7
        %v6467 = vsub.s32 %v6464, %v6466
        %v6468 = vrot.slane %v6043, %v6467
        %v6469 = vcombine.low %v6051, %v6050
        %v6470 = vcombine.low %v6052, %v6060
        %v6472 = vunpack.c.l.s4 1983009808
        %v6473 = vunpack.c.0.s8 %v6472
        %v6474 = vlaneseq
        %v6475 = vshrl.u32 %v6474, 7
        %v6476 = vsub.s32 %v6473, %v6475
        %v6477 = vrot.slane %v6469, %v6476
        %v6479 = vunpack.c.l.s4 1983009808
        %v6480 = vunpack.c.0.s8 %v6479
        %v6481 = vlaneseq
        %v6482 = vshrl.u32 %v6481, 7
        %v6483 = vsub.s32 %v6480, %v6482
        %v6484 = vrot.slane %v6470, %v6483
        %v6485 = vcombine.low %v6477, %v6484
        %v6486 = vcombine.low %v6068, %v6067
        %v6487 = vcombine.low %v6069, %v6077
        %v6489 = vunpack.c.l.s4 1983009808
        %v6490 = vunpack.c.0.s8 %v6489
        %v6491 = vlaneseq
        %v6492 = vshrl.u32 %v6491, 7
        %v6493 = vsub.s32 %v6490, %v6492
        %v6494 = vrot.slane %v6486, %v6493
        %v6496 = vunpack.c.l.s4 1983009808
        %v6497 = vunpack.c.0.s8 %v6496
        %v6498 = vlaneseq
        %v6499 = vshrl.u32 %v6498, 7
        %v6500 = vsub.s32 %v6497, %v6499
        %v6501 = vrot.slane %v6487, %v6500
        %v6502 = vcombine.low %v6494, %v6501
        %v6504 = vunpack.c.l.s4 1983009808
        %v6505 = vunpack.c.0.s8 %v6504
        %v6506 = vlaneseq
        %v6507 = vshrl.u32 %v6506, 7
        %v6508 = vsub.s32 %v6505, %v6507
        %v6509 = vrot.slane %v6085, %v6508
        %v6510 = vcombine.low %v6084, %v6086
        %v6511 = vcombine.low %v6094, %v6102
        %v6513 = vunpack.c.l.s4 1983009808
        %v6514 = vunpack.c.0.s8 %v6513
        %v6515 = vlaneseq
        %v6516 = vshrl.u32 %v6515, 7
        %v6517 = vsub.s32 %v6514, %v6516
        %v6518 = vrot.slane %v6510, %v6517
        %v6520 = vunpack.c.l.s4 1983009808
        %v6521 = vunpack.c.0.s8 %v6520
        %v6522 = vlaneseq
        %v6523 = vshrl.u32 %v6522, 7
        %v6524 = vsub.s32 %v6521, %v6523
        %v6525 = vrot.slane %v6511, %v6524
        %v6526 = vcombine.low %v6518, %v6525
        %v6527 = vcombine.low %v6101, %v6103
        %v6528 = vcombine.low %v6111, %v6119
        %v6530 = vunpack.c.l.s4 1983009808
        %v6531 = vunpack.c.0.s8 %v6530
        %v6532 = vlaneseq
        %v6533 = vshrl.u32 %v6532, 7
        %v6534 = vsub.s32 %v6531, %v6533
        %v6535 = vrot.slane %v6527, %v6534
        %v6537 = vunpack.c.l.s4 1983009808
        %v6538 = vunpack.c.0.s8 %v6537
        %v6539 = vlaneseq
        %v6540 = vshrl.u32 %v6539, 7
        %v6541 = vsub.s32 %v6538, %v6540
        %v6542 = vrot.slane %v6528, %v6541
        %v6543 = vcombine.low %v6535, %v6542
        %v6545 = vunpack.c.l.s4 1983009808
        %v6546 = vunpack.c.0.s8 %v6545
        %v6547 = vlaneseq
        %v6548 = vshrl.u32 %v6547, 7
        %v6549 = vsub.s32 %v6546, %v6548
        %v6550 = vrot.slane %v6118, %v6549
        %v6551 = vcombine.low %v6120, %v6128
        %v6552 = vcombine.low %v6136, %v6135
        %v6554 = vunpack.c.l.s4 1983009808
        %v6555 = vunpack.c.0.s8 %v6554
        %v6556 = vlaneseq
        %v6557 = vshrl.u32 %v6556, 7
        %v6558 = vsub.s32 %v6555, %v6557
        %v6559 = vrot.slane %v6551, %v6558
        %v6561 = vunpack.c.l.s4 1983009808
        %v6562 = vunpack.c.0.s8 %v6561
        %v6563 = vlaneseq
        %v6564 = vshrl.u32 %v6563, 7
        %v6565 = vsub.s32 %v6562, %v6564
        %v6566 = vrot.slane %v6552, %v6565
        %v6567 = vcombine.low %v6559, %v6566
        %v6568 = vcombine.low %v6137, %v6145
        %v6569 = vcombine.low %v6153, %v6152
        %v6571 = vunpack.c.l.s4 1983009808
        %v6572 = vunpack.c.0.s8 %v6571
        %v6573 = vlaneseq
        %v6574 = vshrl.u32 %v6573, 7
        %v6575 = vsub.s32 %v6572, %v6574
        %v6576 = vrot.slane %v6568, %v6575
        %v6578 = vunpack.c.l.s4 1983009808
        %v6579 = vunpack.c.0.s8 %v6578
        %v6580 = vlaneseq
        %v6581 = vshrl.u32 %v6580, 7
        %v6582 = vsub.s32 %v6579, %v6581
        %v6583 = vrot.slane %v6569, %v6582
        %v6584 = vcombine.low %v6576, %v6583
        %v6586 = vunpack.c.l.s4 1983009808
        %v6587 = vunpack.c.0.s8 %v6586
        %v6588 = vlaneseq
        %v6589 = vshrl.u32 %v6588, 7
        %v6590 = vsub.s32 %v6587, %v6589
        %v6591 = vrot.slane %v6154, %v6590
        %v6592 = vcombine.low %v6162, %v6170
        %v6593 = vcombine.low %v6169, %v6171
        %v6595 = vunpack.c.l.s4 1983009808
        %v6596 = vunpack.c.0.s8 %v6595
        %v6597 = vlaneseq
        %v6598 = vshrl.u32 %v6597, 7
        %v6599 = vsub.s32 %v6596, %v6598
        %v6600 = vrot.slane %v6592, %v6599
        %v6602 = vunpack.c.l.s4 1983009808
        %v6603 = vunpack.c.0.s8 %v6602
        %v6604 = vlaneseq
        %v6605 = vshrl.u32 %v6604, 7
        %v6606 = vsub.s32 %v6603, %v6605
        %v6607 = vrot.slane %v6593, %v6606
        %v6608 = vcombine.low %v6600, %v6607
        %v6609 = vcombine.low %v6179, %v6187
        %v6610 = vcombine.low %v6186, %v6188
        %v6612 = vunpack.c.l.s4 1983009808
        %v6613 = vunpack.c.0.s8 %v6612
        %v6614 = vlaneseq
        %v6615 = vshrl.u32 %v6614, 7
        %v6616 = vsub.s32 %v6613, %v6615
        %v6617 = vrot.slane %v6609, %v6616
        %v6619 = vunpack.c.l.s4 1983009808
        %v6620 = vunpack.c.0.s8 %v6619
        %v6621 = vlaneseq
        %v6622 = vshrl.u32 %v6621, 7
        %v6623 = vsub.s32 %v6620, %v6622
        %v6624 = vrot.slane %v6610, %v6623
        %v6625 = vcombine.low %v6617, %v6624
        %v6627 = vunpack.c.l.s4 1983009808
        %v6628 = vunpack.c.0.s8 %v6627
        %v6629 = vlaneseq
        %v6630 = vshrl.u32 %v6629, 7
        %v6631 = vsub.s32 %v6628, %v6630
        %v6632 = vrot.slane %v6196, %v6631
        %v6633 = vcombine.low %v6204, %v6203
        %v6634 = vcombine.low %v6205, %v6213
        %v6636 = vunpack.c.l.s4 1983009808
        %v6637 = vunpack.c.0.s8 %v6636
        %v6638 = vlaneseq
        %v6639 = vshrl.u32 %v6638, 7
        %v6640 = vsub.s32 %v6637, %v6639
        %v6641 = vrot.slane %v6633, %v6640
        %v6643 = vunpack.c.l.s4 1983009808
        %v6644 = vunpack.c.0.s8 %v6643
        %v6645 = vlaneseq
        %v6646 = vshrl.u32 %v6645, 7
        %v6647 = vsub.s32 %v6644, %v6646
        %v6648 = vrot.slane %v6634, %v6647
        %v6649 = vcombine.low %v6641, %v6648
        %v6650 = vcombine.low %v6221, %v6220
        %v6651 = vcombine.low %v6222, %v6229
        %v6653 = vunpack.c.l.s4 1983009808
        %v6654 = vunpack.c.0.s8 %v6653
        %v6655 = vlaneseq
        %v6656 = vshrl.u32 %v6655, 7
        %v6657 = vsub.s32 %v6654, %v6656
        %v6658 = vrot.slane %v6650, %v6657
        %v6660 = vunpack.c.l.s4 1983009808
        %v6661 = vunpack.c.0.s8 %v6660
        %v6662 = vlaneseq
        %v6663 = vshrl.u32 %v6662, 7
        %v6664 = vsub.s32 %v6661, %v6663
        %v6665 = vrot.slane %v6651, %v6664
        %v6666 = vcombine.low %v6658, %v6665
        %v6668 = vunpack.c.l.s4 1983009808
        %v6669 = vunpack.c.0.s8 %v6668
        %v6670 = vlaneseq
        %v6671 = vshrl.u32 %v6670, 7
        %v6672 = vsub.s32 %v6669, %v6671
        %v6673 = vrot.slane %v6230, %v6672
        %v6704 = vsel %vm6258, %v6280, 0.0
        %v6705 = vsel %vm6259, %v6297, 0.0
        %v6706 = vsel %vm6260, %v6304, 0.0
        %v6707 = vsel %vm6251, %v6321, 0.0
        %v6708 = vsel %vm6252, %v6338, 0.0
        %v6709 = vsel %vm6253, %v6345, 0.0
        %v6710 = vsel %vm6251, %v6362, 0.0
        %v6711 = vsel %vm6252, %v6379, 0.0
        %v6712 = vsel %vm6253, %v6386, 0.0
        %v6713 = vsel %vm6251, %v6403, 0.0
        %v6714 = vsel %vm6252, %v6420, 0.0
        %v6715 = vsel %vm6253, %v6427, 0.0
        %v6716 = vsel %vm6251, %v6444, 0.0
        %v6717 = vsel %vm6252, %v6461, 0.0
        %v6718 = vsel %vm6253, %v6468, 0.0
        %v6719 = vsel %vm6251, %v6485, 0.0
        %v6720 = vsel %vm6252, %v6502, 0.0
        %v6721 = vsel %vm6253, %v6509, 0.0
        %v6722 = vsel %vm6251, %v6526, 0.0
        %v6723 = vsel %vm6252, %v6543, 0.0
        %v6724 = vsel %vm6253, %v6550, 0.0
        %v6725 = vsel %vm6251, %v6567, 0.0
        %v6726 = vsel %vm6252, %v6584, 0.0
        %v6727 = vsel %vm6253, %v6591, 0.0
        %v6728 = vsel %vm6251, %v6608, 0.0
        %v6729 = vsel %vm6252, %v6625, 0.0
        %v6730 = vsel %vm6253, %v6632, 0.0
        %v6731 = vsel %vm6261, %v6649, 0.0
        %v6732 = vsel %vm6262, %v6666, 0.0
        %v6733 = vsel %vm6263, %v6673, 0.0
        %v6758 = vrot.slane %v6704, 1
        %v6759 = vrot.slane %v6705, 1
        %v6760 = vsel %vm492, %v6758, %v6759
        %v6761 = vrot.slane %v6706, 1
        %v6762 = vsel %vm492, %v6759, %v6761
        %v6763 = vrot.slane %v6707, 1
        %v6764 = vrot.slane %v6708, 1
        %v6765 = vsel %vm492, %v6763, %v6764
        %v6766 = vrot.slane %v6709, 1
        %v6767 = vsel %vm492, %v6764, %v6766
        %v6768 = vrot.slane %v6710, 1
        %v6769 = vrot.slane %v6711, 1
        %v6770 = vsel %vm492, %v6768, %v6769
        %v6771 = vrot.slane %v6712, 1
        %v6772 = vsel %vm492, %v6769, %v6771
        %v6773 = vrot.slane %v6713, 1
        %v6774 = vrot.slane %v6714, 1
        %v6775 = vsel %vm492, %v6773, %v6774
        %v6776 = vrot.slane %v6715, 1
        %v6777 = vsel %vm492, %v6774, %v6776
        %v6778 = vrot.slane %v6716, 1
        %v6779 = vrot.slane %v6717, 1
        %v6780 = vsel %vm492, %v6778, %v6779
        %v6781 = vrot.slane %v6718, 1
        %v6782 = vsel %vm492, %v6779, %v6781
        %v6783 = vrot.slane %v6719, 1
        %v6784 = vrot.slane %v6720, 1
        %v6785 = vsel %vm492, %v6783, %v6784
        %v6786 = vrot.slane %v6721, 1
        %v6787 = vsel %vm492, %v6784, %v6786
        %v6788 = vrot.slane %v6722, 1
        %v6789 = vrot.slane %v6723, 1
        %v6790 = vsel %vm492, %v6788, %v6789
        %v6791 = vrot.slane %v6724, 1
        %v6792 = vsel %vm492, %v6789, %v6791
        %v6793 = vrot.slane %v6725, 1
        %v6794 = vrot.slane %v6726, 1
        %v6795 = vsel %vm492, %v6793, %v6794
        %v6796 = vrot.slane %v6727, 1
        %v6797 = vsel %vm492, %v6794, %v6796
        %v6814 = vrot.slane %v6704, 2
        %v6815 = vrot.slane %v6705, 2
        %v6816 = vsel %vm543, %v6814, %v6815
        %v6817 = vrot.slane %v6706, 2
        %v6818 = vsel %vm543, %v6815, %v6817
        %v6819 = vrot.slane %v6707, 2
        %v6820 = vrot.slane %v6708, 2
        %v6821 = vsel %vm543, %v6819, %v6820
        %v6822 = vrot.slane %v6709, 2
        %v6823 = vsel %vm543, %v6820, %v6822
        %v6824 = vrot.slane %v6710, 2
        %v6825 = vrot.slane %v6711, 2
        %v6826 = vsel %vm543, %v6824, %v6825
        %v6827 = vrot.slane %v6712, 2
        %v6828 = vsel %vm543, %v6825, %v6827
        %v6829 = vrot.slane %v6713, 2
        %v6830 = vrot.slane %v6714, 2
        %v6831 = vsel %vm543, %v6829, %v6830
        %v6832 = vrot.slane %v6715, 2
        %v6833 = vsel %vm543, %v6830, %v6832
        %v6834 = vrot.slane %v6716, 2
        %v6835 = vrot.slane %v6717, 2
        %v6836 = vsel %vm543, %v6834, %v6835
        %v6837 = vrot.slane %v6718, 2
        %v6838 = vsel %vm543, %v6835, %v6837
        %v6839 = vrot.slane %v6719, 2
        %v6840 = vrot.slane %v6720, 2
        %v6841 = vsel %vm543, %v6839, %v6840
        %v6842 = vrot.slane %v6721, 2
        %v6843 = vsel %vm543, %v6840, %v6842
        %v6844 = vrot.slane %v6722, 2
        %v6845 = vrot.slane %v6723, 2
        %v6846 = vsel %vm543, %v6844, %v6845
        %v6847 = vrot.slane %v6724, 2
        %v6848 = vsel %vm543, %v6845, %v6847
        %v6849 = vrot.slane %v6725, 2
        %v6850 = vrot.slane %v6726, 2
        %v6851 = vsel %vm543, %v6849, %v6850
        %v6852 = vrot.slane %v6727, 2
        %v6853 = vsel %vm543, %v6850, %v6852
        %v6873 = vrot.slane %v6728, 1
        %v6874 = vrot.slane %v6729, 1
        %v6875 = vsel %vm492, %v6873, %v6874
        %v6876 = vrot.slane %v6730, 1
        %v6877 = vsel %vm492, %v6874, %v6876
        %v6880 = vrot.slane %v6728, 2
        %v6881 = vrot.slane %v6729, 2
        %v6882 = vsel %vm543, %v6880, %v6881
        %v6883 = vrot.slane %v6730, 2
        %v6884 = vsel %vm543, %v6881, %v6883
        %v6890 = vrot.slane %v6731, 1
        %v6891 = vrot.slane %v6732, 1
        %v6892 = vsel %vm492, %v6890, %v6891
        %v6893 = vrot.slane %v6733, 1
        %v6894 = vsel %vm492, %v6891, %v6893
        %v6897 = vrot.slane %v6731, 2
        %v6898 = vrot.slane %v6732, 2
        %v6899 = vsel %vm543, %v6897, %v6898
        %v6900 = vrot.slane %v6733, 2
        %v6901 = vsel %vm543, %v6898, %v6900
        %v6904 = vld [vmem:[%s2] sm:$0xff]
        %v6905 = vld [vmem:[%s2 + $0x8] sm:$0xff]
        %v6906 = vld [vmem:[%s2 + $0x10] sm:$0xff]
        %v6907 = vld [vmem:[%s2 + $0x18] sm:$0xff]
        %v6908 = vld [vmem:[%s2 + $0x20] sm:$0xff]
        %v6909 = vld [vmem:[%s2 + $0x28] sm:$0xff]
        %v6910 = vld [vmem:[%s2 + $0x30] sm:$0xff]
        %v6911 = vld [vmem:[%s2 + $0x38] sm:$0xff]
        %v6912 = vld [vmem:[%s2 + $0x40] sm:$0xff]
        %v6913 = vld [vmem:[%s2 + $0x48] sm:$0xff]
        %v6914 = vld [vmem:[%s2 + $0x50] sm:$0xff]
        %v6915 = vld [vmem:[%s2 + $0x58] sm:$0xff]
        %v6916 = vld [vmem:[%s2 + $0x60] sm:$0xff]
        %v6917 = vld [vmem:[%s2 + $0x68] sm:$0xff]
        %v6918 = vld [vmem:[%s2 + $0x70] sm:$0xff]
        %v6919 = vld [vmem:[%s2 + $0x78] sm:$0xff]
        %v6920 = vld [vmem:[%s2 + $0x80] sm:$0xff]
        %v6921 = vld [vmem:[%s2 + $0x88] sm:$0xff]
        %v6922 = vld [vmem:[%s2 + $0x90] sm:$0xff]
        %v6923 = vld [vmem:[%s2 + $0x98] sm:$0xff]
        %v6924 = vld [vmem:[%s2 + $0xa0] sm:$0xff]
        %v6925 = vld [vmem:[%s2 + $0xa8] sm:$0xff]
        %v6926 = vld [vmem:[%s2 + $0xb0] sm:$0xff]
        %v6927 = vld [vmem:[%s2 + $0xb8] sm:$0xff]
        %v6928 = vld [vmem:[%s2 + $0xc0] sm:$0xff]
        %v6929 = vld [vmem:[%s2 + $0xc8] sm:$0xff]
        %v6930 = vld [vmem:[%s2 + $0xd0] sm:$0xff]
        %v6931 = vld [vmem:[%s2 + $0xd8] sm:$0xff]
        %v6932 = vld [vmem:[%s2 + $0xe0] sm:$0xff]
        %v6933 = vld [vmem:[%s2 + $0xe8] sm:$0xff]
        %v6934 = vld [vmem:[%s2 + $0xf0] sm:$0xff]
        %v6935 = vld [vmem:[%s2 + $0xf8] sm:$0xff]
        %v6936 = vld [vmem:[%s2 + $0x100] sm:$0xff]
        %v6937 = vld [vmem:[%s2 + $0x108] sm:$0xff]
        %v6938 = vld [vmem:[%s2 + $0x110] sm:$0xff]
        %v6939 = vld [vmem:[%s2 + $0x118] sm:$0xff]
        %v6940 = vld [vmem:[%s2 + $0x120] sm:$0xff]
        %v6941 = vld [vmem:[%s2 + $0x128] sm:$0xff]
        %v6942 = vld [vmem:[%s2 + $0x130] sm:$0xff]
        %v6943 = vld [vmem:[%s2 + $0x138] sm:$0xff]
        %v6944 = vld [vmem:[%s2 + $0x140] sm:$0xff]
        %v6945 = vld [vmem:[%s2 + $0x148] sm:$0xff]
        %v6946 = vld [vmem:[%s2 + $0x150] sm:$0xff]
        %v6947 = vld [vmem:[%s2 + $0x158] sm:$0xff]
        %v6948 = vld [vmem:[%s2 + $0x160] sm:$0xff]
        %v6949 = vld [vmem:[%s2 + $0x168] sm:$0xff]
        %v6950 = vld [vmem:[%s2 + $0x170] sm:$0xff]
        %v6951 = vld [vmem:[%s2 + $0x178] sm:$0xff]
        %v6952 = vld [vmem:[%s2 + $0x180] sm:$0xff]
        %v6953 = vld [vmem:[%s2 + $0x188] sm:$0xff]
        %v6954 = vld [vmem:[%s2 + $0x190] sm:$0xff]
        %v6955 = vld [vmem:[%s2 + $0x198] sm:$0xff]
        %v6956 = vld [vmem:[%s2 + $0x1a0] sm:$0xff]
        %v6957 = vld [vmem:[%s2 + $0x1a8] sm:$0xff]
        %v6958 = vld [vmem:[%s2 + $0x1b0] sm:$0xff]
        %v6959 = vld [vmem:[%s2 + $0x1b8] sm:$0xff]
        %v6960 = vld [vmem:[%s2 + $0x1c0] sm:$0xff]
        %v6961 = vld [vmem:[%s2 + $0x1c8] sm:$0xff]
        %v6962 = vld [vmem:[%s2 + $0x1d0] sm:$0xff]
        %v6963 = vld [vmem:[%s2 + $0x1d8] sm:$0xff]
        %v6964 = vld [vmem:[%s2 + $0x1e0] sm:$0xff]
        %v6965 = vld [vmem:[%s2 + $0x1e8] sm:$0xff]
        %v6966 = vld [vmem:[%s2 + $0x1f0] sm:$0xff]
        %v6967 = vld [vmem:[%s2 + $0x1f8] sm:$0xff]
        %v6968 = vld [vmem:[%s2 + $0x200] sm:$0xff]
        %v6969 = vld [vmem:[%s2 + $0x208] sm:$0xff]
        %v6970 = vld [vmem:[%s2 + $0x210] sm:$0xff]
        %v6971 = vld [vmem:[%s2 + $0x218] sm:$0xff]
        %v6972 = vld [vmem:[%s2 + $0x220] sm:$0xff]
        %v6973 = vld [vmem:[%s2 + $0x228] sm:$0xff]
        %v6974 = vld [vmem:[%s2 + $0x230] sm:$0xff]
        %v6975 = vld [vmem:[%s2 + $0x238] sm:$0xff]
        %v6976 = vld [vmem:[%s2 + $0x240] sm:$0xff]
        %v6977 = vld [vmem:[%s2 + $0x248] sm:$0xff]
        %v6978 = vld [vmem:[%s2 + $0x250] sm:$0xff]
        %v6979 = vld [vmem:[%s2 + $0x258] sm:$0xff]
        %v6980 = vld [vmem:[%s2 + $0x260] sm:$0xff]
        %v6981 = vld [vmem:[%s2 + $0x268] sm:$0xff]
        %v6982 = vld [vmem:[%s2 + $0x270] sm:$0xff]
        %v6983 = vld [vmem:[%s2 + $0x278] sm:$0xff]
        %v6984 = vld [vmem:[%s2 + $0x280] sm:$0xff]
        %v6985 = vld [vmem:[%s2 + $0x288] sm:$0xff]
        %v6986 = vld [vmem:[%s2 + $0x290] sm:$0xff]
        %v6987 = vld [vmem:[%s2 + $0x298] sm:$0xff]
        %v6988 = vld [vmem:[%s2 + $0x2a0] sm:$0xff]
        %v6989 = vld [vmem:[%s2 + $0x2a8] sm:$0xff]
        %v6990 = vld [vmem:[%s2 + $0x2b0] sm:$0xff]
        %v6991 = vld [vmem:[%s2 + $0x2b8] sm:$0xff]
        %v6992 = vld [vmem:[%s2 + $0x2c0] sm:$0xff]
        %v6993 = vld [vmem:[%s2 + $0x2c8] sm:$0xff]
        %v6994 = vld [vmem:[%s2 + $0x2d0] sm:$0xff]
        %v6995 = vld [vmem:[%s2 + $0x2d8] sm:$0xff]
        %v6996 = vld [vmem:[%s2 + $0x2e0] sm:$0xff]
        %v6997 = vld [vmem:[%s2 + $0x2e8] sm:$0xff]
        %v6998 = vld [vmem:[%s2 + $0x2f0] sm:$0xff]
        %v6999 = vld [vmem:[%s2 + $0x2f8] sm:$0xff]
        %v7000 = vld [vmem:[%s2 + $0x300] sm:$0xff]
        %v7001 = vld [vmem:[%s2 + $0x308] sm:$0xff]
        %v7002 = vld [vmem:[%s2 + $0x310] sm:$0xff]
        %v7003 = vld [vmem:[%s2 + $0x318] sm:$0xff]
        %v7004 = vld [vmem:[%s2 + $0x320] sm:$0xff]
        %v7005 = vld [vmem:[%s2 + $0x328] sm:$0xff]
        %v7006 = vld [vmem:[%s2 + $0x330] sm:$0xff]
        %v7007 = vld [vmem:[%s2 + $0x338] sm:$0xff]
        %v7008 = vld [vmem:[%s2 + $0x340] sm:$0xff]
        %v7009 = vld [vmem:[%s2 + $0x348] sm:$0xff]
        %v7010 = vld [vmem:[%s2 + $0x350] sm:$0xff]
        %v7011 = vld [vmem:[%s2 + $0x358] sm:$0xff]
        %v7012 = vld [vmem:[%s2 + $0x360] sm:$0xff]
        %v7013 = vld [vmem:[%s2 + $0x368] sm:$0xff]
        %v7014 = vld [vmem:[%s2 + $0x370] sm:$0xff]
        %v7015 = vld [vmem:[%s2 + $0x378] sm:$0xff]
        %v7016 = vld [vmem:[%s2 + $0x380] sm:$0xff]
        %v7017 = vld [vmem:[%s2 + $0x388] sm:$0xff]
        %v7018 = vld [vmem:[%s2 + $0x390] sm:$0xff]
        %v7019 = vld [vmem:[%s2 + $0x398] sm:$0xff]
        %v7020 = vld [vmem:[%s2 + $0x3a0] sm:$0xff]
        %v7021 = vld [vmem:[%s2 + $0x3a8] sm:$0xff]
        %v7022 = vld [vmem:[%s2 + $0x3b0] sm:$0xff]
        %v7023 = vld [vmem:[%s2 + $0x3b8] sm:$0xff]
        %v7024 = vld [vmem:[%s2 + $0x3c0] sm:$0xff]
        %v7025 = vld [vmem:[%s2 + $0x3c8] sm:$0xff]
        %v7026 = vld [vmem:[%s2 + $0x3d0] sm:$0xff]
        %v7027 = vld [vmem:[%s2 + $0x3d8] sm:$0xff]
        %v7028 = vld [vmem:[%s2 + $0x3e0] sm:$0xff]
        %v7029 = vld [vmem:[%s2 + $0x3e8] sm:$0xff]
        %v7030 = vld [vmem:[%s2 + $0x3f0] sm:$0xff]
        %v7031 = vld [vmem:[%s2 + $0x3f8] sm:$0xff]
        %v7032 = vld [vmem:[%s2 + $0x400] sm:$0xff]
        %v7033 = vld [vmem:[%s2 + $0x408] sm:$0xff]
        %v7034 = vld [vmem:[%s2 + $0x410] sm:$0xff]
        %v7035 = vld [vmem:[%s2 + $0x418] sm:$0xff]
        %v7036 = vld [vmem:[%s2 + $0x420] sm:$0xff]
        %v7037 = vld [vmem:[%s2 + $0x428] sm:$0xff]
        %v7038 = vld [vmem:[%s2 + $0x430] sm:$0xff]
        %v7039 = vld [vmem:[%s2 + $0x438] sm:$0xff]
        %v7040 = vld [vmem:[%s2 + $0x440] sm:$0xff]
        %v7041 = vld [vmem:[%s2 + $0x448] sm:$0xff]
        %v7042 = vld [vmem:[%s2 + $0x450] sm:$0xff]
        %v7043 = vld [vmem:[%s2 + $0x458] sm:$0xff]
        %v7044 = vld [vmem:[%s2 + $0x460] sm:$0xff]
        %v7045 = vld [vmem:[%s2 + $0x468] sm:$0xff]
        %v7046 = vld [vmem:[%s2 + $0x470] sm:$0xff]
        %v7047 = vld [vmem:[%s2 + $0x478] sm:$0xff]
        %7048 = vmatprep.subr.mxu0 0.0
        %7049 = vmatpush1.msra.mxu0 %v6904
        %7050 = vmatprep.subr.mxu0 0.0
        %7051 = vmatpush1.msra.mxu0 %v6905
        %7052 = vmatprep.subr.mxu0 0.0
        %7053 = vmatpush1.msra.mxu0 %v6906
        %7054 = vmatprep.subr.mxu0 0.0
        %7055 = vmatpush1.msra.mxu0 %v6907
        %7056 = vmatprep.subr.mxu0 0.0
        %7057 = vmatpush1.msra.mxu0 %v6908
        %7058 = vmatprep.subr.mxu0 0.0
        %7059 = vmatpush1.msra.mxu0 %v6909
        %7060 = vmatprep.subr.mxu0 0.0
        %7061 = vmatpush1.msra.mxu0 %v6910
        %7062 = vmatprep.subr.mxu0 0.0
        %7063 = vmatpush1.msra.mxu0 %v6911
        %7064 = vmatprep.subr.mxu0 0.0
        %7065 = vmatpush1.msra.mxu0 %v6912
        %7066 = vmatprep.subr.mxu0 0.0
        %7067 = vmatpush1.msra.mxu0 %v6913
        %7068 = vmatprep.subr.mxu0 0.0
        %7069 = vmatpush1.msra.mxu0 %v6914
        %7070 = vmatprep.subr.mxu0 0.0
        %7071 = vmatpush1.msra.mxu0 %v6915
        %7072 = vmatprep.subr.mxu0 0.0
        %7073 = vmatpush1.msra.mxu0 %v6916
        %7074 = vmatprep.subr.mxu0 0.0
        %7075 = vmatpush1.msra.mxu0 %v6917
        %7076 = vmatprep.subr.mxu0 0.0
        %7077 = vmatpush1.msra.mxu0 %v6918
        %7078 = vmatprep.subr.mxu0 0.0
        %7079 = vmatpush1.msra.mxu0 %v6919
        %7080 = vmatprep.subr.mxu0 0.0
        %7081 = vmatpush1.msra.mxu0 %v6920
        %7082 = vmatprep.subr.mxu0 0.0
        %7083 = vmatpush1.msra.mxu0 %v6921
        %7084 = vmatprep.subr.mxu0 0.0
        %7085 = vmatpush1.msra.mxu0 %v6922
        %7086 = vmatprep.subr.mxu0 0.0
        %7087 = vmatpush1.msra.mxu0 %v6923
        %7088 = vmatprep.subr.mxu0 0.0
        %7089 = vmatpush1.msra.mxu0 %v6924
        %7090 = vmatprep.subr.mxu0 0.0
        %7091 = vmatpush1.msra.mxu0 %v6925
        %7092 = vmatprep.subr.mxu0 0.0
        %7093 = vmatpush1.msra.mxu0 %v6926
        %7094 = vmatprep.subr.mxu0 0.0
        %7095 = vmatpush1.msra.mxu0 %v6927
        %7096 = vmatprep.subr.mxu0 0.0
        %7097 = vmatpush1.msra.mxu0 %v6928
        %7098 = vmatprep.subr.mxu0 0.0
        %7099 = vmatpush1.msra.mxu0 %v6929
        %7100 = vmatprep.subr.mxu0 0.0
        %7101 = vmatpush1.msra.mxu0 %v6930
        %7102 = vmatprep.subr.mxu0 0.0
        %7103 = vmatpush1.msra.mxu0 %v6931
        %7104 = vmatprep.subr.mxu0 0.0
        %7105 = vmatpush1.msra.mxu0 %v6932
        %7106 = vmatprep.subr.mxu0 0.0
        %7107 = vmatpush1.msra.mxu0 %v6933
        %7108 = vmatprep.subr.mxu0 0.0
        %7109 = vmatpush1.msra.mxu0 %v6934
        %7110 = vmatprep.subr.mxu0 0.0
        %7111 = vmatpush1.msra.mxu0 %v6935
        %7112 = vmatprep.mubr.f32.mxu0 %v6760
        %7113 = vmatmul.mubr.f32.gmra.mrb[0].mxu0 %v6704
        %v7114 = vpop.f32.mrb[0].mxu0
        %v7115 = vadd.f32 0.0, %v7114
        %v7116 = vpop.f32.mrb[0].mxu0
        %7117 = vmatprep.mubr.f32.mxu0 %v6762
        %7118 = vmatmul.mubr.f32.gmra.mrb[0].mxu0 %v6705
        %v7119 = vpop.f32.mrb[0].mxu0
        %v7120 = vadd.f32 0.0, %v7119
        %v7121 = vpop.f32.mrb[0].mxu0
        %7122 = vmatprep.mubr.f32.mxu0 %v6765
        %7123 = vmatmul.mubr.f32.gmra.mrb[0].mxu0 %v6707
        %v7124 = vpop.f32.mrb[0].mxu0
        %v7125 = vadd.f32 0.0, %v7124
        %v7126 = vpop.f32.mrb[0].mxu0
        %7127 = vmatprep.mubr.f32.mxu0 %v6767
        %7128 = vmatmul.mubr.f32.gmra.mrb[0].mxu0 %v6708
        %v7129 = vpop.f32.mrb[0].mxu0
        %v7130 = vadd.f32 0.0, %v7129
        %v7131 = vpop.f32.mrb[0].mxu0
        %7132 = vmatprep.mubr.f32.mxu0 %v6770
        %7133 = vmatmul.mubr.f32.gmra.mrb[0].mxu0 %v6710
        %v7134 = vpop.f32.mrb[0].mxu0
        %v7135 = vadd.f32 0.0, %v7134
        %v7136 = vpop.f32.mrb[0].mxu0
        %7137 = vmatprep.mubr.f32.mxu0 %v6772
        %7138 = vmatmul.mubr.f32.gmra.mrb[0].mxu0 %v6711
        %v7139 = vpop.f32.mrb[0].mxu0
        %v7140 = vadd.f32 0.0, %v7139
        %v7141 = vpop.f32.mrb[0].mxu0
        %7142 = vmatprep.mubr.f32.mxu0 %v6775
        %7143 = vmatmul.mubr.f32.gmra.mrb[0].mxu0 %v6713
        %v7144 = vpop.f32.mrb[0].mxu0
        %v7145 = vadd.f32 0.0, %v7144
        %v7146 = vpop.f32.mrb[0].mxu0
        %7147 = vmatprep.mubr.f32.mxu0 %v6777
        %7148 = vmatmul.mubr.f32.gmra.mrb[0].mxu0 %v6714
        %v7149 = vpop.f32.mrb[0].mxu0
        %v7150 = vadd.f32 0.0, %v7149
        %v7151 = vpop.f32.mrb[0].mxu0
        %7152 = vmatprep.mubr.f32.mxu0 %v6780
        %7153 = vmatmul.mubr.f32.gmra.mrb[0].mxu0 %v6716
        %v7154 = vpop.f32.mrb[0].mxu0
        %v7155 = vadd.f32 0.0, %v7154
        %v7156 = vpop.f32.mrb[0].mxu0
        %7157 = vmatprep.mubr.f32.mxu0 %v6782
        %7158 = vmatmul.mubr.f32.gmra.mrb[0].mxu0 %v6717
        %v7159 = vpop.f32.mrb[0].mxu0
        %v7160 = vadd.f32 0.0, %v7159
        %v7161 = vpop.f32.mrb[0].mxu0
        %7162 = vmatprep.mubr.f32.mxu0 %v6785
        %7163 = vmatmul.mubr.f32.gmra.mrb[0].mxu0 %v6719
        %v7164 = vpop.f32.mrb[0].mxu0
        %v7165 = vadd.f32 0.0, %v7164
        %v7166 = vpop.f32.mrb[0].mxu0
        %7167 = vmatprep.mubr.f32.mxu0 %v6787
        %7168 = vmatmul.mubr.f32.gmra.mrb[0].mxu0 %v6720
        %v7169 = vpop.f32.mrb[0].mxu0
        %v7170 = vadd.f32 0.0, %v7169
        %v7171 = vpop.f32.mrb[0].mxu0
        %7172 = vmatprep.mubr.f32.mxu0 %v6790
        %7173 = vmatmul.mubr.f32.gmra.mrb[0].mxu0 %v6722
        %v7174 = vpop.f32.mrb[0].mxu0
        %v7175 = vadd.f32 0.0, %v7174
        %v7176 = vpop.f32.mrb[0].mxu0
        %7177 = vmatprep.mubr.f32.mxu0 %v6792
        %7178 = vmatmul.mubr.f32.gmra.mrb[0].mxu0 %v6723
        %v7179 = vpop.f32.mrb[0].mxu0
        %v7180 = vadd.f32 0.0, %v7179
        %v7181 = vpop.f32.mrb[0].mxu0
        %7182 = vmatprep.mubr.f32.mxu0 %v6795
        %7183 = vmatmul.mubr.f32.gmra.mrb[0].mxu0 %v6725
        %v7184 = vpop.f32.mrb[0].mxu0
        %v7185 = vadd.f32 0.0, %v7184
        %v7186 = vpop.f32.mrb[0].mxu0
        %7187 = vmatprep.mubr.f32.mxu0 %v6797
        %7188 = vmatmul.mubr.f32.gmra.mrb[0].mxu0 %v6726
        %v7189 = vpop.f32.mrb[0].mxu0
        %v7190 = vadd.f32 0.0, %v7189
        %v7191 = vpop.f32.mrb[0].mxu0
        %7192 = vdwg.mxu0
        %7193 = vmatprep.subr.mxu0 0.0
        %7194 = vmatpush1.msra.mxu0 %v6936
        %7195 = vmatprep.subr.mxu0 0.0
        %7196 = vmatpush1.msra.mxu0 %v6937
        %7197 = vmatprep.subr.mxu0 0.0
        %7198 = vmatpush1.msra.mxu0 %v6938
        %7199 = vmatprep.subr.mxu0 0.0
        %7200 = vmatpush1.msra.mxu0 %v6939
        %7201 = vmatprep.subr.mxu0 0.0
        %7202 = vmatpush1.msra.mxu0 %v6940
        %7203 = vmatprep.subr.mxu0 0.0
        %7204 = vmatpush1.msra.mxu0 %v6941
        %7205 = vmatprep.subr.mxu0 0.0
        %7206 = vmatpush1.msra.mxu0 %v6942
        %7207 = vmatprep.subr.mxu0 0.0
        %7208 = vmatpush1.msra.mxu0 %v6943
        %7209 = vmatprep.subr.mxu0 0.0
        %7210 = vmatpush1.msra.mxu0 %v6944
        %7211 = vmatprep.subr.mxu0 0.0
        %7212 = vmatpush1.msra.mxu0 %v6945
        %7213 = vmatprep.subr.mxu0 0.0
        %7214 = vmatpush1.msra.mxu0 %v6946
        %7215 = vmatprep.subr.mxu0 0.0
        %7216 = vmatpush1.msra.mxu0 %v6947
        %7217 = vmatprep.subr.mxu0 0.0
        %7218 = vmatpush1.msra.mxu0 %v6948
        %7219 = vmatprep.subr.mxu0 0.0
        %7220 = vmatpush1.msra.mxu0 %v6949
        %7221 = vmatprep.subr.mxu0 0.0
        %7222 = vmatpush1.msra.mxu0 %v6950
        %7223 = vmatprep.subr.mxu0 0.0
        %7224 = vmatpush1.msra.mxu0 %v6951
        %7225 = vmatprep.subr.mxu0 0.0
        %7226 = vmatpush1.msra.mxu0 %v6952
        %7227 = vmatprep.subr.mxu0 0.0
        %7228 = vmatpush1.msra.mxu0 %v6953
        %7229 = vmatprep.subr.mxu0 0.0
        %7230 = vmatpush1.msra.mxu0 %v6954
        %7231 = vmatprep.subr.mxu0 0.0
        %7232 = vmatpush1.msra.mxu0 %v6955
        %7233 = vmatprep.subr.mxu0 0.0
        %7234 = vmatpush1.msra.mxu0 %v6956
        %7235 = vmatprep.subr.mxu0 0.0
        %7236 = vmatpush1.msra.mxu0 %v6957
        %7237 = vmatprep.subr.mxu0 0.0
        %7238 = vmatpush1.msra.mxu0 %v6958
        %7239 = vmatprep.subr.mxu0 0.0
        %7240 = vmatpush1.msra.mxu0 %v6959
        %7241 = vmatprep.subr.mxu0 0.0
        %7242 = vmatpush1.msra.mxu0 %v6960
        %7243 = vmatprep.subr.mxu0 0.0
        %7244 = vmatpush1.msra.mxu0 %v6961
        %7245 = vmatprep.subr.mxu0 0.0
        %7246 = vmatpush1.msra.mxu0 %v6962
        %7247 = vmatprep.subr.mxu0 0.0
        %7248 = vmatpush1.msra.mxu0 %v6963
        %7249 = vmatprep.subr.mxu0 0.0
        %7250 = vmatpush1.msra.mxu0 %v6964
        %7251 = vmatprep.subr.mxu0 0.0
        %7252 = vmatpush1.msra.mxu0 %v6965
        %7253 = vmatprep.subr.mxu0 0.0
        %7254 = vmatpush1.msra.mxu0 %v6966
        %7255 = vmatprep.subr.mxu0 0.0
        %7256 = vmatpush1.msra.mxu0 %v6967
        %7257 = vmatprep.mubr.f32.mxu0 %v6707
        %7258 = vmatmul.mubr.f32.gmra.mrb[0].mxu0 %v6816
        %v7259 = vpop.f32.mrb[0].mxu0
        %v7260 = vadd.f32 %v7115, %v7259
        %v7261 = vpop.f32.mrb[0].mxu0
        %7262 = vmatprep.mubr.f32.mxu0 %v6708
        %7263 = vmatmul.mubr.f32.gmra.mrb[0].mxu0 %v6818
        %v7264 = vpop.f32.mrb[0].mxu0
        %v7265 = vadd.f32 %v7120, %v7264
        %v7266 = vpop.f32.mrb[0].mxu0
        %7267 = vmatprep.mubr.f32.mxu0 %v6710
        %7268 = vmatmul.mubr.f32.gmra.mrb[0].mxu0 %v6821
        %v7269 = vpop.f32.mrb[0].mxu0
        %v7270 = vadd.f32 %v7125, %v7269
        %v7271 = vpop.f32.mrb[0].mxu0
        %7272 = vmatprep.mubr.f32.mxu0 %v6711
        %7273 = vmatmul.mubr.f32.gmra.mrb[0].mxu0 %v6823
        %v7274 = vpop.f32.mrb[0].mxu0
        %v7275 = vadd.f32 %v7130, %v7274
        %v7276 = vpop.f32.mrb[0].mxu0
        %7277 = vmatprep.mubr.f32.mxu0 %v6713
        %7278 = vmatmul.mubr.f32.gmra.mrb[0].mxu0 %v6826
        %v7279 = vpop.f32.mrb[0].mxu0
        %v7280 = vadd.f32 %v7135, %v7279
        %v7281 = vpop.f32.mrb[0].mxu0
        %7282 = vmatprep.mubr.f32.mxu0 %v6714
        %7283 = vmatmul.mubr.f32.gmra.mrb[0].mxu0 %v6828
        %v7284 = vpop.f32.mrb[0].mxu0
        %v7285 = vadd.f32 %v7140, %v7284
        %v7286 = vpop.f32.mrb[0].mxu0
        %7287 = vmatprep.mubr.f32.mxu0 %v6716
        %7288 = vmatmul.mubr.f32.gmra.mrb[0].mxu0 %v6831
        %v7289 = vpop.f32.mrb[0].mxu0
        %v7290 = vadd.f32 %v7145, %v7289
        %v7291 = vpop.f32.mrb[0].mxu0
        %7292 = vmatprep.mubr.f32.mxu0 %v6717
        %7293 = vmatmul.mubr.f32.gmra.mrb[0].mxu0 %v6833
        %v7294 = vpop.f32.mrb[0].mxu0
        %v7295 = vadd.f32 %v7150, %v7294
        %v7296 = vpop.f32.mrb[0].mxu0
        %7297 = vmatprep.mubr.f32.mxu0 %v6719
        %7298 = vmatmul.mubr.f32.gmra.mrb[0].mxu0 %v6836
        %v7299 = vpop.f32.mrb[0].mxu0
        %v7300 = vadd.f32 %v7155, %v7299
        %v7301 = vpop.f32.mrb[0].mxu0
        %7302 = vmatprep.mubr.f32.mxu0 %v6720
        %7303 = vmatmul.mubr.f32.gmra.mrb[0].mxu0 %v6838
        %v7304 = vpop.f32.mrb[0].mxu0
        %v7305 = vadd.f32 %v7160, %v7304
        %v7306 = vpop.f32.mrb[0].mxu0
        %7307 = vmatprep.mubr.f32.mxu0 %v6722
        %7308 = vmatmul.mubr.f32.gmra.mrb[0].mxu0 %v6841
        %v7309 = vpop.f32.mrb[0].mxu0
        %v7310 = vadd.f32 %v7165, %v7309
        %v7311 = vpop.f32.mrb[0].mxu0
        %7312 = vmatprep.mubr.f32.mxu0 %v6723
        %7313 = vmatmul.mubr.f32.gmra.mrb[0].mxu0 %v6843
        %v7314 = vpop.f32.mrb[0].mxu0
        %v7315 = vadd.f32 %v7170, %v7314
        %v7316 = vpop.f32.mrb[0].mxu0
        %7317 = vmatprep.mubr.f32.mxu0 %v6725
        %7318 = vmatmul.mubr.f32.gmra.mrb[0].mxu0 %v6846
        %v7319 = vpop.f32.mrb[0].mxu0
        %v7320 = vadd.f32 %v7175, %v7319
        %v7321 = vpop.f32.mrb[0].mxu0
        %7322 = vmatprep.mubr.f32.mxu0 %v6726
        %7323 = vmatmul.mubr.f32.gmra.mrb[0].mxu0 %v6848
        %v7324 = vpop.f32.mrb[0].mxu0
        %v7325 = vadd.f32 %v7180, %v7324
        %v7326 = vpop.f32.mrb[0].mxu0
        %7327 = vmatprep.mubr.f32.mxu0 %v6728
        %7328 = vmatmul.mubr.f32.gmra.mrb[0].mxu0 %v6851
        %v7329 = vpop.f32.mrb[0].mxu0
        %v7330 = vadd.f32 %v7185, %v7329
        %v7331 = vpop.f32.mrb[0].mxu0
        %7332 = vmatprep.mubr.f32.mxu0 %v6729
        %7333 = vmatmul.mubr.f32.gmra.mrb[0].mxu0 %v6853
        %v7334 = vpop.f32.mrb[0].mxu0
        %v7335 = vadd.f32 %v7190, %v7334
        %v7336 = vpop.f32.mrb[0].mxu0
        %7337 = vdwg.mxu0
        %7338 = vmatprep.subr.mxu0 0.0
        %7339 = vmatpush1.msra.mxu0 %v6968
        %7340 = vmatprep.subr.mxu0 0.0
        %7341 = vmatpush1.msra.mxu0 %v6969
        %7342 = vmatprep.subr.mxu0 0.0
        %7343 = vmatpush1.msra.mxu0 %v6970
        %7344 = vmatprep.subr.mxu0 0.0
        %7345 = vmatpush1.msra.mxu0 %v6971
        %7346 = vmatprep.subr.mxu0 0.0
        %7347 = vmatpush1.msra.mxu0 %v6972
        %7348 = vmatprep.subr.mxu0 0.0
        %7349 = vmatpush1.msra.mxu0 %v6973
        %7350 = vmatprep.subr.mxu0 0.0
        %7351 = vmatpush1.msra.mxu0 %v6974
        %7352 = vmatprep.subr.mxu0 0.0
        %7353 = vmatpush1.msra.mxu0 %v6975
        %7354 = vmatprep.subr.mxu0 0.0
        %7355 = vmatpush1.msra.mxu0 %v6976
        %7356 = vmatprep.subr.mxu0 0.0
        %7357 = vmatpush1.msra.mxu0 %v6977
        %7358 = vmatprep.subr.mxu0 0.0
        %7359 = vmatpush1.msra.mxu0 %v6978
        %7360 = vmatprep.subr.mxu0 0.0
        %7361 = vmatpush1.msra.mxu0 %v6979
        %7362 = vmatprep.subr.mxu0 0.0
        %7363 = vmatpush1.msra.mxu0 %v6980
        %7364 = vmatprep.subr.mxu0 0.0
        %7365 = vmatpush1.msra.mxu0 %v6981
        %7366 = vmatprep.subr.mxu0 0.0
        %7367 = vmatpush1.msra.mxu0 %v6982
        %7368 = vmatprep.subr.mxu0 0.0
        %7369 = vmatpush1.msra.mxu0 %v6983
        %7370 = vmatprep.subr.mxu0 0.0
        %7371 = vmatpush1.msra.mxu0 %v6984
        %7372 = vmatprep.subr.mxu0 0.0
        %7373 = vmatpush1.msra.mxu0 %v6985
        %7374 = vmatprep.subr.mxu0 0.0
        %7375 = vmatpush1.msra.mxu0 %v6986
        %7376 = vmatprep.subr.mxu0 0.0
        %7377 = vmatpush1.msra.mxu0 %v6987
        %7378 = vmatprep.subr.mxu0 0.0
        %7379 = vmatpush1.msra.mxu0 %v6988
        %7380 = vmatprep.subr.mxu0 0.0
        %7381 = vmatpush1.msra.mxu0 %v6989
        %7382 = vmatprep.subr.mxu0 0.0
        %7383 = vmatpush1.msra.mxu0 %v6990
        %7384 = vmatprep.subr.mxu0 0.0
        %7385 = vmatpush1.msra.mxu0 %v6991
        %7386 = vmatprep.subr.mxu0 0.0
        %7387 = vmatpush1.msra.mxu0 %v6992
        %7388 = vmatprep.subr.mxu0 0.0
        %7389 = vmatpush1.msra.mxu0 %v6993
        %7390 = vmatprep.subr.mxu0 0.0
        %7391 = vmatpush1.msra.mxu0 %v6994
        %7392 = vmatprep.subr.mxu0 0.0
        %7393 = vmatpush1.msra.mxu0 %v6995
        %7394 = vmatprep.subr.mxu0 0.0
        %7395 = vmatpush1.msra.mxu0 %v6996
        %7396 = vmatprep.subr.mxu0 0.0
        %7397 = vmatpush1.msra.mxu0 %v6997
        %7398 = vmatprep.subr.mxu0 0.0
        %7399 = vmatpush1.msra.mxu0 %v6998
        %7400 = vmatprep.subr.mxu0 0.0
        %7401 = vmatpush1.msra.mxu0 %v6999
        %7402 = vmatprep.mubr.f32.mxu0 %v6821
        %7403 = vmatmul.mubr.f32.gmra.mrb[0].mxu0 %v6765
        %v7404 = vpop.f32.mrb[0].mxu0
        %v7405 = vadd.f32 %v7260, %v7404
        %v7406 = vpop.f32.mrb[0].mxu0
        %7407 = vmatprep.mubr.f32.mxu0 %v6823
        %7408 = vmatmul.mubr.f32.gmra.mrb[0].mxu0 %v6767
        %v7409 = vpop.f32.mrb[0].mxu0
        %v7410 = vadd.f32 %v7265, %v7409
        %v7411 = vpop.f32.mrb[0].mxu0
        %7412 = vmatprep.mubr.f32.mxu0 %v6826
        %7413 = vmatmul.mubr.f32.gmra.mrb[0].mxu0 %v6770
        %v7414 = vpop.f32.mrb[0].mxu0
        %v7415 = vadd.f32 %v7270, %v7414
        %v7416 = vpop.f32.mrb[0].mxu0
        %7417 = vmatprep.mubr.f32.mxu0 %v6828
        %7418 = vmatmul.mubr.f32.gmra.mrb[0].mxu0 %v6772
        %v7419 = vpop.f32.mrb[0].mxu0
        %v7420 = vadd.f32 %v7275, %v7419
        %v7421 = vpop.f32.mrb[0].mxu0
        %7422 = vmatprep.mubr.f32.mxu0 %v6831
        %7423 = vmatmul.mubr.f32.gmra.mrb[0].mxu0 %v6775
        %v7424 = vpop.f32.mrb[0].mxu0
        %v7425 = vadd.f32 %v7280, %v7424
        %v7426 = vpop.f32.mrb[0].mxu0
        %7427 = vmatprep.mubr.f32.mxu0 %v6833
        %7428 = vmatmul.mubr.f32.gmra.mrb[0].mxu0 %v6777
        %v7429 = vpop.f32.mrb[0].mxu0
        %v7430 = vadd.f32 %v7285, %v7429
        %v7431 = vpop.f32.mrb[0].mxu0
        %7432 = vmatprep.mubr.f32.mxu0 %v6836
        %7433 = vmatmul.mubr.f32.gmra.mrb[0].mxu0 %v6780
        %v7434 = vpop.f32.mrb[0].mxu0
        %v7435 = vadd.f32 %v7290, %v7434
        %v7436 = vpop.f32.mrb[0].mxu0
        %7437 = vmatprep.mubr.f32.mxu0 %v6838
        %7438 = vmatmul.mubr.f32.gmra.mrb[0].mxu0 %v6782
        %v7439 = vpop.f32.mrb[0].mxu0
        %v7440 = vadd.f32 %v7295, %v7439
        %v7441 = vpop.f32.mrb[0].mxu0
        %7442 = vmatprep.mubr.f32.mxu0 %v6841
        %7443 = vmatmul.mubr.f32.gmra.mrb[0].mxu0 %v6785
        %v7444 = vpop.f32.mrb[0].mxu0
        %v7445 = vadd.f32 %v7300, %v7444
        %v7446 = vpop.f32.mrb[0].mxu0
        %7447 = vmatprep.mubr.f32.mxu0 %v6843
        %7448 = vmatmul.mubr.f32.gmra.mrb[0].mxu0 %v6787
        %v7449 = vpop.f32.mrb[0].mxu0
        %v7450 = vadd.f32 %v7305, %v7449
        %v7451 = vpop.f32.mrb[0].mxu0
        %7452 = vmatprep.mubr.f32.mxu0 %v6846
        %7453 = vmatmul.mubr.f32.gmra.mrb[0].mxu0 %v6790
        %v7454 = vpop.f32.mrb[0].mxu0
        %v7455 = vadd.f32 %v7310, %v7454
        %v7456 = vpop.f32.mrb[0].mxu0
        %7457 = vmatprep.mubr.f32.mxu0 %v6848
        %7458 = vmatmul.mubr.f32.gmra.mrb[0].mxu0 %v6792
        %v7459 = vpop.f32.mrb[0].mxu0
        %v7460 = vadd.f32 %v7315, %v7459
        %v7461 = vpop.f32.mrb[0].mxu0
        %7462 = vmatprep.mubr.f32.mxu0 %v6851
        %7463 = vmatmul.mubr.f32.gmra.mrb[0].mxu0 %v6795
        %v7464 = vpop.f32.mrb[0].mxu0
        %v7465 = vadd.f32 %v7320, %v7464
        %v7466 = vpop.f32.mrb[0].mxu0
        %7467 = vmatprep.mubr.f32.mxu0 %v6853
        %7468 = vmatmul.mubr.f32.gmra.mrb[0].mxu0 %v6797
        %v7469 = vpop.f32.mrb[0].mxu0
        %v7470 = vadd.f32 %v7325, %v7469
        %v7471 = vpop.f32.mrb[0].mxu0
        %7472 = vmatprep.mubr.f32.mxu0 %v6882
        %7473 = vmatmul.mubr.f32.gmra.mrb[0].mxu0 %v6875
        %v7474 = vpop.f32.mrb[0].mxu0
        %v7475 = vadd.f32 %v7330, %v7474
        %v7476 = vpop.f32.mrb[0].mxu0
        %7477 = vmatprep.mubr.f32.mxu0 %v6884
        %7478 = vmatmul.mubr.f32.gmra.mrb[0].mxu0 %v6877
        %v7479 = vpop.f32.mrb[0].mxu0
        %v7480 = vadd.f32 %v7335, %v7479
        %v7481 = vpop.f32.mrb[0].mxu0
        %7482 = vdwg.mxu0
        %7483 = vmatprep.subr.mxu0 0.0
        %7484 = vmatpush1.msra.mxu0 %v7000
        %7485 = vmatprep.subr.mxu0 0.0
        %7486 = vmatpush1.msra.mxu0 %v7001
        %7487 = vmatprep.subr.mxu0 0.0
        %7488 = vmatpush1.msra.mxu0 %v7002
        %7489 = vmatprep.subr.mxu0 0.0
        %7490 = vmatpush1.msra.mxu0 %v7003
        %7491 = vmatprep.subr.mxu0 0.0
        %7492 = vmatpush1.msra.mxu0 %v7004
        %7493 = vmatprep.subr.mxu0 0.0
        %7494 = vmatpush1.msra.mxu0 %v7005
        %7495 = vmatprep.subr.mxu0 0.0
        %7496 = vmatpush1.msra.mxu0 %v7006
        %7497 = vmatprep.subr.mxu0 0.0
        %7498 = vmatpush1.msra.mxu0 %v7007
        %7499 = vmatprep.subr.mxu0 0.0
        %7500 = vmatpush1.msra.mxu0 %v7008
        %7501 = vmatprep.subr.mxu0 0.0
        %7502 = vmatpush1.msra.mxu0 %v7009
        %7503 = vmatprep.subr.mxu0 0.0
        %7504 = vmatpush1.msra.mxu0 %v7010
        %7505 = vmatprep.subr.mxu0 0.0
        %7506 = vmatpush1.msra.mxu0 %v7011
        %7507 = vmatprep.subr.mxu0 0.0
        %7508 = vmatpush1.msra.mxu0 %v7012
        %7509 = vmatprep.subr.mxu0 0.0
        %7510 = vmatpush1.msra.mxu0 %v7013
        %7511 = vmatprep.subr.mxu0 0.0
        %7512 = vmatpush1.msra.mxu0 %v7014
        %7513 = vmatprep.subr.mxu0 0.0
        %7514 = vmatpush1.msra.mxu0 %v7015
        %7515 = vmatprep.subr.mxu0 0.0
        %7516 = vmatpush1.msra.mxu0 %v7016
        %7517 = vmatprep.subr.mxu0 0.0
        %7518 = vmatpush1.msra.mxu0 %v7017
        %7519 = vmatprep.subr.mxu0 0.0
        %7520 = vmatpush1.msra.mxu0 %v7018
        %7521 = vmatprep.subr.mxu0 0.0
        %7522 = vmatpush1.msra.mxu0 %v7019
        %7523 = vmatprep.subr.mxu0 0.0
        %7524 = vmatpush1.msra.mxu0 %v7020
        %7525 = vmatprep.subr.mxu0 0.0
        %7526 = vmatpush1.msra.mxu0 %v7021
        %7527 = vmatprep.subr.mxu0 0.0
        %7528 = vmatpush1.msra.mxu0 %v7022
        %7529 = vmatprep.subr.mxu0 0.0
        %7530 = vmatpush1.msra.mxu0 %v7023
        %7531 = vmatprep.subr.mxu0 0.0
        %7532 = vmatpush1.msra.mxu0 %v7024
        %7533 = vmatprep.subr.mxu0 0.0
        %7534 = vmatpush1.msra.mxu0 %v7025
        %7535 = vmatprep.subr.mxu0 0.0
        %7536 = vmatpush1.msra.mxu0 %v7026
        %7537 = vmatprep.subr.mxu0 0.0
        %7538 = vmatpush1.msra.mxu0 %v7027
        %7539 = vmatprep.subr.mxu0 0.0
        %7540 = vmatpush1.msra.mxu0 %v7028
        %7541 = vmatprep.subr.mxu0 0.0
        %7542 = vmatpush1.msra.mxu0 %v7029
        %7543 = vmatprep.subr.mxu0 0.0
        %7544 = vmatpush1.msra.mxu0 %v7030
        %7545 = vmatprep.subr.mxu0 0.0
        %7546 = vmatpush1.msra.mxu0 %v7031
        %7547 = vmatprep.mubr.f32.mxu0 %v6770
        %7548 = vmatmul.mubr.f32.gmra.mrb[0].mxu0 %v6710
        %v7549 = vpop.f32.mrb[0].mxu0
        %v7550 = vadd.f32 %v7405, %v7549
        %v7551 = vpop.f32.mrb[0].mxu0
        %7552 = vmatprep.mubr.f32.mxu0 %v6772
        %7553 = vmatmul.mubr.f32.gmra.mrb[0].mxu0 %v6711
        %v7554 = vpop.f32.mrb[0].mxu0
        %v7555 = vadd.f32 %v7410, %v7554
        %v7556 = vpop.f32.mrb[0].mxu0
        %7557 = vmatprep.mubr.f32.mxu0 %v6775
        %7558 = vmatmul.mubr.f32.gmra.mrb[0].mxu0 %v6713
        %v7559 = vpop.f32.mrb[0].mxu0
        %v7560 = vadd.f32 %v7415, %v7559
        %v7561 = vpop.f32.mrb[0].mxu0
        %7562 = vmatprep.mubr.f32.mxu0 %v6777
        %7563 = vmatmul.mubr.f32.gmra.mrb[0].mxu0 %v6714
        %v7564 = vpop.f32.mrb[0].mxu0
        %v7565 = vadd.f32 %v7420, %v7564
        %v7566 = vpop.f32.mrb[0].mxu0
        %7567 = vmatprep.mubr.f32.mxu0 %v6780
        %7568 = vmatmul.mubr.f32.gmra.mrb[0].mxu0 %v6716
        %v7569 = vpop.f32.mrb[0].mxu0
        %v7570 = vadd.f32 %v7425, %v7569
        %v7571 = vpop.f32.mrb[0].mxu0
        %7572 = vmatprep.mubr.f32.mxu0 %v6782
        %7573 = vmatmul.mubr.f32.gmra.mrb[0].mxu0 %v6717
        %v7574 = vpop.f32.mrb[0].mxu0
        %v7575 = vadd.f32 %v7430, %v7574
        %v7576 = vpop.f32.mrb[0].mxu0
        %7577 = vmatprep.mubr.f32.mxu0 %v6785
        %7578 = vmatmul.mubr.f32.gmra.mrb[0].mxu0 %v6719
        %v7579 = vpop.f32.mrb[0].mxu0
        %v7580 = vadd.f32 %v7435, %v7579
        %v7581 = vpop.f32.mrb[0].mxu0
        %7582 = vmatprep.mubr.f32.mxu0 %v6787
        %7583 = vmatmul.mubr.f32.gmra.mrb[0].mxu0 %v6720
        %v7584 = vpop.f32.mrb[0].mxu0
        %v7585 = vadd.f32 %v7440, %v7584
        %v7586 = vpop.f32.mrb[0].mxu0
        %7587 = vmatprep.mubr.f32.mxu0 %v6790
        %7588 = vmatmul.mubr.f32.gmra.mrb[0].mxu0 %v6722
        %v7589 = vpop.f32.mrb[0].mxu0
        %v7590 = vadd.f32 %v7445, %v7589
        %v7591 = vpop.f32.mrb[0].mxu0
        %7592 = vmatprep.mubr.f32.mxu0 %v6792
        %7593 = vmatmul.mubr.f32.gmra.mrb[0].mxu0 %v6723
        %v7594 = vpop.f32.mrb[0].mxu0
        %v7595 = vadd.f32 %v7450, %v7594
        %v7596 = vpop.f32.mrb[0].mxu0
        %7597 = vmatprep.mubr.f32.mxu0 %v6795
        %7598 = vmatmul.mubr.f32.gmra.mrb[0].mxu0 %v6725
        %v7599 = vpop.f32.mrb[0].mxu0
        %v7600 = vadd.f32 %v7455, %v7599
        %v7601 = vpop.f32.mrb[0].mxu0
        %7602 = vmatprep.mubr.f32.mxu0 %v6797
        %7603 = vmatmul.mubr.f32.gmra.mrb[0].mxu0 %v6726
        %v7604 = vpop.f32.mrb[0].mxu0
        %v7605 = vadd.f32 %v7460, %v7604
        %v7606 = vpop.f32.mrb[0].mxu0
        %7607 = vmatprep.mubr.f32.mxu0 %v6875
        %7608 = vmatmul.mubr.f32.gmra.mrb[0].mxu0 %v6728
        %v7609 = vpop.f32.mrb[0].mxu0
        %v7610 = vadd.f32 %v7465, %v7609
        %v7611 = vpop.f32.mrb[0].mxu0
        %7612 = vmatprep.mubr.f32.mxu0 %v6877
        %7613 = vmatmul.mubr.f32.gmra.mrb[0].mxu0 %v6729
        %v7614 = vpop.f32.mrb[0].mxu0
        %v7615 = vadd.f32 %v7470, %v7614
        %v7616 = vpop.f32.mrb[0].mxu0
        %7617 = vmatprep.mubr.f32.mxu0 %v6892
        %7618 = vmatmul.mubr.f32.gmra.mrb[0].mxu0 %v6731
        %v7619 = vpop.f32.mrb[0].mxu0
        %v7620 = vadd.f32 %v7475, %v7619
        %v7621 = vpop.f32.mrb[0].mxu0
        %7622 = vmatprep.mubr.f32.mxu0 %v6894
        %7623 = vmatmul.mubr.f32.gmra.mrb[0].mxu0 %v6732
        %v7624 = vpop.f32.mrb[0].mxu0
        %v7625 = vadd.f32 %v7480, %v7624
        %v7626 = vpop.f32.mrb[0].mxu0
        %7627 = vdwg.mxu0
        %7628 = vmatprep.subr.mxu0 0.0
        %7629 = vmatpush1.msra.mxu0 %v7032
        %7630 = vmatprep.subr.mxu0 0.0
        %7631 = vmatpush1.msra.mxu0 %v7033
        %7632 = vmatprep.subr.mxu0 0.0
        %7633 = vmatpush1.msra.mxu0 %v7034
        %7634 = vmatprep.subr.mxu0 0.0
        %7635 = vmatpush1.msra.mxu0 %v7035
        %7636 = vmatprep.subr.mxu0 0.0
        %7637 = vmatpush1.msra.mxu0 %v7036
        %7638 = vmatprep.subr.mxu0 0.0
        %7639 = vmatpush1.msra.mxu0 %v7037
        %7640 = vmatprep.subr.mxu0 0.0
        %7641 = vmatpush1.msra.mxu0 %v7038
        %7642 = vmatprep.subr.mxu0 0.0
        %7643 = vmatpush1.msra.mxu0 %v7039
        %7644 = vmatprep.subr.mxu0 0.0
        %7645 = vmatpush1.msra.mxu0 %v7040
        %7646 = vmatprep.subr.mxu0 0.0
        %7647 = vmatpush1.msra.mxu0 %v7041
        %7648 = vmatprep.subr.mxu0 0.0
        %7649 = vmatpush1.msra.mxu0 %v7042
        %7650 = vmatprep.subr.mxu0 0.0
        %7651 = vmatpush1.msra.mxu0 %v7043
        %7652 = vmatprep.subr.mxu0 0.0
        %7653 = vmatpush1.msra.mxu0 %v7044
        %7654 = vmatprep.subr.mxu0 0.0
        %7655 = vmatpush1.msra.mxu0 %v7045
        %7656 = vmatprep.subr.mxu0 0.0
        %7657 = vmatpush1.msra.mxu0 %v7046
        %7658 = vmatprep.subr.mxu0 0.0
        %7659 = vmatpush1.msra.mxu0 %v7047
        %7660 = vmatprep.subr.mxu0 0.0
        %7661 = vmatpush1.msra.mxu0 0.0
        %7662 = vmatprep.subr.mxu0 0.0
        %7663 = vmatpush1.msra.mxu0 0.0
        %7664 = vmatprep.subr.mxu0 0.0
        %7665 = vmatpush1.msra.mxu0 0.0
        %7666 = vmatprep.subr.mxu0 0.0
        %7667 = vmatpush1.msra.mxu0 0.0
        %7668 = vmatprep.subr.mxu0 0.0
        %7669 = vmatpush1.msra.mxu0 0.0
        %7670 = vmatprep.subr.mxu0 0.0
        %7671 = vmatpush1.msra.mxu0 0.0
        %7672 = vmatprep.subr.mxu0 0.0
        %7673 = vmatpush1.msra.mxu0 0.0
        %7674 = vmatprep.subr.mxu0 0.0
        %7675 = vmatpush1.msra.mxu0 0.0
        %7676 = vmatprep.subr.mxu0 0.0
        %7677 = vmatpush1.msra.mxu0 0.0
        %7678 = vmatprep.subr.mxu0 0.0
        %7679 = vmatpush1.msra.mxu0 0.0
        %7680 = vmatprep.subr.mxu0 0.0
        %7681 = vmatpush1.msra.mxu0 0.0
        %7682 = vmatprep.subr.mxu0 0.0
        %7683 = vmatpush1.msra.mxu0 0.0
        %7684 = vmatprep.subr.mxu0 0.0
        %7685 = vmatpush1.msra.mxu0 0.0
        %7686 = vmatprep.subr.mxu0 0.0
        %7687 = vmatpush1.msra.mxu0 0.0
        %7688 = vmatprep.subr.mxu0 0.0
        %7689 = vmatpush1.msra.mxu0 0.0
        %7690 = vmatprep.subr.mxu0 0.0
        %7691 = vmatpush1.msra.mxu0 0.0
        %7692 = vmatprep.mubr.f32.mxu0 0.0
        %7693 = vmatmul.mubr.f32.gmra.mrb[0].mxu0 %v6826
        %v7694 = vpop.f32.mrb[0].mxu0
        %v7695 = vadd.f32 %v7550, %v7694
        %v7696 = vpop.f32.mrb[0].mxu0
        %7697 = vmatprep.mubr.f32.mxu0 0.0
        %7698 = vmatmul.mubr.f32.gmra.mrb[0].mxu0 %v6828
        %v7699 = vpop.f32.mrb[0].mxu0
        %v7700 = vadd.f32 %v7555, %v7699
        %v7701 = vpop.f32.mrb[0].mxu0
        %7702 = vmatprep.mubr.f32.mxu0 0.0
        %7703 = vmatmul.mubr.f32.gmra.mrb[0].mxu0 %v6831
        %v7704 = vpop.f32.mrb[0].mxu0
        %v7705 = vadd.f32 %v7560, %v7704
        %v7706 = vpop.f32.mrb[0].mxu0
        %7707 = vmatprep.mubr.f32.mxu0 0.0
        %7708 = vmatmul.mubr.f32.gmra.mrb[0].mxu0 %v6833
        %v7709 = vpop.f32.mrb[0].mxu0
        %v7710 = vadd.f32 %v7565, %v7709
        %v7711 = vpop.f32.mrb[0].mxu0
        %7712 = vmatprep.mubr.f32.mxu0 0.0
        %7713 = vmatmul.mubr.f32.gmra.mrb[0].mxu0 %v6836
        %v7714 = vpop.f32.mrb[0].mxu0
        %v7715 = vadd.f32 %v7570, %v7714
        %v7716 = vpop.f32.mrb[0].mxu0
        %7717 = vmatprep.mubr.f32.mxu0 0.0
        %7718 = vmatmul.mubr.f32.gmra.mrb[0].mxu0 %v6838
        %v7719 = vpop.f32.mrb[0].mxu0
        %v7720 = vadd.f32 %v7575, %v7719
        %v7721 = vpop.f32.mrb[0].mxu0
        %7722 = vmatprep.mubr.f32.mxu0 0.0
        %7723 = vmatmul.mubr.f32.gmra.mrb[0].mxu0 %v6841
        %v7724 = vpop.f32.mrb[0].mxu0
        %v7725 = vadd.f32 %v7580, %v7724
        %v7726 = vpop.f32.mrb[0].mxu0
        %7727 = vmatprep.mubr.f32.mxu0 0.0
        %7728 = vmatmul.mubr.f32.gmra.mrb[0].mxu0 %v6843
        %v7729 = vpop.f32.mrb[0].mxu0
        %v7730 = vadd.f32 %v7585, %v7729
        %v7731 = vpop.f32.mrb[0].mxu0
        %7732 = vmatprep.mubr.f32.mxu0 0.0
        %7733 = vmatmul.mubr.f32.gmra.mrb[0].mxu0 %v6846
        %v7734 = vpop.f32.mrb[0].mxu0
        %v7735 = vadd.f32 %v7590, %v7734
        %v7736 = vpop.f32.mrb[0].mxu0
        %7737 = vmatprep.mubr.f32.mxu0 0.0
        %7738 = vmatmul.mubr.f32.gmra.mrb[0].mxu0 %v6848
        %v7739 = vpop.f32.mrb[0].mxu0
        %v7740 = vadd.f32 %v7595, %v7739
        %v7741 = vpop.f32.mrb[0].mxu0
        %7742 = vmatprep.mubr.f32.mxu0 0.0
        %7743 = vmatmul.mubr.f32.gmra.mrb[0].mxu0 %v6851
        %v7744 = vpop.f32.mrb[0].mxu0
        %v7745 = vadd.f32 %v7600, %v7744
        %v7746 = vpop.f32.mrb[0].mxu0
        %7747 = vmatprep.mubr.f32.mxu0 0.0
        %7748 = vmatmul.mubr.f32.gmra.mrb[0].mxu0 %v6853
        %v7749 = vpop.f32.mrb[0].mxu0
        %v7750 = vadd.f32 %v7605, %v7749
        %v7751 = vpop.f32.mrb[0].mxu0
        %7752 = vmatprep.mubr.f32.mxu0 0.0
        %7753 = vmatmul.mubr.f32.gmra.mrb[0].mxu0 %v6882
        %v7754 = vpop.f32.mrb[0].mxu0
        %v7755 = vadd.f32 %v7610, %v7754
        %v7756 = vpop.f32.mrb[0].mxu0
        %7757 = vmatprep.mubr.f32.mxu0 0.0
        %7758 = vmatmul.mubr.f32.gmra.mrb[0].mxu0 %v6884
        %v7759 = vpop.f32.mrb[0].mxu0
        %v7760 = vadd.f32 %v7615, %v7759
        %v7761 = vpop.f32.mrb[0].mxu0
        %7762 = vmatprep.mubr.f32.mxu0 0.0
        %7763 = vmatmul.mubr.f32.gmra.mrb[0].mxu0 %v6899
        %v7764 = vpop.f32.mrb[0].mxu0
        %v7765 = vadd.f32 %v7620, %v7764
        %v7766 = vpop.f32.mrb[0].mxu0
        %7767 = vmatprep.mubr.f32.mxu0 0.0
        %7768 = vmatmul.mubr.f32.gmra.mrb[0].mxu0 %v6901
        %v7769 = vpop.f32.mrb[0].mxu0
        %v7770 = vadd.f32 %v7625, %v7769
        %v7771 = vpop.f32.mrb[0].mxu0
        %7772 = vdwg.mxu0
        %v7773 = vld [vmem:[%s5] sm:$0x1]
        %v7775 = vlaneseq
        %v7776 = vshrl.u32 %v7775, 7
        %v7777 = vsub.s32 0, %v7776
        %v7778 = vrot.slane %v7773, %v7777
        %v7780 = vmul.f32 %v7695, %v7778
        %v7781 = vmul.f32 %v7700, %v7778
        %v7782 = vmul.f32 %v7705, %v7778
        %v7783 = vmul.f32 %v7710, %v7778
        %v7784 = vmul.f32 %v7715, %v7778
        %v7785 = vmul.f32 %v7720, %v7778
        %v7786 = vmul.f32 %v7725, %v7778
        %v7787 = vmul.f32 %v7730, %v7778
        %v7788 = vmul.f32 %v7735, %v7778
        %v7789 = vmul.f32 %v7740, %v7778
        %v7790 = vmul.f32 %v7745, %v7778
        %v7791 = vmul.f32 %v7750, %v7778
        %v7792 = vmul.f32 %v7755, %v7778
        %v7793 = vmul.f32 %v7760, %v7778
        %v7794 = vmul.f32 %v7765, %v7778
        %v7795 = vmul.f32 %v7770, %v7778
        %v7796 = vld [vmem:[%s6] sm:$0x1]
        %v7798 = vlaneseq
        %v7799 = vshrl.u32 %v7798, 7
        %v7800 = vsub.s32 0, %v7799
        %v7801 = vrot.slane %v7796, %v7800
        %v7803 = vadd.f32 %v7780, %v7801
        %v7804 = vadd.f32 %v7781, %v7801
        %v7805 = vadd.f32 %v7782, %v7801
        %v7806 = vadd.f32 %v7783, %v7801
        %v7807 = vadd.f32 %v7784, %v7801
        %v7808 = vadd.f32 %v7785, %v7801
        %v7809 = vadd.f32 %v7786, %v7801
        %v7810 = vadd.f32 %v7787, %v7801
        %v7811 = vadd.f32 %v7788, %v7801
        %v7812 = vadd.f32 %v7789, %v7801
        %v7813 = vadd.f32 %v7790, %v7801
        %v7814 = vadd.f32 %v7791, %v7801
        %v7815 = vadd.f32 %v7792, %v7801
        %v7816 = vadd.f32 %v7793, %v7801
        %v7817 = vadd.f32 %v7794, %v7801
        %v7818 = vadd.f32 %v7795, %v7801
        %v7819 = vmax.f32 %v7803, 0.0
        %v7820 = vmax.f32 %v7804, 0.0
        %v7821 = vmax.f32 %v7805, 0.0
        %v7822 = vmax.f32 %v7806, 0.0
        %v7823 = vmax.f32 %v7807, 0.0
        %v7824 = vmax.f32 %v7808, 0.0
        %v7825 = vmax.f32 %v7809, 0.0
        %v7826 = vmax.f32 %v7810, 0.0
        %v7827 = vmax.f32 %v7811, 0.0
        %v7828 = vmax.f32 %v7812, 0.0
        %v7829 = vmax.f32 %v7813, 0.0
        %v7830 = vmax.f32 %v7814, 0.0
        %v7831 = vmax.f32 %v7815, 0.0
        %v7832 = vmax.f32 %v7816, 0.0
        %v7833 = vmax.f32 %v7817, 0.0
        %v7834 = vmax.f32 %v7818, 0.0
        %7835 = vst [vmem:[%s271] sm:$0xff] %v7819
        %7836 = vst [vmem:[%s271 + $0x8] sm:$0xff] %v7820
        %7837 = vst [vmem:[%s271 + $0x10] sm:$0xff] %v7821
        %7838 = vst [vmem:[%s271 + $0x18] sm:$0xff] %v7822
        %7839 = vst [vmem:[%s271 + $0x20] sm:$0xff] %v7823
        %7840 = vst [vmem:[%s271 + $0x28] sm:$0xff] %v7824
        %7841 = vst [vmem:[%s271 + $0x30] sm:$0xff] %v7825
        %7842 = vst [vmem:[%s271 + $0x38] sm:$0xff] %v7826
        %7843 = vst [vmem:[%s271 + $0x40] sm:$0xff] %v7827
        %7844 = vst [vmem:[%s271 + $0x48] sm:$0xff] %v7828
        %7845 = vst [vmem:[%s271 + $0x50] sm:$0xff] %v7829
        %7846 = vst [vmem:[%s271 + $0x58] sm:$0xff] %v7830
        %7847 = vst [vmem:[%s271 + $0x60] sm:$0xff] %v7831
        %7848 = vst [vmem:[%s271 + $0x68] sm:$0xff] %v7832
        %7849 = vst [vmem:[%s271 + $0x70] sm:$0xff] %v7833
        %7850 = vst [vmem:[%s271 + $0x78] sm:$0xff] %v7834
        %s7851 = smul.u32 8, %s24
        %p7852 = scmp.lt.s32.totalorder %s23, 1
        %s7853 = scalar_select %p7852, %s23, 1
        %p7854 = scmp.lt.s32.totalorder %s7851, 15
        %s7855 = scalar_select %p7854, %s7851, 15
        %s7856 = smul.addr %s7855, 2
        %s7857 = smul.addr %s7853, 32
        %s7858 = sadd.s32 %s7856, %s7857
        %s7859 = smul.addr %s7858, 8
        %s7860 = scalar_lea.vmem %s7, %s7859
        // Predicated region
        $region86: #{a_call__.1} parent=43 // pred_check
          %p7861 = pneg %p177
        $region87: #{a_call__.1} parent=43 // pred_check_branch
          %7863 = sbr.rel (%p7861) target = $region89
        $region88: #{a_call__.1} parent=43 // pred_region
          %s7864 = smul.u32 8, %s24
        $region89: #{a_call__.1} parent=43 // pred_fallthru
          _
      $region44: #{a_call__.1} parent=5 // pred_fallthru
        _
      %p7865 = scmp.le.s32.totalorder 2, %s14
      // Predicated region
      $region90: #{a_call__.1} parent=5 // pred_check
        %p7866 = pneg %p7865
      $region91: #{a_call__.1} parent=5 // pred_check_branch
        %7868 = sbr.rel (%p7866) target = $region93
      $region92: #{a_call__.1} parent=5 // pred_region
        %s7869 = ssub.s32 %s14, 2
        // Predicated region
        $region94: #{a_call__.1} parent=92 // pred_check
          %p7870 = pneg %p183
        $region95: #{a_call__.1} parent=92 // pred_check_branch
          %7872 = sbr.rel (%p7870) target = $region97
        $region96: #{a_call__.1} parent=92 // pred_region
          %s7873 = smul.u32 8, %s26
          %p7874 = scmp.lt.s32.totalorder %s25, 1
          %s7875 = scalar_select %p7874, %s25, 1
          %p7876 = scmp.lt.s32.totalorder %s7873, 15
          %s7877 = scalar_select %p7876, %s7873, 15
          %s7878 = smul.addr %s7877, 2
          %s7879 = smul.addr %s7875, 32
          %s7880 = sadd.s32 %s7878, %s7879
          %s7881 = smul.addr %s7880, 8
          %s7882 = scalar_lea.vmem %s7, %s7881
        $region97: #{a_call__.1} parent=92 // pred_fallthru
          _
      $region93: #{a_call__.1} parent=5 // pred_fallthru
        _
    $region6: #{a_call__.1} parent=1 // loop_footer
      %s18 = sadd.s32 1, %s14
    $region7: #{a_call__.1} parent=1 // loop_footer_branch
      %13 = sbr.rel target = $region3
    $region8: #{a_call__.1} parent=1 // loop_exit
      _
    %7883 = vsyncpa [#allocation5], 1
    %s7884 = scalar_lea.sflag [#allocation5], 1
    %7885 = vsyncpa %s7884, 1
  %7886 = vsyncmov [#allocation3]
  %s7887 = vpop.sfrf %7886
  %p7888 = scmp.eq.s32.totalorder %s7887, 0
  %p7889 = pneg %p7888
  %7891 = shalt.err (%p7889)

</llo_original>
